<compile_context>
chip_gen: v6e
topology: v6e:2x2x1
jax: 0.10.0
libtpu: 0.0.40
codegen_flags: <defaults>
</compile_context>

<pallas_src>
import jax
import jax.numpy as jnp
from jax.experimental import pallas as pl
from jax.experimental.pallas import tpu as pltpu


def cbow_kernel(s1_ref, s2_ref,
                w1a_ref, w1b_ref, w1c_ref, w1d_ref, b1_ref,
                w2_ref, b2_ref,
                w3_ref, b3_ref,
                wc_ref, bc_ref,
                out_ref):
    s1 = s1_ref[...]                       # (tm, D) f32
    s2 = s2_ref[...]                       # (tm, D) f32

    # Feature terms (VPU), cast to bf16 only at the MXU inputs.
    a = s1.astype(jnp.bfloat16)
    b = s2.astype(jnp.bfloat16)
    c = (s1 - s2).astype(jnp.bfloat16)
    d = (s1 * s2).astype(jnp.bfloat16)

    # Layer 1: concat-free -- four accumulated dots against the row blocks
    # of w1 (mathematically identical to dot(concat([s1,s2,s1-s2,s1*s2]), w1)).
    pre = (jnp.dot(a, w1a_ref[...], preferred_element_type=jnp.float32)
           + jnp.dot(b, w1b_ref[...], preferred_element_type=jnp.float32)
           + jnp.dot(c, w1c_ref[...], preferred_element_type=jnp.float32)
           + jnp.dot(d, w1d_ref[...], preferred_element_type=jnp.float32)
           + b1_ref[...])
    h = jnp.tanh(pre)

    h = jnp.tanh(jnp.dot(h.astype(jnp.bfloat16), w2_ref[...],
                         preferred_element_type=jnp.float32) + b2_ref[...])
    h = jnp.tanh(jnp.dot(h.astype(jnp.bfloat16), w3_ref[...],
                         preferred_element_type=jnp.float32) + b3_ref[...])

    # Classifier (lane-dense, padded to 128 cols; pad bias = -1e30 so padded
    # lanes contribute exp(-huge) = 0 to the log_softmax denominator).
    logits = jnp.dot(h.astype(jnp.bfloat16), wc_ref[...],
                     preferred_element_type=jnp.float32) + bc_ref[...]
    m = jnp.max(logits, axis=1, keepdims=True)
    shifted = logits - m
    lse = jnp.log(jnp.sum(jnp.exp(shifted), axis=1, keepdims=True))
    out_ref[...] = shifted - lse


def _round_up(x, m):
    return ((x + m - 1) // m) * m


def cbow_forward(v1, v2, params, *, block_m=128):
    B = v1.shape[0]
    D = v1.shape[-1]
    H = params["w2"].shape[0]
    NC = params["wc"].shape[1]          # padded (lane-dense) classifier width
    n_out = params["n_out"]

    # Seq reduction + batch padding in the wrapper (XLA fuses these for free).
    s1 = jnp.sum(v1, axis=1)
    s2 = jnp.sum(v2, axis=1)

    tm = min(block_m, _round_up(B, 8))
    Bp = _round_up(B, tm)
    if Bp != B:
        s1 = jnp.pad(s1, ((0, Bp - B), (0, 0)))
        s2 = jnp.pad(s2, ((0, Bp - B), (0, 0)))

    grid = (Bp // tm,)
    x_spec = pl.BlockSpec((tm, D), lambda i: (i, 0))
    res = lambda shape: pl.BlockSpec(shape, lambda i: (0, 0))  # VMEM-resident

    weight_bytes = (4 * D * H + 2 * H * H + H * NC) * 2        # bf16
    bias_bytes = (3 * H + NC) * 4
    cost = pl.CostEstimate(
        flops=2 * Bp * (4 * D * H + 2 * H * H + H * NC),
        transcendentals=Bp * (3 * H + NC),
        bytes_accessed=2 * Bp * D * 4 + weight_bytes + bias_bytes + Bp * NC * 4,
    )

    out = pl.pallas_call(
        cbow_kernel,
        out_shape=jax.ShapeDtypeStruct((Bp, NC), jnp.float32),
        grid=grid,
        in_specs=[
            x_spec, x_spec,
            res((D, H)), res((D, H)), res((D, H)), res((D, H)), res((1, H)),
            res((H, H)), res((1, H)),
            res((H, H)), res((1, H)),
            res((H, NC)), res((1, NC)),
        ],
        out_specs=pl.BlockSpec((tm, NC), lambda i: (i, 0)),
        compiler_params=pltpu.CompilerParams(
            dimension_semantics=("parallel",),
            vmem_limit_bytes=32 * 1024 * 1024,   # fits v7x's 64 MiB physical VMEM
        ),
        cost_estimate=cost,
    )(s1, s2,
      params["w1a"], params["w1b"], params["w1c"], params["w1d"], params["b1"],
      params["w2"], params["b2"],
      params["w3"], params["b3"],
      params["wc"], params["bc"])

    return out[:B, :n_out]


def init_params(key, vector_dim, n_out, hidden=1024):
    in_size = vector_dim * 4
    ks = jax.random.split(key, 8)

    def lin(kw, kb, fan_in, fan_out):
        bound = 1.0 / float(fan_in) ** 0.5
        w = jax.random.uniform(kw, (fan_in, fan_out), jnp.float32, -bound, bound)
        b = jax.random.uniform(kb, (1, fan_out), jnp.float32, -bound, bound)
        return w, b

    w1, b1 = lin(ks[0], ks[1], in_size, hidden)
    w2, b2 = lin(ks[2], ks[3], hidden, hidden)
    w3, b3 = lin(ks[4], ks[5], hidden, hidden)
    wc, bc = lin(ks[6], ks[7], hidden, n_out)

    D = vector_dim
    w1a, w1b, w1c, w1d = w1[0:D], w1[D:2 * D], w1[2 * D:3 * D], w1[3 * D:4 * D]

    # Lane-dense classifier: pad weights with zero columns, bias with -1e30 so
    # the padded lanes contribute nothing to the log_softmax.
    nc = max(128, _round_up(n_out, 128))
    wc_p = jnp.zeros((hidden, nc), jnp.float32).at[:, :n_out].set(wc)
    bc_p = jnp.full((1, nc), -1e30, jnp.float32).at[:, :n_out].set(bc)

    bf = lambda x: x.astype(jnp.bfloat16)
    return {
        "w1a": bf(w1a), "w1b": bf(w1b), "w1c": bf(w1c), "w1d": bf(w1d), "b1": b1,
        "w2": bf(w2), "b2": b2,
        "w3": bf(w3), "b3": b3,
        "wc": bf(wc_p), "bc": bc_p,
        "n_out": n_out,
    }


def cbow_reference(v1, v2, p):
    # Mirrors the kernel's numerics (bf16 MXU inputs, f32 accumulation).
    s1 = jnp.sum(v1, axis=1)
    s2 = jnp.sum(v2, axis=1)

    def mm(x, w):
        return jnp.dot(x.astype(jnp.bfloat16), w,
                       preferred_element_type=jnp.float32)

    h = jnp.tanh(mm(s1, p["w1a"]) + mm(s2, p["w1b"])
                 + mm(s1 - s2, p["w1c"]) + mm(s1 * s2, p["w1d"]) + p["b1"])
    h = jnp.tanh(mm(h, p["w2"]) + p["b2"])
    h = jnp.tanh(mm(h, p["w3"]) + p["b3"])
    n = p["n_out"]
    logits = mm(h, p["wc"])[:, :n] + p["bc"][:, :n]
    return jax.nn.log_softmax(logits, axis=1)


if __name__ == "__main__":
    key = jax.random.PRNGKey(0)
    k1, k2, kp = jax.random.split(key, 3)

    # Small, module-consistent shapes: batch=48, seq=5, vector_dim=64, n_out=3.
    B, S, D, n_out = 48, 5, 64, 3
    v1 = jax.random.normal(k1, (B, S, D), jnp.float32)
    v2 = jax.random.normal(k2, (B, S, D), jnp.float32)
    params = init_params(kp, vector_dim=D, n_out=n_out)

    # block_m=16 -> 3 batch tiles, exercising the "parallel" grid path.
    out = cbow_forward(v1, v2, params, block_m=16)
    out = jax.block_until_ready(out)

    ref = cbow_reference(v1, v2, params)
    assert out.shape == (B, n_out)
    assert jnp.allclose(out, ref, atol=5e-3, rtol=5e-3), \
        float(jnp.max(jnp.abs(out - ref)))

    print("KERNEL_OK")
</pallas_src>

<mosaic_0001>
module attributes {stable_mosaic.version = 11 : i64} {
  func.func @cbow_kernel(%arg0: i32, %arg1: memref<16x64xf32, #tpu.memory_space<vmem>>, %arg2: memref<16x64xf32, #tpu.memory_space<vmem>>, %arg3: memref<64x1024xbf16, #tpu.memory_space<vmem>>, %arg4: memref<64x1024xbf16, #tpu.memory_space<vmem>>, %arg5: memref<64x1024xbf16, #tpu.memory_space<vmem>>, %arg6: memref<64x1024xbf16, #tpu.memory_space<vmem>>, %arg7: memref<1x1024xf32, #tpu.memory_space<vmem>>, %arg8: memref<1024x1024xbf16, #tpu.memory_space<vmem>>, %arg9: memref<1x1024xf32, #tpu.memory_space<vmem>>, %arg10: memref<1024x1024xbf16, #tpu.memory_space<vmem>>, %arg11: memref<1x1024xf32, #tpu.memory_space<vmem>>, %arg12: memref<1024x128xbf16, #tpu.memory_space<vmem>>, %arg13: memref<1x128xf32, #tpu.memory_space<vmem>>, %arg14: memref<16x128xf32, #tpu.memory_space<vmem>>) attributes {dimension_semantics = [#tpu.dimension_semantics<parallel>], iteration_bounds = array<i64: 3>, scalar_prefetch = 0 : i64, scratch_operands = 0 : i64, tpu.core_type = #tpu.core_type<tc>, window_params = [{transform_indices = @transform_0, window_bounds = array<i64: 16, 64>}, {transform_indices = @transform_1, window_bounds = array<i64: 16, 64>}, {pipeline_mode = #tpu.pipeline_mode<synchronous>, transform_indices = @transform_2, window_bounds = array<i64: 64, 1024>}, {pipeline_mode = #tpu.pipeline_mode<synchronous>, transform_indices = @transform_3, window_bounds = array<i64: 64, 1024>}, {pipeline_mode = #tpu.pipeline_mode<synchronous>, transform_indices = @transform_4, window_bounds = array<i64: 64, 1024>}, {pipeline_mode = #tpu.pipeline_mode<synchronous>, transform_indices = @transform_5, window_bounds = array<i64: 64, 1024>}, {pipeline_mode = #tpu.pipeline_mode<synchronous>, transform_indices = @transform_6, window_bounds = array<i64: 1, 1024>}, {pipeline_mode = #tpu.pipeline_mode<synchronous>, transform_indices = @transform_7, window_bounds = array<i64: 1024, 1024>}, {pipeline_mode = #tpu.pipeline_mode<synchronous>, transform_indices = @transform_8, window_bounds = array<i64: 1, 1024>}, {pipeline_mode = #tpu.pipeline_mode<synchronous>, transform_indices = @transform_9, window_bounds = array<i64: 1024, 1024>}, {pipeline_mode = #tpu.pipeline_mode<synchronous>, transform_indices = @transform_10, window_bounds = array<i64: 1, 1024>}, {pipeline_mode = #tpu.pipeline_mode<synchronous>, transform_indices = @transform_11, window_bounds = array<i64: 1024, 128>}, {pipeline_mode = #tpu.pipeline_mode<synchronous>, transform_indices = @transform_12, window_bounds = array<i64: 1, 128>}, {transform_indices = @transform_13, window_bounds = array<i64: 16, 128>}]} {
    %c0 = arith.constant 0 : index
    %c0_0 = arith.constant 0 : index
    %0 = vector.load %arg1[%c0, %c0_0] : memref<16x64xf32, #tpu.memory_space<vmem>>, vector<16x64xf32>
    %c0_1 = arith.constant 0 : index
    %c0_2 = arith.constant 0 : index
    %1 = vector.load %arg2[%c0_1, %c0_2] : memref<16x64xf32, #tpu.memory_space<vmem>>, vector<16x64xf32>
    %2 = arith.truncf %0 : vector<16x64xf32> to vector<16x64xbf16>
    %3 = arith.truncf %1 : vector<16x64xf32> to vector<16x64xbf16>
    %4 = arith.subf %0, %1 : vector<16x64xf32>
    %5 = arith.truncf %4 : vector<16x64xf32> to vector<16x64xbf16>
    %6 = arith.mulf %0, %1 : vector<16x64xf32>
    %7 = arith.truncf %6 : vector<16x64xf32> to vector<16x64xbf16>
    %c0_3 = arith.constant 0 : index
    %c0_4 = arith.constant 0 : index
    %8 = vector.load %arg3[%c0_3, %c0_4] : memref<64x1024xbf16, #tpu.memory_space<vmem>>, vector<64x1024xbf16>
    %cst = arith.constant dense<0.000000e+00> : vector<16x1024xf32>
    %9 = tpu.matmul %2, %8, %cst {dimension_numbers = #tpu.dot_dimension_numbers<[1], [0], [0], [1], [0, 0, 1, 1], [], []>} : vector<16x64xbf16>, vector<64x1024xbf16>, vector<16x1024xf32> -> vector<16x1024xf32>
    %c0_5 = arith.constant 0 : index
    %c0_6 = arith.constant 0 : index
    %10 = vector.load %arg4[%c0_5, %c0_6] : memref<64x1024xbf16, #tpu.memory_space<vmem>>, vector<64x1024xbf16>
    %cst_7 = arith.constant dense<0.000000e+00> : vector<16x1024xf32>
    %11 = tpu.matmul %3, %10, %cst_7 {dimension_numbers = #tpu.dot_dimension_numbers<[1], [0], [0], [1], [0, 0, 1, 1], [], []>} : vector<16x64xbf16>, vector<64x1024xbf16>, vector<16x1024xf32> -> vector<16x1024xf32>
    %12 = arith.addf %9, %11 : vector<16x1024xf32>
    %c0_8 = arith.constant 0 : index
    %c0_9 = arith.constant 0 : index
    %13 = vector.load %arg5[%c0_8, %c0_9] : memref<64x1024xbf16, #tpu.memory_space<vmem>>, vector<64x1024xbf16>
    %cst_10 = arith.constant dense<0.000000e+00> : vector<16x1024xf32>
    %14 = tpu.matmul %5, %13, %cst_10 {dimension_numbers = #tpu.dot_dimension_numbers<[1], [0], [0], [1], [0, 0, 1, 1], [], []>} : vector<16x64xbf16>, vector<64x1024xbf16>, vector<16x1024xf32> -> vector<16x1024xf32>
    %15 = arith.addf %12, %14 : vector<16x1024xf32>
    %c0_11 = arith.constant 0 : index
    %c0_12 = arith.constant 0 : index
    %16 = vector.load %arg6[%c0_11, %c0_12] : memref<64x1024xbf16, #tpu.memory_space<vmem>>, vector<64x1024xbf16>
    %cst_13 = arith.constant dense<0.000000e+00> : vector<16x1024xf32>
    %17 = tpu.matmul %7, %16, %cst_13 {dimension_numbers = #tpu.dot_dimension_numbers<[1], [0], [0], [1], [0, 0, 1, 1], [], []>} : vector<16x64xbf16>, vector<64x1024xbf16>, vector<16x1024xf32> -> vector<16x1024xf32>
    %18 = arith.addf %15, %17 : vector<16x1024xf32>
    %c0_14 = arith.constant 0 : index
    %c0_15 = arith.constant 0 : index
    %19 = vector.load %arg7[%c0_14, %c0_15] : memref<1x1024xf32, #tpu.memory_space<vmem>>, vector<1x1024xf32>
    %20 = vector.broadcast %19 : vector<1x1024xf32> to vector<16x1024xf32>
    %21 = arith.addf %18, %20 : vector<16x1024xf32>
    %22 = math.tanh %21 : vector<16x1024xf32>
    %23 = arith.truncf %22 : vector<16x1024xf32> to vector<16x1024xbf16>
    %c0_16 = arith.constant 0 : index
    %c0_17 = arith.constant 0 : index
    %24 = vector.load %arg8[%c0_16, %c0_17] : memref<1024x1024xbf16, #tpu.memory_space<vmem>>, vector<1024x1024xbf16>
    %cst_18 = arith.constant dense<0.000000e+00> : vector<16x1024xf32>
    %25 = tpu.matmul %23, %24, %cst_18 {dimension_numbers = #tpu.dot_dimension_numbers<[1], [0], [0], [1], [0, 0, 1, 1], [], []>} : vector<16x1024xbf16>, vector<1024x1024xbf16>, vector<16x1024xf32> -> vector<16x1024xf32>
    %c0_19 = arith.constant 0 : index
    %c0_20 = arith.constant 0 : index
    %26 = vector.load %arg9[%c0_19, %c0_20] : memref<1x1024xf32, #tpu.memory_space<vmem>>, vector<1x1024xf32>
    %27 = vector.broadcast %26 : vector<1x1024xf32> to vector<16x1024xf32>
    %28 = arith.addf %25, %27 : vector<16x1024xf32>
    %29 = math.tanh %28 : vector<16x1024xf32>
    %30 = arith.truncf %29 : vector<16x1024xf32> to vector<16x1024xbf16>
    %c0_21 = arith.constant 0 : index
    %c0_22 = arith.constant 0 : index
    %31 = vector.load %arg10[%c0_21, %c0_22] : memref<1024x1024xbf16, #tpu.memory_space<vmem>>, vector<1024x1024xbf16>
    %cst_23 = arith.constant dense<0.000000e+00> : vector<16x1024xf32>
    %32 = tpu.matmul %30, %31, %cst_23 {dimension_numbers = #tpu.dot_dimension_numbers<[1], [0], [0], [1], [0, 0, 1, 1], [], []>} : vector<16x1024xbf16>, vector<1024x1024xbf16>, vector<16x1024xf32> -> vector<16x1024xf32>
    %c0_24 = arith.constant 0 : index
    %c0_25 = arith.constant 0 : index
    %33 = vector.load %arg11[%c0_24, %c0_25] : memref<1x1024xf32, #tpu.memory_space<vmem>>, vector<1x1024xf32>
    %34 = vector.broadcast %33 : vector<1x1024xf32> to vector<16x1024xf32>
    %35 = arith.addf %32, %34 : vector<16x1024xf32>
    %36 = math.tanh %35 : vector<16x1024xf32>
    %37 = arith.truncf %36 : vector<16x1024xf32> to vector<16x1024xbf16>
    %c0_26 = arith.constant 0 : index
    %c0_27 = arith.constant 0 : index
    %38 = vector.load %arg12[%c0_26, %c0_27] : memref<1024x128xbf16, #tpu.memory_space<vmem>>, vector<1024x128xbf16>
    %cst_28 = arith.constant dense<0.000000e+00> : vector<16x128xf32>
    %39 = tpu.matmul %37, %38, %cst_28 {dimension_numbers = #tpu.dot_dimension_numbers<[1], [0], [0], [1], [0, 0, 1, 1], [], []>} : vector<16x1024xbf16>, vector<1024x128xbf16>, vector<16x128xf32> -> vector<16x128xf32>
    %c0_29 = arith.constant 0 : index
    %c0_30 = arith.constant 0 : index
    %40 = vector.load %arg13[%c0_29, %c0_30] : memref<1x128xf32, #tpu.memory_space<vmem>>, vector<1x128xf32>
    %41 = vector.broadcast %40 : vector<1x128xf32> to vector<16x128xf32>
    %42 = arith.addf %39, %41 : vector<16x128xf32>
    %cst_31 = arith.constant dense<0xFF800000> : vector<16xf32>
    %43 = vector.multi_reduction <maximumf>, %42, %cst_31 [1] : vector<16x128xf32> to vector<16xf32>
    %44 = vector.shape_cast %43 : vector<16xf32> to vector<16x1xf32>
    %45 = vector.broadcast %44 : vector<16x1xf32> to vector<16x128xf32>
    %46 = arith.subf %42, %45 : vector<16x128xf32>
    %47 = math.exp %46 : vector<16x128xf32>
    %cst_32 = arith.constant dense<0.000000e+00> : vector<16xf32>
    %48 = vector.multi_reduction <add>, %47, %cst_32 [1] : vector<16x128xf32> to vector<16xf32>
    %49 = vector.shape_cast %48 : vector<16xf32> to vector<16x1xf32>
    %50 = math.log %49 : vector<16x1xf32>
    %51 = vector.broadcast %50 : vector<16x1xf32> to vector<16x128xf32>
    %52 = arith.subf %46, %51 : vector<16x128xf32>
    %c0_33 = arith.constant 0 : index
    %c0_34 = arith.constant 0 : index
    %53 = vector.load %arg14[%c0_33, %c0_34] : memref<16x128xf32, #tpu.memory_space<vmem>>, vector<16x128xf32>
    tpu.vector_store %arg14[%c0_33, %c0_34], %52 {strides = array<i32>} : memref<16x128xf32, #tpu.memory_space<vmem>>, vector<16x128xf32>,
    return
  }
  func.func @transform_0(%arg0: i32) -> (i32, i32) {
    %c0_i32 = arith.constant 0 : i32
    %c0_i32_0 = arith.constant 0 : i32
    return %arg0, %c0_i32 : i32, i32
  }
  func.func @transform_1(%arg0: i32) -> (i32, i32) {
    %c0_i32 = arith.constant 0 : i32
    %c0_i32_0 = arith.constant 0 : i32
    return %arg0, %c0_i32 : i32, i32
  }
  func.func @transform_2(%arg0: i32) -> (i32, i32) {
    %c0_i32 = arith.constant 0 : i32
    %c0_i32_0 = arith.constant 0 : i32
    %c0_i32_1 = arith.constant 0 : i32
    return %c0_i32, %c0_i32_0 : i32, i32
  }
  func.func @transform_3(%arg0: i32) -> (i32, i32) {
    %c0_i32 = arith.constant 0 : i32
    %c0_i32_0 = arith.constant 0 : i32
    %c0_i32_1 = arith.constant 0 : i32
    return %c0_i32, %c0_i32_0 : i32, i32
  }
  func.func @transform_4(%arg0: i32) -> (i32, i32) {
    %c0_i32 = arith.constant 0 : i32
    %c0_i32_0 = arith.constant 0 : i32
    %c0_i32_1 = arith.constant 0 : i32
    return %c0_i32, %c0_i32_0 : i32, i32
  }
  func.func @transform_5(%arg0: i32) -> (i32, i32) {
    %c0_i32 = arith.constant 0 : i32
    %c0_i32_0 = arith.constant 0 : i32
    %c0_i32_1 = arith.constant 0 : i32
    return %c0_i32, %c0_i32_0 : i32, i32
  }
  func.func @transform_6(%arg0: i32) -> (i32, i32) {
    %c0_i32 = arith.constant 0 : i32
    %c0_i32_0 = arith.constant 0 : i32
    %c0_i32_1 = arith.constant 0 : i32
    return %c0_i32, %c0_i32_0 : i32, i32
  }
  func.func @transform_7(%arg0: i32) -> (i32, i32) {
    %c0_i32 = arith.constant 0 : i32
    %c0_i32_0 = arith.constant 0 : i32
    %c0_i32_1 = arith.constant 0 : i32
    return %c0_i32, %c0_i32_0 : i32, i32
  }
  func.func @transform_8(%arg0: i32) -> (i32, i32) {
    %c0_i32 = arith.constant 0 : i32
    %c0_i32_0 = arith.constant 0 : i32
    %c0_i32_1 = arith.constant 0 : i32
    return %c0_i32, %c0_i32_0 : i32, i32
  }
  func.func @transform_9(%arg0: i32) -> (i32, i32) {
    %c0_i32 = arith.constant 0 : i32
    %c0_i32_0 = arith.constant 0 : i32
    %c0_i32_1 = arith.constant 0 : i32
    return %c0_i32, %c0_i32_0 : i32, i32
  }
  func.func @transform_10(%arg0: i32) -> (i32, i32) {
    %c0_i32 = arith.constant 0 : i32
    %c0_i32_0 = arith.constant 0 : i32
    %c0_i32_1 = arith.constant 0 : i32
    return %c0_i32, %c0_i32_0 : i32, i32
  }
  func.func @transform_11(%arg0: i32) -> (i32, i32) {
    %c0_i32 = arith.constant 0 : i32
    %c0_i32_0 = arith.constant 0 : i32
    %c0_i32_1 = arith.constant 0 : i32
    return %c0_i32, %c0_i32_0 : i32, i32
  }
  func.func @transform_12(%arg0: i32) -> (i32, i32) {
    %c0_i32 = arith.constant 0 : i32
    %c0_i32_0 = arith.constant 0 : i32
    %c0_i32_1 = arith.constant 0 : i32
    return %c0_i32, %c0_i32_0 : i32, i32
  }
  func.func @transform_13(%arg0: i32) -> (i32, i32) {
    %c0_i32 = arith.constant 0 : i32
    %c0_i32_0 = arith.constant 0 : i32
    return %arg0, %c0_i32 : i32, i32
  }
}

</mosaic_0001>

<llo_original>
// kernel: tpu_custom_call.1
$region0: #{tpu_custom_call.1}
  #allocation0 [shape = 'u32[]', space=smem, size = 0x4, offset = 0x4, fixed_abs, tag = 'smem constant byte address 0x4 - core index']
  #allocation1 [shape = 'u32[144,128]{1,0:T(1,128)}', space=vmem, size = 0x12000, scoped, tag = 'internal scratch']
  %s0 = inlined_call_operand.hbm [shape: f32[48,64], index: 0, kind: input, shape index: {}]
  %s1 = inlined_call_operand.hbm [shape: f32[48,64], index: 1, kind: input, shape index: {}]
  %s2 = inlined_call_operand.hbm [shape: bf16[64,1024], index: 2, kind: input, shape index: {}]
  %s3 = inlined_call_operand.hbm [shape: bf16[64,1024], index: 3, kind: input, shape index: {}]
  %s4 = inlined_call_operand.hbm [shape: bf16[64,1024], index: 4, kind: input, shape index: {}]
  %s5 = inlined_call_operand.hbm [shape: bf16[64,1024], index: 5, kind: input, shape index: {}]
  %s6 = inlined_call_operand.hbm [shape: f32[1,1024], index: 6, kind: input, shape index: {}]
  %s7 = inlined_call_operand.hbm [shape: bf16[1024,1024], index: 7, kind: input, shape index: {}]
  %s8 = inlined_call_operand.hbm [shape: f32[1,1024], index: 8, kind: input, shape index: {}]
  %s9 = inlined_call_operand.hbm [shape: bf16[1024,1024], index: 9, kind: input, shape index: {}]
  %s10 = inlined_call_operand.hbm [shape: f32[1,1024], index: 10, kind: input, shape index: {}]
  %s11 = inlined_call_operand.hbm [shape: bf16[1024,128], index: 11, kind: input, shape index: {}]
  %s12 = inlined_call_operand.hbm [shape: f32[1,128], index: 12, kind: input, shape index: {}]
  %s13 = inlined_call_operand.hbm [shape: f32[48,128], index: 13, kind: output, shape index: {}]
  %s14 = sld [smem:[#allocation0]]
  $region137: #{tpu_custom_call.1} parent=0
    _
  %s16 = ssub.s32 1, %s14
  %s17 = scalar_select 0, %s16, %s14
  $region1: #{tpu_custom_call.1} parent=0
    #allocation2 [shape = 'u8[16384]{0}', space=vmem, size = 0x4000, scoped, tag = 'input window, operand 0']
    #allocation3 [shape = 's32[2]{0}', space=sflag, size = 0x8, scoped, tag = 'scoped memory for tpu_custom_call.1']
    #allocation4 [shape = 's32[2]{0}', space=sflag, size = 0x8, scoped, tag = 'scoped memory for tpu_custom_call.1']
    #allocation5 [shape = 'u8[16384]{0}', space=vmem, size = 0x4000, scoped, tag = 'input window, operand 1']
    #allocation6 [shape = 's32[2]{0}', space=sflag, size = 0x8, scoped, tag = 'scoped memory for tpu_custom_call.1']
    #allocation7 [shape = 'u8[131072]{0}', space=vmem, size = 0x20000, scoped, tag = 'input window, operand 2, single buffered']
    #allocation8 [shape = 'u8[131072]{0}', space=vmem, size = 0x20000, scoped, tag = 'input window, operand 3, single buffered']
    #allocation9 [shape = 's32[1]{0}', space=sflag, size = 0x4, scoped, tag = 'scoped memory for tpu_custom_call.1']
    #allocation10 [shape = 'u8[131072]{0}', space=vmem, size = 0x20000, scoped, tag = 'input window, operand 4, single buffered']
    #allocation11 [shape = 'u8[131072]{0}', space=vmem, size = 0x20000, scoped, tag = 'input window, operand 5, single buffered']
    #allocation12 [shape = 's32[1]{0}', space=sflag, size = 0x4, scoped, tag = 'scoped memory for tpu_custom_call.1']
    #allocation13 [shape = 'u8[4096]{0}', space=vmem, size = 0x1000, scoped, tag = 'input window, operand 6, single buffered']
    #allocation14 [shape = 'u8[2097152]{0}', space=vmem, size = 0x200000, scoped, tag = 'input window, operand 7, single buffered']
    #allocation15 [shape = 's32[1]{0}', space=sflag, size = 0x4, scoped, tag = 'scoped memory for tpu_custom_call.1']
    #allocation16 [shape = 'u8[4096]{0}', space=vmem, size = 0x1000, scoped, tag = 'input window, operand 8, single buffered']
    #allocation17 [shape = 'u8[2097152]{0}', space=vmem, size = 0x200000, scoped, tag = 'input window, operand 9, single buffered']
    #allocation18 [shape = 's32[1]{0}', space=sflag, size = 0x4, scoped, tag = 'scoped memory for tpu_custom_call.1']
    #allocation19 [shape = 'u8[4096]{0}', space=vmem, size = 0x1000, scoped, tag = 'input window, operand 10, single buffered']
    #allocation20 [shape = 'u8[262144]{0}', space=vmem, size = 0x40000, scoped, tag = 'input window, operand 11, single buffered']
    #allocation21 [shape = 's32[1]{0}', space=sflag, size = 0x4, scoped, tag = 'scoped memory for tpu_custom_call.1']
    #allocation22 [shape = 'u8[512]{0}', space=vmem, size = 0x400, scoped, tag = 'input window, operand 12, single buffered']
    #allocation23 [shape = 'u8[16384]{0}', space=vmem, size = 0x4000, scoped, tag = 'output window, operand 0']
    %18 = vsyncpa [#allocation3], 0
    %s19 = scalar_lea.sflag [#allocation3], 1
    %20 = vsyncpa %s19, 0
    %21 = vsyncpa [#allocation6], 0
    %s22 = scalar_lea.sflag [#allocation6], 1
    %23 = vsyncpa %s22, 0
    %24 = vsyncpa [#allocation9], 0
    %25 = vsyncpa [#allocation12], 0
    %26 = vsyncpa [#allocation15], 0
    %27 = vsyncpa [#allocation18], 0
    %28 = vsyncpa [#allocation21], 0
    %29 = vsyncpa [#allocation4], 0
    %s30 = scalar_lea.sflag [#allocation4], 1
    %31 = vsyncpa %s30, 0
    loop: start=0, step=1, limit=5
    $region2: #{tpu_custom_call.1} parent=1 // loop_pre_header
      _
    $region3: #{tpu_custom_call.1} parent=1 // loop_header
      %s33 = sphi 0, %s37
      %p34 = scmp.ge.s32.totalorder %s33, 5
      %s43 = sphi 0, %s45
      %s46 = sphi 0, %s43
      %s47 = sphi 0, %s46
      %s63 = sphi 0, %s47
      %s69 = sphi 0, %s71
      %s72 = sphi 0, %s69
      %s73 = sphi 0, %s72
      %s89 = sphi 0, %s73
      %s93 = sphi 0, %s93
      %s95 = sphi 0, %s93
      %s96 = sphi 0, %s95
      %s110 = sphi 0, %s96
      %s114 = sphi 0, %s114
      %s116 = sphi 0, %s114
      %s117 = sphi 0, %s116
      %s131 = sphi 0, %s117
      %s135 = sphi 0, %s135
      %s137 = sphi 0, %s135
      %s138 = sphi 0, %s137
      %s152 = sphi 0, %s138
      %s156 = sphi 0, %s156
      %s158 = sphi 0, %s156
      %s159 = sphi 0, %s158
      %s173 = sphi 0, %s159
      %s177 = sphi 0, %s177
      %s179 = sphi 0, %s177
      %s180 = sphi 0, %s179
      %s194 = sphi 0, %s180
      %s198 = sphi 0, %s198
      %s200 = sphi 0, %s198
      %s201 = sphi 0, %s200
      %s215 = sphi 0, %s201
      %s219 = sphi 0, %s219
      %s221 = sphi 0, %s219
      %s222 = sphi 0, %s221
      %s236 = sphi 0, %s222
      %s240 = sphi 0, %s240
      %s242 = sphi 0, %s240
      %s243 = sphi 0, %s242
      %s257 = sphi 0, %s243
      %s261 = sphi 0, %s261
      %s263 = sphi 0, %s261
      %s264 = sphi 0, %s263
      %s278 = sphi 0, %s264
      %s282 = sphi 0, %s282
      %s284 = sphi 0, %s282
      %s285 = sphi 0, %s284
      %s299 = sphi 0, %s285
      %s303 = sphi 0, %s303
      %s305 = sphi 0, %s303
      %s306 = sphi 0, %s305
      %s320 = sphi 0, %s306
      %s326 = sphi 0, %s328
      %s329 = sphi 0, %s326
      %s330 = sphi 0, %s329
      %s346 = sphi 0, %s330
    $region4: #{tpu_custom_call.1} parent=1 // loop_header_branch
      %36 = sbr.rel (%p34) target = $region8
    $region5: #{tpu_custom_call.1} parent=1 // loop_body
      %s38 = ssub.s32 %s33, 1
      %s39 = ssub.s32 %s33, 2
      %s40 = sadd.s32 %s33, 1
      %s41 = ssub.s32 %s33, %s40
      %p42 = scmp.eq.s32.totalorder %s41, 0
      %s44 = sadd.s32 %s43, 1
      %s45 = scalar_select %p42, %s43, %s44
      %p48 = pneg %p42
      %p49 = scmp.eq.s32.totalorder %s33, 2
      %p50 = por %p48, %p49
      %p51 = scmp.ne.s32.totalorder %s43, %s46
      %p52 = scmp.eq.s32.totalorder %s33, 0
      %p53 = por %p51, %p52
      %p54 = scmp.ne.s32.totalorder %s43, %s46
      %p55 = scmp.eq.s32.totalorder %s38, 2
      %p56 = por %p54, %p55
      %p57 = scmp.ne.s32.totalorder %s46, %s47
      %p58 = scmp.eq.s32.totalorder %s38, 0
      %p59 = por %p57, %p58
      %p60 = scmp.ne.s32.totalorder %s46, %s47
      %p61 = scmp.eq.s32.totalorder %s39, 2
      %p62 = por %p60, %p61
      %p64 = scmp.ne.s32.totalorder %s47, %s63
      %p65 = scmp.eq.s32.totalorder %s39, 0
      %p66 = por %p64, %p65
      %s67 = ssub.s32 %s33, %s40
      %p68 = scmp.eq.s32.totalorder %s67, 0
      %s70 = sadd.s32 %s69, 1
      %s71 = scalar_select %p68, %s69, %s70
      %p74 = pneg %p68
      %p75 = scmp.eq.s32.totalorder %s33, 2
      %p76 = por %p74, %p75
      %p77 = scmp.ne.s32.totalorder %s69, %s72
      %p78 = scmp.eq.s32.totalorder %s33, 0
      %p79 = por %p77, %p78
      %p80 = scmp.ne.s32.totalorder %s69, %s72
      %p81 = scmp.eq.s32.totalorder %s38, 2
      %p82 = por %p80, %p81
      %p83 = scmp.ne.s32.totalorder %s72, %s73
      %p84 = scmp.eq.s32.totalorder %s38, 0
      %p85 = por %p83, %p84
      %p86 = scmp.ne.s32.totalorder %s72, %s73
      %p87 = scmp.eq.s32.totalorder %s39, 2
      %p88 = por %p86, %p87
      %p90 = scmp.ne.s32.totalorder %s73, %s89
      %p91 = scmp.eq.s32.totalorder %s39, 0
      %p92 = por %p90, %p91
      %s94 = sadd.s32 %s93, 1
      %p97 = scmp.eq.s32.totalorder %s33, 2
      %p98 = scmp.ne.s32.totalorder %s93, %s95
      %p99 = scmp.eq.s32.totalorder %s33, 0
      %p100 = por %p98, %p99
      %p101 = scmp.ne.s32.totalorder %s93, %s95
      %p102 = scmp.eq.s32.totalorder %s38, 2
      %p103 = por %p101, %p102
      %p104 = scmp.ne.s32.totalorder %s95, %s96
      %p105 = scmp.eq.s32.totalorder %s38, 0
      %p106 = por %p104, %p105
      %p107 = scmp.ne.s32.totalorder %s95, %s96
      %p108 = scmp.eq.s32.totalorder %s39, 2
      %p109 = por %p107, %p108
      %p111 = scmp.ne.s32.totalorder %s96, %s110
      %p112 = scmp.eq.s32.totalorder %s39, 0
      %p113 = por %p111, %p112
      %s115 = sadd.s32 %s114, 1
      %p118 = scmp.eq.s32.totalorder %s33, 2
      %p119 = scmp.ne.s32.totalorder %s114, %s116
      %p120 = scmp.eq.s32.totalorder %s33, 0
      %p121 = por %p119, %p120
      %p122 = scmp.ne.s32.totalorder %s114, %s116
      %p123 = scmp.eq.s32.totalorder %s38, 2
      %p124 = por %p122, %p123
      %p125 = scmp.ne.s32.totalorder %s116, %s117
      %p126 = scmp.eq.s32.totalorder %s38, 0
      %p127 = por %p125, %p126
      %p128 = scmp.ne.s32.totalorder %s116, %s117
      %p129 = scmp.eq.s32.totalorder %s39, 2
      %p130 = por %p128, %p129
      %p132 = scmp.ne.s32.totalorder %s117, %s131
      %p133 = scmp.eq.s32.totalorder %s39, 0
      %p134 = por %p132, %p133
      %s136 = sadd.s32 %s135, 1
      %p139 = scmp.eq.s32.totalorder %s33, 2
      %p140 = scmp.ne.s32.totalorder %s135, %s137
      %p141 = scmp.eq.s32.totalorder %s33, 0
      %p142 = por %p140, %p141
      %p143 = scmp.ne.s32.totalorder %s135, %s137
      %p144 = scmp.eq.s32.totalorder %s38, 2
      %p145 = por %p143, %p144
      %p146 = scmp.ne.s32.totalorder %s137, %s138
      %p147 = scmp.eq.s32.totalorder %s38, 0
      %p148 = por %p146, %p147
      %p149 = scmp.ne.s32.totalorder %s137, %s138
      %p150 = scmp.eq.s32.totalorder %s39, 2
      %p151 = por %p149, %p150
      %p153 = scmp.ne.s32.totalorder %s138, %s152
      %p154 = scmp.eq.s32.totalorder %s39, 0
      %p155 = por %p153, %p154
      %s157 = sadd.s32 %s156, 1
      %p160 = scmp.eq.s32.totalorder %s33, 2
      %p161 = scmp.ne.s32.totalorder %s156, %s158
      %p162 = scmp.eq.s32.totalorder %s33, 0
      %p163 = por %p161, %p162
      %p164 = scmp.ne.s32.totalorder %s156, %s158
      %p165 = scmp.eq.s32.totalorder %s38, 2
      %p166 = por %p164, %p165
      %p167 = scmp.ne.s32.totalorder %s158, %s159
      %p168 = scmp.eq.s32.totalorder %s38, 0
      %p169 = por %p167, %p168
      %p170 = scmp.ne.s32.totalorder %s158, %s159
      %p171 = scmp.eq.s32.totalorder %s39, 2
      %p172 = por %p170, %p171
      %p174 = scmp.ne.s32.totalorder %s159, %s173
      %p175 = scmp.eq.s32.totalorder %s39, 0
      %p176 = por %p174, %p175
      %s178 = sadd.s32 %s177, 1
      %p181 = scmp.eq.s32.totalorder %s33, 2
      %p182 = scmp.ne.s32.totalorder %s177, %s179
      %p183 = scmp.eq.s32.totalorder %s33, 0
      %p184 = por %p182, %p183
      %p185 = scmp.ne.s32.totalorder %s177, %s179
      %p186 = scmp.eq.s32.totalorder %s38, 2
      %p187 = por %p185, %p186
      %p188 = scmp.ne.s32.totalorder %s179, %s180
      %p189 = scmp.eq.s32.totalorder %s38, 0
      %p190 = por %p188, %p189
      %p191 = scmp.ne.s32.totalorder %s179, %s180
      %p192 = scmp.eq.s32.totalorder %s39, 2
      %p193 = por %p191, %p192
      %p195 = scmp.ne.s32.totalorder %s180, %s194
      %p196 = scmp.eq.s32.totalorder %s39, 0
      %p197 = por %p195, %p196
      %s199 = sadd.s32 %s198, 1
      %p202 = scmp.eq.s32.totalorder %s33, 2
      %p203 = scmp.ne.s32.totalorder %s198, %s200
      %p204 = scmp.eq.s32.totalorder %s33, 0
      %p205 = por %p203, %p204
      %p206 = scmp.ne.s32.totalorder %s198, %s200
      %p207 = scmp.eq.s32.totalorder %s38, 2
      %p208 = por %p206, %p207
      %p209 = scmp.ne.s32.totalorder %s200, %s201
      %p210 = scmp.eq.s32.totalorder %s38, 0
      %p211 = por %p209, %p210
      %p212 = scmp.ne.s32.totalorder %s200, %s201
      %p213 = scmp.eq.s32.totalorder %s39, 2
      %p214 = por %p212, %p213
      %p216 = scmp.ne.s32.totalorder %s201, %s215
      %p217 = scmp.eq.s32.totalorder %s39, 0
      %p218 = por %p216, %p217
      %s220 = sadd.s32 %s219, 1
      %p223 = scmp.eq.s32.totalorder %s33, 2
      %p224 = scmp.ne.s32.totalorder %s219, %s221
      %p225 = scmp.eq.s32.totalorder %s33, 0
      %p226 = por %p224, %p225
      %p227 = scmp.ne.s32.totalorder %s219, %s221
      %p228 = scmp.eq.s32.totalorder %s38, 2
      %p229 = por %p227, %p228
      %p230 = scmp.ne.s32.totalorder %s221, %s222
      %p231 = scmp.eq.s32.totalorder %s38, 0
      %p232 = por %p230, %p231
      %p233 = scmp.ne.s32.totalorder %s221, %s222
      %p234 = scmp.eq.s32.totalorder %s39, 2
      %p235 = por %p233, %p234
      %p237 = scmp.ne.s32.totalorder %s222, %s236
      %p238 = scmp.eq.s32.totalorder %s39, 0
      %p239 = por %p237, %p238
      %s241 = sadd.s32 %s240, 1
      %p244 = scmp.eq.s32.totalorder %s33, 2
      %p245 = scmp.ne.s32.totalorder %s240, %s242
      %p246 = scmp.eq.s32.totalorder %s33, 0
      %p247 = por %p245, %p246
      %p248 = scmp.ne.s32.totalorder %s240, %s242
      %p249 = scmp.eq.s32.totalorder %s38, 2
      %p250 = por %p248, %p249
      %p251 = scmp.ne.s32.totalorder %s242, %s243
      %p252 = scmp.eq.s32.totalorder %s38, 0
      %p253 = por %p251, %p252
      %p254 = scmp.ne.s32.totalorder %s242, %s243
      %p255 = scmp.eq.s32.totalorder %s39, 2
      %p256 = por %p254, %p255
      %p258 = scmp.ne.s32.totalorder %s243, %s257
      %p259 = scmp.eq.s32.totalorder %s39, 0
      %p260 = por %p258, %p259
      %s262 = sadd.s32 %s261, 1
      %p265 = scmp.eq.s32.totalorder %s33, 2
      %p266 = scmp.ne.s32.totalorder %s261, %s263
      %p267 = scmp.eq.s32.totalorder %s33, 0
      %p268 = por %p266, %p267
      %p269 = scmp.ne.s32.totalorder %s261, %s263
      %p270 = scmp.eq.s32.totalorder %s38, 2
      %p271 = por %p269, %p270
      %p272 = scmp.ne.s32.totalorder %s263, %s264
      %p273 = scmp.eq.s32.totalorder %s38, 0
      %p274 = por %p272, %p273
      %p275 = scmp.ne.s32.totalorder %s263, %s264
      %p276 = scmp.eq.s32.totalorder %s39, 2
      %p277 = por %p275, %p276
      %p279 = scmp.ne.s32.totalorder %s264, %s278
      %p280 = scmp.eq.s32.totalorder %s39, 0
      %p281 = por %p279, %p280
      %s283 = sadd.s32 %s282, 1
      %p286 = scmp.eq.s32.totalorder %s33, 2
      %p287 = scmp.ne.s32.totalorder %s282, %s284
      %p288 = scmp.eq.s32.totalorder %s33, 0
      %p289 = por %p287, %p288
      %p290 = scmp.ne.s32.totalorder %s282, %s284
      %p291 = scmp.eq.s32.totalorder %s38, 2
      %p292 = por %p290, %p291
      %p293 = scmp.ne.s32.totalorder %s284, %s285
      %p294 = scmp.eq.s32.totalorder %s38, 0
      %p295 = por %p293, %p294
      %p296 = scmp.ne.s32.totalorder %s284, %s285
      %p297 = scmp.eq.s32.totalorder %s39, 2
      %p298 = por %p296, %p297
      %p300 = scmp.ne.s32.totalorder %s285, %s299
      %p301 = scmp.eq.s32.totalorder %s39, 0
      %p302 = por %p300, %p301
      %s304 = sadd.s32 %s303, 1
      %p307 = scmp.eq.s32.totalorder %s33, 2
      %p308 = scmp.ne.s32.totalorder %s303, %s305
      %p309 = scmp.eq.s32.totalorder %s33, 0
      %p310 = por %p308, %p309
      %p311 = scmp.ne.s32.totalorder %s303, %s305
      %p312 = scmp.eq.s32.totalorder %s38, 2
      %p313 = por %p311, %p312
      %p314 = scmp.ne.s32.totalorder %s305, %s306
      %p315 = scmp.eq.s32.totalorder %s38, 0
      %p316 = por %p314, %p315
      %p317 = scmp.ne.s32.totalorder %s305, %s306
      %p318 = scmp.eq.s32.totalorder %s39, 2
      %p319 = por %p317, %p318
      %p321 = scmp.ne.s32.totalorder %s306, %s320
      %p322 = scmp.eq.s32.totalorder %s39, 0
      %p323 = por %p321, %p322
      %s324 = ssub.s32 %s33, %s40
      %p325 = scmp.eq.s32.totalorder %s324, 0
      %s327 = sadd.s32 %s326, 1
      %s328 = scalar_select %p325, %s326, %s327
      %p331 = pneg %p325
      %p332 = scmp.eq.s32.totalorder %s33, 2
      %p333 = por %p331, %p332
      %p334 = scmp.ne.s32.totalorder %s326, %s329
      %p335 = scmp.eq.s32.totalorder %s33, 0
      %p336 = por %p334, %p335
      %p337 = scmp.ne.s32.totalorder %s326, %s329
      %p338 = scmp.eq.s32.totalorder %s38, 2
      %p339 = por %p337, %p338
      %p340 = scmp.ne.s32.totalorder %s329, %s330
      %p341 = scmp.eq.s32.totalorder %s38, 0
      %p342 = por %p340, %p341
      %p343 = scmp.ne.s32.totalorder %s329, %s330
      %p344 = scmp.eq.s32.totalorder %s39, 2
      %p345 = por %p343, %p344
      %p347 = scmp.ne.s32.totalorder %s330, %s346
      %p348 = scmp.eq.s32.totalorder %s39, 0
      %p349 = por %p347, %p348
      %p350 = scmp.le.s32.totalorder 1, %s33
      %p351 = scmp.lt.s32.totalorder %s33, 4
      %p352 = pnand %p350, %p351
      %p353 = pneg %p352
      // Predicated region
      $region9: #{tpu_custom_call.1} parent=5 // pred_check
        _
      $region10: #{tpu_custom_call.1} parent=5 // pred_check_branch
        %355 = sbr.rel (%p352) target = $region12
      $region11: #{tpu_custom_call.1} parent=5 // pred_region
        %s356 = ssub.s32 %s33, 1
        // Predicated region
        $region13: #{tpu_custom_call.1} parent=11 // pred_check
          %p357 = pneg %p106
        $region14: #{tpu_custom_call.1} parent=11 // pred_check_branch
          %359 = sbr.rel (%p357) target = $region16
        $region15: #{tpu_custom_call.1} parent=11 // pred_region
          %s361 = ssub.s32 4096, 4096
          %362 = vsyncadd [#allocation6], %s361
          %s363 = sshll.u32 [#allocation7], 4
          %s364 = int_to_ptr.vmem [resolvable:$true] %s363
          %369 = dma.hbm_to_vmem [thread:$0]  %s2, 4096, %s364, [#allocation6], 512, 512, 32
        $region16: #{tpu_custom_call.1} parent=11 // pred_fallthru
          _
        // Predicated region
        $region17: #{tpu_custom_call.1} parent=11 // pred_check
          %p370 = pneg %p127
        $region18: #{tpu_custom_call.1} parent=11 // pred_check_branch
          %372 = sbr.rel (%p370) target = $region20
        $region19: #{tpu_custom_call.1} parent=11 // pred_region
          %s374 = ssub.s32 4096, 4096
          %375 = vsyncadd [#allocation9], %s374
          %s376 = sshll.u32 [#allocation8], 4
          %s377 = int_to_ptr.vmem [resolvable:$true] %s376
          %382 = dma.hbm_to_vmem [thread:$0]  %s3, 4096, %s377, [#allocation9], 512, 512, 32
        $region20: #{tpu_custom_call.1} parent=11 // pred_fallthru
          _
        // Predicated region
        $region21: #{tpu_custom_call.1} parent=11 // pred_check
          %p383 = pneg %p148
        $region22: #{tpu_custom_call.1} parent=11 // pred_check_branch
          %385 = sbr.rel (%p383) target = $region24
        $region23: #{tpu_custom_call.1} parent=11 // pred_region
          %s387 = ssub.s32 4096, 4096
          %388 = vsyncadd [#allocation9], %s387
          %s389 = sshll.u32 [#allocation10], 4
          %s390 = int_to_ptr.vmem [resolvable:$true] %s389
          %395 = dma.hbm_to_vmem [thread:$0]  %s4, 4096, %s390, [#allocation9], 512, 512, 32
        $region24: #{tpu_custom_call.1} parent=11 // pred_fallthru
          _
        // Predicated region
        $region25: #{tpu_custom_call.1} parent=11 // pred_check
          %p396 = pneg %p169
        $region26: #{tpu_custom_call.1} parent=11 // pred_check_branch
          %398 = sbr.rel (%p396) target = $region28
        $region27: #{tpu_custom_call.1} parent=11 // pred_region
          %s400 = ssub.s32 4096, 4096
          %401 = vsyncadd [#allocation12], %s400
          %s402 = sshll.u32 [#allocation11], 4
          %s403 = int_to_ptr.vmem [resolvable:$true] %s402
          %408 = dma.hbm_to_vmem [thread:$0]  %s5, 4096, %s403, [#allocation12], 512, 512, 32
        $region28: #{tpu_custom_call.1} parent=11 // pred_fallthru
          _
        // Predicated region
        $region29: #{tpu_custom_call.1} parent=11 // pred_check
          %p409 = pneg %p190
        $region30: #{tpu_custom_call.1} parent=11 // pred_check_branch
          %411 = sbr.rel (%p409) target = $region32
        $region31: #{tpu_custom_call.1} parent=11 // pred_region
          %s413 = ssub.s32 128, 128
          %414 = vsyncadd [#allocation12], %s413
          %s416 = sshll.u32 [#allocation13], 4
          %s417 = int_to_ptr.vmem [resolvable:$true] %s416
          %419 = dma.hbm_to_vmem [thread:$0]  %s6, 128, %s417, [#allocation12]
        $region32: #{tpu_custom_call.1} parent=11 // pred_fallthru
          _
        // Predicated region
        $region33: #{tpu_custom_call.1} parent=11 // pred_check
          %p420 = pneg %p211
        $region34: #{tpu_custom_call.1} parent=11 // pred_check_branch
          %422 = sbr.rel (%p420) target = $region36
        $region35: #{tpu_custom_call.1} parent=11 // pred_region
          %s424 = ssub.s32 65536, 65536
          %425 = vsyncadd [#allocation15], %s424
          %s426 = sshll.u32 [#allocation14], 4
          %s427 = int_to_ptr.vmem [resolvable:$true] %s426
          %432 = dma.hbm_to_vmem [thread:$0]  %s7, 65536, %s427, [#allocation15], 512, 512, 32
        $region36: #{tpu_custom_call.1} parent=11 // pred_fallthru
          _
        // Predicated region
        $region37: #{tpu_custom_call.1} parent=11 // pred_check
          %p433 = pneg %p232
        $region38: #{tpu_custom_call.1} parent=11 // pred_check_branch
          %435 = sbr.rel (%p433) target = $region40
        $region39: #{tpu_custom_call.1} parent=11 // pred_region
          %s437 = ssub.s32 128, 128
          %438 = vsyncadd [#allocation15], %s437
          %s440 = sshll.u32 [#allocation16], 4
          %s441 = int_to_ptr.vmem [resolvable:$true] %s440
          %443 = dma.hbm_to_vmem [thread:$0]  %s8, 128, %s441, [#allocation15]
        $region40: #{tpu_custom_call.1} parent=11 // pred_fallthru
          _
        // Predicated region
        $region41: #{tpu_custom_call.1} parent=11 // pred_check
          %p444 = pneg %p253
        $region42: #{tpu_custom_call.1} parent=11 // pred_check_branch
          %446 = sbr.rel (%p444) target = $region44
        $region43: #{tpu_custom_call.1} parent=11 // pred_region
          %s448 = ssub.s32 65536, 65536
          %449 = vsyncadd [#allocation18], %s448
          %s450 = sshll.u32 [#allocation17], 4
          %s451 = int_to_ptr.vmem [resolvable:$true] %s450
          %456 = dma.hbm_to_vmem [thread:$0]  %s9, 65536, %s451, [#allocation18], 512, 512, 32
        $region44: #{tpu_custom_call.1} parent=11 // pred_fallthru
          _
        // Predicated region
        $region45: #{tpu_custom_call.1} parent=11 // pred_check
          %p457 = pneg %p274
        $region46: #{tpu_custom_call.1} parent=11 // pred_check_branch
          %459 = sbr.rel (%p457) target = $region48
        $region47: #{tpu_custom_call.1} parent=11 // pred_region
          %s461 = ssub.s32 128, 128
          %462 = vsyncadd [#allocation18], %s461
          %s464 = sshll.u32 [#allocation19], 4
          %s465 = int_to_ptr.vmem [resolvable:$true] %s464
          %467 = dma.hbm_to_vmem [thread:$0]  %s10, 128, %s465, [#allocation18]
        $region48: #{tpu_custom_call.1} parent=11 // pred_fallthru
          _
        // Predicated region
        $region49: #{tpu_custom_call.1} parent=11 // pred_check
          %p468 = pneg %p295
        $region50: #{tpu_custom_call.1} parent=11 // pred_check_branch
          %470 = sbr.rel (%p468) target = $region52
        $region51: #{tpu_custom_call.1} parent=11 // pred_region
          %s472 = ssub.s32 8192, 8192
          %473 = vsyncadd [#allocation21], %s472
          %s474 = sshll.u32 [#allocation20], 4
          %s475 = int_to_ptr.vmem [resolvable:$true] %s474
          %480 = dma.hbm_to_vmem [thread:$0]  %s11, 8192, %s475, [#allocation21], 64, 64, 4
        $region52: #{tpu_custom_call.1} parent=11 // pred_fallthru
          _
        // Predicated region
        $region53: #{tpu_custom_call.1} parent=11 // pred_check
          %p481 = pneg %p316
        $region54: #{tpu_custom_call.1} parent=11 // pred_check_branch
          %483 = sbr.rel (%p481) target = $region56
        $region55: #{tpu_custom_call.1} parent=11 // pred_region
          %s485 = ssub.s32 16, 16
          %486 = vsyncadd [#allocation21], %s485
          %s488 = sshll.u32 [#allocation22], 4
          %s489 = int_to_ptr.vmem [resolvable:$true] %s488
          %491 = dma.hbm_to_vmem [thread:$0]  %s12, 16, %s489, [#allocation21]
        $region56: #{tpu_custom_call.1} parent=11 // pred_fallthru
          _
      $region12: #{tpu_custom_call.1} parent=5 // pred_fallthru
        _
      %p492 = scmp.lt.s32.totalorder %s33, 3
      // Predicated region
      $region57: #{tpu_custom_call.1} parent=5 // pred_check
        %p493 = pneg %p492
      $region58: #{tpu_custom_call.1} parent=5 // pred_check_branch
        %495 = sbr.rel (%p493) target = $region60
      $region59: #{tpu_custom_call.1} parent=5 // pred_region
        // Predicated region
        $region61: #{tpu_custom_call.1} parent=59 // pred_check
          %p496 = pneg %p53
        $region62: #{tpu_custom_call.1} parent=59 // pred_check_branch
          %498 = sbr.rel (%p496) target = $region64
        $region63: #{tpu_custom_call.1} parent=59 // pred_region
          %s499 = sand.u32 %s43, 1
          %s500 = scalar_lea.sflag [#allocation3], %s499
          %s501 = sand.u32 %s43, 1
          %s502 = smul.addr %s501, 16
          %s503 = scalar_lea.vmem [#allocation2], %s502
          %s504 = smul.u32 2, %s33
          %s506 = ssub.s32 256, 256
          %507 = vsyncadd %s500, %s506
          %s508 = smul.addr %s504, 128
          %s509 = scalar_lea.hbm %s0, %s508
          %s510 = sshll.u32 %s503, 4
          %s511 = int_to_ptr.vmem [resolvable:$true] %s510
          %516 = dma.hbm_to_vmem [thread:$0]  %s509, 256, %s511, %s500, 128, 128, 8
        $region64: #{tpu_custom_call.1} parent=59 // pred_fallthru
          _
        // Predicated region
        $region65: #{tpu_custom_call.1} parent=59 // pred_check
          %p517 = pneg %p79
        $region66: #{tpu_custom_call.1} parent=59 // pred_check_branch
          %519 = sbr.rel (%p517) target = $region68
        $region67: #{tpu_custom_call.1} parent=59 // pred_region
          %s520 = sand.u32 %s33, 1
          %s521 = scalar_lea.sflag [#allocation6], %s520
          %s522 = sand.u32 %s69, 1
          %s523 = smul.addr %s522, 16
          %s524 = scalar_lea.vmem [#allocation5], %s523
          %s525 = smul.u32 2, %s33
          %s527 = ssub.s32 256, 256
          %528 = vsyncadd %s521, %s527
          %s529 = smul.addr %s525, 128
          %s530 = scalar_lea.hbm %s1, %s529
          %s531 = sshll.u32 %s524, 4
          %s532 = int_to_ptr.vmem [resolvable:$true] %s531
          %537 = dma.hbm_to_vmem [thread:$0]  %s530, 256, %s532, %s521, 128, 128, 8
        $region68: #{tpu_custom_call.1} parent=59 // pred_fallthru
          _
      $region60: #{tpu_custom_call.1} parent=5 // pred_fallthru
        _
      %p538 = scmp.le.s32.totalorder 1, %s33
      %p539 = scmp.lt.s32.totalorder %s33, 4
      %p540 = pnand %p538, %p539
      %p541 = pneg %p540
      // Predicated region
      $region69: #{tpu_custom_call.1} parent=5 // pred_check
        _
      $region70: #{tpu_custom_call.1} parent=5 // pred_check_branch
        %543 = sbr.rel (%p540) target = $region72
      $region71: #{tpu_custom_call.1} parent=5 // pred_region
        %s544 = ssub.s32 %s33, 1
        %s545 = sand.u32 %s46, 1
        %s546 = scalar_lea.sflag [#allocation3], %s545
        %s547 = sand.u32 %s46, 1
        %s548 = smul.addr %s547, 16
        %s549 = scalar_lea.vmem [#allocation2], %s548
        // Predicated region
        $region73: #{tpu_custom_call.1} parent=71 // pred_check
          %p550 = pneg %p59
        $region74: #{tpu_custom_call.1} parent=71 // pred_check_branch
          %552 = sbr.rel (%p550) target = $region76
        $region75: #{tpu_custom_call.1} parent=71 // pred_region
          %553 = dma.done %s546, 256
        $region76: #{tpu_custom_call.1} parent=71 // pred_fallthru
          _
        %s554 = sand.u32 %s38, 1
        %s555 = scalar_lea.sflag [#allocation6], %s554
        %s556 = sand.u32 %s72, 1
        %s557 = smul.addr %s556, 16
        %s558 = scalar_lea.vmem [#allocation5], %s557
        // Predicated region
        $region77: #{tpu_custom_call.1} parent=71 // pred_check
          %p559 = pneg %p85
        $region78: #{tpu_custom_call.1} parent=71 // pred_check_branch
          %561 = sbr.rel (%p559) target = $region80
        $region79: #{tpu_custom_call.1} parent=71 // pred_region
          %562 = dma.done %s555, 256
        $region80: #{tpu_custom_call.1} parent=71 // pred_fallthru
          _
        // Predicated region
        $region81: #{tpu_custom_call.1} parent=71 // pred_check
          %p563 = pneg %p106
        $region82: #{tpu_custom_call.1} parent=71 // pred_check_branch
          %565 = sbr.rel (%p563) target = $region84
        $region83: #{tpu_custom_call.1} parent=71 // pred_region
          %566 = dma.done [#allocation6], 4096
        $region84: #{tpu_custom_call.1} parent=71 // pred_fallthru
          _
        // Predicated region
        $region85: #{tpu_custom_call.1} parent=71 // pred_check
          %p567 = pneg %p127
        $region86: #{tpu_custom_call.1} parent=71 // pred_check_branch
          %569 = sbr.rel (%p567) target = $region88
        $region87: #{tpu_custom_call.1} parent=71 // pred_region
          %570 = dma.done [#allocation9], 4096
        $region88: #{tpu_custom_call.1} parent=71 // pred_fallthru
          _
        // Predicated region
        $region89: #{tpu_custom_call.1} parent=71 // pred_check
          %p571 = pneg %p148
        $region90: #{tpu_custom_call.1} parent=71 // pred_check_branch
          %573 = sbr.rel (%p571) target = $region92
        $region91: #{tpu_custom_call.1} parent=71 // pred_region
          %574 = dma.done [#allocation9], 4096
        $region92: #{tpu_custom_call.1} parent=71 // pred_fallthru
          _
        // Predicated region
        $region93: #{tpu_custom_call.1} parent=71 // pred_check
          %p575 = pneg %p169
        $region94: #{tpu_custom_call.1} parent=71 // pred_check_branch
          %577 = sbr.rel (%p575) target = $region96
        $region95: #{tpu_custom_call.1} parent=71 // pred_region
          %578 = dma.done [#allocation12], 4096
        $region96: #{tpu_custom_call.1} parent=71 // pred_fallthru
          _
        // Predicated region
        $region97: #{tpu_custom_call.1} parent=71 // pred_check
          %p579 = pneg %p190
        $region98: #{tpu_custom_call.1} parent=71 // pred_check_branch
          %581 = sbr.rel (%p579) target = $region100
        $region99: #{tpu_custom_call.1} parent=71 // pred_region
          %582 = dma.done [#allocation12], 128
        $region100: #{tpu_custom_call.1} parent=71 // pred_fallthru
          _
        // Predicated region
        $region101: #{tpu_custom_call.1} parent=71 // pred_check
          %p583 = pneg %p211
        $region102: #{tpu_custom_call.1} parent=71 // pred_check_branch
          %585 = sbr.rel (%p583) target = $region104
        $region103: #{tpu_custom_call.1} parent=71 // pred_region
          %586 = dma.done [#allocation15], 65536
        $region104: #{tpu_custom_call.1} parent=71 // pred_fallthru
          _
        // Predicated region
        $region105: #{tpu_custom_call.1} parent=71 // pred_check
          %p587 = pneg %p232
        $region106: #{tpu_custom_call.1} parent=71 // pred_check_branch
          %589 = sbr.rel (%p587) target = $region108
        $region107: #{tpu_custom_call.1} parent=71 // pred_region
          %590 = dma.done [#allocation15], 128
        $region108: #{tpu_custom_call.1} parent=71 // pred_fallthru
          _
        // Predicated region
        $region109: #{tpu_custom_call.1} parent=71 // pred_check
          %p591 = pneg %p253
        $region110: #{tpu_custom_call.1} parent=71 // pred_check_branch
          %593 = sbr.rel (%p591) target = $region112
        $region111: #{tpu_custom_call.1} parent=71 // pred_region
          %594 = dma.done [#allocation18], 65536
        $region112: #{tpu_custom_call.1} parent=71 // pred_fallthru
          _
        // Predicated region
        $region113: #{tpu_custom_call.1} parent=71 // pred_check
          %p595 = pneg %p274
        $region114: #{tpu_custom_call.1} parent=71 // pred_check_branch
          %597 = sbr.rel (%p595) target = $region116
        $region115: #{tpu_custom_call.1} parent=71 // pred_region
          %598 = dma.done [#allocation18], 128
        $region116: #{tpu_custom_call.1} parent=71 // pred_fallthru
          _
        // Predicated region
        $region117: #{tpu_custom_call.1} parent=71 // pred_check
          %p599 = pneg %p295
        $region118: #{tpu_custom_call.1} parent=71 // pred_check_branch
          %601 = sbr.rel (%p599) target = $region120
        $region119: #{tpu_custom_call.1} parent=71 // pred_region
          %602 = dma.done [#allocation21], 8192
        $region120: #{tpu_custom_call.1} parent=71 // pred_fallthru
          _
        // Predicated region
        $region121: #{tpu_custom_call.1} parent=71 // pred_check
          %p603 = pneg %p316
        $region122: #{tpu_custom_call.1} parent=71 // pred_check_branch
          %605 = sbr.rel (%p603) target = $region124
        $region123: #{tpu_custom_call.1} parent=71 // pred_region
          %606 = dma.done [#allocation21], 16
        $region124: #{tpu_custom_call.1} parent=71 // pred_fallthru
          _
        %s607 = sand.u32 %s46, 1
        %s608 = scalar_lea.sflag [#allocation3], %s607
        %s609 = sand.u32 %s46, 1
        %s610 = smul.addr %s609, 16
        %s611 = scalar_lea.vmem [#allocation2], %s610
        %p612 = pneg %p59
        %p613 = pneg %p56
        %s614 = sand.u32 %s38, 1
        %s615 = scalar_lea.sflag [#allocation6], %s614
        %s616 = sand.u32 %s72, 1
        %s617 = smul.addr %s616, 16
        %s618 = scalar_lea.vmem [#allocation5], %s617
        %p619 = pneg %p85
        %p620 = pneg %p82
        %p621 = pneg %p106
        %p622 = pneg %p103
        %p623 = pneg %p127
        %p624 = pneg %p124
        %p625 = pneg %p148
        %p626 = pneg %p145
        %p627 = pneg %p169
        %p628 = pneg %p166
        %p629 = pneg %p190
        %p630 = pneg %p187
        %p631 = pneg %p211
        %p632 = pneg %p208
        %p633 = pneg %p232
        %p634 = pneg %p229
        %p635 = pneg %p253
        %p636 = pneg %p250
        %p637 = pneg %p274
        %p638 = pneg %p271
        %p639 = pneg %p295
        %p640 = pneg %p292
        %p641 = pneg %p316
        %p642 = pneg %p313
        %p643 = pneg %p342
        %p644 = pneg %p339
        %s645 = sand.u32 %s329, 1
        %s646 = scalar_lea.sflag [#allocation4], %s645
        %s647 = sand.u32 %s329, 1
        %s648 = smul.addr %s647, 16
        %s649 = scalar_lea.vmem [#allocation23], %s648
        %s650 = smul.u32 2, %s38
        %s651 = smul.u32 2, %s38
        %s652 = smul.u32 2, %s38
        %v654 = vld [vmem:[%s549] sm:$0xff]
        %v655 = vld [vmem:[%s549 + $0x8] sm:$0xff]
        %v656 = vld [vmem:[%s558] sm:$0xff]
        %v657 = vld [vmem:[%s558 + $0x8] sm:$0xff]
        %v658 = vpack.c.bf16 %v655, %v654
        %v659 = vpack.c.bf16 %v657, %v656
        %v660 = vsub.f32 %v654, %v656
        %v661 = vsub.f32 %v655, %v657
        %v662 = vpack.c.bf16 %v661, %v660
        %v663 = vmul.f32 %v654, %v656
        %v664 = vmul.f32 %v655, %v657
        %v665 = vpack.c.bf16 %v664, %v663
        %v666 = vld [vmem:[#allocation7] sm:$0xff]
        %v667 = vld [vmem:[#allocation7 + $0x8] sm:$0xff]
        %v668 = vld [vmem:[#allocation7 + $0x10] sm:$0xff]
        %v669 = vld [vmem:[#allocation7 + $0x18] sm:$0xff]
        %v670 = vld [vmem:[#allocation7 + $0x20] sm:$0xff]
        %v671 = vld [vmem:[#allocation7 + $0x28] sm:$0xff]
        %v672 = vld [vmem:[#allocation7 + $0x30] sm:$0xff]
        %v673 = vld [vmem:[#allocation7 + $0x38] sm:$0xff]
        %v674 = vld [vmem:[#allocation7 + $0x40] sm:$0xff]
        %v675 = vld [vmem:[#allocation7 + $0x48] sm:$0xff]
        %v676 = vld [vmem:[#allocation7 + $0x50] sm:$0xff]
        %v677 = vld [vmem:[#allocation7 + $0x58] sm:$0xff]
        %v678 = vld [vmem:[#allocation7 + $0x60] sm:$0xff]
        %v679 = vld [vmem:[#allocation7 + $0x68] sm:$0xff]
        %v680 = vld [vmem:[#allocation7 + $0x70] sm:$0xff]
        %v681 = vld [vmem:[#allocation7 + $0x78] sm:$0xff]
        %v682 = vld [vmem:[#allocation7 + $0x80] sm:$0xff]
        %v683 = vld [vmem:[#allocation7 + $0x88] sm:$0xff]
        %v684 = vld [vmem:[#allocation7 + $0x90] sm:$0xff]
        %v685 = vld [vmem:[#allocation7 + $0x98] sm:$0xff]
        %v686 = vld [vmem:[#allocation7 + $0xa0] sm:$0xff]
        %v687 = vld [vmem:[#allocation7 + $0xa8] sm:$0xff]
        %v688 = vld [vmem:[#allocation7 + $0xb0] sm:$0xff]
        %v689 = vld [vmem:[#allocation7 + $0xb8] sm:$0xff]
        %v690 = vld [vmem:[#allocation7 + $0xc0] sm:$0xff]
        %v691 = vld [vmem:[#allocation7 + $0xc8] sm:$0xff]
        %v692 = vld [vmem:[#allocation7 + $0xd0] sm:$0xff]
        %v693 = vld [vmem:[#allocation7 + $0xd8] sm:$0xff]
        %v694 = vld [vmem:[#allocation7 + $0xe0] sm:$0xff]
        %v695 = vld [vmem:[#allocation7 + $0xe8] sm:$0xff]
        %v696 = vld [vmem:[#allocation7 + $0xf0] sm:$0xff]
        %v697 = vld [vmem:[#allocation7 + $0xf8] sm:$0xff]
        %v698 = vld [vmem:[#allocation8] sm:$0xff]
        %v699 = vld [vmem:[#allocation8 + $0x8] sm:$0xff]
        %v700 = vld [vmem:[#allocation8 + $0x10] sm:$0xff]
        %v701 = vld [vmem:[#allocation8 + $0x18] sm:$0xff]
        %v702 = vld [vmem:[#allocation8 + $0x20] sm:$0xff]
        %v703 = vld [vmem:[#allocation8 + $0x28] sm:$0xff]
        %v704 = vld [vmem:[#allocation8 + $0x30] sm:$0xff]
        %v705 = vld [vmem:[#allocation8 + $0x38] sm:$0xff]
        %v706 = vld [vmem:[#allocation8 + $0x40] sm:$0xff]
        %v707 = vld [vmem:[#allocation8 + $0x48] sm:$0xff]
        %v708 = vld [vmem:[#allocation8 + $0x50] sm:$0xff]
        %v709 = vld [vmem:[#allocation8 + $0x58] sm:$0xff]
        %v710 = vld [vmem:[#allocation8 + $0x60] sm:$0xff]
        %v711 = vld [vmem:[#allocation8 + $0x68] sm:$0xff]
        %v712 = vld [vmem:[#allocation8 + $0x70] sm:$0xff]
        %v713 = vld [vmem:[#allocation8 + $0x78] sm:$0xff]
        %v714 = vld [vmem:[#allocation8 + $0x80] sm:$0xff]
        %v715 = vld [vmem:[#allocation8 + $0x88] sm:$0xff]
        %v716 = vld [vmem:[#allocation8 + $0x90] sm:$0xff]
        %v717 = vld [vmem:[#allocation8 + $0x98] sm:$0xff]
        %v718 = vld [vmem:[#allocation8 + $0xa0] sm:$0xff]
        %v719 = vld [vmem:[#allocation8 + $0xa8] sm:$0xff]
        %v720 = vld [vmem:[#allocation8 + $0xb0] sm:$0xff]
        %v721 = vld [vmem:[#allocation8 + $0xb8] sm:$0xff]
        %v722 = vld [vmem:[#allocation8 + $0xc0] sm:$0xff]
        %v723 = vld [vmem:[#allocation8 + $0xc8] sm:$0xff]
        %v724 = vld [vmem:[#allocation8 + $0xd0] sm:$0xff]
        %v725 = vld [vmem:[#allocation8 + $0xd8] sm:$0xff]
        %v726 = vld [vmem:[#allocation8 + $0xe0] sm:$0xff]
        %v727 = vld [vmem:[#allocation8 + $0xe8] sm:$0xff]
        %v728 = vld [vmem:[#allocation8 + $0xf0] sm:$0xff]
        %v729 = vld [vmem:[#allocation8 + $0xf8] sm:$0xff]
        %v762 = vunpack.c.l.b16 %v698
        %v763 = vunpack.c.h.b16 %v698
        %v764 = vunpack.c.l.b16 %v699
        %v765 = vunpack.c.h.b16 %v699
        %v766 = vunpack.c.l.b16 %v700
        %v767 = vunpack.c.h.b16 %v700
        %v768 = vunpack.c.l.b16 %v701
        %v769 = vunpack.c.h.b16 %v701
        %v770 = vunpack.c.l.b16 %v702
        %v771 = vunpack.c.h.b16 %v702
        %v772 = vunpack.c.l.b16 %v703
        %v773 = vunpack.c.h.b16 %v703
        %v774 = vunpack.c.l.b16 %v704
        %v775 = vunpack.c.h.b16 %v704
        %v776 = vunpack.c.l.b16 %v705
        %v777 = vunpack.c.h.b16 %v705
        %v778 = vunpack.c.l.b16 %v706
        %v779 = vunpack.c.h.b16 %v706
        %v780 = vunpack.c.l.b16 %v707
        %v781 = vunpack.c.h.b16 %v707
        %v782 = vunpack.c.l.b16 %v708
        %v783 = vunpack.c.h.b16 %v708
        %v784 = vunpack.c.l.b16 %v709
        %v785 = vunpack.c.h.b16 %v709
        %v786 = vunpack.c.l.b16 %v710
        %v787 = vunpack.c.h.b16 %v710
        %v788 = vunpack.c.l.b16 %v711
        %v789 = vunpack.c.h.b16 %v711
        %v790 = vunpack.c.l.b16 %v712
        %v791 = vunpack.c.h.b16 %v712
        %v792 = vunpack.c.l.b16 %v713
        %v793 = vunpack.c.h.b16 %v713
        %v794 = vunpack.c.l.b16 %v714
        %v795 = vunpack.c.h.b16 %v714
        %v796 = vunpack.c.l.b16 %v715
        %v797 = vunpack.c.h.b16 %v715
        %v798 = vunpack.c.l.b16 %v716
        %v799 = vunpack.c.h.b16 %v716
        %v800 = vunpack.c.l.b16 %v717
        %v801 = vunpack.c.h.b16 %v717
        %v802 = vunpack.c.l.b16 %v718
        %v803 = vunpack.c.h.b16 %v718
        %v804 = vunpack.c.l.b16 %v719
        %v805 = vunpack.c.h.b16 %v719
        %v806 = vunpack.c.l.b16 %v720
        %v807 = vunpack.c.h.b16 %v720
        %v808 = vunpack.c.l.b16 %v721
        %v809 = vunpack.c.h.b16 %v721
        %v810 = vunpack.c.l.b16 %v722
        %v811 = vunpack.c.h.b16 %v722
        %v812 = vunpack.c.l.b16 %v723
        %v813 = vunpack.c.h.b16 %v723
        %v814 = vunpack.c.l.b16 %v724
        %v815 = vunpack.c.h.b16 %v724
        %v816 = vunpack.c.l.b16 %v725
        %v817 = vunpack.c.h.b16 %v725
        %v818 = vunpack.c.l.b16 %v726
        %v819 = vunpack.c.h.b16 %v726
        %v820 = vunpack.c.l.b16 %v727
        %v821 = vunpack.c.h.b16 %v727
        %v822 = vunpack.c.l.b16 %v728
        %v823 = vunpack.c.h.b16 %v728
        %v824 = vunpack.c.l.b16 %v729
        %v825 = vunpack.c.h.b16 %v729
        %v826 = vpack.c.b16 %v770, %v762
        %v827 = vpack.c.b16 %v771, %v763
        %v828 = vpack.c.b16 %v772, %v764
        %v829 = vpack.c.b16 %v773, %v765
        %v830 = vpack.c.b16 %v774, %v766
        %v831 = vpack.c.b16 %v775, %v767
        %v832 = vpack.c.b16 %v776, %v768
        %v833 = vpack.c.b16 %v777, %v769
        %v834 = vpack.c.b16 %v786, %v778
        %v835 = vpack.c.b16 %v787, %v779
        %v836 = vpack.c.b16 %v788, %v780
        %v837 = vpack.c.b16 %v789, %v781
        %v838 = vpack.c.b16 %v790, %v782
        %v839 = vpack.c.b16 %v791, %v783
        %v840 = vpack.c.b16 %v792, %v784
        %v841 = vpack.c.b16 %v793, %v785
        %v842 = vpack.c.b16 %v802, %v794
        %v843 = vpack.c.b16 %v803, %v795
        %v844 = vpack.c.b16 %v804, %v796
        %v845 = vpack.c.b16 %v805, %v797
        %v846 = vpack.c.b16 %v806, %v798
        %v847 = vpack.c.b16 %v807, %v799
        %v848 = vpack.c.b16 %v808, %v800
        %v849 = vpack.c.b16 %v809, %v801
        %v850 = vpack.c.b16 %v818, %v810
        %v851 = vpack.c.b16 %v819, %v811
        %v852 = vpack.c.b16 %v820, %v812
        %v853 = vpack.c.b16 %v821, %v813
        %v854 = vpack.c.b16 %v822, %v814
        %v855 = vpack.c.b16 %v823, %v815
        %v856 = vpack.c.b16 %v824, %v816
        %v857 = vpack.c.b16 %v825, %v817
        %vm890 = vcmask 523264
        %v892 = vsel %vm890, %v659, 0
        %894 = vmatprep.subr.bf16.mxu0 0
        %895 = vmatpush1.bf16.msra.mxu0 0
        %896 = vmatprep.subr.bf16.mxu0 0
        %897 = vmatpush1.bf16.msra.mxu0 0
        %898 = vmatprep.subr.bf16.mxu0 0
        %899 = vmatpush1.bf16.msra.mxu0 0
        %900 = vmatprep.subr.bf16.mxu0 0
        %901 = vmatpush1.bf16.msra.mxu0 0
        %902 = vmatprep.subr.bf16.mxu0 %v851
        %903 = vmatpush1.bf16.msra.mxu0 %v850
        %904 = vmatprep.subr.bf16.mxu0 %v843
        %905 = vmatpush1.bf16.msra.mxu0 %v842
        %906 = vmatprep.subr.bf16.mxu0 %v835
        %907 = vmatpush1.bf16.msra.mxu0 %v834
        %908 = vmatprep.subr.bf16.mxu0 %v827
        %909 = vmatpush1.bf16.msra.mxu0 %v826
        %910 = vmatprep.subr.bf16.mxu0 0
        %911 = vmatpush2.bf16.msra.mxu0 0
        %912 = vmatprep.subr.bf16.mxu0 0
        %913 = vmatpush2.bf16.msra.mxu0 0
        %914 = vmatprep.subr.bf16.mxu0 0
        %915 = vmatpush2.bf16.msra.mxu0 0
        %916 = vmatprep.subr.bf16.mxu0 0
        %917 = vmatpush2.bf16.msra.mxu0 0
        %918 = vmatprep.subr.bf16.mxu0 0
        %919 = vmatpush2.bf16.msra.mxu0 0
        %920 = vmatprep.subr.bf16.mxu0 0
        %921 = vmatpush2.bf16.msra.mxu0 0
        %922 = vmatprep.subr.bf16.mxu0 0
        %923 = vmatpush2.bf16.msra.mxu0 0
        %924 = vmatprep.subr.bf16.mxu0 0
        %925 = vmatpush2.bf16.msra.mxu0 0
        %926 = vmatprep.mubr.bf16.mxu0 0
        %927 = vmatmul.mubr.bf16.gmra.mxu0 %v892
        %v928 = vpop.f32.mrf.mxu0
        %v929 = vadd.f32 0.0, %v928
        %v930 = vpop.f32.mrf.mxu0
        %v931 = vadd.f32 0.0, %v930
        %v932 = vpop.f32.mrf.mxu0
        %v933 = vadd.f32 0.0, %v932
        %v934 = vpop.f32.mrf.mxu0
        %v935 = vadd.f32 0.0, %v934
        %936 = vdwg.mxu0
        %937 = vmatprep.subr.bf16.mxu0 0
        %938 = vmatpush1.bf16.msra.mxu0 0
        %939 = vmatprep.subr.bf16.mxu0 0
        %940 = vmatpush1.bf16.msra.mxu0 0
        %941 = vmatprep.subr.bf16.mxu0 0
        %942 = vmatpush1.bf16.msra.mxu0 0
        %943 = vmatprep.subr.bf16.mxu0 0
        %944 = vmatpush1.bf16.msra.mxu0 0
        %945 = vmatprep.subr.bf16.mxu0 %v853
        %946 = vmatpush1.bf16.msra.mxu0 %v852
        %947 = vmatprep.subr.bf16.mxu0 %v845
        %948 = vmatpush1.bf16.msra.mxu0 %v844
        %949 = vmatprep.subr.bf16.mxu0 %v837
        %950 = vmatpush1.bf16.msra.mxu0 %v836
        %951 = vmatprep.subr.bf16.mxu0 %v829
        %952 = vmatpush1.bf16.msra.mxu0 %v828
        %953 = vmatprep.subr.bf16.mxu0 0
        %954 = vmatpush2.bf16.msra.mxu0 0
        %955 = vmatprep.subr.bf16.mxu0 0
        %956 = vmatpush2.bf16.msra.mxu0 0
        %957 = vmatprep.subr.bf16.mxu0 0
        %958 = vmatpush2.bf16.msra.mxu0 0
        %959 = vmatprep.subr.bf16.mxu0 0
        %960 = vmatpush2.bf16.msra.mxu0 0
        %961 = vmatprep.subr.bf16.mxu0 0
        %962 = vmatpush2.bf16.msra.mxu0 0
        %963 = vmatprep.subr.bf16.mxu0 0
        %964 = vmatpush2.bf16.msra.mxu0 0
        %965 = vmatprep.subr.bf16.mxu0 0
        %966 = vmatpush2.bf16.msra.mxu0 0
        %967 = vmatprep.subr.bf16.mxu0 0
        %968 = vmatpush2.bf16.msra.mxu0 0
        %969 = vmatprep.mubr.bf16.mxu0 0
        %970 = vmatmul.mubr.bf16.gmra.mxu0 %v892
        %v971 = vpop.f32.mrf.mxu0
        %v972 = vadd.f32 0.0, %v971
        %v973 = vpop.f32.mrf.mxu0
        %v974 = vadd.f32 0.0, %v973
        %v975 = vpop.f32.mrf.mxu0
        %v976 = vadd.f32 0.0, %v975
        %v977 = vpop.f32.mrf.mxu0
        %v978 = vadd.f32 0.0, %v977
        %979 = vdwg.mxu0
        %980 = vmatprep.subr.bf16.mxu0 0
        %981 = vmatpush1.bf16.msra.mxu0 0
        %982 = vmatprep.subr.bf16.mxu0 0
        %983 = vmatpush1.bf16.msra.mxu0 0
        %984 = vmatprep.subr.bf16.mxu0 0
        %985 = vmatpush1.bf16.msra.mxu0 0
        %986 = vmatprep.subr.bf16.mxu0 0
        %987 = vmatpush1.bf16.msra.mxu0 0
        %988 = vmatprep.subr.bf16.mxu0 %v855
        %989 = vmatpush1.bf16.msra.mxu0 %v854
        %990 = vmatprep.subr.bf16.mxu0 %v847
        %991 = vmatpush1.bf16.msra.mxu0 %v846
        %992 = vmatprep.subr.bf16.mxu0 %v839
        %993 = vmatpush1.bf16.msra.mxu0 %v838
        %994 = vmatprep.subr.bf16.mxu0 %v831
        %995 = vmatpush1.bf16.msra.mxu0 %v830
        %996 = vmatprep.subr.bf16.mxu0 0
        %997 = vmatpush2.bf16.msra.mxu0 0
        %998 = vmatprep.subr.bf16.mxu0 0
        %999 = vmatpush2.bf16.msra.mxu0 0
        %1000 = vmatprep.subr.bf16.mxu0 0
        %1001 = vmatpush2.bf16.msra.mxu0 0
        %1002 = vmatprep.subr.bf16.mxu0 0
        %1003 = vmatpush2.bf16.msra.mxu0 0
        %1004 = vmatprep.subr.bf16.mxu0 0
        %1005 = vmatpush2.bf16.msra.mxu0 0
        %1006 = vmatprep.subr.bf16.mxu0 0
        %1007 = vmatpush2.bf16.msra.mxu0 0
        %1008 = vmatprep.subr.bf16.mxu0 0
        %1009 = vmatpush2.bf16.msra.mxu0 0
        %1010 = vmatprep.subr.bf16.mxu0 0
        %1011 = vmatpush2.bf16.msra.mxu0 0
        %1012 = vmatprep.mubr.bf16.mxu0 0
        %1013 = vmatmul.mubr.bf16.gmra.mxu0 %v892
        %v1014 = vpop.f32.mrf.mxu0
        %v1015 = vadd.f32 0.0, %v1014
        %v1016 = vpop.f32.mrf.mxu0
        %v1017 = vadd.f32 0.0, %v1016
        %v1018 = vpop.f32.mrf.mxu0
        %v1019 = vadd.f32 0.0, %v1018
        %v1020 = vpop.f32.mrf.mxu0
        %v1021 = vadd.f32 0.0, %v1020
        %1022 = vdwg.mxu0
        %1023 = vmatprep.subr.bf16.mxu0 0
        %1024 = vmatpush1.bf16.msra.mxu0 0
        %1025 = vmatprep.subr.bf16.mxu0 0
        %1026 = vmatpush1.bf16.msra.mxu0 0
        %1027 = vmatprep.subr.bf16.mxu0 0
        %1028 = vmatpush1.bf16.msra.mxu0 0
        %1029 = vmatprep.subr.bf16.mxu0 0
        %1030 = vmatpush1.bf16.msra.mxu0 0
        %1031 = vmatprep.subr.bf16.mxu0 %v857
        %1032 = vmatpush1.bf16.msra.mxu0 %v856
        %1033 = vmatprep.subr.bf16.mxu0 %v849
        %1034 = vmatpush1.bf16.msra.mxu0 %v848
        %1035 = vmatprep.subr.bf16.mxu0 %v841
        %1036 = vmatpush1.bf16.msra.mxu0 %v840
        %1037 = vmatprep.subr.bf16.mxu0 %v833
        %1038 = vmatpush1.bf16.msra.mxu0 %v832
        %1039 = vmatprep.subr.bf16.mxu0 0
        %1040 = vmatpush2.bf16.msra.mxu0 0
        %1041 = vmatprep.subr.bf16.mxu0 0
        %1042 = vmatpush2.bf16.msra.mxu0 0
        %1043 = vmatprep.subr.bf16.mxu0 0
        %1044 = vmatpush2.bf16.msra.mxu0 0
        %1045 = vmatprep.subr.bf16.mxu0 0
        %1046 = vmatpush2.bf16.msra.mxu0 0
        %1047 = vmatprep.subr.bf16.mxu0 0
        %1048 = vmatpush2.bf16.msra.mxu0 0
        %1049 = vmatprep.subr.bf16.mxu0 0
        %1050 = vmatpush2.bf16.msra.mxu0 0
        %1051 = vmatprep.subr.bf16.mxu0 0
        %1052 = vmatpush2.bf16.msra.mxu0 0
        %1053 = vmatprep.subr.bf16.mxu0 0
        %1054 = vmatpush2.bf16.msra.mxu0 0
        %1055 = vmatprep.mubr.bf16.mxu0 0
        %1056 = vmatmul.mubr.bf16.gmra.mxu0 %v892
        %v1057 = vpop.f32.mrf.mxu0
        %v1058 = vadd.f32 0.0, %v1057
        %v1059 = vpop.f32.mrf.mxu0
        %v1060 = vadd.f32 0.0, %v1059
        %v1061 = vpop.f32.mrf.mxu0
        %v1062 = vadd.f32 0.0, %v1061
        %v1063 = vpop.f32.mrf.mxu0
        %v1064 = vadd.f32 0.0, %v1063
        %1065 = vdwg.mxu0
        %v1098 = vunpack.c.l.b16 %v666
        %v1099 = vunpack.c.h.b16 %v666
        %v1100 = vunpack.c.l.b16 %v667
        %v1101 = vunpack.c.h.b16 %v667
        %v1102 = vunpack.c.l.b16 %v668
        %v1103 = vunpack.c.h.b16 %v668
        %v1104 = vunpack.c.l.b16 %v669
        %v1105 = vunpack.c.h.b16 %v669
        %v1106 = vunpack.c.l.b16 %v670
        %v1107 = vunpack.c.h.b16 %v670
        %v1108 = vunpack.c.l.b16 %v671
        %v1109 = vunpack.c.h.b16 %v671
        %v1110 = vunpack.c.l.b16 %v672
        %v1111 = vunpack.c.h.b16 %v672
        %v1112 = vunpack.c.l.b16 %v673
        %v1113 = vunpack.c.h.b16 %v673
        %v1114 = vunpack.c.l.b16 %v674
        %v1115 = vunpack.c.h.b16 %v674
        %v1116 = vunpack.c.l.b16 %v675
        %v1117 = vunpack.c.h.b16 %v675
        %v1118 = vunpack.c.l.b16 %v676
        %v1119 = vunpack.c.h.b16 %v676
        %v1120 = vunpack.c.l.b16 %v677
        %v1121 = vunpack.c.h.b16 %v677
        %v1122 = vunpack.c.l.b16 %v678
        %v1123 = vunpack.c.h.b16 %v678
        %v1124 = vunpack.c.l.b16 %v679
        %v1125 = vunpack.c.h.b16 %v679
        %v1126 = vunpack.c.l.b16 %v680
        %v1127 = vunpack.c.h.b16 %v680
        %v1128 = vunpack.c.l.b16 %v681
        %v1129 = vunpack.c.h.b16 %v681
        %v1130 = vunpack.c.l.b16 %v682
        %v1131 = vunpack.c.h.b16 %v682
        %v1132 = vunpack.c.l.b16 %v683
        %v1133 = vunpack.c.h.b16 %v683
        %v1134 = vunpack.c.l.b16 %v684
        %v1135 = vunpack.c.h.b16 %v684
        %v1136 = vunpack.c.l.b16 %v685
        %v1137 = vunpack.c.h.b16 %v685
        %v1138 = vunpack.c.l.b16 %v686
        %v1139 = vunpack.c.h.b16 %v686
        %v1140 = vunpack.c.l.b16 %v687
        %v1141 = vunpack.c.h.b16 %v687
        %v1142 = vunpack.c.l.b16 %v688
        %v1143 = vunpack.c.h.b16 %v688
        %v1144 = vunpack.c.l.b16 %v689
        %v1145 = vunpack.c.h.b16 %v689
        %v1146 = vunpack.c.l.b16 %v690
        %v1147 = vunpack.c.h.b16 %v690
        %v1148 = vunpack.c.l.b16 %v691
        %v1149 = vunpack.c.h.b16 %v691
        %v1150 = vunpack.c.l.b16 %v692
        %v1151 = vunpack.c.h.b16 %v692
        %v1152 = vunpack.c.l.b16 %v693
        %v1153 = vunpack.c.h.b16 %v693
        %v1154 = vunpack.c.l.b16 %v694
        %v1155 = vunpack.c.h.b16 %v694
        %v1156 = vunpack.c.l.b16 %v695
        %v1157 = vunpack.c.h.b16 %v695
        %v1158 = vunpack.c.l.b16 %v696
        %v1159 = vunpack.c.h.b16 %v696
        %v1160 = vunpack.c.l.b16 %v697
        %v1161 = vunpack.c.h.b16 %v697
        %v1162 = vpack.c.b16 %v1106, %v1098
        %v1163 = vpack.c.b16 %v1107, %v1099
        %v1164 = vpack.c.b16 %v1108, %v1100
        %v1165 = vpack.c.b16 %v1109, %v1101
        %v1166 = vpack.c.b16 %v1110, %v1102
        %v1167 = vpack.c.b16 %v1111, %v1103
        %v1168 = vpack.c.b16 %v1112, %v1104
        %v1169 = vpack.c.b16 %v1113, %v1105
        %v1170 = vpack.c.b16 %v1122, %v1114
        %v1171 = vpack.c.b16 %v1123, %v1115
        %v1172 = vpack.c.b16 %v1124, %v1116
        %v1173 = vpack.c.b16 %v1125, %v1117
        %v1174 = vpack.c.b16 %v1126, %v1118
        %v1175 = vpack.c.b16 %v1127, %v1119
        %v1176 = vpack.c.b16 %v1128, %v1120
        %v1177 = vpack.c.b16 %v1129, %v1121
        %v1178 = vpack.c.b16 %v1138, %v1130
        %v1179 = vpack.c.b16 %v1139, %v1131
        %v1180 = vpack.c.b16 %v1140, %v1132
        %v1181 = vpack.c.b16 %v1141, %v1133
        %v1182 = vpack.c.b16 %v1142, %v1134
        %v1183 = vpack.c.b16 %v1143, %v1135
        %v1184 = vpack.c.b16 %v1144, %v1136
        %v1185 = vpack.c.b16 %v1145, %v1137
        %v1186 = vpack.c.b16 %v1154, %v1146
        %v1187 = vpack.c.b16 %v1155, %v1147
        %v1188 = vpack.c.b16 %v1156, %v1148
        %v1189 = vpack.c.b16 %v1157, %v1149
        %v1190 = vpack.c.b16 %v1158, %v1150
        %v1191 = vpack.c.b16 %v1159, %v1151
        %v1192 = vpack.c.b16 %v1160, %v1152
        %v1193 = vpack.c.b16 %v1161, %v1153
        %v1227 = vsel %vm890, %v658, 0
        %1229 = vmatprep.subr.bf16.mxu0 0
        %1230 = vmatpush1.bf16.msra.mxu0 0
        %1231 = vmatprep.subr.bf16.mxu0 0
        %1232 = vmatpush1.bf16.msra.mxu0 0
        %1233 = vmatprep.subr.bf16.mxu0 0
        %1234 = vmatpush1.bf16.msra.mxu0 0
        %1235 = vmatprep.subr.bf16.mxu0 0
        %1236 = vmatpush1.bf16.msra.mxu0 0
        %1237 = vmatprep.subr.bf16.mxu0 %v1187
        %1238 = vmatpush1.bf16.msra.mxu0 %v1186
        %1239 = vmatprep.subr.bf16.mxu0 %v1179
        %1240 = vmatpush1.bf16.msra.mxu0 %v1178
        %1241 = vmatprep.subr.bf16.mxu0 %v1171
        %1242 = vmatpush1.bf16.msra.mxu0 %v1170
        %1243 = vmatprep.subr.bf16.mxu0 %v1163
        %1244 = vmatpush1.bf16.msra.mxu0 %v1162
        %1245 = vmatprep.subr.bf16.mxu0 0
        %1246 = vmatpush2.bf16.msra.mxu0 0
        %1247 = vmatprep.subr.bf16.mxu0 0
        %1248 = vmatpush2.bf16.msra.mxu0 0
        %1249 = vmatprep.subr.bf16.mxu0 0
        %1250 = vmatpush2.bf16.msra.mxu0 0
        %1251 = vmatprep.subr.bf16.mxu0 0
        %1252 = vmatpush2.bf16.msra.mxu0 0
        %1253 = vmatprep.subr.bf16.mxu0 0
        %1254 = vmatpush2.bf16.msra.mxu0 0
        %1255 = vmatprep.subr.bf16.mxu0 0
        %1256 = vmatpush2.bf16.msra.mxu0 0
        %1257 = vmatprep.subr.bf16.mxu0 0
        %1258 = vmatpush2.bf16.msra.mxu0 0
        %1259 = vmatprep.subr.bf16.mxu0 0
        %1260 = vmatpush2.bf16.msra.mxu0 0
        %1261 = vmatprep.mubr.bf16.mxu0 0
        %1262 = vmatmul.mubr.bf16.gmra.mxu0 %v1227
        %v1263 = vpop.f32.mrf.mxu0
        %v1264 = vadd.f32 %v929, %v1263
        %v1265 = vpop.f32.mrf.mxu0
        %v1266 = vadd.f32 %v931, %v1265
        %v1267 = vpop.f32.mrf.mxu0
        %v1268 = vadd.f32 %v933, %v1267
        %v1269 = vpop.f32.mrf.mxu0
        %v1270 = vadd.f32 %v935, %v1269
        %1271 = vdwg.mxu0
        %1272 = vmatprep.subr.bf16.mxu0 0
        %1273 = vmatpush1.bf16.msra.mxu0 0
        %1274 = vmatprep.subr.bf16.mxu0 0
        %1275 = vmatpush1.bf16.msra.mxu0 0
        %1276 = vmatprep.subr.bf16.mxu0 0
        %1277 = vmatpush1.bf16.msra.mxu0 0
        %1278 = vmatprep.subr.bf16.mxu0 0
        %1279 = vmatpush1.bf16.msra.mxu0 0
        %1280 = vmatprep.subr.bf16.mxu0 %v1189
        %1281 = vmatpush1.bf16.msra.mxu0 %v1188
        %1282 = vmatprep.subr.bf16.mxu0 %v1181
        %1283 = vmatpush1.bf16.msra.mxu0 %v1180
        %1284 = vmatprep.subr.bf16.mxu0 %v1173
        %1285 = vmatpush1.bf16.msra.mxu0 %v1172
        %1286 = vmatprep.subr.bf16.mxu0 %v1165
        %1287 = vmatpush1.bf16.msra.mxu0 %v1164
        %1288 = vmatprep.subr.bf16.mxu0 0
        %1289 = vmatpush2.bf16.msra.mxu0 0
        %1290 = vmatprep.subr.bf16.mxu0 0
        %1291 = vmatpush2.bf16.msra.mxu0 0
        %1292 = vmatprep.subr.bf16.mxu0 0
        %1293 = vmatpush2.bf16.msra.mxu0 0
        %1294 = vmatprep.subr.bf16.mxu0 0
        %1295 = vmatpush2.bf16.msra.mxu0 0
        %1296 = vmatprep.subr.bf16.mxu0 0
        %1297 = vmatpush2.bf16.msra.mxu0 0
        %1298 = vmatprep.subr.bf16.mxu0 0
        %1299 = vmatpush2.bf16.msra.mxu0 0
        %1300 = vmatprep.subr.bf16.mxu0 0
        %1301 = vmatpush2.bf16.msra.mxu0 0
        %1302 = vmatprep.subr.bf16.mxu0 0
        %1303 = vmatpush2.bf16.msra.mxu0 0
        %1304 = vmatprep.mubr.bf16.mxu0 0
        %1305 = vmatmul.mubr.bf16.gmra.mxu0 %v1227
        %v1306 = vpop.f32.mrf.mxu0
        %v1307 = vadd.f32 %v972, %v1306
        %v1308 = vpop.f32.mrf.mxu0
        %v1309 = vadd.f32 %v974, %v1308
        %v1310 = vpop.f32.mrf.mxu0
        %v1311 = vadd.f32 %v976, %v1310
        %v1312 = vpop.f32.mrf.mxu0
        %v1313 = vadd.f32 %v978, %v1312
        %1314 = vdwg.mxu0
        %1315 = vmatprep.subr.bf16.mxu0 0
        %1316 = vmatpush1.bf16.msra.mxu0 0
        %1317 = vmatprep.subr.bf16.mxu0 0
        %1318 = vmatpush1.bf16.msra.mxu0 0
        %1319 = vmatprep.subr.bf16.mxu0 0
        %1320 = vmatpush1.bf16.msra.mxu0 0
        %1321 = vmatprep.subr.bf16.mxu0 0
        %1322 = vmatpush1.bf16.msra.mxu0 0
        %1323 = vmatprep.subr.bf16.mxu0 %v1191
        %1324 = vmatpush1.bf16.msra.mxu0 %v1190
        %1325 = vmatprep.subr.bf16.mxu0 %v1183
        %1326 = vmatpush1.bf16.msra.mxu0 %v1182
        %1327 = vmatprep.subr.bf16.mxu0 %v1175
        %1328 = vmatpush1.bf16.msra.mxu0 %v1174
        %1329 = vmatprep.subr.bf16.mxu0 %v1167
        %1330 = vmatpush1.bf16.msra.mxu0 %v1166
        %1331 = vmatprep.subr.bf16.mxu0 0
        %1332 = vmatpush2.bf16.msra.mxu0 0
        %1333 = vmatprep.subr.bf16.mxu0 0
        %1334 = vmatpush2.bf16.msra.mxu0 0
        %1335 = vmatprep.subr.bf16.mxu0 0
        %1336 = vmatpush2.bf16.msra.mxu0 0
        %1337 = vmatprep.subr.bf16.mxu0 0
        %1338 = vmatpush2.bf16.msra.mxu0 0
        %1339 = vmatprep.subr.bf16.mxu0 0
        %1340 = vmatpush2.bf16.msra.mxu0 0
        %1341 = vmatprep.subr.bf16.mxu0 0
        %1342 = vmatpush2.bf16.msra.mxu0 0
        %1343 = vmatprep.subr.bf16.mxu0 0
        %1344 = vmatpush2.bf16.msra.mxu0 0
        %1345 = vmatprep.subr.bf16.mxu0 0
        %1346 = vmatpush2.bf16.msra.mxu0 0
        %1347 = vmatprep.mubr.bf16.mxu0 0
        %1348 = vmatmul.mubr.bf16.gmra.mxu0 %v1227
        %v1349 = vpop.f32.mrf.mxu0
        %v1350 = vadd.f32 %v1015, %v1349
        %v1351 = vpop.f32.mrf.mxu0
        %v1352 = vadd.f32 %v1017, %v1351
        %v1353 = vpop.f32.mrf.mxu0
        %v1354 = vadd.f32 %v1019, %v1353
        %v1355 = vpop.f32.mrf.mxu0
        %v1356 = vadd.f32 %v1021, %v1355
        %1357 = vdwg.mxu0
        %1358 = vmatprep.subr.bf16.mxu0 0
        %1359 = vmatpush1.bf16.msra.mxu0 0
        %1360 = vmatprep.subr.bf16.mxu0 0
        %1361 = vmatpush1.bf16.msra.mxu0 0
        %1362 = vmatprep.subr.bf16.mxu0 0
        %1363 = vmatpush1.bf16.msra.mxu0 0
        %1364 = vmatprep.subr.bf16.mxu0 0
        %1365 = vmatpush1.bf16.msra.mxu0 0
        %1366 = vmatprep.subr.bf16.mxu0 %v1193
        %1367 = vmatpush1.bf16.msra.mxu0 %v1192
        %1368 = vmatprep.subr.bf16.mxu0 %v1185
        %1369 = vmatpush1.bf16.msra.mxu0 %v1184
        %1370 = vmatprep.subr.bf16.mxu0 %v1177
        %1371 = vmatpush1.bf16.msra.mxu0 %v1176
        %1372 = vmatprep.subr.bf16.mxu0 %v1169
        %1373 = vmatpush1.bf16.msra.mxu0 %v1168
        %1374 = vmatprep.subr.bf16.mxu0 0
        %1375 = vmatpush2.bf16.msra.mxu0 0
        %1376 = vmatprep.subr.bf16.mxu0 0
        %1377 = vmatpush2.bf16.msra.mxu0 0
        %1378 = vmatprep.subr.bf16.mxu0 0
        %1379 = vmatpush2.bf16.msra.mxu0 0
        %1380 = vmatprep.subr.bf16.mxu0 0
        %1381 = vmatpush2.bf16.msra.mxu0 0
        %1382 = vmatprep.subr.bf16.mxu0 0
        %1383 = vmatpush2.bf16.msra.mxu0 0
        %1384 = vmatprep.subr.bf16.mxu0 0
        %1385 = vmatpush2.bf16.msra.mxu0 0
        %1386 = vmatprep.subr.bf16.mxu0 0
        %1387 = vmatpush2.bf16.msra.mxu0 0
        %1388 = vmatprep.subr.bf16.mxu0 0
        %1389 = vmatpush2.bf16.msra.mxu0 0
        %1390 = vmatprep.mubr.bf16.mxu0 0
        %1391 = vmatmul.mubr.bf16.gmra.mxu0 %v1227
        %v1392 = vpop.f32.mrf.mxu0
        %v1393 = vadd.f32 %v1058, %v1392
        %v1394 = vpop.f32.mrf.mxu0
        %v1395 = vadd.f32 %v1060, %v1394
        %v1396 = vpop.f32.mrf.mxu0
        %v1397 = vadd.f32 %v1062, %v1396
        %v1398 = vpop.f32.mrf.mxu0
        %v1399 = vadd.f32 %v1064, %v1398
        %1400 = vdwg.mxu0
        %v1401 = vld [vmem:[#allocation10] sm:$0xff]
        %v1402 = vld [vmem:[#allocation10 + $0x8] sm:$0xff]
        %v1403 = vld [vmem:[#allocation10 + $0x10] sm:$0xff]
        %v1404 = vld [vmem:[#allocation10 + $0x18] sm:$0xff]
        %v1405 = vld [vmem:[#allocation10 + $0x20] sm:$0xff]
        %v1406 = vld [vmem:[#allocation10 + $0x28] sm:$0xff]
        %v1407 = vld [vmem:[#allocation10 + $0x30] sm:$0xff]
        %v1408 = vld [vmem:[#allocation10 + $0x38] sm:$0xff]
        %v1409 = vld [vmem:[#allocation10 + $0x40] sm:$0xff]
        %v1410 = vld [vmem:[#allocation10 + $0x48] sm:$0xff]
        %v1411 = vld [vmem:[#allocation10 + $0x50] sm:$0xff]
        %v1412 = vld [vmem:[#allocation10 + $0x58] sm:$0xff]
        %v1413 = vld [vmem:[#allocation10 + $0x60] sm:$0xff]
        %v1414 = vld [vmem:[#allocation10 + $0x68] sm:$0xff]
        %v1415 = vld [vmem:[#allocation10 + $0x70] sm:$0xff]
        %v1416 = vld [vmem:[#allocation10 + $0x78] sm:$0xff]
        %v1417 = vld [vmem:[#allocation10 + $0x80] sm:$0xff]
        %v1418 = vld [vmem:[#allocation10 + $0x88] sm:$0xff]
        %v1419 = vld [vmem:[#allocation10 + $0x90] sm:$0xff]
        %v1420 = vld [vmem:[#allocation10 + $0x98] sm:$0xff]
        %v1421 = vld [vmem:[#allocation10 + $0xa0] sm:$0xff]
        %v1422 = vld [vmem:[#allocation10 + $0xa8] sm:$0xff]
        %v1423 = vld [vmem:[#allocation10 + $0xb0] sm:$0xff]
        %v1424 = vld [vmem:[#allocation10 + $0xb8] sm:$0xff]
        %v1425 = vld [vmem:[#allocation10 + $0xc0] sm:$0xff]
        %v1426 = vld [vmem:[#allocation10 + $0xc8] sm:$0xff]
        %v1427 = vld [vmem:[#allocation10 + $0xd0] sm:$0xff]
        %v1428 = vld [vmem:[#allocation10 + $0xd8] sm:$0xff]
        %v1429 = vld [vmem:[#allocation10 + $0xe0] sm:$0xff]
        %v1430 = vld [vmem:[#allocation10 + $0xe8] sm:$0xff]
        %v1431 = vld [vmem:[#allocation10 + $0xf0] sm:$0xff]
        %v1432 = vld [vmem:[#allocation10 + $0xf8] sm:$0xff]
        %v1465 = vunpack.c.l.b16 %v1401
        %v1466 = vunpack.c.h.b16 %v1401
        %v1467 = vunpack.c.l.b16 %v1402
        %v1468 = vunpack.c.h.b16 %v1402
        %v1469 = vunpack.c.l.b16 %v1403
        %v1470 = vunpack.c.h.b16 %v1403
        %v1471 = vunpack.c.l.b16 %v1404
        %v1472 = vunpack.c.h.b16 %v1404
        %v1473 = vunpack.c.l.b16 %v1405
        %v1474 = vunpack.c.h.b16 %v1405
        %v1475 = vunpack.c.l.b16 %v1406
        %v1476 = vunpack.c.h.b16 %v1406
        %v1477 = vunpack.c.l.b16 %v1407
        %v1478 = vunpack.c.h.b16 %v1407
        %v1479 = vunpack.c.l.b16 %v1408
        %v1480 = vunpack.c.h.b16 %v1408
        %v1481 = vunpack.c.l.b16 %v1409
        %v1482 = vunpack.c.h.b16 %v1409
        %v1483 = vunpack.c.l.b16 %v1410
        %v1484 = vunpack.c.h.b16 %v1410
        %v1485 = vunpack.c.l.b16 %v1411
        %v1486 = vunpack.c.h.b16 %v1411
        %v1487 = vunpack.c.l.b16 %v1412
        %v1488 = vunpack.c.h.b16 %v1412
        %v1489 = vunpack.c.l.b16 %v1413
        %v1490 = vunpack.c.h.b16 %v1413
        %v1491 = vunpack.c.l.b16 %v1414
        %v1492 = vunpack.c.h.b16 %v1414
        %v1493 = vunpack.c.l.b16 %v1415
        %v1494 = vunpack.c.h.b16 %v1415
        %v1495 = vunpack.c.l.b16 %v1416
        %v1496 = vunpack.c.h.b16 %v1416
        %v1497 = vunpack.c.l.b16 %v1417
        %v1498 = vunpack.c.h.b16 %v1417
        %v1499 = vunpack.c.l.b16 %v1418
        %v1500 = vunpack.c.h.b16 %v1418
        %v1501 = vunpack.c.l.b16 %v1419
        %v1502 = vunpack.c.h.b16 %v1419
        %v1503 = vunpack.c.l.b16 %v1420
        %v1504 = vunpack.c.h.b16 %v1420
        %v1505 = vunpack.c.l.b16 %v1421
        %v1506 = vunpack.c.h.b16 %v1421
        %v1507 = vunpack.c.l.b16 %v1422
        %v1508 = vunpack.c.h.b16 %v1422
        %v1509 = vunpack.c.l.b16 %v1423
        %v1510 = vunpack.c.h.b16 %v1423
        %v1511 = vunpack.c.l.b16 %v1424
        %v1512 = vunpack.c.h.b16 %v1424
        %v1513 = vunpack.c.l.b16 %v1425
        %v1514 = vunpack.c.h.b16 %v1425
        %v1515 = vunpack.c.l.b16 %v1426
        %v1516 = vunpack.c.h.b16 %v1426
        %v1517 = vunpack.c.l.b16 %v1427
        %v1518 = vunpack.c.h.b16 %v1427
        %v1519 = vunpack.c.l.b16 %v1428
        %v1520 = vunpack.c.h.b16 %v1428
        %v1521 = vunpack.c.l.b16 %v1429
        %v1522 = vunpack.c.h.b16 %v1429
        %v1523 = vunpack.c.l.b16 %v1430
        %v1524 = vunpack.c.h.b16 %v1430
        %v1525 = vunpack.c.l.b16 %v1431
        %v1526 = vunpack.c.h.b16 %v1431
        %v1527 = vunpack.c.l.b16 %v1432
        %v1528 = vunpack.c.h.b16 %v1432
        %v1529 = vpack.c.b16 %v1473, %v1465
        %v1530 = vpack.c.b16 %v1474, %v1466
        %v1531 = vpack.c.b16 %v1475, %v1467
        %v1532 = vpack.c.b16 %v1476, %v1468
        %v1533 = vpack.c.b16 %v1477, %v1469
        %v1534 = vpack.c.b16 %v1478, %v1470
        %v1535 = vpack.c.b16 %v1479, %v1471
        %v1536 = vpack.c.b16 %v1480, %v1472
        %v1537 = vpack.c.b16 %v1489, %v1481
        %v1538 = vpack.c.b16 %v1490, %v1482
        %v1539 = vpack.c.b16 %v1491, %v1483
        %v1540 = vpack.c.b16 %v1492, %v1484
        %v1541 = vpack.c.b16 %v1493, %v1485
        %v1542 = vpack.c.b16 %v1494, %v1486
        %v1543 = vpack.c.b16 %v1495, %v1487
        %v1544 = vpack.c.b16 %v1496, %v1488
        %v1545 = vpack.c.b16 %v1505, %v1497
        %v1546 = vpack.c.b16 %v1506, %v1498
        %v1547 = vpack.c.b16 %v1507, %v1499
        %v1548 = vpack.c.b16 %v1508, %v1500
        %v1549 = vpack.c.b16 %v1509, %v1501
        %v1550 = vpack.c.b16 %v1510, %v1502
        %v1551 = vpack.c.b16 %v1511, %v1503
        %v1552 = vpack.c.b16 %v1512, %v1504
        %v1553 = vpack.c.b16 %v1521, %v1513
        %v1554 = vpack.c.b16 %v1522, %v1514
        %v1555 = vpack.c.b16 %v1523, %v1515
        %v1556 = vpack.c.b16 %v1524, %v1516
        %v1557 = vpack.c.b16 %v1525, %v1517
        %v1558 = vpack.c.b16 %v1526, %v1518
        %v1559 = vpack.c.b16 %v1527, %v1519
        %v1560 = vpack.c.b16 %v1528, %v1520
        %v1594 = vsel %vm890, %v662, 0
        %1596 = vmatprep.subr.bf16.mxu0 0
        %1597 = vmatpush1.bf16.msra.mxu0 0
        %1598 = vmatprep.subr.bf16.mxu0 0
        %1599 = vmatpush1.bf16.msra.mxu0 0
        %1600 = vmatprep.subr.bf16.mxu0 0
        %1601 = vmatpush1.bf16.msra.mxu0 0
        %1602 = vmatprep.subr.bf16.mxu0 0
        %1603 = vmatpush1.bf16.msra.mxu0 0
        %1604 = vmatprep.subr.bf16.mxu0 %v1554
        %1605 = vmatpush1.bf16.msra.mxu0 %v1553
        %1606 = vmatprep.subr.bf16.mxu0 %v1546
        %1607 = vmatpush1.bf16.msra.mxu0 %v1545
        %1608 = vmatprep.subr.bf16.mxu0 %v1538
        %1609 = vmatpush1.bf16.msra.mxu0 %v1537
        %1610 = vmatprep.subr.bf16.mxu0 %v1530
        %1611 = vmatpush1.bf16.msra.mxu0 %v1529
        %1612 = vmatprep.subr.bf16.mxu0 0
        %1613 = vmatpush2.bf16.msra.mxu0 0
        %1614 = vmatprep.subr.bf16.mxu0 0
        %1615 = vmatpush2.bf16.msra.mxu0 0
        %1616 = vmatprep.subr.bf16.mxu0 0
        %1617 = vmatpush2.bf16.msra.mxu0 0
        %1618 = vmatprep.subr.bf16.mxu0 0
        %1619 = vmatpush2.bf16.msra.mxu0 0
        %1620 = vmatprep.subr.bf16.mxu0 0
        %1621 = vmatpush2.bf16.msra.mxu0 0
        %1622 = vmatprep.subr.bf16.mxu0 0
        %1623 = vmatpush2.bf16.msra.mxu0 0
        %1624 = vmatprep.subr.bf16.mxu0 0
        %1625 = vmatpush2.bf16.msra.mxu0 0
        %1626 = vmatprep.subr.bf16.mxu0 0
        %1627 = vmatpush2.bf16.msra.mxu0 0
        %1628 = vmatprep.mubr.bf16.mxu0 0
        %1629 = vmatmul.mubr.bf16.gmra.mxu0 %v1594
        %v1630 = vpop.f32.mrf.mxu0
        %v1631 = vadd.f32 0.0, %v1630
        %v1632 = vpop.f32.mrf.mxu0
        %v1633 = vadd.f32 0.0, %v1632
        %v1634 = vpop.f32.mrf.mxu0
        %v1635 = vadd.f32 0.0, %v1634
        %v1636 = vpop.f32.mrf.mxu0
        %v1637 = vadd.f32 0.0, %v1636
        %1638 = vdwg.mxu0
        %1639 = vmatprep.subr.bf16.mxu0 0
        %1640 = vmatpush1.bf16.msra.mxu0 0
        %1641 = vmatprep.subr.bf16.mxu0 0
        %1642 = vmatpush1.bf16.msra.mxu0 0
        %1643 = vmatprep.subr.bf16.mxu0 0
        %1644 = vmatpush1.bf16.msra.mxu0 0
        %1645 = vmatprep.subr.bf16.mxu0 0
        %1646 = vmatpush1.bf16.msra.mxu0 0
        %1647 = vmatprep.subr.bf16.mxu0 %v1556
        %1648 = vmatpush1.bf16.msra.mxu0 %v1555
        %1649 = vmatprep.subr.bf16.mxu0 %v1548
        %1650 = vmatpush1.bf16.msra.mxu0 %v1547
        %1651 = vmatprep.subr.bf16.mxu0 %v1540
        %1652 = vmatpush1.bf16.msra.mxu0 %v1539
        %1653 = vmatprep.subr.bf16.mxu0 %v1532
        %1654 = vmatpush1.bf16.msra.mxu0 %v1531
        %1655 = vmatprep.subr.bf16.mxu0 0
        %1656 = vmatpush2.bf16.msra.mxu0 0
        %1657 = vmatprep.subr.bf16.mxu0 0
        %1658 = vmatpush2.bf16.msra.mxu0 0
        %1659 = vmatprep.subr.bf16.mxu0 0
        %1660 = vmatpush2.bf16.msra.mxu0 0
        %1661 = vmatprep.subr.bf16.mxu0 0
        %1662 = vmatpush2.bf16.msra.mxu0 0
        %1663 = vmatprep.subr.bf16.mxu0 0
        %1664 = vmatpush2.bf16.msra.mxu0 0
        %1665 = vmatprep.subr.bf16.mxu0 0
        %1666 = vmatpush2.bf16.msra.mxu0 0
        %1667 = vmatprep.subr.bf16.mxu0 0
        %1668 = vmatpush2.bf16.msra.mxu0 0
        %1669 = vmatprep.subr.bf16.mxu0 0
        %1670 = vmatpush2.bf16.msra.mxu0 0
        %1671 = vmatprep.mubr.bf16.mxu0 0
        %1672 = vmatmul.mubr.bf16.gmra.mxu0 %v1594
        %v1673 = vpop.f32.mrf.mxu0
        %v1674 = vadd.f32 0.0, %v1673
        %v1675 = vpop.f32.mrf.mxu0
        %v1676 = vadd.f32 0.0, %v1675
        %v1677 = vpop.f32.mrf.mxu0
        %v1678 = vadd.f32 0.0, %v1677
        %v1679 = vpop.f32.mrf.mxu0
        %v1680 = vadd.f32 0.0, %v1679
        %1681 = vdwg.mxu0
        %1682 = vmatprep.subr.bf16.mxu0 0
        %1683 = vmatpush1.bf16.msra.mxu0 0
        %1684 = vmatprep.subr.bf16.mxu0 0
        %1685 = vmatpush1.bf16.msra.mxu0 0
        %1686 = vmatprep.subr.bf16.mxu0 0
        %1687 = vmatpush1.bf16.msra.mxu0 0
        %1688 = vmatprep.subr.bf16.mxu0 0
        %1689 = vmatpush1.bf16.msra.mxu0 0
        %1690 = vmatprep.subr.bf16.mxu0 %v1558
        %1691 = vmatpush1.bf16.msra.mxu0 %v1557
        %1692 = vmatprep.subr.bf16.mxu0 %v1550
        %1693 = vmatpush1.bf16.msra.mxu0 %v1549
        %1694 = vmatprep.subr.bf16.mxu0 %v1542
        %1695 = vmatpush1.bf16.msra.mxu0 %v1541
        %1696 = vmatprep.subr.bf16.mxu0 %v1534
        %1697 = vmatpush1.bf16.msra.mxu0 %v1533
        %1698 = vmatprep.subr.bf16.mxu0 0
        %1699 = vmatpush2.bf16.msra.mxu0 0
        %1700 = vmatprep.subr.bf16.mxu0 0
        %1701 = vmatpush2.bf16.msra.mxu0 0
        %1702 = vmatprep.subr.bf16.mxu0 0
        %1703 = vmatpush2.bf16.msra.mxu0 0
        %1704 = vmatprep.subr.bf16.mxu0 0
        %1705 = vmatpush2.bf16.msra.mxu0 0
        %1706 = vmatprep.subr.bf16.mxu0 0
        %1707 = vmatpush2.bf16.msra.mxu0 0
        %1708 = vmatprep.subr.bf16.mxu0 0
        %1709 = vmatpush2.bf16.msra.mxu0 0
        %1710 = vmatprep.subr.bf16.mxu0 0
        %1711 = vmatpush2.bf16.msra.mxu0 0
        %1712 = vmatprep.subr.bf16.mxu0 0
        %1713 = vmatpush2.bf16.msra.mxu0 0
        %1714 = vmatprep.mubr.bf16.mxu0 0
        %1715 = vmatmul.mubr.bf16.gmra.mxu0 %v1594
        %v1716 = vpop.f32.mrf.mxu0
        %v1717 = vadd.f32 0.0, %v1716
        %v1718 = vpop.f32.mrf.mxu0
        %v1719 = vadd.f32 0.0, %v1718
        %v1720 = vpop.f32.mrf.mxu0
        %v1721 = vadd.f32 0.0, %v1720
        %v1722 = vpop.f32.mrf.mxu0
        %v1723 = vadd.f32 0.0, %v1722
        %1724 = vdwg.mxu0
        %1725 = vmatprep.subr.bf16.mxu0 0
        %1726 = vmatpush1.bf16.msra.mxu0 0
        %1727 = vmatprep.subr.bf16.mxu0 0
        %1728 = vmatpush1.bf16.msra.mxu0 0
        %1729 = vmatprep.subr.bf16.mxu0 0
        %1730 = vmatpush1.bf16.msra.mxu0 0
        %1731 = vmatprep.subr.bf16.mxu0 0
        %1732 = vmatpush1.bf16.msra.mxu0 0
        %1733 = vmatprep.subr.bf16.mxu0 %v1560
        %1734 = vmatpush1.bf16.msra.mxu0 %v1559
        %1735 = vmatprep.subr.bf16.mxu0 %v1552
        %1736 = vmatpush1.bf16.msra.mxu0 %v1551
        %1737 = vmatprep.subr.bf16.mxu0 %v1544
        %1738 = vmatpush1.bf16.msra.mxu0 %v1543
        %1739 = vmatprep.subr.bf16.mxu0 %v1536
        %1740 = vmatpush1.bf16.msra.mxu0 %v1535
        %1741 = vmatprep.subr.bf16.mxu0 0
        %1742 = vmatpush2.bf16.msra.mxu0 0
        %1743 = vmatprep.subr.bf16.mxu0 0
        %1744 = vmatpush2.bf16.msra.mxu0 0
        %1745 = vmatprep.subr.bf16.mxu0 0
        %1746 = vmatpush2.bf16.msra.mxu0 0
        %1747 = vmatprep.subr.bf16.mxu0 0
        %1748 = vmatpush2.bf16.msra.mxu0 0
        %1749 = vmatprep.subr.bf16.mxu0 0
        %1750 = vmatpush2.bf16.msra.mxu0 0
        %1751 = vmatprep.subr.bf16.mxu0 0
        %1752 = vmatpush2.bf16.msra.mxu0 0
        %1753 = vmatprep.subr.bf16.mxu0 0
        %1754 = vmatpush2.bf16.msra.mxu0 0
        %1755 = vmatprep.subr.bf16.mxu0 0
        %1756 = vmatpush2.bf16.msra.mxu0 0
        %1757 = vmatprep.mubr.bf16.mxu0 0
        %1758 = vmatmul.mubr.bf16.gmra.mxu0 %v1594
        %v1759 = vpop.f32.mrf.mxu0
        %v1760 = vadd.f32 0.0, %v1759
        %v1761 = vpop.f32.mrf.mxu0
        %v1762 = vadd.f32 0.0, %v1761
        %v1763 = vpop.f32.mrf.mxu0
        %v1764 = vadd.f32 0.0, %v1763
        %v1765 = vpop.f32.mrf.mxu0
        %v1766 = vadd.f32 0.0, %v1765
        %1767 = vdwg.mxu0
        %v1768 = vadd.f32 %v1264, %v1631
        %v1769 = vadd.f32 %v1266, %v1633
        %v1770 = vadd.f32 %v1307, %v1674
        %v1771 = vadd.f32 %v1309, %v1676
        %v1772 = vadd.f32 %v1350, %v1717
        %v1773 = vadd.f32 %v1352, %v1719
        %v1774 = vadd.f32 %v1393, %v1760
        %v1775 = vadd.f32 %v1395, %v1762
        %v1776 = vadd.f32 %v1268, %v1635
        %v1777 = vadd.f32 %v1270, %v1637
        %v1778 = vadd.f32 %v1311, %v1678
        %v1779 = vadd.f32 %v1313, %v1680
        %v1780 = vadd.f32 %v1354, %v1721
        %v1781 = vadd.f32 %v1356, %v1723
        %v1782 = vadd.f32 %v1397, %v1764
        %v1783 = vadd.f32 %v1399, %v1766
        %v1784 = vld [vmem:[#allocation11] sm:$0xff]
        %v1785 = vld [vmem:[#allocation11 + $0x8] sm:$0xff]
        %v1786 = vld [vmem:[#allocation11 + $0x10] sm:$0xff]
        %v1787 = vld [vmem:[#allocation11 + $0x18] sm:$0xff]
        %v1788 = vld [vmem:[#allocation11 + $0x20] sm:$0xff]
        %v1789 = vld [vmem:[#allocation11 + $0x28] sm:$0xff]
        %v1790 = vld [vmem:[#allocation11 + $0x30] sm:$0xff]
        %v1791 = vld [vmem:[#allocation11 + $0x38] sm:$0xff]
        %v1792 = vld [vmem:[#allocation11 + $0x40] sm:$0xff]
        %v1793 = vld [vmem:[#allocation11 + $0x48] sm:$0xff]
        %v1794 = vld [vmem:[#allocation11 + $0x50] sm:$0xff]
        %v1795 = vld [vmem:[#allocation11 + $0x58] sm:$0xff]
        %v1796 = vld [vmem:[#allocation11 + $0x60] sm:$0xff]
        %v1797 = vld [vmem:[#allocation11 + $0x68] sm:$0xff]
        %v1798 = vld [vmem:[#allocation11 + $0x70] sm:$0xff]
        %v1799 = vld [vmem:[#allocation11 + $0x78] sm:$0xff]
        %v1800 = vld [vmem:[#allocation11 + $0x80] sm:$0xff]
        %v1801 = vld [vmem:[#allocation11 + $0x88] sm:$0xff]
        %v1802 = vld [vmem:[#allocation11 + $0x90] sm:$0xff]
        %v1803 = vld [vmem:[#allocation11 + $0x98] sm:$0xff]
        %v1804 = vld [vmem:[#allocation11 + $0xa0] sm:$0xff]
        %v1805 = vld [vmem:[#allocation11 + $0xa8] sm:$0xff]
        %v1806 = vld [vmem:[#allocation11 + $0xb0] sm:$0xff]
        %v1807 = vld [vmem:[#allocation11 + $0xb8] sm:$0xff]
        %v1808 = vld [vmem:[#allocation11 + $0xc0] sm:$0xff]
        %v1809 = vld [vmem:[#allocation11 + $0xc8] sm:$0xff]
        %v1810 = vld [vmem:[#allocation11 + $0xd0] sm:$0xff]
        %v1811 = vld [vmem:[#allocation11 + $0xd8] sm:$0xff]
        %v1812 = vld [vmem:[#allocation11 + $0xe0] sm:$0xff]
        %v1813 = vld [vmem:[#allocation11 + $0xe8] sm:$0xff]
        %v1814 = vld [vmem:[#allocation11 + $0xf0] sm:$0xff]
        %v1815 = vld [vmem:[#allocation11 + $0xf8] sm:$0xff]
        %v1848 = vunpack.c.l.b16 %v1784
        %v1849 = vunpack.c.h.b16 %v1784
        %v1850 = vunpack.c.l.b16 %v1785
        %v1851 = vunpack.c.h.b16 %v1785
        %v1852 = vunpack.c.l.b16 %v1786
        %v1853 = vunpack.c.h.b16 %v1786
        %v1854 = vunpack.c.l.b16 %v1787
        %v1855 = vunpack.c.h.b16 %v1787
        %v1856 = vunpack.c.l.b16 %v1788
        %v1857 = vunpack.c.h.b16 %v1788
        %v1858 = vunpack.c.l.b16 %v1789
        %v1859 = vunpack.c.h.b16 %v1789
        %v1860 = vunpack.c.l.b16 %v1790
        %v1861 = vunpack.c.h.b16 %v1790
        %v1862 = vunpack.c.l.b16 %v1791
        %v1863 = vunpack.c.h.b16 %v1791
        %v1864 = vunpack.c.l.b16 %v1792
        %v1865 = vunpack.c.h.b16 %v1792
        %v1866 = vunpack.c.l.b16 %v1793
        %v1867 = vunpack.c.h.b16 %v1793
        %v1868 = vunpack.c.l.b16 %v1794
        %v1869 = vunpack.c.h.b16 %v1794
        %v1870 = vunpack.c.l.b16 %v1795
        %v1871 = vunpack.c.h.b16 %v1795
        %v1872 = vunpack.c.l.b16 %v1796
        %v1873 = vunpack.c.h.b16 %v1796
        %v1874 = vunpack.c.l.b16 %v1797
        %v1875 = vunpack.c.h.b16 %v1797
        %v1876 = vunpack.c.l.b16 %v1798
        %v1877 = vunpack.c.h.b16 %v1798
        %v1878 = vunpack.c.l.b16 %v1799
        %v1879 = vunpack.c.h.b16 %v1799
        %v1880 = vunpack.c.l.b16 %v1800
        %v1881 = vunpack.c.h.b16 %v1800
        %v1882 = vunpack.c.l.b16 %v1801
        %v1883 = vunpack.c.h.b16 %v1801
        %v1884 = vunpack.c.l.b16 %v1802
        %v1885 = vunpack.c.h.b16 %v1802
        %v1886 = vunpack.c.l.b16 %v1803
        %v1887 = vunpack.c.h.b16 %v1803
        %v1888 = vunpack.c.l.b16 %v1804
        %v1889 = vunpack.c.h.b16 %v1804
        %v1890 = vunpack.c.l.b16 %v1805
        %v1891 = vunpack.c.h.b16 %v1805
        %v1892 = vunpack.c.l.b16 %v1806
        %v1893 = vunpack.c.h.b16 %v1806
        %v1894 = vunpack.c.l.b16 %v1807
        %v1895 = vunpack.c.h.b16 %v1807
        %v1896 = vunpack.c.l.b16 %v1808
        %v1897 = vunpack.c.h.b16 %v1808
        %v1898 = vunpack.c.l.b16 %v1809
        %v1899 = vunpack.c.h.b16 %v1809
        %v1900 = vunpack.c.l.b16 %v1810
        %v1901 = vunpack.c.h.b16 %v1810
        %v1902 = vunpack.c.l.b16 %v1811
        %v1903 = vunpack.c.h.b16 %v1811
        %v1904 = vunpack.c.l.b16 %v1812
        %v1905 = vunpack.c.h.b16 %v1812
        %v1906 = vunpack.c.l.b16 %v1813
        %v1907 = vunpack.c.h.b16 %v1813
        %v1908 = vunpack.c.l.b16 %v1814
        %v1909 = vunpack.c.h.b16 %v1814
        %v1910 = vunpack.c.l.b16 %v1815
        %v1911 = vunpack.c.h.b16 %v1815
        %v1912 = vpack.c.b16 %v1856, %v1848
        %v1913 = vpack.c.b16 %v1857, %v1849
        %v1914 = vpack.c.b16 %v1858, %v1850
        %v1915 = vpack.c.b16 %v1859, %v1851
        %v1916 = vpack.c.b16 %v1860, %v1852
        %v1917 = vpack.c.b16 %v1861, %v1853
        %v1918 = vpack.c.b16 %v1862, %v1854
        %v1919 = vpack.c.b16 %v1863, %v1855
        %v1920 = vpack.c.b16 %v1872, %v1864
        %v1921 = vpack.c.b16 %v1873, %v1865
        %v1922 = vpack.c.b16 %v1874, %v1866
        %v1923 = vpack.c.b16 %v1875, %v1867
        %v1924 = vpack.c.b16 %v1876, %v1868
        %v1925 = vpack.c.b16 %v1877, %v1869
        %v1926 = vpack.c.b16 %v1878, %v1870
        %v1927 = vpack.c.b16 %v1879, %v1871
        %v1928 = vpack.c.b16 %v1888, %v1880
        %v1929 = vpack.c.b16 %v1889, %v1881
        %v1930 = vpack.c.b16 %v1890, %v1882
        %v1931 = vpack.c.b16 %v1891, %v1883
        %v1932 = vpack.c.b16 %v1892, %v1884
        %v1933 = vpack.c.b16 %v1893, %v1885
        %v1934 = vpack.c.b16 %v1894, %v1886
        %v1935 = vpack.c.b16 %v1895, %v1887
        %v1936 = vpack.c.b16 %v1904, %v1896
        %v1937 = vpack.c.b16 %v1905, %v1897
        %v1938 = vpack.c.b16 %v1906, %v1898
        %v1939 = vpack.c.b16 %v1907, %v1899
        %v1940 = vpack.c.b16 %v1908, %v1900
        %v1941 = vpack.c.b16 %v1909, %v1901
        %v1942 = vpack.c.b16 %v1910, %v1902
        %v1943 = vpack.c.b16 %v1911, %v1903
        %v1977 = vsel %vm890, %v665, 0
        %1979 = vmatprep.subr.bf16.mxu0 0
        %1980 = vmatpush1.bf16.msra.mxu0 0
        %1981 = vmatprep.subr.bf16.mxu0 0
        %1982 = vmatpush1.bf16.msra.mxu0 0
        %1983 = vmatprep.subr.bf16.mxu0 0
        %1984 = vmatpush1.bf16.msra.mxu0 0
        %1985 = vmatprep.subr.bf16.mxu0 0
        %1986 = vmatpush1.bf16.msra.mxu0 0
        %1987 = vmatprep.subr.bf16.mxu0 %v1937
        %1988 = vmatpush1.bf16.msra.mxu0 %v1936
        %1989 = vmatprep.subr.bf16.mxu0 %v1929
        %1990 = vmatpush1.bf16.msra.mxu0 %v1928
        %1991 = vmatprep.subr.bf16.mxu0 %v1921
        %1992 = vmatpush1.bf16.msra.mxu0 %v1920
        %1993 = vmatprep.subr.bf16.mxu0 %v1913
        %1994 = vmatpush1.bf16.msra.mxu0 %v1912
        %1995 = vmatprep.subr.bf16.mxu0 0
        %1996 = vmatpush2.bf16.msra.mxu0 0
        %1997 = vmatprep.subr.bf16.mxu0 0
        %1998 = vmatpush2.bf16.msra.mxu0 0
        %1999 = vmatprep.subr.bf16.mxu0 0
        %2000 = vmatpush2.bf16.msra.mxu0 0
        %2001 = vmatprep.subr.bf16.mxu0 0
        %2002 = vmatpush2.bf16.msra.mxu0 0
        %2003 = vmatprep.subr.bf16.mxu0 0
        %2004 = vmatpush2.bf16.msra.mxu0 0
        %2005 = vmatprep.subr.bf16.mxu0 0
        %2006 = vmatpush2.bf16.msra.mxu0 0
        %2007 = vmatprep.subr.bf16.mxu0 0
        %2008 = vmatpush2.bf16.msra.mxu0 0
        %2009 = vmatprep.subr.bf16.mxu0 0
        %2010 = vmatpush2.bf16.msra.mxu0 0
        %2011 = vmatprep.mubr.bf16.mxu0 0
        %2012 = vmatmul.mubr.bf16.gmra.mxu0 %v1977
        %v2013 = vpop.f32.mrf.mxu0
        %v2014 = vadd.f32 0.0, %v2013
        %v2015 = vpop.f32.mrf.mxu0
        %v2016 = vadd.f32 0.0, %v2015
        %v2017 = vpop.f32.mrf.mxu0
        %v2018 = vadd.f32 0.0, %v2017
        %v2019 = vpop.f32.mrf.mxu0
        %v2020 = vadd.f32 0.0, %v2019
        %2021 = vdwg.mxu0
        %2022 = vmatprep.subr.bf16.mxu0 0
        %2023 = vmatpush1.bf16.msra.mxu0 0
        %2024 = vmatprep.subr.bf16.mxu0 0
        %2025 = vmatpush1.bf16.msra.mxu0 0
        %2026 = vmatprep.subr.bf16.mxu0 0
        %2027 = vmatpush1.bf16.msra.mxu0 0
        %2028 = vmatprep.subr.bf16.mxu0 0
        %2029 = vmatpush1.bf16.msra.mxu0 0
        %2030 = vmatprep.subr.bf16.mxu0 %v1939
        %2031 = vmatpush1.bf16.msra.mxu0 %v1938
        %2032 = vmatprep.subr.bf16.mxu0 %v1931
        %2033 = vmatpush1.bf16.msra.mxu0 %v1930
        %2034 = vmatprep.subr.bf16.mxu0 %v1923
        %2035 = vmatpush1.bf16.msra.mxu0 %v1922
        %2036 = vmatprep.subr.bf16.mxu0 %v1915
        %2037 = vmatpush1.bf16.msra.mxu0 %v1914
        %2038 = vmatprep.subr.bf16.mxu0 0
        %2039 = vmatpush2.bf16.msra.mxu0 0
        %2040 = vmatprep.subr.bf16.mxu0 0
        %2041 = vmatpush2.bf16.msra.mxu0 0
        %2042 = vmatprep.subr.bf16.mxu0 0
        %2043 = vmatpush2.bf16.msra.mxu0 0
        %2044 = vmatprep.subr.bf16.mxu0 0
        %2045 = vmatpush2.bf16.msra.mxu0 0
        %2046 = vmatprep.subr.bf16.mxu0 0
        %2047 = vmatpush2.bf16.msra.mxu0 0
        %2048 = vmatprep.subr.bf16.mxu0 0
        %2049 = vmatpush2.bf16.msra.mxu0 0
        %2050 = vmatprep.subr.bf16.mxu0 0
        %2051 = vmatpush2.bf16.msra.mxu0 0
        %2052 = vmatprep.subr.bf16.mxu0 0
        %2053 = vmatpush2.bf16.msra.mxu0 0
        %2054 = vmatprep.mubr.bf16.mxu0 0
        %2055 = vmatmul.mubr.bf16.gmra.mxu0 %v1977
        %v2056 = vpop.f32.mrf.mxu0
        %v2057 = vadd.f32 0.0, %v2056
        %v2058 = vpop.f32.mrf.mxu0
        %v2059 = vadd.f32 0.0, %v2058
        %v2060 = vpop.f32.mrf.mxu0
        %v2061 = vadd.f32 0.0, %v2060
        %v2062 = vpop.f32.mrf.mxu0
        %v2063 = vadd.f32 0.0, %v2062
        %2064 = vdwg.mxu0
        %2065 = vmatprep.subr.bf16.mxu0 0
        %2066 = vmatpush1.bf16.msra.mxu0 0
        %2067 = vmatprep.subr.bf16.mxu0 0
        %2068 = vmatpush1.bf16.msra.mxu0 0
        %2069 = vmatprep.subr.bf16.mxu0 0
        %2070 = vmatpush1.bf16.msra.mxu0 0
        %2071 = vmatprep.subr.bf16.mxu0 0
        %2072 = vmatpush1.bf16.msra.mxu0 0
        %2073 = vmatprep.subr.bf16.mxu0 %v1941
        %2074 = vmatpush1.bf16.msra.mxu0 %v1940
        %2075 = vmatprep.subr.bf16.mxu0 %v1933
        %2076 = vmatpush1.bf16.msra.mxu0 %v1932
        %2077 = vmatprep.subr.bf16.mxu0 %v1925
        %2078 = vmatpush1.bf16.msra.mxu0 %v1924
        %2079 = vmatprep.subr.bf16.mxu0 %v1917
        %2080 = vmatpush1.bf16.msra.mxu0 %v1916
        %2081 = vmatprep.subr.bf16.mxu0 0
        %2082 = vmatpush2.bf16.msra.mxu0 0
        %2083 = vmatprep.subr.bf16.mxu0 0
        %2084 = vmatpush2.bf16.msra.mxu0 0
        %2085 = vmatprep.subr.bf16.mxu0 0
        %2086 = vmatpush2.bf16.msra.mxu0 0
        %2087 = vmatprep.subr.bf16.mxu0 0
        %2088 = vmatpush2.bf16.msra.mxu0 0
        %2089 = vmatprep.subr.bf16.mxu0 0
        %2090 = vmatpush2.bf16.msra.mxu0 0
        %2091 = vmatprep.subr.bf16.mxu0 0
        %2092 = vmatpush2.bf16.msra.mxu0 0
        %2093 = vmatprep.subr.bf16.mxu0 0
        %2094 = vmatpush2.bf16.msra.mxu0 0
        %2095 = vmatprep.subr.bf16.mxu0 0
        %2096 = vmatpush2.bf16.msra.mxu0 0
        %2097 = vmatprep.mubr.bf16.mxu0 0
        %2098 = vmatmul.mubr.bf16.gmra.mxu0 %v1977
        %v2099 = vpop.f32.mrf.mxu0
        %v2100 = vadd.f32 0.0, %v2099
        %v2101 = vpop.f32.mrf.mxu0
        %v2102 = vadd.f32 0.0, %v2101
        %v2103 = vpop.f32.mrf.mxu0
        %v2104 = vadd.f32 0.0, %v2103
        %v2105 = vpop.f32.mrf.mxu0
        %v2106 = vadd.f32 0.0, %v2105
        %2107 = vdwg.mxu0
        %2108 = vmatprep.subr.bf16.mxu0 0
        %2109 = vmatpush1.bf16.msra.mxu0 0
        %2110 = vmatprep.subr.bf16.mxu0 0
        %2111 = vmatpush1.bf16.msra.mxu0 0
        %2112 = vmatprep.subr.bf16.mxu0 0
        %2113 = vmatpush1.bf16.msra.mxu0 0
        %2114 = vmatprep.subr.bf16.mxu0 0
        %2115 = vmatpush1.bf16.msra.mxu0 0
        %2116 = vmatprep.subr.bf16.mxu0 %v1943
        %2117 = vmatpush1.bf16.msra.mxu0 %v1942
        %2118 = vmatprep.subr.bf16.mxu0 %v1935
        %2119 = vmatpush1.bf16.msra.mxu0 %v1934
        %2120 = vmatprep.subr.bf16.mxu0 %v1927
        %2121 = vmatpush1.bf16.msra.mxu0 %v1926
        %2122 = vmatprep.subr.bf16.mxu0 %v1919
        %2123 = vmatpush1.bf16.msra.mxu0 %v1918
        %2124 = vmatprep.subr.bf16.mxu0 0
        %2125 = vmatpush2.bf16.msra.mxu0 0
        %2126 = vmatprep.subr.bf16.mxu0 0
        %2127 = vmatpush2.bf16.msra.mxu0 0
        %2128 = vmatprep.subr.bf16.mxu0 0
        %2129 = vmatpush2.bf16.msra.mxu0 0
        %2130 = vmatprep.subr.bf16.mxu0 0
        %2131 = vmatpush2.bf16.msra.mxu0 0
        %2132 = vmatprep.subr.bf16.mxu0 0
        %2133 = vmatpush2.bf16.msra.mxu0 0
        %2134 = vmatprep.subr.bf16.mxu0 0
        %2135 = vmatpush2.bf16.msra.mxu0 0
        %2136 = vmatprep.subr.bf16.mxu0 0
        %2137 = vmatpush2.bf16.msra.mxu0 0
        %2138 = vmatprep.subr.bf16.mxu0 0
        %2139 = vmatpush2.bf16.msra.mxu0 0
        %2140 = vmatprep.mubr.bf16.mxu0 0
        %2141 = vmatmul.mubr.bf16.gmra.mxu0 %v1977
        %v2142 = vpop.f32.mrf.mxu0
        %v2143 = vadd.f32 0.0, %v2142
        %v2144 = vpop.f32.mrf.mxu0
        %v2145 = vadd.f32 0.0, %v2144
        %v2146 = vpop.f32.mrf.mxu0
        %v2147 = vadd.f32 0.0, %v2146
        %v2148 = vpop.f32.mrf.mxu0
        %v2149 = vadd.f32 0.0, %v2148
        %2150 = vdwg.mxu0
        %v2151 = vadd.f32 %v1768, %v2014
        %v2152 = vadd.f32 %v1769, %v2016
        %v2153 = vadd.f32 %v1770, %v2057
        %v2154 = vadd.f32 %v1771, %v2059
        %v2155 = vadd.f32 %v1772, %v2100
        %v2156 = vadd.f32 %v1773, %v2102
        %v2157 = vadd.f32 %v1774, %v2143
        %v2158 = vadd.f32 %v1775, %v2145
        %v2159 = vadd.f32 %v1776, %v2018
        %v2160 = vadd.f32 %v1777, %v2020
        %v2161 = vadd.f32 %v1778, %v2061
        %v2162 = vadd.f32 %v1779, %v2063
        %v2163 = vadd.f32 %v1780, %v2104
        %v2164 = vadd.f32 %v1781, %v2106
        %v2165 = vadd.f32 %v1782, %v2147
        %v2166 = vadd.f32 %v1783, %v2149
        %v2167 = vld [vmem:[#allocation13] sm:$0xff]
        %v2169 = vlaneseq
        %v2170 = vshrl.u32 %v2169, 7
        %v2171 = vsub.s32 0, %v2170
        %v2172 = vrot.slane %v2167, %v2171
        %v2173 = vlaneseq
        %v2174 = vshrl.u32 %v2173, 7
        %v2175 = vsub.s32 1, %v2174
        %v2176 = vrot.slane %v2167, %v2175
        %v2177 = vlaneseq
        %v2178 = vshrl.u32 %v2177, 7
        %v2179 = vsub.s32 2, %v2178
        %v2180 = vrot.slane %v2167, %v2179
        %v2181 = vlaneseq
        %v2182 = vshrl.u32 %v2181, 7
        %v2183 = vsub.s32 3, %v2182
        %v2184 = vrot.slane %v2167, %v2183
        %v2185 = vlaneseq
        %v2186 = vshrl.u32 %v2185, 7
        %v2187 = vsub.s32 4, %v2186
        %v2188 = vrot.slane %v2167, %v2187
        %v2189 = vlaneseq
        %v2190 = vshrl.u32 %v2189, 7
        %v2191 = vsub.s32 5, %v2190
        %v2192 = vrot.slane %v2167, %v2191
        %v2193 = vlaneseq
        %v2194 = vshrl.u32 %v2193, 7
        %v2195 = vsub.s32 6, %v2194
        %v2196 = vrot.slane %v2167, %v2195
        %v2197 = vlaneseq
        %v2198 = vshrl.u32 %v2197, 7
        %v2199 = vsub.s32 7, %v2198
        %v2200 = vrot.slane %v2167, %v2199
        %v2209 = vadd.f32 %v2151, %v2172
        %v2210 = vadd.f32 %v2152, %v2176
        %v2211 = vadd.f32 %v2153, %v2180
        %v2212 = vadd.f32 %v2154, %v2184
        %v2213 = vadd.f32 %v2155, %v2188
        %v2214 = vadd.f32 %v2156, %v2192
        %v2215 = vadd.f32 %v2157, %v2196
        %v2216 = vadd.f32 %v2158, %v2200
        %v2217 = vadd.f32 %v2159, %v2172
        %v2218 = vadd.f32 %v2160, %v2176
        %v2219 = vadd.f32 %v2161, %v2180
        %v2220 = vadd.f32 %v2162, %v2184
        %v2221 = vadd.f32 %v2163, %v2188
        %v2222 = vadd.f32 %v2164, %v2192
        %v2223 = vadd.f32 %v2165, %v2196
        %v2224 = vadd.f32 %v2166, %v2200
        %v2225 = vtanh.pop %v2209
        %v2226 = vtanh.pop %v2210
        %v2227 = vtanh.pop %v2211
        %v2228 = vtanh.pop %v2212
        %v2229 = vtanh.pop %v2213
        %v2230 = vtanh.pop %v2214
        %v2231 = vtanh.pop %v2215
        %v2232 = vtanh.pop %v2216
        %v2233 = vtanh.pop %v2217
        %v2234 = vtanh.pop %v2218
        %v2235 = vtanh.pop %v2219
        %v2236 = vtanh.pop %v2220
        %v2237 = vtanh.pop %v2221
        %v2238 = vtanh.pop %v2222
        %v2239 = vtanh.pop %v2223
        %v2240 = vtanh.pop %v2224
        %v2241 = vpack.c.bf16 %v2233, %v2225
        %v2242 = vpack.c.bf16 %v2234, %v2226
        %v2243 = vpack.c.bf16 %v2235, %v2227
        %v2244 = vpack.c.bf16 %v2236, %v2228
        %v2245 = vpack.c.bf16 %v2237, %v2229
        %v2246 = vpack.c.bf16 %v2238, %v2230
        %v2247 = vpack.c.bf16 %v2239, %v2231
        %v2248 = vpack.c.bf16 %v2240, %v2232
        %v2249 = vld [vmem:[#allocation14] sm:$0xff]
        %v2250 = vld [vmem:[#allocation14 + $0x8] sm:$0xff]
        %v2251 = vld [vmem:[#allocation14 + $0x10] sm:$0xff]
        %v2252 = vld [vmem:[#allocation14 + $0x18] sm:$0xff]
        %v2253 = vld [vmem:[#allocation14 + $0x20] sm:$0xff]
        %v2254 = vld [vmem:[#allocation14 + $0x28] sm:$0xff]
        %v2255 = vld [vmem:[#allocation14 + $0x30] sm:$0xff]
        %v2256 = vld [vmem:[#allocation14 + $0x38] sm:$0xff]
        %v2257 = vld [vmem:[#allocation14 + $0x40] sm:$0xff]
        %v2258 = vld [vmem:[#allocation14 + $0x48] sm:$0xff]
        %v2259 = vld [vmem:[#allocation14 + $0x50] sm:$0xff]
        %v2260 = vld [vmem:[#allocation14 + $0x58] sm:$0xff]
        %v2261 = vld [vmem:[#allocation14 + $0x60] sm:$0xff]
        %v2262 = vld [vmem:[#allocation14 + $0x68] sm:$0xff]
        %v2263 = vld [vmem:[#allocation14 + $0x70] sm:$0xff]
        %v2264 = vld [vmem:[#allocation14 + $0x78] sm:$0xff]
        %v2265 = vld [vmem:[#allocation14 + $0x80] sm:$0xff]
        %v2266 = vld [vmem:[#allocation14 + $0x88] sm:$0xff]
        %v2267 = vld [vmem:[#allocation14 + $0x90] sm:$0xff]
        %v2268 = vld [vmem:[#allocation14 + $0x98] sm:$0xff]
        %v2269 = vld [vmem:[#allocation14 + $0xa0] sm:$0xff]
        %v2270 = vld [vmem:[#allocation14 + $0xa8] sm:$0xff]
        %v2271 = vld [vmem:[#allocation14 + $0xb0] sm:$0xff]
        %v2272 = vld [vmem:[#allocation14 + $0xb8] sm:$0xff]
        %v2273 = vld [vmem:[#allocation14 + $0xc0] sm:$0xff]
        %v2274 = vld [vmem:[#allocation14 + $0xc8] sm:$0xff]
        %v2275 = vld [vmem:[#allocation14 + $0xd0] sm:$0xff]
        %v2276 = vld [vmem:[#allocation14 + $0xd8] sm:$0xff]
        %v2277 = vld [vmem:[#allocation14 + $0xe0] sm:$0xff]
        %v2278 = vld [vmem:[#allocation14 + $0xe8] sm:$0xff]
        %v2279 = vld [vmem:[#allocation14 + $0xf0] sm:$0xff]
        %v2280 = vld [vmem:[#allocation14 + $0xf8] sm:$0xff]
        %v2281 = vld [vmem:[#allocation14 + $0x100] sm:$0xff]
        %v2282 = vld [vmem:[#allocation14 + $0x108] sm:$0xff]
        %v2283 = vld [vmem:[#allocation14 + $0x110] sm:$0xff]
        %v2284 = vld [vmem:[#allocation14 + $0x118] sm:$0xff]
        %v2285 = vld [vmem:[#allocation14 + $0x120] sm:$0xff]
        %v2286 = vld [vmem:[#allocation14 + $0x128] sm:$0xff]
        %v2287 = vld [vmem:[#allocation14 + $0x130] sm:$0xff]
        %v2288 = vld [vmem:[#allocation14 + $0x138] sm:$0xff]
        %v2289 = vld [vmem:[#allocation14 + $0x140] sm:$0xff]
        %v2290 = vld [vmem:[#allocation14 + $0x148] sm:$0xff]
        %v2291 = vld [vmem:[#allocation14 + $0x150] sm:$0xff]
        %v2292 = vld [vmem:[#allocation14 + $0x158] sm:$0xff]
        %v2293 = vld [vmem:[#allocation14 + $0x160] sm:$0xff]
        %v2294 = vld [vmem:[#allocation14 + $0x168] sm:$0xff]
        %v2295 = vld [vmem:[#allocation14 + $0x170] sm:$0xff]
        %v2296 = vld [vmem:[#allocation14 + $0x178] sm:$0xff]
        %v2297 = vld [vmem:[#allocation14 + $0x180] sm:$0xff]
        %v2298 = vld [vmem:[#allocation14 + $0x188] sm:$0xff]
        %v2299 = vld [vmem:[#allocation14 + $0x190] sm:$0xff]
        %v2300 = vld [vmem:[#allocation14 + $0x198] sm:$0xff]
        %v2301 = vld [vmem:[#allocation14 + $0x1a0] sm:$0xff]
        %v2302 = vld [vmem:[#allocation14 + $0x1a8] sm:$0xff]
        %v2303 = vld [vmem:[#allocation14 + $0x1b0] sm:$0xff]
        %v2304 = vld [vmem:[#allocation14 + $0x1b8] sm:$0xff]
        %v2305 = vld [vmem:[#allocation14 + $0x1c0] sm:$0xff]
        %v2306 = vld [vmem:[#allocation14 + $0x1c8] sm:$0xff]
        %v2307 = vld [vmem:[#allocation14 + $0x1d0] sm:$0xff]
        %v2308 = vld [vmem:[#allocation14 + $0x1d8] sm:$0xff]
        %v2309 = vld [vmem:[#allocation14 + $0x1e0] sm:$0xff]
        %v2310 = vld [vmem:[#allocation14 + $0x1e8] sm:$0xff]
        %v2311 = vld [vmem:[#allocation14 + $0x1f0] sm:$0xff]
        %v2312 = vld [vmem:[#allocation14 + $0x1f8] sm:$0xff]
        %v2313 = vld [vmem:[#allocation14 + $0x200] sm:$0xff]
        %v2314 = vld [vmem:[#allocation14 + $0x208] sm:$0xff]
        %v2315 = vld [vmem:[#allocation14 + $0x210] sm:$0xff]
        %v2316 = vld [vmem:[#allocation14 + $0x218] sm:$0xff]
        %v2317 = vld [vmem:[#allocation14 + $0x220] sm:$0xff]
        %v2318 = vld [vmem:[#allocation14 + $0x228] sm:$0xff]
        %v2319 = vld [vmem:[#allocation14 + $0x230] sm:$0xff]
        %v2320 = vld [vmem:[#allocation14 + $0x238] sm:$0xff]
        %v2321 = vld [vmem:[#allocation14 + $0x240] sm:$0xff]
        %v2322 = vld [vmem:[#allocation14 + $0x248] sm:$0xff]
        %v2323 = vld [vmem:[#allocation14 + $0x250] sm:$0xff]
        %v2324 = vld [vmem:[#allocation14 + $0x258] sm:$0xff]
        %v2325 = vld [vmem:[#allocation14 + $0x260] sm:$0xff]
        %v2326 = vld [vmem:[#allocation14 + $0x268] sm:$0xff]
        %v2327 = vld [vmem:[#allocation14 + $0x270] sm:$0xff]
        %v2328 = vld [vmem:[#allocation14 + $0x278] sm:$0xff]
        %v2329 = vld [vmem:[#allocation14 + $0x280] sm:$0xff]
        %v2330 = vld [vmem:[#allocation14 + $0x288] sm:$0xff]
        %v2331 = vld [vmem:[#allocation14 + $0x290] sm:$0xff]
        %v2332 = vld [vmem:[#allocation14 + $0x298] sm:$0xff]
        %v2333 = vld [vmem:[#allocation14 + $0x2a0] sm:$0xff]
        %v2334 = vld [vmem:[#allocation14 + $0x2a8] sm:$0xff]
        %v2335 = vld [vmem:[#allocation14 + $0x2b0] sm:$0xff]
        %v2336 = vld [vmem:[#allocation14 + $0x2b8] sm:$0xff]
        %v2337 = vld [vmem:[#allocation14 + $0x2c0] sm:$0xff]
        %v2338 = vld [vmem:[#allocation14 + $0x2c8] sm:$0xff]
        %v2339 = vld [vmem:[#allocation14 + $0x2d0] sm:$0xff]
        %v2340 = vld [vmem:[#allocation14 + $0x2d8] sm:$0xff]
        %v2341 = vld [vmem:[#allocation14 + $0x2e0] sm:$0xff]
        %v2342 = vld [vmem:[#allocation14 + $0x2e8] sm:$0xff]
        %v2343 = vld [vmem:[#allocation14 + $0x2f0] sm:$0xff]
        %v2344 = vld [vmem:[#allocation14 + $0x2f8] sm:$0xff]
        %v2345 = vld [vmem:[#allocation14 + $0x300] sm:$0xff]
        %v2346 = vld [vmem:[#allocation14 + $0x308] sm:$0xff]
        %v2347 = vld [vmem:[#allocation14 + $0x310] sm:$0xff]
        %v2348 = vld [vmem:[#allocation14 + $0x318] sm:$0xff]
        %v2349 = vld [vmem:[#allocation14 + $0x320] sm:$0xff]
        %v2350 = vld [vmem:[#allocation14 + $0x328] sm:$0xff]
        %v2351 = vld [vmem:[#allocation14 + $0x330] sm:$0xff]
        %v2352 = vld [vmem:[#allocation14 + $0x338] sm:$0xff]
        %v2353 = vld [vmem:[#allocation14 + $0x340] sm:$0xff]
        %v2354 = vld [vmem:[#allocation14 + $0x348] sm:$0xff]
        %v2355 = vld [vmem:[#allocation14 + $0x350] sm:$0xff]
        %v2356 = vld [vmem:[#allocation14 + $0x358] sm:$0xff]
        %v2357 = vld [vmem:[#allocation14 + $0x360] sm:$0xff]
        %v2358 = vld [vmem:[#allocation14 + $0x368] sm:$0xff]
        %v2359 = vld [vmem:[#allocation14 + $0x370] sm:$0xff]
        %v2360 = vld [vmem:[#allocation14 + $0x378] sm:$0xff]
        %v2361 = vld [vmem:[#allocation14 + $0x380] sm:$0xff]
        %v2362 = vld [vmem:[#allocation14 + $0x388] sm:$0xff]
        %v2363 = vld [vmem:[#allocation14 + $0x390] sm:$0xff]
        %v2364 = vld [vmem:[#allocation14 + $0x398] sm:$0xff]
        %v2365 = vld [vmem:[#allocation14 + $0x3a0] sm:$0xff]
        %v2366 = vld [vmem:[#allocation14 + $0x3a8] sm:$0xff]
        %v2367 = vld [vmem:[#allocation14 + $0x3b0] sm:$0xff]
        %v2368 = vld [vmem:[#allocation14 + $0x3b8] sm:$0xff]
        %v2369 = vld [vmem:[#allocation14 + $0x3c0] sm:$0xff]
        %v2370 = vld [vmem:[#allocation14 + $0x3c8] sm:$0xff]
        %v2371 = vld [vmem:[#allocation14 + $0x3d0] sm:$0xff]
        %v2372 = vld [vmem:[#allocation14 + $0x3d8] sm:$0xff]
        %v2373 = vld [vmem:[#allocation14 + $0x3e0] sm:$0xff]
        %v2374 = vld [vmem:[#allocation14 + $0x3e8] sm:$0xff]
        %v2375 = vld [vmem:[#allocation14 + $0x3f0] sm:$0xff]
        %v2376 = vld [vmem:[#allocation14 + $0x3f8] sm:$0xff]
        %v2377 = vld [vmem:[#allocation14 + $0x400] sm:$0xff]
        %v2378 = vld [vmem:[#allocation14 + $0x408] sm:$0xff]
        %v2379 = vld [vmem:[#allocation14 + $0x410] sm:$0xff]
        %v2380 = vld [vmem:[#allocation14 + $0x418] sm:$0xff]
        %v2381 = vld [vmem:[#allocation14 + $0x420] sm:$0xff]
        %v2382 = vld [vmem:[#allocation14 + $0x428] sm:$0xff]
        %v2383 = vld [vmem:[#allocation14 + $0x430] sm:$0xff]
        %v2384 = vld [vmem:[#allocation14 + $0x438] sm:$0xff]
        %v2385 = vld [vmem:[#allocation14 + $0x440] sm:$0xff]
        %v2386 = vld [vmem:[#allocation14 + $0x448] sm:$0xff]
        %v2387 = vld [vmem:[#allocation14 + $0x450] sm:$0xff]
        %v2388 = vld [vmem:[#allocation14 + $0x458] sm:$0xff]
        %v2389 = vld [vmem:[#allocation14 + $0x460] sm:$0xff]
        %v2390 = vld [vmem:[#allocation14 + $0x468] sm:$0xff]
        %v2391 = vld [vmem:[#allocation14 + $0x470] sm:$0xff]
        %v2392 = vld [vmem:[#allocation14 + $0x478] sm:$0xff]
        %v2393 = vld [vmem:[#allocation14 + $0x480] sm:$0xff]
        %v2394 = vld [vmem:[#allocation14 + $0x488] sm:$0xff]
        %v2395 = vld [vmem:[#allocation14 + $0x490] sm:$0xff]
        %v2396 = vld [vmem:[#allocation14 + $0x498] sm:$0xff]
        %v2397 = vld [vmem:[#allocation14 + $0x4a0] sm:$0xff]
        %v2398 = vld [vmem:[#allocation14 + $0x4a8] sm:$0xff]
        %v2399 = vld [vmem:[#allocation14 + $0x4b0] sm:$0xff]
        %v2400 = vld [vmem:[#allocation14 + $0x4b8] sm:$0xff]
        %v2401 = vld [vmem:[#allocation14 + $0x4c0] sm:$0xff]
        %v2402 = vld [vmem:[#allocation14 + $0x4c8] sm:$0xff]
        %v2403 = vld [vmem:[#allocation14 + $0x4d0] sm:$0xff]
        %v2404 = vld [vmem:[#allocation14 + $0x4d8] sm:$0xff]
        %v2405 = vld [vmem:[#allocation14 + $0x4e0] sm:$0xff]
        %v2406 = vld [vmem:[#allocation14 + $0x4e8] sm:$0xff]
        %v2407 = vld [vmem:[#allocation14 + $0x4f0] sm:$0xff]
        %v2408 = vld [vmem:[#allocation14 + $0x4f8] sm:$0xff]
        %v2409 = vld [vmem:[#allocation14 + $0x500] sm:$0xff]
        %v2410 = vld [vmem:[#allocation14 + $0x508] sm:$0xff]
        %v2411 = vld [vmem:[#allocation14 + $0x510] sm:$0xff]
        %v2412 = vld [vmem:[#allocation14 + $0x518] sm:$0xff]
        %v2413 = vld [vmem:[#allocation14 + $0x520] sm:$0xff]
        %v2414 = vld [vmem:[#allocation14 + $0x528] sm:$0xff]
        %v2415 = vld [vmem:[#allocation14 + $0x530] sm:$0xff]
        %v2416 = vld [vmem:[#allocation14 + $0x538] sm:$0xff]
        %v2417 = vld [vmem:[#allocation14 + $0x540] sm:$0xff]
        %v2418 = vld [vmem:[#allocation14 + $0x548] sm:$0xff]
        %v2419 = vld [vmem:[#allocation14 + $0x550] sm:$0xff]
        %v2420 = vld [vmem:[#allocation14 + $0x558] sm:$0xff]
        %v2421 = vld [vmem:[#allocation14 + $0x560] sm:$0xff]
        %v2422 = vld [vmem:[#allocation14 + $0x568] sm:$0xff]
        %v2423 = vld [vmem:[#allocation14 + $0x570] sm:$0xff]
        %v2424 = vld [vmem:[#allocation14 + $0x578] sm:$0xff]
        %v2425 = vld [vmem:[#allocation14 + $0x580] sm:$0xff]
        %v2426 = vld [vmem:[#allocation14 + $0x588] sm:$0xff]
        %v2427 = vld [vmem:[#allocation14 + $0x590] sm:$0xff]
        %v2428 = vld [vmem:[#allocation14 + $0x598] sm:$0xff]
        %v2429 = vld [vmem:[#allocation14 + $0x5a0] sm:$0xff]
        %v2430 = vld [vmem:[#allocation14 + $0x5a8] sm:$0xff]
        %v2431 = vld [vmem:[#allocation14 + $0x5b0] sm:$0xff]
        %v2432 = vld [vmem:[#allocation14 + $0x5b8] sm:$0xff]
        %v2433 = vld [vmem:[#allocation14 + $0x5c0] sm:$0xff]
        %v2434 = vld [vmem:[#allocation14 + $0x5c8] sm:$0xff]
        %v2435 = vld [vmem:[#allocation14 + $0x5d0] sm:$0xff]
        %v2436 = vld [vmem:[#allocation14 + $0x5d8] sm:$0xff]
        %v2437 = vld [vmem:[#allocation14 + $0x5e0] sm:$0xff]
        %v2438 = vld [vmem:[#allocation14 + $0x5e8] sm:$0xff]
        %v2439 = vld [vmem:[#allocation14 + $0x5f0] sm:$0xff]
        %v2440 = vld [vmem:[#allocation14 + $0x5f8] sm:$0xff]
        %v2441 = vld [vmem:[#allocation14 + $0x600] sm:$0xff]
        %v2442 = vld [vmem:[#allocation14 + $0x608] sm:$0xff]
        %v2443 = vld [vmem:[#allocation14 + $0x610] sm:$0xff]
        %v2444 = vld [vmem:[#allocation14 + $0x618] sm:$0xff]
        %v2445 = vld [vmem:[#allocation14 + $0x620] sm:$0xff]
        %v2446 = vld [vmem:[#allocation14 + $0x628] sm:$0xff]
        %v2447 = vld [vmem:[#allocation14 + $0x630] sm:$0xff]
        %v2448 = vld [vmem:[#allocation14 + $0x638] sm:$0xff]
        %v2449 = vld [vmem:[#allocation14 + $0x640] sm:$0xff]
        %v2450 = vld [vmem:[#allocation14 + $0x648] sm:$0xff]
        %v2451 = vld [vmem:[#allocation14 + $0x650] sm:$0xff]
        %v2452 = vld [vmem:[#allocation14 + $0x658] sm:$0xff]
        %v2453 = vld [vmem:[#allocation14 + $0x660] sm:$0xff]
        %v2454 = vld [vmem:[#allocation14 + $0x668] sm:$0xff]
        %v2455 = vld [vmem:[#allocation14 + $0x670] sm:$0xff]
        %v2456 = vld [vmem:[#allocation14 + $0x678] sm:$0xff]
        %v2457 = vld [vmem:[#allocation14 + $0x680] sm:$0xff]
        %v2458 = vld [vmem:[#allocation14 + $0x688] sm:$0xff]
        %v2459 = vld [vmem:[#allocation14 + $0x690] sm:$0xff]
        %v2460 = vld [vmem:[#allocation14 + $0x698] sm:$0xff]
        %v2461 = vld [vmem:[#allocation14 + $0x6a0] sm:$0xff]
        %v2462 = vld [vmem:[#allocation14 + $0x6a8] sm:$0xff]
        %v2463 = vld [vmem:[#allocation14 + $0x6b0] sm:$0xff]
        %v2464 = vld [vmem:[#allocation14 + $0x6b8] sm:$0xff]
        %v2465 = vld [vmem:[#allocation14 + $0x6c0] sm:$0xff]
        %v2466 = vld [vmem:[#allocation14 + $0x6c8] sm:$0xff]
        %v2467 = vld [vmem:[#allocation14 + $0x6d0] sm:$0xff]
        %v2468 = vld [vmem:[#allocation14 + $0x6d8] sm:$0xff]
        %v2469 = vld [vmem:[#allocation14 + $0x6e0] sm:$0xff]
        %v2470 = vld [vmem:[#allocation14 + $0x6e8] sm:$0xff]
        %v2471 = vld [vmem:[#allocation14 + $0x6f0] sm:$0xff]
        %v2472 = vld [vmem:[#allocation14 + $0x6f8] sm:$0xff]
        %v2473 = vld [vmem:[#allocation14 + $0x700] sm:$0xff]
        %v2474 = vld [vmem:[#allocation14 + $0x708] sm:$0xff]
        %v2475 = vld [vmem:[#allocation14 + $0x710] sm:$0xff]
        %v2476 = vld [vmem:[#allocation14 + $0x718] sm:$0xff]
        %v2477 = vld [vmem:[#allocation14 + $0x720] sm:$0xff]
        %v2478 = vld [vmem:[#allocation14 + $0x728] sm:$0xff]
        %v2479 = vld [vmem:[#allocation14 + $0x730] sm:$0xff]
        %v2480 = vld [vmem:[#allocation14 + $0x738] sm:$0xff]
        %v2481 = vld [vmem:[#allocation14 + $0x740] sm:$0xff]
        %v2482 = vld [vmem:[#allocation14 + $0x748] sm:$0xff]
        %v2483 = vld [vmem:[#allocation14 + $0x750] sm:$0xff]
        %v2484 = vld [vmem:[#allocation14 + $0x758] sm:$0xff]
        %v2485 = vld [vmem:[#allocation14 + $0x760] sm:$0xff]
        %v2486 = vld [vmem:[#allocation14 + $0x768] sm:$0xff]
        %v2487 = vld [vmem:[#allocation14 + $0x770] sm:$0xff]
        %v2488 = vld [vmem:[#allocation14 + $0x778] sm:$0xff]
        %v2489 = vld [vmem:[#allocation14 + $0x780] sm:$0xff]
        %v2490 = vld [vmem:[#allocation14 + $0x788] sm:$0xff]
        %v2491 = vld [vmem:[#allocation14 + $0x790] sm:$0xff]
        %v2492 = vld [vmem:[#allocation14 + $0x798] sm:$0xff]
        %v2493 = vld [vmem:[#allocation14 + $0x7a0] sm:$0xff]
        %v2494 = vld [vmem:[#allocation14 + $0x7a8] sm:$0xff]
        %v2495 = vld [vmem:[#allocation14 + $0x7b0] sm:$0xff]
        %v2496 = vld [vmem:[#allocation14 + $0x7b8] sm:$0xff]
        %v2497 = vld [vmem:[#allocation14 + $0x7c0] sm:$0xff]
        %v2498 = vld [vmem:[#allocation14 + $0x7c8] sm:$0xff]
        %v2499 = vld [vmem:[#allocation14 + $0x7d0] sm:$0xff]
        %v2500 = vld [vmem:[#allocation14 + $0x7d8] sm:$0xff]
        %v2501 = vld [vmem:[#allocation14 + $0x7e0] sm:$0xff]
        %v2502 = vld [vmem:[#allocation14 + $0x7e8] sm:$0xff]
        %v2503 = vld [vmem:[#allocation14 + $0x7f0] sm:$0xff]
        %v2504 = vld [vmem:[#allocation14 + $0x7f8] sm:$0xff]
        %v2505 = vld [vmem:[#allocation14 + $0x800] sm:$0xff]
        %v2506 = vld [vmem:[#allocation14 + $0x808] sm:$0xff]
        %v2507 = vld [vmem:[#allocation14 + $0x810] sm:$0xff]
        %v2508 = vld [vmem:[#allocation14 + $0x818] sm:$0xff]
        %v2509 = vld [vmem:[#allocation14 + $0x820] sm:$0xff]
        %v2510 = vld [vmem:[#allocation14 + $0x828] sm:$0xff]
        %v2511 = vld [vmem:[#allocation14 + $0x830] sm:$0xff]
        %v2512 = vld [vmem:[#allocation14 + $0x838] sm:$0xff]
        %v2513 = vld [vmem:[#allocation14 + $0x840] sm:$0xff]
        %v2514 = vld [vmem:[#allocation14 + $0x848] sm:$0xff]
        %v2515 = vld [vmem:[#allocation14 + $0x850] sm:$0xff]
        %v2516 = vld [vmem:[#allocation14 + $0x858] sm:$0xff]
        %v2517 = vld [vmem:[#allocation14 + $0x860] sm:$0xff]
        %v2518 = vld [vmem:[#allocation14 + $0x868] sm:$0xff]
        %v2519 = vld [vmem:[#allocation14 + $0x870] sm:$0xff]
        %v2520 = vld [vmem:[#allocation14 + $0x878] sm:$0xff]
        %v2521 = vld [vmem:[#allocation14 + $0x880] sm:$0xff]
        %v2522 = vld [vmem:[#allocation14 + $0x888] sm:$0xff]
        %v2523 = vld [vmem:[#allocation14 + $0x890] sm:$0xff]
        %v2524 = vld [vmem:[#allocation14 + $0x898] sm:$0xff]
        %v2525 = vld [vmem:[#allocation14 + $0x8a0] sm:$0xff]
        %v2526 = vld [vmem:[#allocation14 + $0x8a8] sm:$0xff]
        %v2527 = vld [vmem:[#allocation14 + $0x8b0] sm:$0xff]
        %v2528 = vld [vmem:[#allocation14 + $0x8b8] sm:$0xff]
        %v2529 = vld [vmem:[#allocation14 + $0x8c0] sm:$0xff]
        %v2530 = vld [vmem:[#allocation14 + $0x8c8] sm:$0xff]
        %v2531 = vld [vmem:[#allocation14 + $0x8d0] sm:$0xff]
        %v2532 = vld [vmem:[#allocation14 + $0x8d8] sm:$0xff]
        %v2533 = vld [vmem:[#allocation14 + $0x8e0] sm:$0xff]
        %v2534 = vld [vmem:[#allocation14 + $0x8e8] sm:$0xff]
        %v2535 = vld [vmem:[#allocation14 + $0x8f0] sm:$0xff]
        %v2536 = vld [vmem:[#allocation14 + $0x8f8] sm:$0xff]
        %v2537 = vld [vmem:[#allocation14 + $0x900] sm:$0xff]
        %v2538 = vld [vmem:[#allocation14 + $0x908] sm:$0xff]
        %v2539 = vld [vmem:[#allocation14 + $0x910] sm:$0xff]
        %v2540 = vld [vmem:[#allocation14 + $0x918] sm:$0xff]
        %v2541 = vld [vmem:[#allocation14 + $0x920] sm:$0xff]
        %v2542 = vld [vmem:[#allocation14 + $0x928] sm:$0xff]
        %v2543 = vld [vmem:[#allocation14 + $0x930] sm:$0xff]
        %v2544 = vld [vmem:[#allocation14 + $0x938] sm:$0xff]
        %v2545 = vld [vmem:[#allocation14 + $0x940] sm:$0xff]
        %v2546 = vld [vmem:[#allocation14 + $0x948] sm:$0xff]
        %v2547 = vld [vmem:[#allocation14 + $0x950] sm:$0xff]
        %v2548 = vld [vmem:[#allocation14 + $0x958] sm:$0xff]
        %v2549 = vld [vmem:[#allocation14 + $0x960] sm:$0xff]
        %v2550 = vld [vmem:[#allocation14 + $0x968] sm:$0xff]
        %v2551 = vld [vmem:[#allocation14 + $0x970] sm:$0xff]
        %v2552 = vld [vmem:[#allocation14 + $0x978] sm:$0xff]
        %v2553 = vld [vmem:[#allocation14 + $0x980] sm:$0xff]
        %v2554 = vld [vmem:[#allocation14 + $0x988] sm:$0xff]
        %v2555 = vld [vmem:[#allocation14 + $0x990] sm:$0xff]
        %v2556 = vld [vmem:[#allocation14 + $0x998] sm:$0xff]
        %v2557 = vld [vmem:[#allocation14 + $0x9a0] sm:$0xff]
        %v2558 = vld [vmem:[#allocation14 + $0x9a8] sm:$0xff]
        %v2559 = vld [vmem:[#allocation14 + $0x9b0] sm:$0xff]
        %v2560 = vld [vmem:[#allocation14 + $0x9b8] sm:$0xff]
        %v2561 = vld [vmem:[#allocation14 + $0x9c0] sm:$0xff]
        %v2562 = vld [vmem:[#allocation14 + $0x9c8] sm:$0xff]
        %v2563 = vld [vmem:[#allocation14 + $0x9d0] sm:$0xff]
        %v2564 = vld [vmem:[#allocation14 + $0x9d8] sm:$0xff]
        %v2565 = vld [vmem:[#allocation14 + $0x9e0] sm:$0xff]
        %v2566 = vld [vmem:[#allocation14 + $0x9e8] sm:$0xff]
        %v2567 = vld [vmem:[#allocation14 + $0x9f0] sm:$0xff]
        %v2568 = vld [vmem:[#allocation14 + $0x9f8] sm:$0xff]
        %v2569 = vld [vmem:[#allocation14 + $0xa00] sm:$0xff]
        %v2570 = vld [vmem:[#allocation14 + $0xa08] sm:$0xff]
        %v2571 = vld [vmem:[#allocation14 + $0xa10] sm:$0xff]
        %v2572 = vld [vmem:[#allocation14 + $0xa18] sm:$0xff]
        %v2573 = vld [vmem:[#allocation14 + $0xa20] sm:$0xff]
        %v2574 = vld [vmem:[#allocation14 + $0xa28] sm:$0xff]
        %v2575 = vld [vmem:[#allocation14 + $0xa30] sm:$0xff]
        %v2576 = vld [vmem:[#allocation14 + $0xa38] sm:$0xff]
        %v2577 = vld [vmem:[#allocation14 + $0xa40] sm:$0xff]
        %v2578 = vld [vmem:[#allocation14 + $0xa48] sm:$0xff]
        %v2579 = vld [vmem:[#allocation14 + $0xa50] sm:$0xff]
        %v2580 = vld [vmem:[#allocation14 + $0xa58] sm:$0xff]
        %v2581 = vld [vmem:[#allocation14 + $0xa60] sm:$0xff]
        %v2582 = vld [vmem:[#allocation14 + $0xa68] sm:$0xff]
        %v2583 = vld [vmem:[#allocation14 + $0xa70] sm:$0xff]
        %v2584 = vld [vmem:[#allocation14 + $0xa78] sm:$0xff]
        %v2585 = vld [vmem:[#allocation14 + $0xa80] sm:$0xff]
        %v2586 = vld [vmem:[#allocation14 + $0xa88] sm:$0xff]
        %v2587 = vld [vmem:[#allocation14 + $0xa90] sm:$0xff]
        %v2588 = vld [vmem:[#allocation14 + $0xa98] sm:$0xff]
        %v2589 = vld [vmem:[#allocation14 + $0xaa0] sm:$0xff]
        %v2590 = vld [vmem:[#allocation14 + $0xaa8] sm:$0xff]
        %v2591 = vld [vmem:[#allocation14 + $0xab0] sm:$0xff]
        %v2592 = vld [vmem:[#allocation14 + $0xab8] sm:$0xff]
        %v2593 = vld [vmem:[#allocation14 + $0xac0] sm:$0xff]
        %v2594 = vld [vmem:[#allocation14 + $0xac8] sm:$0xff]
        %v2595 = vld [vmem:[#allocation14 + $0xad0] sm:$0xff]
        %v2596 = vld [vmem:[#allocation14 + $0xad8] sm:$0xff]
        %v2597 = vld [vmem:[#allocation14 + $0xae0] sm:$0xff]
        %v2598 = vld [vmem:[#allocation14 + $0xae8] sm:$0xff]
        %v2599 = vld [vmem:[#allocation14 + $0xaf0] sm:$0xff]
        %v2600 = vld [vmem:[#allocation14 + $0xaf8] sm:$0xff]
        %v2601 = vld [vmem:[#allocation14 + $0xb00] sm:$0xff]
        %v2602 = vld [vmem:[#allocation14 + $0xb08] sm:$0xff]
        %v2603 = vld [vmem:[#allocation14 + $0xb10] sm:$0xff]
        %v2604 = vld [vmem:[#allocation14 + $0xb18] sm:$0xff]
        %v2605 = vld [vmem:[#allocation14 + $0xb20] sm:$0xff]
        %v2606 = vld [vmem:[#allocation14 + $0xb28] sm:$0xff]
        %v2607 = vld [vmem:[#allocation14 + $0xb30] sm:$0xff]
        %v2608 = vld [vmem:[#allocation14 + $0xb38] sm:$0xff]
        %v2609 = vld [vmem:[#allocation14 + $0xb40] sm:$0xff]
        %v2610 = vld [vmem:[#allocation14 + $0xb48] sm:$0xff]
        %v2611 = vld [vmem:[#allocation14 + $0xb50] sm:$0xff]
        %v2612 = vld [vmem:[#allocation14 + $0xb58] sm:$0xff]
        %v2613 = vld [vmem:[#allocation14 + $0xb60] sm:$0xff]
        %v2614 = vld [vmem:[#allocation14 + $0xb68] sm:$0xff]
        %v2615 = vld [vmem:[#allocation14 + $0xb70] sm:$0xff]
        %v2616 = vld [vmem:[#allocation14 + $0xb78] sm:$0xff]
        %v2617 = vld [vmem:[#allocation14 + $0xb80] sm:$0xff]
        %v2618 = vld [vmem:[#allocation14 + $0xb88] sm:$0xff]
        %v2619 = vld [vmem:[#allocation14 + $0xb90] sm:$0xff]
        %v2620 = vld [vmem:[#allocation14 + $0xb98] sm:$0xff]
        %v2621 = vld [vmem:[#allocation14 + $0xba0] sm:$0xff]
        %v2622 = vld [vmem:[#allocation14 + $0xba8] sm:$0xff]
        %v2623 = vld [vmem:[#allocation14 + $0xbb0] sm:$0xff]
        %v2624 = vld [vmem:[#allocation14 + $0xbb8] sm:$0xff]
        %v2625 = vld [vmem:[#allocation14 + $0xbc0] sm:$0xff]
        %v2626 = vld [vmem:[#allocation14 + $0xbc8] sm:$0xff]
        %v2627 = vld [vmem:[#allocation14 + $0xbd0] sm:$0xff]
        %v2628 = vld [vmem:[#allocation14 + $0xbd8] sm:$0xff]
        %v2629 = vld [vmem:[#allocation14 + $0xbe0] sm:$0xff]
        %v2630 = vld [vmem:[#allocation14 + $0xbe8] sm:$0xff]
        %v2631 = vld [vmem:[#allocation14 + $0xbf0] sm:$0xff]
        %v2632 = vld [vmem:[#allocation14 + $0xbf8] sm:$0xff]
        %v2633 = vld [vmem:[#allocation14 + $0xc00] sm:$0xff]
        %v2634 = vld [vmem:[#allocation14 + $0xc08] sm:$0xff]
        %v2635 = vld [vmem:[#allocation14 + $0xc10] sm:$0xff]
        %v2636 = vld [vmem:[#allocation14 + $0xc18] sm:$0xff]
        %v2637 = vld [vmem:[#allocation14 + $0xc20] sm:$0xff]
        %v2638 = vld [vmem:[#allocation14 + $0xc28] sm:$0xff]
        %v2639 = vld [vmem:[#allocation14 + $0xc30] sm:$0xff]
        %v2640 = vld [vmem:[#allocation14 + $0xc38] sm:$0xff]
        %v2641 = vld [vmem:[#allocation14 + $0xc40] sm:$0xff]
        %v2642 = vld [vmem:[#allocation14 + $0xc48] sm:$0xff]
        %v2643 = vld [vmem:[#allocation14 + $0xc50] sm:$0xff]
        %v2644 = vld [vmem:[#allocation14 + $0xc58] sm:$0xff]
        %v2645 = vld [vmem:[#allocation14 + $0xc60] sm:$0xff]
        %v2646 = vld [vmem:[#allocation14 + $0xc68] sm:$0xff]
        %v2647 = vld [vmem:[#allocation14 + $0xc70] sm:$0xff]
        %v2648 = vld [vmem:[#allocation14 + $0xc78] sm:$0xff]
        %v2649 = vld [vmem:[#allocation14 + $0xc80] sm:$0xff]
        %v2650 = vld [vmem:[#allocation14 + $0xc88] sm:$0xff]
        %v2651 = vld [vmem:[#allocation14 + $0xc90] sm:$0xff]
        %v2652 = vld [vmem:[#allocation14 + $0xc98] sm:$0xff]
        %v2653 = vld [vmem:[#allocation14 + $0xca0] sm:$0xff]
        %v2654 = vld [vmem:[#allocation14 + $0xca8] sm:$0xff]
        %v2655 = vld [vmem:[#allocation14 + $0xcb0] sm:$0xff]
        %v2656 = vld [vmem:[#allocation14 + $0xcb8] sm:$0xff]
        %v2657 = vld [vmem:[#allocation14 + $0xcc0] sm:$0xff]
        %v2658 = vld [vmem:[#allocation14 + $0xcc8] sm:$0xff]
        %v2659 = vld [vmem:[#allocation14 + $0xcd0] sm:$0xff]
        %v2660 = vld [vmem:[#allocation14 + $0xcd8] sm:$0xff]
        %v2661 = vld [vmem:[#allocation14 + $0xce0] sm:$0xff]
        %v2662 = vld [vmem:[#allocation14 + $0xce8] sm:$0xff]
        %v2663 = vld [vmem:[#allocation14 + $0xcf0] sm:$0xff]
        %v2664 = vld [vmem:[#allocation14 + $0xcf8] sm:$0xff]
        %v2665 = vld [vmem:[#allocation14 + $0xd00] sm:$0xff]
        %v2666 = vld [vmem:[#allocation14 + $0xd08] sm:$0xff]
        %v2667 = vld [vmem:[#allocation14 + $0xd10] sm:$0xff]
        %v2668 = vld [vmem:[#allocation14 + $0xd18] sm:$0xff]
        %v2669 = vld [vmem:[#allocation14 + $0xd20] sm:$0xff]
        %v2670 = vld [vmem:[#allocation14 + $0xd28] sm:$0xff]
        %v2671 = vld [vmem:[#allocation14 + $0xd30] sm:$0xff]
        %v2672 = vld [vmem:[#allocation14 + $0xd38] sm:$0xff]
        %v2673 = vld [vmem:[#allocation14 + $0xd40] sm:$0xff]
        %v2674 = vld [vmem:[#allocation14 + $0xd48] sm:$0xff]
        %v2675 = vld [vmem:[#allocation14 + $0xd50] sm:$0xff]
        %v2676 = vld [vmem:[#allocation14 + $0xd58] sm:$0xff]
        %v2677 = vld [vmem:[#allocation14 + $0xd60] sm:$0xff]
        %v2678 = vld [vmem:[#allocation14 + $0xd68] sm:$0xff]
        %v2679 = vld [vmem:[#allocation14 + $0xd70] sm:$0xff]
        %v2680 = vld [vmem:[#allocation14 + $0xd78] sm:$0xff]
        %v2681 = vld [vmem:[#allocation14 + $0xd80] sm:$0xff]
        %v2682 = vld [vmem:[#allocation14 + $0xd88] sm:$0xff]
        %v2683 = vld [vmem:[#allocation14 + $0xd90] sm:$0xff]
        %v2684 = vld [vmem:[#allocation14 + $0xd98] sm:$0xff]
        %v2685 = vld [vmem:[#allocation14 + $0xda0] sm:$0xff]
        %v2686 = vld [vmem:[#allocation14 + $0xda8] sm:$0xff]
        %v2687 = vld [vmem:[#allocation14 + $0xdb0] sm:$0xff]
        %v2688 = vld [vmem:[#allocation14 + $0xdb8] sm:$0xff]
        %v2689 = vld [vmem:[#allocation14 + $0xdc0] sm:$0xff]
        %v2690 = vld [vmem:[#allocation14 + $0xdc8] sm:$0xff]
        %v2691 = vld [vmem:[#allocation14 + $0xdd0] sm:$0xff]
        %v2692 = vld [vmem:[#allocation14 + $0xdd8] sm:$0xff]
        %v2693 = vld [vmem:[#allocation14 + $0xde0] sm:$0xff]
        %v2694 = vld [vmem:[#allocation14 + $0xde8] sm:$0xff]
        %v2695 = vld [vmem:[#allocation14 + $0xdf0] sm:$0xff]
        %v2696 = vld [vmem:[#allocation14 + $0xdf8] sm:$0xff]
        %v2697 = vld [vmem:[#allocation14 + $0xe00] sm:$0xff]
        %v2698 = vld [vmem:[#allocation14 + $0xe08] sm:$0xff]
        %v2699 = vld [vmem:[#allocation14 + $0xe10] sm:$0xff]
        %v2700 = vld [vmem:[#allocation14 + $0xe18] sm:$0xff]
        %v2701 = vld [vmem:[#allocation14 + $0xe20] sm:$0xff]
        %v2702 = vld [vmem:[#allocation14 + $0xe28] sm:$0xff]
        %v2703 = vld [vmem:[#allocation14 + $0xe30] sm:$0xff]
        %v2704 = vld [vmem:[#allocation14 + $0xe38] sm:$0xff]
        %v2705 = vld [vmem:[#allocation14 + $0xe40] sm:$0xff]
        %v2706 = vld [vmem:[#allocation14 + $0xe48] sm:$0xff]
        %v2707 = vld [vmem:[#allocation14 + $0xe50] sm:$0xff]
        %v2708 = vld [vmem:[#allocation14 + $0xe58] sm:$0xff]
        %v2709 = vld [vmem:[#allocation14 + $0xe60] sm:$0xff]
        %v2710 = vld [vmem:[#allocation14 + $0xe68] sm:$0xff]
        %v2711 = vld [vmem:[#allocation14 + $0xe70] sm:$0xff]
        %v2712 = vld [vmem:[#allocation14 + $0xe78] sm:$0xff]
        %v2713 = vld [vmem:[#allocation14 + $0xe80] sm:$0xff]
        %v2714 = vld [vmem:[#allocation14 + $0xe88] sm:$0xff]
        %v2715 = vld [vmem:[#allocation14 + $0xe90] sm:$0xff]
        %v2716 = vld [vmem:[#allocation14 + $0xe98] sm:$0xff]
        %v2717 = vld [vmem:[#allocation14 + $0xea0] sm:$0xff]
        %v2718 = vld [vmem:[#allocation14 + $0xea8] sm:$0xff]
        %v2719 = vld [vmem:[#allocation14 + $0xeb0] sm:$0xff]
        %v2720 = vld [vmem:[#allocation14 + $0xeb8] sm:$0xff]
        %v2721 = vld [vmem:[#allocation14 + $0xec0] sm:$0xff]
        %v2722 = vld [vmem:[#allocation14 + $0xec8] sm:$0xff]
        %v2723 = vld [vmem:[#allocation14 + $0xed0] sm:$0xff]
        %v2724 = vld [vmem:[#allocation14 + $0xed8] sm:$0xff]
        %v2725 = vld [vmem:[#allocation14 + $0xee0] sm:$0xff]
        %v2726 = vld [vmem:[#allocation14 + $0xee8] sm:$0xff]
        %v2727 = vld [vmem:[#allocation14 + $0xef0] sm:$0xff]
        %v2728 = vld [vmem:[#allocation14 + $0xef8] sm:$0xff]
        %v2729 = vld [vmem:[#allocation14 + $0xf00] sm:$0xff]
        %v2730 = vld [vmem:[#allocation14 + $0xf08] sm:$0xff]
        %v2731 = vld [vmem:[#allocation14 + $0xf10] sm:$0xff]
        %v2732 = vld [vmem:[#allocation14 + $0xf18] sm:$0xff]
        %v2733 = vld [vmem:[#allocation14 + $0xf20] sm:$0xff]
        %v2734 = vld [vmem:[#allocation14 + $0xf28] sm:$0xff]
        %v2735 = vld [vmem:[#allocation14 + $0xf30] sm:$0xff]
        %v2736 = vld [vmem:[#allocation14 + $0xf38] sm:$0xff]
        %v2737 = vld [vmem:[#allocation14 + $0xf40] sm:$0xff]
        %v2738 = vld [vmem:[#allocation14 + $0xf48] sm:$0xff]
        %v2739 = vld [vmem:[#allocation14 + $0xf50] sm:$0xff]
        %v2740 = vld [vmem:[#allocation14 + $0xf58] sm:$0xff]
        %v2741 = vld [vmem:[#allocation14 + $0xf60] sm:$0xff]
        %v2742 = vld [vmem:[#allocation14 + $0xf68] sm:$0xff]
        %v2743 = vld [vmem:[#allocation14 + $0xf70] sm:$0xff]
        %v2744 = vld [vmem:[#allocation14 + $0xf78] sm:$0xff]
        %v2745 = vld [vmem:[#allocation14 + $0xf80] sm:$0xff]
        %v2746 = vld [vmem:[#allocation14 + $0xf88] sm:$0xff]
        %v2747 = vld [vmem:[#allocation14 + $0xf90] sm:$0xff]
        %v2748 = vld [vmem:[#allocation14 + $0xf98] sm:$0xff]
        %v2749 = vld [vmem:[#allocation14 + $0xfa0] sm:$0xff]
        %v2750 = vld [vmem:[#allocation14 + $0xfa8] sm:$0xff]
        %v2751 = vld [vmem:[#allocation14 + $0xfb0] sm:$0xff]
        %v2752 = vld [vmem:[#allocation14 + $0xfb8] sm:$0xff]
        %v2753 = vld [vmem:[#allocation14 + $0xfc0] sm:$0xff]
        %v2754 = vld [vmem:[#allocation14 + $0xfc8] sm:$0xff]
        %v2755 = vld [vmem:[#allocation14 + $0xfd0] sm:$0xff]
        %v2756 = vld [vmem:[#allocation14 + $0xfd8] sm:$0xff]
        %v2757 = vld [vmem:[#allocation14 + $0xfe0] sm:$0xff]
        %v2758 = vld [vmem:[#allocation14 + $0xfe8] sm:$0xff]
        %v2759 = vld [vmem:[#allocation14 + $0xff0] sm:$0xff]
        %v2760 = vld [vmem:[#allocation14 + $0xff8] sm:$0xff]
        %v2761 = vld [vmem:[#allocation16] sm:$0xff]
        %v2763 = vlaneseq
        %v2764 = vshrl.u32 %v2763, 7
        %v2765 = vsub.s32 0, %v2764
        %v2766 = vrot.slane %v2761, %v2765
        %v2767 = vlaneseq
        %v2768 = vshrl.u32 %v2767, 7
        %v2769 = vsub.s32 1, %v2768
        %v2770 = vrot.slane %v2761, %v2769
        %v2771 = vlaneseq
        %v2772 = vshrl.u32 %v2771, 7
        %v2773 = vsub.s32 2, %v2772
        %v2774 = vrot.slane %v2761, %v2773
        %v2775 = vlaneseq
        %v2776 = vshrl.u32 %v2775, 7
        %v2777 = vsub.s32 3, %v2776
        %v2778 = vrot.slane %v2761, %v2777
        %v2779 = vlaneseq
        %v2780 = vshrl.u32 %v2779, 7
        %v2781 = vsub.s32 4, %v2780
        %v2782 = vrot.slane %v2761, %v2781
        %v2783 = vlaneseq
        %v2784 = vshrl.u32 %v2783, 7
        %v2785 = vsub.s32 5, %v2784
        %v2786 = vrot.slane %v2761, %v2785
        %v2787 = vlaneseq
        %v2788 = vshrl.u32 %v2787, 7
        %v2789 = vsub.s32 6, %v2788
        %v2790 = vrot.slane %v2761, %v2789
        %v2791 = vlaneseq
        %v2792 = vshrl.u32 %v2791, 7
        %v2793 = vsub.s32 7, %v2792
        %v2794 = vrot.slane %v2761, %v2793
        %v3315 = vunpack.c.l.b16 %v2249
        %v3316 = vunpack.c.h.b16 %v2249
        %v3317 = vunpack.c.l.b16 %v2250
        %v3318 = vunpack.c.h.b16 %v2250
        %v3319 = vunpack.c.l.b16 %v2251
        %v3320 = vunpack.c.h.b16 %v2251
        %v3321 = vunpack.c.l.b16 %v2252
        %v3322 = vunpack.c.h.b16 %v2252
        %v3323 = vunpack.c.l.b16 %v2253
        %v3324 = vunpack.c.h.b16 %v2253
        %v3325 = vunpack.c.l.b16 %v2254
        %v3326 = vunpack.c.h.b16 %v2254
        %v3327 = vunpack.c.l.b16 %v2255
        %v3328 = vunpack.c.h.b16 %v2255
        %v3329 = vunpack.c.l.b16 %v2256
        %v3330 = vunpack.c.h.b16 %v2256
        %v3331 = vunpack.c.l.b16 %v2257
        %v3332 = vunpack.c.h.b16 %v2257
        %v3333 = vunpack.c.l.b16 %v2258
        %v3334 = vunpack.c.h.b16 %v2258
        %v3335 = vunpack.c.l.b16 %v2259
        %v3336 = vunpack.c.h.b16 %v2259
        %v3337 = vunpack.c.l.b16 %v2260
        %v3338 = vunpack.c.h.b16 %v2260
        %v3339 = vunpack.c.l.b16 %v2261
        %v3340 = vunpack.c.h.b16 %v2261
        %v3341 = vunpack.c.l.b16 %v2262
        %v3342 = vunpack.c.h.b16 %v2262
        %v3343 = vunpack.c.l.b16 %v2263
        %v3344 = vunpack.c.h.b16 %v2263
        %v3345 = vunpack.c.l.b16 %v2264
        %v3346 = vunpack.c.h.b16 %v2264
        %v3347 = vunpack.c.l.b16 %v2265
        %v3348 = vunpack.c.h.b16 %v2265
        %v3349 = vunpack.c.l.b16 %v2266
        %v3350 = vunpack.c.h.b16 %v2266
        %v3351 = vunpack.c.l.b16 %v2267
        %v3352 = vunpack.c.h.b16 %v2267
        %v3353 = vunpack.c.l.b16 %v2268
        %v3354 = vunpack.c.h.b16 %v2268
        %v3355 = vunpack.c.l.b16 %v2269
        %v3356 = vunpack.c.h.b16 %v2269
        %v3357 = vunpack.c.l.b16 %v2270
        %v3358 = vunpack.c.h.b16 %v2270
        %v3359 = vunpack.c.l.b16 %v2271
        %v3360 = vunpack.c.h.b16 %v2271
        %v3361 = vunpack.c.l.b16 %v2272
        %v3362 = vunpack.c.h.b16 %v2272
        %v3363 = vunpack.c.l.b16 %v2273
        %v3364 = vunpack.c.h.b16 %v2273
        %v3365 = vunpack.c.l.b16 %v2274
        %v3366 = vunpack.c.h.b16 %v2274
        %v3367 = vunpack.c.l.b16 %v2275
        %v3368 = vunpack.c.h.b16 %v2275
        %v3369 = vunpack.c.l.b16 %v2276
        %v3370 = vunpack.c.h.b16 %v2276
        %v3371 = vunpack.c.l.b16 %v2277
        %v3372 = vunpack.c.h.b16 %v2277
        %v3373 = vunpack.c.l.b16 %v2278
        %v3374 = vunpack.c.h.b16 %v2278
        %v3375 = vunpack.c.l.b16 %v2279
        %v3376 = vunpack.c.h.b16 %v2279
        %v3377 = vunpack.c.l.b16 %v2280
        %v3378 = vunpack.c.h.b16 %v2280
        %v3379 = vunpack.c.l.b16 %v2281
        %v3380 = vunpack.c.h.b16 %v2281
        %v3381 = vunpack.c.l.b16 %v2282
        %v3382 = vunpack.c.h.b16 %v2282
        %v3383 = vunpack.c.l.b16 %v2283
        %v3384 = vunpack.c.h.b16 %v2283
        %v3385 = vunpack.c.l.b16 %v2284
        %v3386 = vunpack.c.h.b16 %v2284
        %v3387 = vunpack.c.l.b16 %v2285
        %v3388 = vunpack.c.h.b16 %v2285
        %v3389 = vunpack.c.l.b16 %v2286
        %v3390 = vunpack.c.h.b16 %v2286
        %v3391 = vunpack.c.l.b16 %v2287
        %v3392 = vunpack.c.h.b16 %v2287
        %v3393 = vunpack.c.l.b16 %v2288
        %v3394 = vunpack.c.h.b16 %v2288
        %v3395 = vunpack.c.l.b16 %v2289
        %v3396 = vunpack.c.h.b16 %v2289
        %v3397 = vunpack.c.l.b16 %v2290
        %v3398 = vunpack.c.h.b16 %v2290
        %v3399 = vunpack.c.l.b16 %v2291
        %v3400 = vunpack.c.h.b16 %v2291
        %v3401 = vunpack.c.l.b16 %v2292
        %v3402 = vunpack.c.h.b16 %v2292
        %v3403 = vunpack.c.l.b16 %v2293
        %v3404 = vunpack.c.h.b16 %v2293
        %v3405 = vunpack.c.l.b16 %v2294
        %v3406 = vunpack.c.h.b16 %v2294
        %v3407 = vunpack.c.l.b16 %v2295
        %v3408 = vunpack.c.h.b16 %v2295
        %v3409 = vunpack.c.l.b16 %v2296
        %v3410 = vunpack.c.h.b16 %v2296
        %v3411 = vunpack.c.l.b16 %v2297
        %v3412 = vunpack.c.h.b16 %v2297
        %v3413 = vunpack.c.l.b16 %v2298
        %v3414 = vunpack.c.h.b16 %v2298
        %v3415 = vunpack.c.l.b16 %v2299
        %v3416 = vunpack.c.h.b16 %v2299
        %v3417 = vunpack.c.l.b16 %v2300
        %v3418 = vunpack.c.h.b16 %v2300
        %v3419 = vunpack.c.l.b16 %v2301
        %v3420 = vunpack.c.h.b16 %v2301
        %v3421 = vunpack.c.l.b16 %v2302
        %v3422 = vunpack.c.h.b16 %v2302
        %v3423 = vunpack.c.l.b16 %v2303
        %v3424 = vunpack.c.h.b16 %v2303
        %v3425 = vunpack.c.l.b16 %v2304
        %v3426 = vunpack.c.h.b16 %v2304
        %v3427 = vunpack.c.l.b16 %v2305
        %v3428 = vunpack.c.h.b16 %v2305
        %v3429 = vunpack.c.l.b16 %v2306
        %v3430 = vunpack.c.h.b16 %v2306
        %v3431 = vunpack.c.l.b16 %v2307
        %v3432 = vunpack.c.h.b16 %v2307
        %v3433 = vunpack.c.l.b16 %v2308
        %v3434 = vunpack.c.h.b16 %v2308
        %v3435 = vunpack.c.l.b16 %v2309
        %v3436 = vunpack.c.h.b16 %v2309
        %v3437 = vunpack.c.l.b16 %v2310
        %v3438 = vunpack.c.h.b16 %v2310
        %v3439 = vunpack.c.l.b16 %v2311
        %v3440 = vunpack.c.h.b16 %v2311
        %v3441 = vunpack.c.l.b16 %v2312
        %v3442 = vunpack.c.h.b16 %v2312
        %v3443 = vunpack.c.l.b16 %v2313
        %v3444 = vunpack.c.h.b16 %v2313
        %v3445 = vunpack.c.l.b16 %v2314
        %v3446 = vunpack.c.h.b16 %v2314
        %v3447 = vunpack.c.l.b16 %v2315
        %v3448 = vunpack.c.h.b16 %v2315
        %v3449 = vunpack.c.l.b16 %v2316
        %v3450 = vunpack.c.h.b16 %v2316
        %v3451 = vunpack.c.l.b16 %v2317
        %v3452 = vunpack.c.h.b16 %v2317
        %v3453 = vunpack.c.l.b16 %v2318
        %v3454 = vunpack.c.h.b16 %v2318
        %v3455 = vunpack.c.l.b16 %v2319
        %v3456 = vunpack.c.h.b16 %v2319
        %v3457 = vunpack.c.l.b16 %v2320
        %v3458 = vunpack.c.h.b16 %v2320
        %v3459 = vunpack.c.l.b16 %v2321
        %v3460 = vunpack.c.h.b16 %v2321
        %v3461 = vunpack.c.l.b16 %v2322
        %v3462 = vunpack.c.h.b16 %v2322
        %v3463 = vunpack.c.l.b16 %v2323
        %v3464 = vunpack.c.h.b16 %v2323
        %v3465 = vunpack.c.l.b16 %v2324
        %v3466 = vunpack.c.h.b16 %v2324
        %v3467 = vunpack.c.l.b16 %v2325
        %v3468 = vunpack.c.h.b16 %v2325
        %v3469 = vunpack.c.l.b16 %v2326
        %v3470 = vunpack.c.h.b16 %v2326
        %v3471 = vunpack.c.l.b16 %v2327
        %v3472 = vunpack.c.h.b16 %v2327
        %v3473 = vunpack.c.l.b16 %v2328
        %v3474 = vunpack.c.h.b16 %v2328
        %v3475 = vunpack.c.l.b16 %v2329
        %v3476 = vunpack.c.h.b16 %v2329
        %v3477 = vunpack.c.l.b16 %v2330
        %v3478 = vunpack.c.h.b16 %v2330
        %v3479 = vunpack.c.l.b16 %v2331
        %v3480 = vunpack.c.h.b16 %v2331
        %v3481 = vunpack.c.l.b16 %v2332
        %v3482 = vunpack.c.h.b16 %v2332
        %v3483 = vunpack.c.l.b16 %v2333
        %v3484 = vunpack.c.h.b16 %v2333
        %v3485 = vunpack.c.l.b16 %v2334
        %v3486 = vunpack.c.h.b16 %v2334
        %v3487 = vunpack.c.l.b16 %v2335
        %v3488 = vunpack.c.h.b16 %v2335
        %v3489 = vunpack.c.l.b16 %v2336
        %v3490 = vunpack.c.h.b16 %v2336
        %v3491 = vunpack.c.l.b16 %v2337
        %v3492 = vunpack.c.h.b16 %v2337
        %v3493 = vunpack.c.l.b16 %v2338
        %v3494 = vunpack.c.h.b16 %v2338
        %v3495 = vunpack.c.l.b16 %v2339
        %v3496 = vunpack.c.h.b16 %v2339
        %v3497 = vunpack.c.l.b16 %v2340
        %v3498 = vunpack.c.h.b16 %v2340
        %v3499 = vunpack.c.l.b16 %v2341
        %v3500 = vunpack.c.h.b16 %v2341
        %v3501 = vunpack.c.l.b16 %v2342
        %v3502 = vunpack.c.h.b16 %v2342
        %v3503 = vunpack.c.l.b16 %v2343
        %v3504 = vunpack.c.h.b16 %v2343
        %v3505 = vunpack.c.l.b16 %v2344
        %v3506 = vunpack.c.h.b16 %v2344
        %v3507 = vunpack.c.l.b16 %v2345
        %v3508 = vunpack.c.h.b16 %v2345
        %v3509 = vunpack.c.l.b16 %v2346
        %v3510 = vunpack.c.h.b16 %v2346
        %v3511 = vunpack.c.l.b16 %v2347
        %v3512 = vunpack.c.h.b16 %v2347
        %v3513 = vunpack.c.l.b16 %v2348
        %v3514 = vunpack.c.h.b16 %v2348
        %v3515 = vunpack.c.l.b16 %v2349
        %v3516 = vunpack.c.h.b16 %v2349
        %v3517 = vunpack.c.l.b16 %v2350
        %v3518 = vunpack.c.h.b16 %v2350
        %v3519 = vunpack.c.l.b16 %v2351
        %v3520 = vunpack.c.h.b16 %v2351
        %v3521 = vunpack.c.l.b16 %v2352
        %v3522 = vunpack.c.h.b16 %v2352
        %v3523 = vunpack.c.l.b16 %v2353
        %v3524 = vunpack.c.h.b16 %v2353
        %v3525 = vunpack.c.l.b16 %v2354
        %v3526 = vunpack.c.h.b16 %v2354
        %v3527 = vunpack.c.l.b16 %v2355
        %v3528 = vunpack.c.h.b16 %v2355
        %v3529 = vunpack.c.l.b16 %v2356
        %v3530 = vunpack.c.h.b16 %v2356
        %v3531 = vunpack.c.l.b16 %v2357
        %v3532 = vunpack.c.h.b16 %v2357
        %v3533 = vunpack.c.l.b16 %v2358
        %v3534 = vunpack.c.h.b16 %v2358
        %v3535 = vunpack.c.l.b16 %v2359
        %v3536 = vunpack.c.h.b16 %v2359
        %v3537 = vunpack.c.l.b16 %v2360
        %v3538 = vunpack.c.h.b16 %v2360
        %v3539 = vunpack.c.l.b16 %v2361
        %v3540 = vunpack.c.h.b16 %v2361
        %v3541 = vunpack.c.l.b16 %v2362
        %v3542 = vunpack.c.h.b16 %v2362
        %v3543 = vunpack.c.l.b16 %v2363
        %v3544 = vunpack.c.h.b16 %v2363
        %v3545 = vunpack.c.l.b16 %v2364
        %v3546 = vunpack.c.h.b16 %v2364
        %v3547 = vunpack.c.l.b16 %v2365
        %v3548 = vunpack.c.h.b16 %v2365
        %v3549 = vunpack.c.l.b16 %v2366
        %v3550 = vunpack.c.h.b16 %v2366
        %v3551 = vunpack.c.l.b16 %v2367
        %v3552 = vunpack.c.h.b16 %v2367
        %v3553 = vunpack.c.l.b16 %v2368
        %v3554 = vunpack.c.h.b16 %v2368
        %v3555 = vunpack.c.l.b16 %v2369
        %v3556 = vunpack.c.h.b16 %v2369
        %v3557 = vunpack.c.l.b16 %v2370
        %v3558 = vunpack.c.h.b16 %v2370
        %v3559 = vunpack.c.l.b16 %v2371
        %v3560 = vunpack.c.h.b16 %v2371
        %v3561 = vunpack.c.l.b16 %v2372
        %v3562 = vunpack.c.h.b16 %v2372
        %v3563 = vunpack.c.l.b16 %v2373
        %v3564 = vunpack.c.h.b16 %v2373
        %v3565 = vunpack.c.l.b16 %v2374
        %v3566 = vunpack.c.h.b16 %v2374
        %v3567 = vunpack.c.l.b16 %v2375
        %v3568 = vunpack.c.h.b16 %v2375
        %v3569 = vunpack.c.l.b16 %v2376
        %v3570 = vunpack.c.h.b16 %v2376
        %v3571 = vunpack.c.l.b16 %v2377
        %v3572 = vunpack.c.h.b16 %v2377
        %v3573 = vunpack.c.l.b16 %v2378
        %v3574 = vunpack.c.h.b16 %v2378
        %v3575 = vunpack.c.l.b16 %v2379
        %v3576 = vunpack.c.h.b16 %v2379
        %v3577 = vunpack.c.l.b16 %v2380
        %v3578 = vunpack.c.h.b16 %v2380
        %v3579 = vunpack.c.l.b16 %v2381
        %v3580 = vunpack.c.h.b16 %v2381
        %v3581 = vunpack.c.l.b16 %v2382
        %v3582 = vunpack.c.h.b16 %v2382
        %v3583 = vunpack.c.l.b16 %v2383
        %v3584 = vunpack.c.h.b16 %v2383
        %v3585 = vunpack.c.l.b16 %v2384
        %v3586 = vunpack.c.h.b16 %v2384
        %v3587 = vunpack.c.l.b16 %v2385
        %v3588 = vunpack.c.h.b16 %v2385
        %v3589 = vunpack.c.l.b16 %v2386
        %v3590 = vunpack.c.h.b16 %v2386
        %v3591 = vunpack.c.l.b16 %v2387
        %v3592 = vunpack.c.h.b16 %v2387
        %v3593 = vunpack.c.l.b16 %v2388
        %v3594 = vunpack.c.h.b16 %v2388
        %v3595 = vunpack.c.l.b16 %v2389
        %v3596 = vunpack.c.h.b16 %v2389
        %v3597 = vunpack.c.l.b16 %v2390
        %v3598 = vunpack.c.h.b16 %v2390
        %v3599 = vunpack.c.l.b16 %v2391
        %v3600 = vunpack.c.h.b16 %v2391
        %v3601 = vunpack.c.l.b16 %v2392
        %v3602 = vunpack.c.h.b16 %v2392
        %v3603 = vunpack.c.l.b16 %v2393
        %v3604 = vunpack.c.h.b16 %v2393
        %v3605 = vunpack.c.l.b16 %v2394
        %v3606 = vunpack.c.h.b16 %v2394
        %v3607 = vunpack.c.l.b16 %v2395
        %v3608 = vunpack.c.h.b16 %v2395
        %v3609 = vunpack.c.l.b16 %v2396
        %v3610 = vunpack.c.h.b16 %v2396
        %v3611 = vunpack.c.l.b16 %v2397
        %v3612 = vunpack.c.h.b16 %v2397
        %v3613 = vunpack.c.l.b16 %v2398
        %v3614 = vunpack.c.h.b16 %v2398
        %v3615 = vunpack.c.l.b16 %v2399
        %v3616 = vunpack.c.h.b16 %v2399
        %v3617 = vunpack.c.l.b16 %v2400
        %v3618 = vunpack.c.h.b16 %v2400
        %v3619 = vunpack.c.l.b16 %v2401
        %v3620 = vunpack.c.h.b16 %v2401
        %v3621 = vunpack.c.l.b16 %v2402
        %v3622 = vunpack.c.h.b16 %v2402
        %v3623 = vunpack.c.l.b16 %v2403
        %v3624 = vunpack.c.h.b16 %v2403
        %v3625 = vunpack.c.l.b16 %v2404
        %v3626 = vunpack.c.h.b16 %v2404
        %v3627 = vunpack.c.l.b16 %v2405
        %v3628 = vunpack.c.h.b16 %v2405
        %v3629 = vunpack.c.l.b16 %v2406
        %v3630 = vunpack.c.h.b16 %v2406
        %v3631 = vunpack.c.l.b16 %v2407
        %v3632 = vunpack.c.h.b16 %v2407
        %v3633 = vunpack.c.l.b16 %v2408
        %v3634 = vunpack.c.h.b16 %v2408
        %v3635 = vunpack.c.l.b16 %v2409
        %v3636 = vunpack.c.h.b16 %v2409
        %v3637 = vunpack.c.l.b16 %v2410
        %v3638 = vunpack.c.h.b16 %v2410
        %v3639 = vunpack.c.l.b16 %v2411
        %v3640 = vunpack.c.h.b16 %v2411
        %v3641 = vunpack.c.l.b16 %v2412
        %v3642 = vunpack.c.h.b16 %v2412
        %v3643 = vunpack.c.l.b16 %v2413
        %v3644 = vunpack.c.h.b16 %v2413
        %v3645 = vunpack.c.l.b16 %v2414
        %v3646 = vunpack.c.h.b16 %v2414
        %v3647 = vunpack.c.l.b16 %v2415
        %v3648 = vunpack.c.h.b16 %v2415
        %v3649 = vunpack.c.l.b16 %v2416
        %v3650 = vunpack.c.h.b16 %v2416
        %v3651 = vunpack.c.l.b16 %v2417
        %v3652 = vunpack.c.h.b16 %v2417
        %v3653 = vunpack.c.l.b16 %v2418
        %v3654 = vunpack.c.h.b16 %v2418
        %v3655 = vunpack.c.l.b16 %v2419
        %v3656 = vunpack.c.h.b16 %v2419
        %v3657 = vunpack.c.l.b16 %v2420
        %v3658 = vunpack.c.h.b16 %v2420
        %v3659 = vunpack.c.l.b16 %v2421
        %v3660 = vunpack.c.h.b16 %v2421
        %v3661 = vunpack.c.l.b16 %v2422
        %v3662 = vunpack.c.h.b16 %v2422
        %v3663 = vunpack.c.l.b16 %v2423
        %v3664 = vunpack.c.h.b16 %v2423
        %v3665 = vunpack.c.l.b16 %v2424
        %v3666 = vunpack.c.h.b16 %v2424
        %v3667 = vunpack.c.l.b16 %v2425
        %v3668 = vunpack.c.h.b16 %v2425
        %v3669 = vunpack.c.l.b16 %v2426
        %v3670 = vunpack.c.h.b16 %v2426
        %v3671 = vunpack.c.l.b16 %v2427
        %v3672 = vunpack.c.h.b16 %v2427
        %v3673 = vunpack.c.l.b16 %v2428
        %v3674 = vunpack.c.h.b16 %v2428
        %v3675 = vunpack.c.l.b16 %v2429
        %v3676 = vunpack.c.h.b16 %v2429
        %v3677 = vunpack.c.l.b16 %v2430
        %v3678 = vunpack.c.h.b16 %v2430
        %v3679 = vunpack.c.l.b16 %v2431
        %v3680 = vunpack.c.h.b16 %v2431
        %v3681 = vunpack.c.l.b16 %v2432
        %v3682 = vunpack.c.h.b16 %v2432
        %v3683 = vunpack.c.l.b16 %v2433
        %v3684 = vunpack.c.h.b16 %v2433
        %v3685 = vunpack.c.l.b16 %v2434
        %v3686 = vunpack.c.h.b16 %v2434
        %v3687 = vunpack.c.l.b16 %v2435
        %v3688 = vunpack.c.h.b16 %v2435
        %v3689 = vunpack.c.l.b16 %v2436
        %v3690 = vunpack.c.h.b16 %v2436
        %v3691 = vunpack.c.l.b16 %v2437
        %v3692 = vunpack.c.h.b16 %v2437
        %v3693 = vunpack.c.l.b16 %v2438
        %v3694 = vunpack.c.h.b16 %v2438
        %v3695 = vunpack.c.l.b16 %v2439
        %v3696 = vunpack.c.h.b16 %v2439
        %v3697 = vunpack.c.l.b16 %v2440
        %v3698 = vunpack.c.h.b16 %v2440
        %v3699 = vunpack.c.l.b16 %v2441
        %v3700 = vunpack.c.h.b16 %v2441
        %v3701 = vunpack.c.l.b16 %v2442
        %v3702 = vunpack.c.h.b16 %v2442
        %v3703 = vunpack.c.l.b16 %v2443
        %v3704 = vunpack.c.h.b16 %v2443
        %v3705 = vunpack.c.l.b16 %v2444
        %v3706 = vunpack.c.h.b16 %v2444
        %v3707 = vunpack.c.l.b16 %v2445
        %v3708 = vunpack.c.h.b16 %v2445
        %v3709 = vunpack.c.l.b16 %v2446
        %v3710 = vunpack.c.h.b16 %v2446
        %v3711 = vunpack.c.l.b16 %v2447
        %v3712 = vunpack.c.h.b16 %v2447
        %v3713 = vunpack.c.l.b16 %v2448
        %v3714 = vunpack.c.h.b16 %v2448
        %v3715 = vunpack.c.l.b16 %v2449
        %v3716 = vunpack.c.h.b16 %v2449
        %v3717 = vunpack.c.l.b16 %v2450
        %v3718 = vunpack.c.h.b16 %v2450
        %v3719 = vunpack.c.l.b16 %v2451
        %v3720 = vunpack.c.h.b16 %v2451
        %v3721 = vunpack.c.l.b16 %v2452
        %v3722 = vunpack.c.h.b16 %v2452
        %v3723 = vunpack.c.l.b16 %v2453
        %v3724 = vunpack.c.h.b16 %v2453
        %v3725 = vunpack.c.l.b16 %v2454
        %v3726 = vunpack.c.h.b16 %v2454
        %v3727 = vunpack.c.l.b16 %v2455
        %v3728 = vunpack.c.h.b16 %v2455
        %v3729 = vunpack.c.l.b16 %v2456
        %v3730 = vunpack.c.h.b16 %v2456
        %v3731 = vunpack.c.l.b16 %v2457
        %v3732 = vunpack.c.h.b16 %v2457
        %v3733 = vunpack.c.l.b16 %v2458
        %v3734 = vunpack.c.h.b16 %v2458
        %v3735 = vunpack.c.l.b16 %v2459
        %v3736 = vunpack.c.h.b16 %v2459
        %v3737 = vunpack.c.l.b16 %v2460
        %v3738 = vunpack.c.h.b16 %v2460
        %v3739 = vunpack.c.l.b16 %v2461
        %v3740 = vunpack.c.h.b16 %v2461
        %v3741 = vunpack.c.l.b16 %v2462
        %v3742 = vunpack.c.h.b16 %v2462
        %v3743 = vunpack.c.l.b16 %v2463
        %v3744 = vunpack.c.h.b16 %v2463
        %v3745 = vunpack.c.l.b16 %v2464
        %v3746 = vunpack.c.h.b16 %v2464
        %v3747 = vunpack.c.l.b16 %v2465
        %v3748 = vunpack.c.h.b16 %v2465
        %v3749 = vunpack.c.l.b16 %v2466
        %v3750 = vunpack.c.h.b16 %v2466
        %v3751 = vunpack.c.l.b16 %v2467
        %v3752 = vunpack.c.h.b16 %v2467
        %v3753 = vunpack.c.l.b16 %v2468
        %v3754 = vunpack.c.h.b16 %v2468
        %v3755 = vunpack.c.l.b16 %v2469
        %v3756 = vunpack.c.h.b16 %v2469
        %v3757 = vunpack.c.l.b16 %v2470
        %v3758 = vunpack.c.h.b16 %v2470
        %v3759 = vunpack.c.l.b16 %v2471
        %v3760 = vunpack.c.h.b16 %v2471
        %v3761 = vunpack.c.l.b16 %v2472
        %v3762 = vunpack.c.h.b16 %v2472
        %v3763 = vunpack.c.l.b16 %v2473
        %v3764 = vunpack.c.h.b16 %v2473
        %v3765 = vunpack.c.l.b16 %v2474
        %v3766 = vunpack.c.h.b16 %v2474
        %v3767 = vunpack.c.l.b16 %v2475
        %v3768 = vunpack.c.h.b16 %v2475
        %v3769 = vunpack.c.l.b16 %v2476
        %v3770 = vunpack.c.h.b16 %v2476
        %v3771 = vunpack.c.l.b16 %v2477
        %v3772 = vunpack.c.h.b16 %v2477
        %v3773 = vunpack.c.l.b16 %v2478
        %v3774 = vunpack.c.h.b16 %v2478
        %v3775 = vunpack.c.l.b16 %v2479
        %v3776 = vunpack.c.h.b16 %v2479
        %v3777 = vunpack.c.l.b16 %v2480
        %v3778 = vunpack.c.h.b16 %v2480
        %v3779 = vunpack.c.l.b16 %v2481
        %v3780 = vunpack.c.h.b16 %v2481
        %v3781 = vunpack.c.l.b16 %v2482
        %v3782 = vunpack.c.h.b16 %v2482
        %v3783 = vunpack.c.l.b16 %v2483
        %v3784 = vunpack.c.h.b16 %v2483
        %v3785 = vunpack.c.l.b16 %v2484
        %v3786 = vunpack.c.h.b16 %v2484
        %v3787 = vunpack.c.l.b16 %v2485
        %v3788 = vunpack.c.h.b16 %v2485
        %v3789 = vunpack.c.l.b16 %v2486
        %v3790 = vunpack.c.h.b16 %v2486
        %v3791 = vunpack.c.l.b16 %v2487
        %v3792 = vunpack.c.h.b16 %v2487
        %v3793 = vunpack.c.l.b16 %v2488
        %v3794 = vunpack.c.h.b16 %v2488
        %v3795 = vunpack.c.l.b16 %v2489
        %v3796 = vunpack.c.h.b16 %v2489
        %v3797 = vunpack.c.l.b16 %v2490
        %v3798 = vunpack.c.h.b16 %v2490
        %v3799 = vunpack.c.l.b16 %v2491
        %v3800 = vunpack.c.h.b16 %v2491
        %v3801 = vunpack.c.l.b16 %v2492
        %v3802 = vunpack.c.h.b16 %v2492
        %v3803 = vunpack.c.l.b16 %v2493
        %v3804 = vunpack.c.h.b16 %v2493
        %v3805 = vunpack.c.l.b16 %v2494
        %v3806 = vunpack.c.h.b16 %v2494
        %v3807 = vunpack.c.l.b16 %v2495
        %v3808 = vunpack.c.h.b16 %v2495
        %v3809 = vunpack.c.l.b16 %v2496
        %v3810 = vunpack.c.h.b16 %v2496
        %v3811 = vunpack.c.l.b16 %v2497
        %v3812 = vunpack.c.h.b16 %v2497
        %v3813 = vunpack.c.l.b16 %v2498
        %v3814 = vunpack.c.h.b16 %v2498
        %v3815 = vunpack.c.l.b16 %v2499
        %v3816 = vunpack.c.h.b16 %v2499
        %v3817 = vunpack.c.l.b16 %v2500
        %v3818 = vunpack.c.h.b16 %v2500
        %v3819 = vunpack.c.l.b16 %v2501
        %v3820 = vunpack.c.h.b16 %v2501
        %v3821 = vunpack.c.l.b16 %v2502
        %v3822 = vunpack.c.h.b16 %v2502
        %v3823 = vunpack.c.l.b16 %v2503
        %v3824 = vunpack.c.h.b16 %v2503
        %v3825 = vunpack.c.l.b16 %v2504
        %v3826 = vunpack.c.h.b16 %v2504
        %v3827 = vunpack.c.l.b16 %v2505
        %v3828 = vunpack.c.h.b16 %v2505
        %v3829 = vunpack.c.l.b16 %v2506
        %v3830 = vunpack.c.h.b16 %v2506
        %v3831 = vunpack.c.l.b16 %v2507
        %v3832 = vunpack.c.h.b16 %v2507
        %v3833 = vunpack.c.l.b16 %v2508
        %v3834 = vunpack.c.h.b16 %v2508
        %v3835 = vunpack.c.l.b16 %v2509
        %v3836 = vunpack.c.h.b16 %v2509
        %v3837 = vunpack.c.l.b16 %v2510
        %v3838 = vunpack.c.h.b16 %v2510
        %v3839 = vunpack.c.l.b16 %v2511
        %v3840 = vunpack.c.h.b16 %v2511
        %v3841 = vunpack.c.l.b16 %v2512
        %v3842 = vunpack.c.h.b16 %v2512
        %v3843 = vunpack.c.l.b16 %v2513
        %v3844 = vunpack.c.h.b16 %v2513
        %v3845 = vunpack.c.l.b16 %v2514
        %v3846 = vunpack.c.h.b16 %v2514
        %v3847 = vunpack.c.l.b16 %v2515
        %v3848 = vunpack.c.h.b16 %v2515
        %v3849 = vunpack.c.l.b16 %v2516
        %v3850 = vunpack.c.h.b16 %v2516
        %v3851 = vunpack.c.l.b16 %v2517
        %v3852 = vunpack.c.h.b16 %v2517
        %v3853 = vunpack.c.l.b16 %v2518
        %v3854 = vunpack.c.h.b16 %v2518
        %v3855 = vunpack.c.l.b16 %v2519
        %v3856 = vunpack.c.h.b16 %v2519
        %v3857 = vunpack.c.l.b16 %v2520
        %v3858 = vunpack.c.h.b16 %v2520
        %v3859 = vunpack.c.l.b16 %v2521
        %v3860 = vunpack.c.h.b16 %v2521
        %v3861 = vunpack.c.l.b16 %v2522
        %v3862 = vunpack.c.h.b16 %v2522
        %v3863 = vunpack.c.l.b16 %v2523
        %v3864 = vunpack.c.h.b16 %v2523
        %v3865 = vunpack.c.l.b16 %v2524
        %v3866 = vunpack.c.h.b16 %v2524
        %v3867 = vunpack.c.l.b16 %v2525
        %v3868 = vunpack.c.h.b16 %v2525
        %v3869 = vunpack.c.l.b16 %v2526
        %v3870 = vunpack.c.h.b16 %v2526
        %v3871 = vunpack.c.l.b16 %v2527
        %v3872 = vunpack.c.h.b16 %v2527
        %v3873 = vunpack.c.l.b16 %v2528
        %v3874 = vunpack.c.h.b16 %v2528
        %v3875 = vunpack.c.l.b16 %v2529
        %v3876 = vunpack.c.h.b16 %v2529
        %v3877 = vunpack.c.l.b16 %v2530
        %v3878 = vunpack.c.h.b16 %v2530
        %v3879 = vunpack.c.l.b16 %v2531
        %v3880 = vunpack.c.h.b16 %v2531
        %v3881 = vunpack.c.l.b16 %v2532
        %v3882 = vunpack.c.h.b16 %v2532
        %v3883 = vunpack.c.l.b16 %v2533
        %v3884 = vunpack.c.h.b16 %v2533
        %v3885 = vunpack.c.l.b16 %v2534
        %v3886 = vunpack.c.h.b16 %v2534
        %v3887 = vunpack.c.l.b16 %v2535
        %v3888 = vunpack.c.h.b16 %v2535
        %v3889 = vunpack.c.l.b16 %v2536
        %v3890 = vunpack.c.h.b16 %v2536
        %v3891 = vunpack.c.l.b16 %v2537
        %v3892 = vunpack.c.h.b16 %v2537
        %v3893 = vunpack.c.l.b16 %v2538
        %v3894 = vunpack.c.h.b16 %v2538
        %v3895 = vunpack.c.l.b16 %v2539
        %v3896 = vunpack.c.h.b16 %v2539
        %v3897 = vunpack.c.l.b16 %v2540
        %v3898 = vunpack.c.h.b16 %v2540
        %v3899 = vunpack.c.l.b16 %v2541
        %v3900 = vunpack.c.h.b16 %v2541
        %v3901 = vunpack.c.l.b16 %v2542
        %v3902 = vunpack.c.h.b16 %v2542
        %v3903 = vunpack.c.l.b16 %v2543
        %v3904 = vunpack.c.h.b16 %v2543
        %v3905 = vunpack.c.l.b16 %v2544
        %v3906 = vunpack.c.h.b16 %v2544
        %v3907 = vunpack.c.l.b16 %v2545
        %v3908 = vunpack.c.h.b16 %v2545
        %v3909 = vunpack.c.l.b16 %v2546
        %v3910 = vunpack.c.h.b16 %v2546
        %v3911 = vunpack.c.l.b16 %v2547
        %v3912 = vunpack.c.h.b16 %v2547
        %v3913 = vunpack.c.l.b16 %v2548
        %v3914 = vunpack.c.h.b16 %v2548
        %v3915 = vunpack.c.l.b16 %v2549
        %v3916 = vunpack.c.h.b16 %v2549
        %v3917 = vunpack.c.l.b16 %v2550
        %v3918 = vunpack.c.h.b16 %v2550
        %v3919 = vunpack.c.l.b16 %v2551
        %v3920 = vunpack.c.h.b16 %v2551
        %v3921 = vunpack.c.l.b16 %v2552
        %v3922 = vunpack.c.h.b16 %v2552
        %v3923 = vunpack.c.l.b16 %v2553
        %v3924 = vunpack.c.h.b16 %v2553
        %v3925 = vunpack.c.l.b16 %v2554
        %v3926 = vunpack.c.h.b16 %v2554
        %v3927 = vunpack.c.l.b16 %v2555
        %v3928 = vunpack.c.h.b16 %v2555
        %v3929 = vunpack.c.l.b16 %v2556
        %v3930 = vunpack.c.h.b16 %v2556
        %v3931 = vunpack.c.l.b16 %v2557
        %v3932 = vunpack.c.h.b16 %v2557
        %v3933 = vunpack.c.l.b16 %v2558
        %v3934 = vunpack.c.h.b16 %v2558
        %v3935 = vunpack.c.l.b16 %v2559
        %v3936 = vunpack.c.h.b16 %v2559
        %v3937 = vunpack.c.l.b16 %v2560
        %v3938 = vunpack.c.h.b16 %v2560
        %v3939 = vunpack.c.l.b16 %v2561
        %v3940 = vunpack.c.h.b16 %v2561
        %v3941 = vunpack.c.l.b16 %v2562
        %v3942 = vunpack.c.h.b16 %v2562
        %v3943 = vunpack.c.l.b16 %v2563
        %v3944 = vunpack.c.h.b16 %v2563
        %v3945 = vunpack.c.l.b16 %v2564
        %v3946 = vunpack.c.h.b16 %v2564
        %v3947 = vunpack.c.l.b16 %v2565
        %v3948 = vunpack.c.h.b16 %v2565
        %v3949 = vunpack.c.l.b16 %v2566
        %v3950 = vunpack.c.h.b16 %v2566
        %v3951 = vunpack.c.l.b16 %v2567
        %v3952 = vunpack.c.h.b16 %v2567
        %v3953 = vunpack.c.l.b16 %v2568
        %v3954 = vunpack.c.h.b16 %v2568
        %v3955 = vunpack.c.l.b16 %v2569
        %v3956 = vunpack.c.h.b16 %v2569
        %v3957 = vunpack.c.l.b16 %v2570
        %v3958 = vunpack.c.h.b16 %v2570
        %v3959 = vunpack.c.l.b16 %v2571
        %v3960 = vunpack.c.h.b16 %v2571
        %v3961 = vunpack.c.l.b16 %v2572
        %v3962 = vunpack.c.h.b16 %v2572
        %v3963 = vunpack.c.l.b16 %v2573
        %v3964 = vunpack.c.h.b16 %v2573
        %v3965 = vunpack.c.l.b16 %v2574
        %v3966 = vunpack.c.h.b16 %v2574
        %v3967 = vunpack.c.l.b16 %v2575
        %v3968 = vunpack.c.h.b16 %v2575
        %v3969 = vunpack.c.l.b16 %v2576
        %v3970 = vunpack.c.h.b16 %v2576
        %v3971 = vunpack.c.l.b16 %v2577
        %v3972 = vunpack.c.h.b16 %v2577
        %v3973 = vunpack.c.l.b16 %v2578
        %v3974 = vunpack.c.h.b16 %v2578
        %v3975 = vunpack.c.l.b16 %v2579
        %v3976 = vunpack.c.h.b16 %v2579
        %v3977 = vunpack.c.l.b16 %v2580
        %v3978 = vunpack.c.h.b16 %v2580
        %v3979 = vunpack.c.l.b16 %v2581
        %v3980 = vunpack.c.h.b16 %v2581
        %v3981 = vunpack.c.l.b16 %v2582
        %v3982 = vunpack.c.h.b16 %v2582
        %v3983 = vunpack.c.l.b16 %v2583
        %v3984 = vunpack.c.h.b16 %v2583
        %v3985 = vunpack.c.l.b16 %v2584
        %v3986 = vunpack.c.h.b16 %v2584
        %v3987 = vunpack.c.l.b16 %v2585
        %v3988 = vunpack.c.h.b16 %v2585
        %v3989 = vunpack.c.l.b16 %v2586
        %v3990 = vunpack.c.h.b16 %v2586
        %v3991 = vunpack.c.l.b16 %v2587
        %v3992 = vunpack.c.h.b16 %v2587
        %v3993 = vunpack.c.l.b16 %v2588
        %v3994 = vunpack.c.h.b16 %v2588
        %v3995 = vunpack.c.l.b16 %v2589
        %v3996 = vunpack.c.h.b16 %v2589
        %v3997 = vunpack.c.l.b16 %v2590
        %v3998 = vunpack.c.h.b16 %v2590
        %v3999 = vunpack.c.l.b16 %v2591
        %v4000 = vunpack.c.h.b16 %v2591
        %v4001 = vunpack.c.l.b16 %v2592
        %v4002 = vunpack.c.h.b16 %v2592
        %v4003 = vunpack.c.l.b16 %v2593
        %v4004 = vunpack.c.h.b16 %v2593
        %v4005 = vunpack.c.l.b16 %v2594
        %v4006 = vunpack.c.h.b16 %v2594
        %v4007 = vunpack.c.l.b16 %v2595
        %v4008 = vunpack.c.h.b16 %v2595
        %v4009 = vunpack.c.l.b16 %v2596
        %v4010 = vunpack.c.h.b16 %v2596
        %v4011 = vunpack.c.l.b16 %v2597
        %v4012 = vunpack.c.h.b16 %v2597
        %v4013 = vunpack.c.l.b16 %v2598
        %v4014 = vunpack.c.h.b16 %v2598
        %v4015 = vunpack.c.l.b16 %v2599
        %v4016 = vunpack.c.h.b16 %v2599
        %v4017 = vunpack.c.l.b16 %v2600
        %v4018 = vunpack.c.h.b16 %v2600
        %v4019 = vunpack.c.l.b16 %v2601
        %v4020 = vunpack.c.h.b16 %v2601
        %v4021 = vunpack.c.l.b16 %v2602
        %v4022 = vunpack.c.h.b16 %v2602
        %v4023 = vunpack.c.l.b16 %v2603
        %v4024 = vunpack.c.h.b16 %v2603
        %v4025 = vunpack.c.l.b16 %v2604
        %v4026 = vunpack.c.h.b16 %v2604
        %v4027 = vunpack.c.l.b16 %v2605
        %v4028 = vunpack.c.h.b16 %v2605
        %v4029 = vunpack.c.l.b16 %v2606
        %v4030 = vunpack.c.h.b16 %v2606
        %v4031 = vunpack.c.l.b16 %v2607
        %v4032 = vunpack.c.h.b16 %v2607
        %v4033 = vunpack.c.l.b16 %v2608
        %v4034 = vunpack.c.h.b16 %v2608
        %v4035 = vunpack.c.l.b16 %v2609
        %v4036 = vunpack.c.h.b16 %v2609
        %v4037 = vunpack.c.l.b16 %v2610
        %v4038 = vunpack.c.h.b16 %v2610
        %v4039 = vunpack.c.l.b16 %v2611
        %v4040 = vunpack.c.h.b16 %v2611
        %v4041 = vunpack.c.l.b16 %v2612
        %v4042 = vunpack.c.h.b16 %v2612
        %v4043 = vunpack.c.l.b16 %v2613
        %v4044 = vunpack.c.h.b16 %v2613
        %v4045 = vunpack.c.l.b16 %v2614
        %v4046 = vunpack.c.h.b16 %v2614
        %v4047 = vunpack.c.l.b16 %v2615
        %v4048 = vunpack.c.h.b16 %v2615
        %v4049 = vunpack.c.l.b16 %v2616
        %v4050 = vunpack.c.h.b16 %v2616
        %v4051 = vunpack.c.l.b16 %v2617
        %v4052 = vunpack.c.h.b16 %v2617
        %v4053 = vunpack.c.l.b16 %v2618
        %v4054 = vunpack.c.h.b16 %v2618
        %v4055 = vunpack.c.l.b16 %v2619
        %v4056 = vunpack.c.h.b16 %v2619
        %v4057 = vunpack.c.l.b16 %v2620
        %v4058 = vunpack.c.h.b16 %v2620
        %v4059 = vunpack.c.l.b16 %v2621
        %v4060 = vunpack.c.h.b16 %v2621
        %v4061 = vunpack.c.l.b16 %v2622
        %v4062 = vunpack.c.h.b16 %v2622
        %v4063 = vunpack.c.l.b16 %v2623
        %v4064 = vunpack.c.h.b16 %v2623
        %v4065 = vunpack.c.l.b16 %v2624
        %v4066 = vunpack.c.h.b16 %v2624
        %v4067 = vunpack.c.l.b16 %v2625
        %v4068 = vunpack.c.h.b16 %v2625
        %v4069 = vunpack.c.l.b16 %v2626
        %v4070 = vunpack.c.h.b16 %v2626
        %v4071 = vunpack.c.l.b16 %v2627
        %v4072 = vunpack.c.h.b16 %v2627
        %v4073 = vunpack.c.l.b16 %v2628
        %v4074 = vunpack.c.h.b16 %v2628
        %v4075 = vunpack.c.l.b16 %v2629
        %v4076 = vunpack.c.h.b16 %v2629
        %v4077 = vunpack.c.l.b16 %v2630
        %v4078 = vunpack.c.h.b16 %v2630
        %v4079 = vunpack.c.l.b16 %v2631
        %v4080 = vunpack.c.h.b16 %v2631
        %v4081 = vunpack.c.l.b16 %v2632
        %v4082 = vunpack.c.h.b16 %v2632
        %v4083 = vunpack.c.l.b16 %v2633
        %v4084 = vunpack.c.h.b16 %v2633
        %v4085 = vunpack.c.l.b16 %v2634
        %v4086 = vunpack.c.h.b16 %v2634
        %v4087 = vunpack.c.l.b16 %v2635
        %v4088 = vunpack.c.h.b16 %v2635
        %v4089 = vunpack.c.l.b16 %v2636
        %v4090 = vunpack.c.h.b16 %v2636
        %v4091 = vunpack.c.l.b16 %v2637
        %v4092 = vunpack.c.h.b16 %v2637
        %v4093 = vunpack.c.l.b16 %v2638
        %v4094 = vunpack.c.h.b16 %v2638
        %v4095 = vunpack.c.l.b16 %v2639
        %v4096 = vunpack.c.h.b16 %v2639
        %v4097 = vunpack.c.l.b16 %v2640
        %v4098 = vunpack.c.h.b16 %v2640
        %v4099 = vunpack.c.l.b16 %v2641
        %v4100 = vunpack.c.h.b16 %v2641
        %v4101 = vunpack.c.l.b16 %v2642
        %v4102 = vunpack.c.h.b16 %v2642
        %v4103 = vunpack.c.l.b16 %v2643
        %v4104 = vunpack.c.h.b16 %v2643
        %v4105 = vunpack.c.l.b16 %v2644
        %v4106 = vunpack.c.h.b16 %v2644
        %v4107 = vunpack.c.l.b16 %v2645
        %v4108 = vunpack.c.h.b16 %v2645
        %v4109 = vunpack.c.l.b16 %v2646
        %v4110 = vunpack.c.h.b16 %v2646
        %v4111 = vunpack.c.l.b16 %v2647
        %v4112 = vunpack.c.h.b16 %v2647
        %v4113 = vunpack.c.l.b16 %v2648
        %v4114 = vunpack.c.h.b16 %v2648
        %v4115 = vunpack.c.l.b16 %v2649
        %v4116 = vunpack.c.h.b16 %v2649
        %v4117 = vunpack.c.l.b16 %v2650
        %v4118 = vunpack.c.h.b16 %v2650
        %v4119 = vunpack.c.l.b16 %v2651
        %v4120 = vunpack.c.h.b16 %v2651
        %v4121 = vunpack.c.l.b16 %v2652
        %v4122 = vunpack.c.h.b16 %v2652
        %v4123 = vunpack.c.l.b16 %v2653
        %v4124 = vunpack.c.h.b16 %v2653
        %v4125 = vunpack.c.l.b16 %v2654
        %v4126 = vunpack.c.h.b16 %v2654
        %v4127 = vunpack.c.l.b16 %v2655
        %v4128 = vunpack.c.h.b16 %v2655
        %v4129 = vunpack.c.l.b16 %v2656
        %v4130 = vunpack.c.h.b16 %v2656
        %v4131 = vunpack.c.l.b16 %v2657
        %v4132 = vunpack.c.h.b16 %v2657
        %v4133 = vunpack.c.l.b16 %v2658
        %v4134 = vunpack.c.h.b16 %v2658
        %v4135 = vunpack.c.l.b16 %v2659
        %v4136 = vunpack.c.h.b16 %v2659
        %v4137 = vunpack.c.l.b16 %v2660
        %v4138 = vunpack.c.h.b16 %v2660
        %v4139 = vunpack.c.l.b16 %v2661
        %v4140 = vunpack.c.h.b16 %v2661
        %v4141 = vunpack.c.l.b16 %v2662
        %v4142 = vunpack.c.h.b16 %v2662
        %v4143 = vunpack.c.l.b16 %v2663
        %v4144 = vunpack.c.h.b16 %v2663
        %v4145 = vunpack.c.l.b16 %v2664
        %v4146 = vunpack.c.h.b16 %v2664
        %v4147 = vunpack.c.l.b16 %v2665
        %v4148 = vunpack.c.h.b16 %v2665
        %v4149 = vunpack.c.l.b16 %v2666
        %v4150 = vunpack.c.h.b16 %v2666
        %v4151 = vunpack.c.l.b16 %v2667
        %v4152 = vunpack.c.h.b16 %v2667
        %v4153 = vunpack.c.l.b16 %v2668
        %v4154 = vunpack.c.h.b16 %v2668
        %v4155 = vunpack.c.l.b16 %v2669
        %v4156 = vunpack.c.h.b16 %v2669
        %v4157 = vunpack.c.l.b16 %v2670
        %v4158 = vunpack.c.h.b16 %v2670
        %v4159 = vunpack.c.l.b16 %v2671
        %v4160 = vunpack.c.h.b16 %v2671
        %v4161 = vunpack.c.l.b16 %v2672
        %v4162 = vunpack.c.h.b16 %v2672
        %v4163 = vunpack.c.l.b16 %v2673
        %v4164 = vunpack.c.h.b16 %v2673
        %v4165 = vunpack.c.l.b16 %v2674
        %v4166 = vunpack.c.h.b16 %v2674
        %v4167 = vunpack.c.l.b16 %v2675
        %v4168 = vunpack.c.h.b16 %v2675
        %v4169 = vunpack.c.l.b16 %v2676
        %v4170 = vunpack.c.h.b16 %v2676
        %v4171 = vunpack.c.l.b16 %v2677
        %v4172 = vunpack.c.h.b16 %v2677
        %v4173 = vunpack.c.l.b16 %v2678
        %v4174 = vunpack.c.h.b16 %v2678
        %v4175 = vunpack.c.l.b16 %v2679
        %v4176 = vunpack.c.h.b16 %v2679
        %v4177 = vunpack.c.l.b16 %v2680
        %v4178 = vunpack.c.h.b16 %v2680
        %v4179 = vunpack.c.l.b16 %v2681
        %v4180 = vunpack.c.h.b16 %v2681
        %v4181 = vunpack.c.l.b16 %v2682
        %v4182 = vunpack.c.h.b16 %v2682
        %v4183 = vunpack.c.l.b16 %v2683
        %v4184 = vunpack.c.h.b16 %v2683
        %v4185 = vunpack.c.l.b16 %v2684
        %v4186 = vunpack.c.h.b16 %v2684
        %v4187 = vunpack.c.l.b16 %v2685
        %v4188 = vunpack.c.h.b16 %v2685
        %v4189 = vunpack.c.l.b16 %v2686
        %v4190 = vunpack.c.h.b16 %v2686
        %v4191 = vunpack.c.l.b16 %v2687
        %v4192 = vunpack.c.h.b16 %v2687
        %v4193 = vunpack.c.l.b16 %v2688
        %v4194 = vunpack.c.h.b16 %v2688
        %v4195 = vunpack.c.l.b16 %v2689
        %v4196 = vunpack.c.h.b16 %v2689
        %v4197 = vunpack.c.l.b16 %v2690
        %v4198 = vunpack.c.h.b16 %v2690
        %v4199 = vunpack.c.l.b16 %v2691
        %v4200 = vunpack.c.h.b16 %v2691
        %v4201 = vunpack.c.l.b16 %v2692
        %v4202 = vunpack.c.h.b16 %v2692
        %v4203 = vunpack.c.l.b16 %v2693
        %v4204 = vunpack.c.h.b16 %v2693
        %v4205 = vunpack.c.l.b16 %v2694
        %v4206 = vunpack.c.h.b16 %v2694
        %v4207 = vunpack.c.l.b16 %v2695
        %v4208 = vunpack.c.h.b16 %v2695
        %v4209 = vunpack.c.l.b16 %v2696
        %v4210 = vunpack.c.h.b16 %v2696
        %v4211 = vunpack.c.l.b16 %v2697
        %v4212 = vunpack.c.h.b16 %v2697
        %v4213 = vunpack.c.l.b16 %v2698
        %v4214 = vunpack.c.h.b16 %v2698
        %v4215 = vunpack.c.l.b16 %v2699
        %v4216 = vunpack.c.h.b16 %v2699
        %v4217 = vunpack.c.l.b16 %v2700
        %v4218 = vunpack.c.h.b16 %v2700
        %v4219 = vunpack.c.l.b16 %v2701
        %v4220 = vunpack.c.h.b16 %v2701
        %v4221 = vunpack.c.l.b16 %v2702
        %v4222 = vunpack.c.h.b16 %v2702
        %v4223 = vunpack.c.l.b16 %v2703
        %v4224 = vunpack.c.h.b16 %v2703
        %v4225 = vunpack.c.l.b16 %v2704
        %v4226 = vunpack.c.h.b16 %v2704
        %v4227 = vunpack.c.l.b16 %v2705
        %v4228 = vunpack.c.h.b16 %v2705
        %v4229 = vunpack.c.l.b16 %v2706
        %v4230 = vunpack.c.h.b16 %v2706
        %v4231 = vunpack.c.l.b16 %v2707
        %v4232 = vunpack.c.h.b16 %v2707
        %v4233 = vunpack.c.l.b16 %v2708
        %v4234 = vunpack.c.h.b16 %v2708
        %v4235 = vunpack.c.l.b16 %v2709
        %v4236 = vunpack.c.h.b16 %v2709
        %v4237 = vunpack.c.l.b16 %v2710
        %v4238 = vunpack.c.h.b16 %v2710
        %v4239 = vunpack.c.l.b16 %v2711
        %v4240 = vunpack.c.h.b16 %v2711
        %v4241 = vunpack.c.l.b16 %v2712
        %v4242 = vunpack.c.h.b16 %v2712
        %v4243 = vunpack.c.l.b16 %v2713
        %v4244 = vunpack.c.h.b16 %v2713
        %v4245 = vunpack.c.l.b16 %v2714
        %v4246 = vunpack.c.h.b16 %v2714
        %v4247 = vunpack.c.l.b16 %v2715
        %v4248 = vunpack.c.h.b16 %v2715
        %v4249 = vunpack.c.l.b16 %v2716
        %v4250 = vunpack.c.h.b16 %v2716
        %v4251 = vunpack.c.l.b16 %v2717
        %v4252 = vunpack.c.h.b16 %v2717
        %v4253 = vunpack.c.l.b16 %v2718
        %v4254 = vunpack.c.h.b16 %v2718
        %v4255 = vunpack.c.l.b16 %v2719
        %v4256 = vunpack.c.h.b16 %v2719
        %v4257 = vunpack.c.l.b16 %v2720
        %v4258 = vunpack.c.h.b16 %v2720
        %v4259 = vunpack.c.l.b16 %v2721
        %v4260 = vunpack.c.h.b16 %v2721
        %v4261 = vunpack.c.l.b16 %v2722
        %v4262 = vunpack.c.h.b16 %v2722
        %v4263 = vunpack.c.l.b16 %v2723
        %v4264 = vunpack.c.h.b16 %v2723
        %v4265 = vunpack.c.l.b16 %v2724
        %v4266 = vunpack.c.h.b16 %v2724
        %v4267 = vunpack.c.l.b16 %v2725
        %v4268 = vunpack.c.h.b16 %v2725
        %v4269 = vunpack.c.l.b16 %v2726
        %v4270 = vunpack.c.h.b16 %v2726
        %v4271 = vunpack.c.l.b16 %v2727
        %v4272 = vunpack.c.h.b16 %v2727
        %v4273 = vunpack.c.l.b16 %v2728
        %v4274 = vunpack.c.h.b16 %v2728
        %v4275 = vunpack.c.l.b16 %v2729
        %v4276 = vunpack.c.h.b16 %v2729
        %v4277 = vunpack.c.l.b16 %v2730
        %v4278 = vunpack.c.h.b16 %v2730
        %v4279 = vunpack.c.l.b16 %v2731
        %v4280 = vunpack.c.h.b16 %v2731
        %v4281 = vunpack.c.l.b16 %v2732
        %v4282 = vunpack.c.h.b16 %v2732
        %v4283 = vunpack.c.l.b16 %v2733
        %v4284 = vunpack.c.h.b16 %v2733
        %v4285 = vunpack.c.l.b16 %v2734
        %v4286 = vunpack.c.h.b16 %v2734
        %v4287 = vunpack.c.l.b16 %v2735
        %v4288 = vunpack.c.h.b16 %v2735
        %v4289 = vunpack.c.l.b16 %v2736
        %v4290 = vunpack.c.h.b16 %v2736
        %v4291 = vunpack.c.l.b16 %v2737
        %v4292 = vunpack.c.h.b16 %v2737
        %v4293 = vunpack.c.l.b16 %v2738
        %v4294 = vunpack.c.h.b16 %v2738
        %v4295 = vunpack.c.l.b16 %v2739
        %v4296 = vunpack.c.h.b16 %v2739
        %v4297 = vunpack.c.l.b16 %v2740
        %v4298 = vunpack.c.h.b16 %v2740
        %v4299 = vunpack.c.l.b16 %v2741
        %v4300 = vunpack.c.h.b16 %v2741
        %v4301 = vunpack.c.l.b16 %v2742
        %v4302 = vunpack.c.h.b16 %v2742
        %v4303 = vunpack.c.l.b16 %v2743
        %v4304 = vunpack.c.h.b16 %v2743
        %v4305 = vunpack.c.l.b16 %v2744
        %v4306 = vunpack.c.h.b16 %v2744
        %v4307 = vunpack.c.l.b16 %v2745
        %v4308 = vunpack.c.h.b16 %v2745
        %v4309 = vunpack.c.l.b16 %v2746
        %v4310 = vunpack.c.h.b16 %v2746
        %v4311 = vunpack.c.l.b16 %v2747
        %v4312 = vunpack.c.h.b16 %v2747
        %v4313 = vunpack.c.l.b16 %v2748
        %v4314 = vunpack.c.h.b16 %v2748
        %v4315 = vunpack.c.l.b16 %v2749
        %v4316 = vunpack.c.h.b16 %v2749
        %v4317 = vunpack.c.l.b16 %v2750
        %v4318 = vunpack.c.h.b16 %v2750
        %v4319 = vunpack.c.l.b16 %v2751
        %v4320 = vunpack.c.h.b16 %v2751
        %v4321 = vunpack.c.l.b16 %v2752
        %v4322 = vunpack.c.h.b16 %v2752
        %v4323 = vunpack.c.l.b16 %v2753
        %v4324 = vunpack.c.h.b16 %v2753
        %v4325 = vunpack.c.l.b16 %v2754
        %v4326 = vunpack.c.h.b16 %v2754
        %v4327 = vunpack.c.l.b16 %v2755
        %v4328 = vunpack.c.h.b16 %v2755
        %v4329 = vunpack.c.l.b16 %v2756
        %v4330 = vunpack.c.h.b16 %v2756
        %v4331 = vunpack.c.l.b16 %v2757
        %v4332 = vunpack.c.h.b16 %v2757
        %v4333 = vunpack.c.l.b16 %v2758
        %v4334 = vunpack.c.h.b16 %v2758
        %v4335 = vunpack.c.l.b16 %v2759
        %v4336 = vunpack.c.h.b16 %v2759
        %v4337 = vunpack.c.l.b16 %v2760
        %v4338 = vunpack.c.h.b16 %v2760
        %v4339 = vpack.c.b16 %v3323, %v3315
        %v4340 = vpack.c.b16 %v3324, %v3316
        %v4341 = vpack.c.b16 %v3325, %v3317
        %v4342 = vpack.c.b16 %v3326, %v3318
        %v4343 = vpack.c.b16 %v3327, %v3319
        %v4344 = vpack.c.b16 %v3328, %v3320
        %v4345 = vpack.c.b16 %v3329, %v3321
        %v4346 = vpack.c.b16 %v3330, %v3322
        %v4347 = vpack.c.b16 %v3339, %v3331
        %v4348 = vpack.c.b16 %v3340, %v3332
        %v4349 = vpack.c.b16 %v3341, %v3333
        %v4350 = vpack.c.b16 %v3342, %v3334
        %v4351 = vpack.c.b16 %v3343, %v3335
        %v4352 = vpack.c.b16 %v3344, %v3336
        %v4353 = vpack.c.b16 %v3345, %v3337
        %v4354 = vpack.c.b16 %v3346, %v3338
        %v4355 = vpack.c.b16 %v3355, %v3347
        %v4356 = vpack.c.b16 %v3356, %v3348
        %v4357 = vpack.c.b16 %v3357, %v3349
        %v4358 = vpack.c.b16 %v3358, %v3350
        %v4359 = vpack.c.b16 %v3359, %v3351
        %v4360 = vpack.c.b16 %v3360, %v3352
        %v4361 = vpack.c.b16 %v3361, %v3353
        %v4362 = vpack.c.b16 %v3362, %v3354
        %v4363 = vpack.c.b16 %v3371, %v3363
        %v4364 = vpack.c.b16 %v3372, %v3364
        %v4365 = vpack.c.b16 %v3373, %v3365
        %v4366 = vpack.c.b16 %v3374, %v3366
        %v4367 = vpack.c.b16 %v3375, %v3367
        %v4368 = vpack.c.b16 %v3376, %v3368
        %v4369 = vpack.c.b16 %v3377, %v3369
        %v4370 = vpack.c.b16 %v3378, %v3370
        %v4371 = vpack.c.b16 %v3387, %v3379
        %v4372 = vpack.c.b16 %v3388, %v3380
        %v4373 = vpack.c.b16 %v3389, %v3381
        %v4374 = vpack.c.b16 %v3390, %v3382
        %v4375 = vpack.c.b16 %v3391, %v3383
        %v4376 = vpack.c.b16 %v3392, %v3384
        %v4377 = vpack.c.b16 %v3393, %v3385
        %v4378 = vpack.c.b16 %v3394, %v3386
        %v4379 = vpack.c.b16 %v3403, %v3395
        %v4380 = vpack.c.b16 %v3404, %v3396
        %v4381 = vpack.c.b16 %v3405, %v3397
        %v4382 = vpack.c.b16 %v3406, %v3398
        %v4383 = vpack.c.b16 %v3407, %v3399
        %v4384 = vpack.c.b16 %v3408, %v3400
        %v4385 = vpack.c.b16 %v3409, %v3401
        %v4386 = vpack.c.b16 %v3410, %v3402
        %v4387 = vpack.c.b16 %v3419, %v3411
        %v4388 = vpack.c.b16 %v3420, %v3412
        %v4389 = vpack.c.b16 %v3421, %v3413
        %v4390 = vpack.c.b16 %v3422, %v3414
        %v4391 = vpack.c.b16 %v3423, %v3415
        %v4392 = vpack.c.b16 %v3424, %v3416
        %v4393 = vpack.c.b16 %v3425, %v3417
        %v4394 = vpack.c.b16 %v3426, %v3418
        %v4395 = vpack.c.b16 %v3435, %v3427
        %v4396 = vpack.c.b16 %v3436, %v3428
        %v4397 = vpack.c.b16 %v3437, %v3429
        %v4398 = vpack.c.b16 %v3438, %v3430
        %v4399 = vpack.c.b16 %v3439, %v3431
        %v4400 = vpack.c.b16 %v3440, %v3432
        %v4401 = vpack.c.b16 %v3441, %v3433
        %v4402 = vpack.c.b16 %v3442, %v3434
        %v4403 = vpack.c.b16 %v3451, %v3443
        %v4404 = vpack.c.b16 %v3452, %v3444
        %v4405 = vpack.c.b16 %v3453, %v3445
        %v4406 = vpack.c.b16 %v3454, %v3446
        %v4407 = vpack.c.b16 %v3455, %v3447
        %v4408 = vpack.c.b16 %v3456, %v3448
        %v4409 = vpack.c.b16 %v3457, %v3449
        %v4410 = vpack.c.b16 %v3458, %v3450
        %v4411 = vpack.c.b16 %v3467, %v3459
        %v4412 = vpack.c.b16 %v3468, %v3460
        %v4413 = vpack.c.b16 %v3469, %v3461
        %v4414 = vpack.c.b16 %v3470, %v3462
        %v4415 = vpack.c.b16 %v3471, %v3463
        %v4416 = vpack.c.b16 %v3472, %v3464
        %v4417 = vpack.c.b16 %v3473, %v3465
        %v4418 = vpack.c.b16 %v3474, %v3466
        %v4419 = vpack.c.b16 %v3483, %v3475
        %v4420 = vpack.c.b16 %v3484, %v3476
        %v4421 = vpack.c.b16 %v3485, %v3477
        %v4422 = vpack.c.b16 %v3486, %v3478
        %v4423 = vpack.c.b16 %v3487, %v3479
        %v4424 = vpack.c.b16 %v3488, %v3480
        %v4425 = vpack.c.b16 %v3489, %v3481
        %v4426 = vpack.c.b16 %v3490, %v3482
        %v4427 = vpack.c.b16 %v3499, %v3491
        %v4428 = vpack.c.b16 %v3500, %v3492
        %v4429 = vpack.c.b16 %v3501, %v3493
        %v4430 = vpack.c.b16 %v3502, %v3494
        %v4431 = vpack.c.b16 %v3503, %v3495
        %v4432 = vpack.c.b16 %v3504, %v3496
        %v4433 = vpack.c.b16 %v3505, %v3497
        %v4434 = vpack.c.b16 %v3506, %v3498
        %v4435 = vpack.c.b16 %v3515, %v3507
        %v4436 = vpack.c.b16 %v3516, %v3508
        %v4437 = vpack.c.b16 %v3517, %v3509
        %v4438 = vpack.c.b16 %v3518, %v3510
        %v4439 = vpack.c.b16 %v3519, %v3511
        %v4440 = vpack.c.b16 %v3520, %v3512
        %v4441 = vpack.c.b16 %v3521, %v3513
        %v4442 = vpack.c.b16 %v3522, %v3514
        %v4443 = vpack.c.b16 %v3531, %v3523
        %v4444 = vpack.c.b16 %v3532, %v3524
        %v4445 = vpack.c.b16 %v3533, %v3525
        %v4446 = vpack.c.b16 %v3534, %v3526
        %v4447 = vpack.c.b16 %v3535, %v3527
        %v4448 = vpack.c.b16 %v3536, %v3528
        %v4449 = vpack.c.b16 %v3537, %v3529
        %v4450 = vpack.c.b16 %v3538, %v3530
        %v4451 = vpack.c.b16 %v3547, %v3539
        %v4452 = vpack.c.b16 %v3548, %v3540
        %v4453 = vpack.c.b16 %v3549, %v3541
        %v4454 = vpack.c.b16 %v3550, %v3542
        %v4455 = vpack.c.b16 %v3551, %v3543
        %v4456 = vpack.c.b16 %v3552, %v3544
        %v4457 = vpack.c.b16 %v3553, %v3545
        %v4458 = vpack.c.b16 %v3554, %v3546
        %v4459 = vpack.c.b16 %v3563, %v3555
        %v4460 = vpack.c.b16 %v3564, %v3556
        %v4461 = vpack.c.b16 %v3565, %v3557
        %v4462 = vpack.c.b16 %v3566, %v3558
        %v4463 = vpack.c.b16 %v3567, %v3559
        %v4464 = vpack.c.b16 %v3568, %v3560
        %v4465 = vpack.c.b16 %v3569, %v3561
        %v4466 = vpack.c.b16 %v3570, %v3562
        %v4467 = vpack.c.b16 %v3579, %v3571
        %v4468 = vpack.c.b16 %v3580, %v3572
        %v4469 = vpack.c.b16 %v3581, %v3573
        %v4470 = vpack.c.b16 %v3582, %v3574
        %v4471 = vpack.c.b16 %v3583, %v3575
        %v4472 = vpack.c.b16 %v3584, %v3576
        %v4473 = vpack.c.b16 %v3585, %v3577
        %v4474 = vpack.c.b16 %v3586, %v3578
        %v4475 = vpack.c.b16 %v3595, %v3587
        %v4476 = vpack.c.b16 %v3596, %v3588
        %v4477 = vpack.c.b16 %v3597, %v3589
        %v4478 = vpack.c.b16 %v3598, %v3590
        %v4479 = vpack.c.b16 %v3599, %v3591
        %v4480 = vpack.c.b16 %v3600, %v3592
        %v4481 = vpack.c.b16 %v3601, %v3593
        %v4482 = vpack.c.b16 %v3602, %v3594
        %v4483 = vpack.c.b16 %v3611, %v3603
        %v4484 = vpack.c.b16 %v3612, %v3604
        %v4485 = vpack.c.b16 %v3613, %v3605
        %v4486 = vpack.c.b16 %v3614, %v3606
        %v4487 = vpack.c.b16 %v3615, %v3607
        %v4488 = vpack.c.b16 %v3616, %v3608
        %v4489 = vpack.c.b16 %v3617, %v3609
        %v4490 = vpack.c.b16 %v3618, %v3610
        %v4491 = vpack.c.b16 %v3627, %v3619
        %v4492 = vpack.c.b16 %v3628, %v3620
        %v4493 = vpack.c.b16 %v3629, %v3621
        %v4494 = vpack.c.b16 %v3630, %v3622
        %v4495 = vpack.c.b16 %v3631, %v3623
        %v4496 = vpack.c.b16 %v3632, %v3624
        %v4497 = vpack.c.b16 %v3633, %v3625
        %v4498 = vpack.c.b16 %v3634, %v3626
        %v4499 = vpack.c.b16 %v3643, %v3635
        %v4500 = vpack.c.b16 %v3644, %v3636
        %v4501 = vpack.c.b16 %v3645, %v3637
        %v4502 = vpack.c.b16 %v3646, %v3638
        %v4503 = vpack.c.b16 %v3647, %v3639
        %v4504 = vpack.c.b16 %v3648, %v3640
        %v4505 = vpack.c.b16 %v3649, %v3641
        %v4506 = vpack.c.b16 %v3650, %v3642
        %v4507 = vpack.c.b16 %v3659, %v3651
        %v4508 = vpack.c.b16 %v3660, %v3652
        %v4509 = vpack.c.b16 %v3661, %v3653
        %v4510 = vpack.c.b16 %v3662, %v3654
        %v4511 = vpack.c.b16 %v3663, %v3655
        %v4512 = vpack.c.b16 %v3664, %v3656
        %v4513 = vpack.c.b16 %v3665, %v3657
        %v4514 = vpack.c.b16 %v3666, %v3658
        %v4515 = vpack.c.b16 %v3675, %v3667
        %v4516 = vpack.c.b16 %v3676, %v3668
        %v4517 = vpack.c.b16 %v3677, %v3669
        %v4518 = vpack.c.b16 %v3678, %v3670
        %v4519 = vpack.c.b16 %v3679, %v3671
        %v4520 = vpack.c.b16 %v3680, %v3672
        %v4521 = vpack.c.b16 %v3681, %v3673
        %v4522 = vpack.c.b16 %v3682, %v3674
        %v4523 = vpack.c.b16 %v3691, %v3683
        %v4524 = vpack.c.b16 %v3692, %v3684
        %v4525 = vpack.c.b16 %v3693, %v3685
        %v4526 = vpack.c.b16 %v3694, %v3686
        %v4527 = vpack.c.b16 %v3695, %v3687
        %v4528 = vpack.c.b16 %v3696, %v3688
        %v4529 = vpack.c.b16 %v3697, %v3689
        %v4530 = vpack.c.b16 %v3698, %v3690
        %v4531 = vpack.c.b16 %v3707, %v3699
        %v4532 = vpack.c.b16 %v3708, %v3700
        %v4533 = vpack.c.b16 %v3709, %v3701
        %v4534 = vpack.c.b16 %v3710, %v3702
        %v4535 = vpack.c.b16 %v3711, %v3703
        %v4536 = vpack.c.b16 %v3712, %v3704
        %v4537 = vpack.c.b16 %v3713, %v3705
        %v4538 = vpack.c.b16 %v3714, %v3706
        %v4539 = vpack.c.b16 %v3723, %v3715
        %v4540 = vpack.c.b16 %v3724, %v3716
        %v4541 = vpack.c.b16 %v3725, %v3717
        %v4542 = vpack.c.b16 %v3726, %v3718
        %v4543 = vpack.c.b16 %v3727, %v3719
        %v4544 = vpack.c.b16 %v3728, %v3720
        %v4545 = vpack.c.b16 %v3729, %v3721
        %v4546 = vpack.c.b16 %v3730, %v3722
        %v4547 = vpack.c.b16 %v3739, %v3731
        %v4548 = vpack.c.b16 %v3740, %v3732
        %v4549 = vpack.c.b16 %v3741, %v3733
        %v4550 = vpack.c.b16 %v3742, %v3734
        %v4551 = vpack.c.b16 %v3743, %v3735
        %v4552 = vpack.c.b16 %v3744, %v3736
        %v4553 = vpack.c.b16 %v3745, %v3737
        %v4554 = vpack.c.b16 %v3746, %v3738
        %v4555 = vpack.c.b16 %v3755, %v3747
        %v4556 = vpack.c.b16 %v3756, %v3748
        %v4557 = vpack.c.b16 %v3757, %v3749
        %v4558 = vpack.c.b16 %v3758, %v3750
        %v4559 = vpack.c.b16 %v3759, %v3751
        %v4560 = vpack.c.b16 %v3760, %v3752
        %v4561 = vpack.c.b16 %v3761, %v3753
        %v4562 = vpack.c.b16 %v3762, %v3754
        %v4563 = vpack.c.b16 %v3771, %v3763
        %v4564 = vpack.c.b16 %v3772, %v3764
        %v4565 = vpack.c.b16 %v3773, %v3765
        %v4566 = vpack.c.b16 %v3774, %v3766
        %v4567 = vpack.c.b16 %v3775, %v3767
        %v4568 = vpack.c.b16 %v3776, %v3768
        %v4569 = vpack.c.b16 %v3777, %v3769
        %v4570 = vpack.c.b16 %v3778, %v3770
        %v4571 = vpack.c.b16 %v3787, %v3779
        %v4572 = vpack.c.b16 %v3788, %v3780
        %v4573 = vpack.c.b16 %v3789, %v3781
        %v4574 = vpack.c.b16 %v3790, %v3782
        %v4575 = vpack.c.b16 %v3791, %v3783
        %v4576 = vpack.c.b16 %v3792, %v3784
        %v4577 = vpack.c.b16 %v3793, %v3785
        %v4578 = vpack.c.b16 %v3794, %v3786
        %v4579 = vpack.c.b16 %v3803, %v3795
        %v4580 = vpack.c.b16 %v3804, %v3796
        %v4581 = vpack.c.b16 %v3805, %v3797
        %v4582 = vpack.c.b16 %v3806, %v3798
        %v4583 = vpack.c.b16 %v3807, %v3799
        %v4584 = vpack.c.b16 %v3808, %v3800
        %v4585 = vpack.c.b16 %v3809, %v3801
        %v4586 = vpack.c.b16 %v3810, %v3802
        %v4587 = vpack.c.b16 %v3819, %v3811
        %v4588 = vpack.c.b16 %v3820, %v3812
        %v4589 = vpack.c.b16 %v3821, %v3813
        %v4590 = vpack.c.b16 %v3822, %v3814
        %v4591 = vpack.c.b16 %v3823, %v3815
        %v4592 = vpack.c.b16 %v3824, %v3816
        %v4593 = vpack.c.b16 %v3825, %v3817
        %v4594 = vpack.c.b16 %v3826, %v3818
        %v4595 = vpack.c.b16 %v3835, %v3827
        %v4596 = vpack.c.b16 %v3836, %v3828
        %v4597 = vpack.c.b16 %v3837, %v3829
        %v4598 = vpack.c.b16 %v3838, %v3830
        %v4599 = vpack.c.b16 %v3839, %v3831
        %v4600 = vpack.c.b16 %v3840, %v3832
        %v4601 = vpack.c.b16 %v3841, %v3833
        %v4602 = vpack.c.b16 %v3842, %v3834
        %v4603 = vpack.c.b16 %v3851, %v3843
        %v4604 = vpack.c.b16 %v3852, %v3844
        %v4605 = vpack.c.b16 %v3853, %v3845
        %v4606 = vpack.c.b16 %v3854, %v3846
        %v4607 = vpack.c.b16 %v3855, %v3847
        %v4608 = vpack.c.b16 %v3856, %v3848
        %v4609 = vpack.c.b16 %v3857, %v3849
        %v4610 = vpack.c.b16 %v3858, %v3850
        %v4611 = vpack.c.b16 %v3867, %v3859
        %v4612 = vpack.c.b16 %v3868, %v3860
        %v4613 = vpack.c.b16 %v3869, %v3861
        %v4614 = vpack.c.b16 %v3870, %v3862
        %v4615 = vpack.c.b16 %v3871, %v3863
        %v4616 = vpack.c.b16 %v3872, %v3864
        %v4617 = vpack.c.b16 %v3873, %v3865
        %v4618 = vpack.c.b16 %v3874, %v3866
        %v4619 = vpack.c.b16 %v3883, %v3875
        %v4620 = vpack.c.b16 %v3884, %v3876
        %v4621 = vpack.c.b16 %v3885, %v3877
        %v4622 = vpack.c.b16 %v3886, %v3878
        %v4623 = vpack.c.b16 %v3887, %v3879
        %v4624 = vpack.c.b16 %v3888, %v3880
        %v4625 = vpack.c.b16 %v3889, %v3881
        %v4626 = vpack.c.b16 %v3890, %v3882
        %v4627 = vpack.c.b16 %v3899, %v3891
        %v4628 = vpack.c.b16 %v3900, %v3892
        %v4629 = vpack.c.b16 %v3901, %v3893
        %v4630 = vpack.c.b16 %v3902, %v3894
        %v4631 = vpack.c.b16 %v3903, %v3895
        %v4632 = vpack.c.b16 %v3904, %v3896
        %v4633 = vpack.c.b16 %v3905, %v3897
        %v4634 = vpack.c.b16 %v3906, %v3898
        %v4635 = vpack.c.b16 %v3915, %v3907
        %v4636 = vpack.c.b16 %v3916, %v3908
        %v4637 = vpack.c.b16 %v3917, %v3909
        %v4638 = vpack.c.b16 %v3918, %v3910
        %v4639 = vpack.c.b16 %v3919, %v3911
        %v4640 = vpack.c.b16 %v3920, %v3912
        %v4641 = vpack.c.b16 %v3921, %v3913
        %v4642 = vpack.c.b16 %v3922, %v3914
        %v4643 = vpack.c.b16 %v3931, %v3923
        %v4644 = vpack.c.b16 %v3932, %v3924
        %v4645 = vpack.c.b16 %v3933, %v3925
        %v4646 = vpack.c.b16 %v3934, %v3926
        %v4647 = vpack.c.b16 %v3935, %v3927
        %v4648 = vpack.c.b16 %v3936, %v3928
        %v4649 = vpack.c.b16 %v3937, %v3929
        %v4650 = vpack.c.b16 %v3938, %v3930
        %v4651 = vpack.c.b16 %v3947, %v3939
        %v4652 = vpack.c.b16 %v3948, %v3940
        %v4653 = vpack.c.b16 %v3949, %v3941
        %v4654 = vpack.c.b16 %v3950, %v3942
        %v4655 = vpack.c.b16 %v3951, %v3943
        %v4656 = vpack.c.b16 %v3952, %v3944
        %v4657 = vpack.c.b16 %v3953, %v3945
        %v4658 = vpack.c.b16 %v3954, %v3946
        %v4659 = vpack.c.b16 %v3963, %v3955
        %v4660 = vpack.c.b16 %v3964, %v3956
        %v4661 = vpack.c.b16 %v3965, %v3957
        %v4662 = vpack.c.b16 %v3966, %v3958
        %v4663 = vpack.c.b16 %v3967, %v3959
        %v4664 = vpack.c.b16 %v3968, %v3960
        %v4665 = vpack.c.b16 %v3969, %v3961
        %v4666 = vpack.c.b16 %v3970, %v3962
        %v4667 = vpack.c.b16 %v3979, %v3971
        %v4668 = vpack.c.b16 %v3980, %v3972
        %v4669 = vpack.c.b16 %v3981, %v3973
        %v4670 = vpack.c.b16 %v3982, %v3974
        %v4671 = vpack.c.b16 %v3983, %v3975
        %v4672 = vpack.c.b16 %v3984, %v3976
        %v4673 = vpack.c.b16 %v3985, %v3977
        %v4674 = vpack.c.b16 %v3986, %v3978
        %v4675 = vpack.c.b16 %v3995, %v3987
        %v4676 = vpack.c.b16 %v3996, %v3988
        %v4677 = vpack.c.b16 %v3997, %v3989
        %v4678 = vpack.c.b16 %v3998, %v3990
        %v4679 = vpack.c.b16 %v3999, %v3991
        %v4680 = vpack.c.b16 %v4000, %v3992
        %v4681 = vpack.c.b16 %v4001, %v3993
        %v4682 = vpack.c.b16 %v4002, %v3994
        %v4683 = vpack.c.b16 %v4011, %v4003
        %v4684 = vpack.c.b16 %v4012, %v4004
        %v4685 = vpack.c.b16 %v4013, %v4005
        %v4686 = vpack.c.b16 %v4014, %v4006
        %v4687 = vpack.c.b16 %v4015, %v4007
        %v4688 = vpack.c.b16 %v4016, %v4008
        %v4689 = vpack.c.b16 %v4017, %v4009
        %v4690 = vpack.c.b16 %v4018, %v4010
        %v4691 = vpack.c.b16 %v4027, %v4019
        %v4692 = vpack.c.b16 %v4028, %v4020
        %v4693 = vpack.c.b16 %v4029, %v4021
        %v4694 = vpack.c.b16 %v4030, %v4022
        %v4695 = vpack.c.b16 %v4031, %v4023
        %v4696 = vpack.c.b16 %v4032, %v4024
        %v4697 = vpack.c.b16 %v4033, %v4025
        %v4698 = vpack.c.b16 %v4034, %v4026
        %v4699 = vpack.c.b16 %v4043, %v4035
        %v4700 = vpack.c.b16 %v4044, %v4036
        %v4701 = vpack.c.b16 %v4045, %v4037
        %v4702 = vpack.c.b16 %v4046, %v4038
        %v4703 = vpack.c.b16 %v4047, %v4039
        %v4704 = vpack.c.b16 %v4048, %v4040
        %v4705 = vpack.c.b16 %v4049, %v4041
        %v4706 = vpack.c.b16 %v4050, %v4042
        %v4707 = vpack.c.b16 %v4059, %v4051
        %v4708 = vpack.c.b16 %v4060, %v4052
        %v4709 = vpack.c.b16 %v4061, %v4053
        %v4710 = vpack.c.b16 %v4062, %v4054
        %v4711 = vpack.c.b16 %v4063, %v4055
        %v4712 = vpack.c.b16 %v4064, %v4056
        %v4713 = vpack.c.b16 %v4065, %v4057
        %v4714 = vpack.c.b16 %v4066, %v4058
        %v4715 = vpack.c.b16 %v4075, %v4067
        %v4716 = vpack.c.b16 %v4076, %v4068
        %v4717 = vpack.c.b16 %v4077, %v4069
        %v4718 = vpack.c.b16 %v4078, %v4070
        %v4719 = vpack.c.b16 %v4079, %v4071
        %v4720 = vpack.c.b16 %v4080, %v4072
        %v4721 = vpack.c.b16 %v4081, %v4073
        %v4722 = vpack.c.b16 %v4082, %v4074
        %v4723 = vpack.c.b16 %v4091, %v4083
        %v4724 = vpack.c.b16 %v4092, %v4084
        %v4725 = vpack.c.b16 %v4093, %v4085
        %v4726 = vpack.c.b16 %v4094, %v4086
        %v4727 = vpack.c.b16 %v4095, %v4087
        %v4728 = vpack.c.b16 %v4096, %v4088
        %v4729 = vpack.c.b16 %v4097, %v4089
        %v4730 = vpack.c.b16 %v4098, %v4090
        %v4731 = vpack.c.b16 %v4107, %v4099
        %v4732 = vpack.c.b16 %v4108, %v4100
        %v4733 = vpack.c.b16 %v4109, %v4101
        %v4734 = vpack.c.b16 %v4110, %v4102
        %v4735 = vpack.c.b16 %v4111, %v4103
        %v4736 = vpack.c.b16 %v4112, %v4104
        %v4737 = vpack.c.b16 %v4113, %v4105
        %v4738 = vpack.c.b16 %v4114, %v4106
        %v4739 = vpack.c.b16 %v4123, %v4115
        %v4740 = vpack.c.b16 %v4124, %v4116
        %v4741 = vpack.c.b16 %v4125, %v4117
        %v4742 = vpack.c.b16 %v4126, %v4118
        %v4743 = vpack.c.b16 %v4127, %v4119
        %v4744 = vpack.c.b16 %v4128, %v4120
        %v4745 = vpack.c.b16 %v4129, %v4121
        %v4746 = vpack.c.b16 %v4130, %v4122
        %v4747 = vpack.c.b16 %v4139, %v4131
        %v4748 = vpack.c.b16 %v4140, %v4132
        %v4749 = vpack.c.b16 %v4141, %v4133
        %v4750 = vpack.c.b16 %v4142, %v4134
        %v4751 = vpack.c.b16 %v4143, %v4135
        %v4752 = vpack.c.b16 %v4144, %v4136
        %v4753 = vpack.c.b16 %v4145, %v4137
        %v4754 = vpack.c.b16 %v4146, %v4138
        %v4755 = vpack.c.b16 %v4155, %v4147
        %v4756 = vpack.c.b16 %v4156, %v4148
        %v4757 = vpack.c.b16 %v4157, %v4149
        %v4758 = vpack.c.b16 %v4158, %v4150
        %v4759 = vpack.c.b16 %v4159, %v4151
        %v4760 = vpack.c.b16 %v4160, %v4152
        %v4761 = vpack.c.b16 %v4161, %v4153
        %v4762 = vpack.c.b16 %v4162, %v4154
        %v4763 = vpack.c.b16 %v4171, %v4163
        %v4764 = vpack.c.b16 %v4172, %v4164
        %v4765 = vpack.c.b16 %v4173, %v4165
        %v4766 = vpack.c.b16 %v4174, %v4166
        %v4767 = vpack.c.b16 %v4175, %v4167
        %v4768 = vpack.c.b16 %v4176, %v4168
        %v4769 = vpack.c.b16 %v4177, %v4169
        %v4770 = vpack.c.b16 %v4178, %v4170
        %v4771 = vpack.c.b16 %v4187, %v4179
        %v4772 = vpack.c.b16 %v4188, %v4180
        %v4773 = vpack.c.b16 %v4189, %v4181
        %v4774 = vpack.c.b16 %v4190, %v4182
        %v4775 = vpack.c.b16 %v4191, %v4183
        %v4776 = vpack.c.b16 %v4192, %v4184
        %v4777 = vpack.c.b16 %v4193, %v4185
        %v4778 = vpack.c.b16 %v4194, %v4186
        %v4779 = vpack.c.b16 %v4203, %v4195
        %v4780 = vpack.c.b16 %v4204, %v4196
        %v4781 = vpack.c.b16 %v4205, %v4197
        %v4782 = vpack.c.b16 %v4206, %v4198
        %v4783 = vpack.c.b16 %v4207, %v4199
        %v4784 = vpack.c.b16 %v4208, %v4200
        %v4785 = vpack.c.b16 %v4209, %v4201
        %v4786 = vpack.c.b16 %v4210, %v4202
        %v4787 = vpack.c.b16 %v4219, %v4211
        %v4788 = vpack.c.b16 %v4220, %v4212
        %v4789 = vpack.c.b16 %v4221, %v4213
        %v4790 = vpack.c.b16 %v4222, %v4214
        %v4791 = vpack.c.b16 %v4223, %v4215
        %v4792 = vpack.c.b16 %v4224, %v4216
        %v4793 = vpack.c.b16 %v4225, %v4217
        %v4794 = vpack.c.b16 %v4226, %v4218
        %v4795 = vpack.c.b16 %v4235, %v4227
        %v4796 = vpack.c.b16 %v4236, %v4228
        %v4797 = vpack.c.b16 %v4237, %v4229
        %v4798 = vpack.c.b16 %v4238, %v4230
        %v4799 = vpack.c.b16 %v4239, %v4231
        %v4800 = vpack.c.b16 %v4240, %v4232
        %v4801 = vpack.c.b16 %v4241, %v4233
        %v4802 = vpack.c.b16 %v4242, %v4234
        %v4803 = vpack.c.b16 %v4251, %v4243
        %v4804 = vpack.c.b16 %v4252, %v4244
        %v4805 = vpack.c.b16 %v4253, %v4245
        %v4806 = vpack.c.b16 %v4254, %v4246
        %v4807 = vpack.c.b16 %v4255, %v4247
        %v4808 = vpack.c.b16 %v4256, %v4248
        %v4809 = vpack.c.b16 %v4257, %v4249
        %v4810 = vpack.c.b16 %v4258, %v4250
        %v4811 = vpack.c.b16 %v4267, %v4259
        %v4812 = vpack.c.b16 %v4268, %v4260
        %v4813 = vpack.c.b16 %v4269, %v4261
        %v4814 = vpack.c.b16 %v4270, %v4262
        %v4815 = vpack.c.b16 %v4271, %v4263
        %v4816 = vpack.c.b16 %v4272, %v4264
        %v4817 = vpack.c.b16 %v4273, %v4265
        %v4818 = vpack.c.b16 %v4274, %v4266
        %v4819 = vpack.c.b16 %v4283, %v4275
        %v4820 = vpack.c.b16 %v4284, %v4276
        %v4821 = vpack.c.b16 %v4285, %v4277
        %v4822 = vpack.c.b16 %v4286, %v4278
        %v4823 = vpack.c.b16 %v4287, %v4279
        %v4824 = vpack.c.b16 %v4288, %v4280
        %v4825 = vpack.c.b16 %v4289, %v4281
        %v4826 = vpack.c.b16 %v4290, %v4282
        %v4827 = vpack.c.b16 %v4299, %v4291
        %v4828 = vpack.c.b16 %v4300, %v4292
        %v4829 = vpack.c.b16 %v4301, %v4293
        %v4830 = vpack.c.b16 %v4302, %v4294
        %v4831 = vpack.c.b16 %v4303, %v4295
        %v4832 = vpack.c.b16 %v4304, %v4296
        %v4833 = vpack.c.b16 %v4305, %v4297
        %v4834 = vpack.c.b16 %v4306, %v4298
        %v4835 = vpack.c.b16 %v4315, %v4307
        %v4836 = vpack.c.b16 %v4316, %v4308
        %v4837 = vpack.c.b16 %v4317, %v4309
        %v4838 = vpack.c.b16 %v4318, %v4310
        %v4839 = vpack.c.b16 %v4319, %v4311
        %v4840 = vpack.c.b16 %v4320, %v4312
        %v4841 = vpack.c.b16 %v4321, %v4313
        %v4842 = vpack.c.b16 %v4322, %v4314
        %v4843 = vpack.c.b16 %v4331, %v4323
        %v4844 = vpack.c.b16 %v4332, %v4324
        %v4845 = vpack.c.b16 %v4333, %v4325
        %v4846 = vpack.c.b16 %v4334, %v4326
        %v4847 = vpack.c.b16 %v4335, %v4327
        %v4848 = vpack.c.b16 %v4336, %v4328
        %v4849 = vpack.c.b16 %v4337, %v4329
        %v4850 = vpack.c.b16 %v4338, %v4330
        %5363 = vmatprep.subr.bf16.mxu0 %v4396
        %5364 = vmatpush1.bf16.msra.mxu0 %v4395
        %5365 = vmatprep.subr.bf16.mxu0 %v4388
        %5366 = vmatpush1.bf16.msra.mxu0 %v4387
        %5367 = vmatprep.subr.bf16.mxu0 %v4380
        %5368 = vmatpush1.bf16.msra.mxu0 %v4379
        %5369 = vmatprep.subr.bf16.mxu0 %v4372
        %5370 = vmatpush1.bf16.msra.mxu0 %v4371
        %5371 = vmatprep.subr.bf16.mxu0 %v4364
        %5372 = vmatpush1.bf16.msra.mxu0 %v4363
        %5373 = vmatprep.subr.bf16.mxu0 %v4356
        %5374 = vmatpush1.bf16.msra.mxu0 %v4355
        %5375 = vmatprep.subr.bf16.mxu0 %v4348
        %5376 = vmatpush1.bf16.msra.mxu0 %v4347
        %5377 = vmatprep.subr.bf16.mxu0 %v4340
        %5378 = vmatpush1.bf16.msra.mxu0 %v4339
        %5379 = vmatprep.subr.bf16.mxu0 %v4460
        %5380 = vmatpush2.bf16.msra.mxu0 %v4459
        %5381 = vmatprep.subr.bf16.mxu0 %v4452
        %5382 = vmatpush2.bf16.msra.mxu0 %v4451
        %5383 = vmatprep.subr.bf16.mxu0 %v4444
        %5384 = vmatpush2.bf16.msra.mxu0 %v4443
        %5385 = vmatprep.subr.bf16.mxu0 %v4436
        %5386 = vmatpush2.bf16.msra.mxu0 %v4435
        %5387 = vmatprep.subr.bf16.mxu0 %v4428
        %5388 = vmatpush2.bf16.msra.mxu0 %v4427
        %5389 = vmatprep.subr.bf16.mxu0 %v4420
        %5390 = vmatpush2.bf16.msra.mxu0 %v4419
        %5391 = vmatprep.subr.bf16.mxu0 %v4412
        %5392 = vmatpush2.bf16.msra.mxu0 %v4411
        %5393 = vmatprep.subr.bf16.mxu0 %v4404
        %5394 = vmatpush2.bf16.msra.mxu0 %v4403
        %5395 = vmatprep.mubr.bf16.mxu0 %v2242
        %5396 = vmatmul.mubr.bf16.gmra.mxu0 %v2241
        %v5397 = vpop.f32.mrf.mxu0
        %v5398 = vadd.f32 %v2766, %v5397
        %v5399 = vpop.f32.mrf.mxu0
        %v5400 = vadd.f32 %v2770, %v5399
        %v5401 = vpop.f32.mrf.mxu0
        %v5402 = vadd.f32 %v2766, %v5401
        %v5403 = vpop.f32.mrf.mxu0
        %v5404 = vadd.f32 %v2770, %v5403
        %5405 = vdwg.mxu0
        %5406 = vmatprep.subr.bf16.mxu0 %v4524
        %5407 = vmatpush1.bf16.msra.mxu0 %v4523
        %5408 = vmatprep.subr.bf16.mxu0 %v4516
        %5409 = vmatpush1.bf16.msra.mxu0 %v4515
        %5410 = vmatprep.subr.bf16.mxu0 %v4508
        %5411 = vmatpush1.bf16.msra.mxu0 %v4507
        %5412 = vmatprep.subr.bf16.mxu0 %v4500
        %5413 = vmatpush1.bf16.msra.mxu0 %v4499
        %5414 = vmatprep.subr.bf16.mxu0 %v4492
        %5415 = vmatpush1.bf16.msra.mxu0 %v4491
        %5416 = vmatprep.subr.bf16.mxu0 %v4484
        %5417 = vmatpush1.bf16.msra.mxu0 %v4483
        %5418 = vmatprep.subr.bf16.mxu0 %v4476
        %5419 = vmatpush1.bf16.msra.mxu0 %v4475
        %5420 = vmatprep.subr.bf16.mxu0 %v4468
        %5421 = vmatpush1.bf16.msra.mxu0 %v4467
        %5422 = vmatprep.subr.bf16.mxu0 %v4588
        %5423 = vmatpush2.bf16.msra.mxu0 %v4587
        %5424 = vmatprep.subr.bf16.mxu0 %v4580
        %5425 = vmatpush2.bf16.msra.mxu0 %v4579
        %5426 = vmatprep.subr.bf16.mxu0 %v4572
        %5427 = vmatpush2.bf16.msra.mxu0 %v4571
        %5428 = vmatprep.subr.bf16.mxu0 %v4564
        %5429 = vmatpush2.bf16.msra.mxu0 %v4563
        %5430 = vmatprep.subr.bf16.mxu0 %v4556
        %5431 = vmatpush2.bf16.msra.mxu0 %v4555
        %5432 = vmatprep.subr.bf16.mxu0 %v4548
        %5433 = vmatpush2.bf16.msra.mxu0 %v4547
        %5434 = vmatprep.subr.bf16.mxu0 %v4540
        %5435 = vmatpush2.bf16.msra.mxu0 %v4539
        %5436 = vmatprep.subr.bf16.mxu0 %v4532
        %5437 = vmatpush2.bf16.msra.mxu0 %v4531
        %5438 = vmatprep.mubr.bf16.mxu0 %v2244
        %5439 = vmatmul.mubr.bf16.gmra.mxu0 %v2243
        %v5440 = vpop.f32.mrf.mxu0
        %v5441 = vadd.f32 %v5398, %v5440
        %v5442 = vpop.f32.mrf.mxu0
        %v5443 = vadd.f32 %v5400, %v5442
        %v5444 = vpop.f32.mrf.mxu0
        %v5445 = vadd.f32 %v5402, %v5444
        %v5446 = vpop.f32.mrf.mxu0
        %v5447 = vadd.f32 %v5404, %v5446
        %5448 = vdwg.mxu0
        %5449 = vmatprep.subr.bf16.mxu0 %v4652
        %5450 = vmatpush1.bf16.msra.mxu0 %v4651
        %5451 = vmatprep.subr.bf16.mxu0 %v4644
        %5452 = vmatpush1.bf16.msra.mxu0 %v4643
        %5453 = vmatprep.subr.bf16.mxu0 %v4636
        %5454 = vmatpush1.bf16.msra.mxu0 %v4635
        %5455 = vmatprep.subr.bf16.mxu0 %v4628
        %5456 = vmatpush1.bf16.msra.mxu0 %v4627
        %5457 = vmatprep.subr.bf16.mxu0 %v4620
        %5458 = vmatpush1.bf16.msra.mxu0 %v4619
        %5459 = vmatprep.subr.bf16.mxu0 %v4612
        %5460 = vmatpush1.bf16.msra.mxu0 %v4611
        %5461 = vmatprep.subr.bf16.mxu0 %v4604
        %5462 = vmatpush1.bf16.msra.mxu0 %v4603
        %5463 = vmatprep.subr.bf16.mxu0 %v4596
        %5464 = vmatpush1.bf16.msra.mxu0 %v4595
        %5465 = vmatprep.subr.bf16.mxu0 %v4716
        %5466 = vmatpush2.bf16.msra.mxu0 %v4715
        %5467 = vmatprep.subr.bf16.mxu0 %v4708
        %5468 = vmatpush2.bf16.msra.mxu0 %v4707
        %5469 = vmatprep.subr.bf16.mxu0 %v4700
        %5470 = vmatpush2.bf16.msra.mxu0 %v4699
        %5471 = vmatprep.subr.bf16.mxu0 %v4692
        %5472 = vmatpush2.bf16.msra.mxu0 %v4691
        %5473 = vmatprep.subr.bf16.mxu0 %v4684
        %5474 = vmatpush2.bf16.msra.mxu0 %v4683
        %5475 = vmatprep.subr.bf16.mxu0 %v4676
        %5476 = vmatpush2.bf16.msra.mxu0 %v4675
        %5477 = vmatprep.subr.bf16.mxu0 %v4668
        %5478 = vmatpush2.bf16.msra.mxu0 %v4667
        %5479 = vmatprep.subr.bf16.mxu0 %v4660
        %5480 = vmatpush2.bf16.msra.mxu0 %v4659
        %5481 = vmatprep.mubr.bf16.mxu0 %v2246
        %5482 = vmatmul.mubr.bf16.gmra.mxu0 %v2245
        %v5483 = vpop.f32.mrf.mxu0
        %v5484 = vadd.f32 %v5441, %v5483
        %v5485 = vpop.f32.mrf.mxu0
        %v5486 = vadd.f32 %v5443, %v5485
        %v5487 = vpop.f32.mrf.mxu0
        %v5488 = vadd.f32 %v5445, %v5487
        %v5489 = vpop.f32.mrf.mxu0
        %v5490 = vadd.f32 %v5447, %v5489
        %5491 = vdwg.mxu0
        %5492 = vmatprep.subr.bf16.mxu0 %v4780
        %5493 = vmatpush1.bf16.msra.mxu0 %v4779
        %5494 = vmatprep.subr.bf16.mxu0 %v4772
        %5495 = vmatpush1.bf16.msra.mxu0 %v4771
        %5496 = vmatprep.subr.bf16.mxu0 %v4764
        %5497 = vmatpush1.bf16.msra.mxu0 %v4763
        %5498 = vmatprep.subr.bf16.mxu0 %v4756
        %5499 = vmatpush1.bf16.msra.mxu0 %v4755
        %5500 = vmatprep.subr.bf16.mxu0 %v4748
        %5501 = vmatpush1.bf16.msra.mxu0 %v4747
        %5502 = vmatprep.subr.bf16.mxu0 %v4740
        %5503 = vmatpush1.bf16.msra.mxu0 %v4739
        %5504 = vmatprep.subr.bf16.mxu0 %v4732
        %5505 = vmatpush1.bf16.msra.mxu0 %v4731
        %5506 = vmatprep.subr.bf16.mxu0 %v4724
        %5507 = vmatpush1.bf16.msra.mxu0 %v4723
        %5508 = vmatprep.subr.bf16.mxu0 %v4844
        %5509 = vmatpush2.bf16.msra.mxu0 %v4843
        %5510 = vmatprep.subr.bf16.mxu0 %v4836
        %5511 = vmatpush2.bf16.msra.mxu0 %v4835
        %5512 = vmatprep.subr.bf16.mxu0 %v4828
        %5513 = vmatpush2.bf16.msra.mxu0 %v4827
        %5514 = vmatprep.subr.bf16.mxu0 %v4820
        %5515 = vmatpush2.bf16.msra.mxu0 %v4819
        %5516 = vmatprep.subr.bf16.mxu0 %v4812
        %5517 = vmatpush2.bf16.msra.mxu0 %v4811
        %5518 = vmatprep.subr.bf16.mxu0 %v4804
        %5519 = vmatpush2.bf16.msra.mxu0 %v4803
        %5520 = vmatprep.subr.bf16.mxu0 %v4796
        %5521 = vmatpush2.bf16.msra.mxu0 %v4795
        %5522 = vmatprep.subr.bf16.mxu0 %v4788
        %5523 = vmatpush2.bf16.msra.mxu0 %v4787
        %5524 = vmatprep.mubr.bf16.mxu0 %v2248
        %5525 = vmatmul.mubr.bf16.gmra.mxu0 %v2247
        %v5526 = vpop.f32.mrf.mxu0
        %v5527 = vadd.f32 %v5484, %v5526
        %v5528 = vpop.f32.mrf.mxu0
        %v5529 = vadd.f32 %v5486, %v5528
        %v5530 = vpop.f32.mrf.mxu0
        %v5531 = vadd.f32 %v5488, %v5530
        %v5532 = vpop.f32.mrf.mxu0
        %v5533 = vadd.f32 %v5490, %v5532
        %5534 = vdwg.mxu0
        %5535 = vmatprep.subr.bf16.mxu0 %v4398
        %5536 = vmatpush1.bf16.msra.mxu0 %v4397
        %5537 = vmatprep.subr.bf16.mxu0 %v4390
        %5538 = vmatpush1.bf16.msra.mxu0 %v4389
        %5539 = vmatprep.subr.bf16.mxu0 %v4382
        %5540 = vmatpush1.bf16.msra.mxu0 %v4381
        %5541 = vmatprep.subr.bf16.mxu0 %v4374
        %5542 = vmatpush1.bf16.msra.mxu0 %v4373
        %5543 = vmatprep.subr.bf16.mxu0 %v4366
        %5544 = vmatpush1.bf16.msra.mxu0 %v4365
        %5545 = vmatprep.subr.bf16.mxu0 %v4358
        %5546 = vmatpush1.bf16.msra.mxu0 %v4357
        %5547 = vmatprep.subr.bf16.mxu0 %v4350
        %5548 = vmatpush1.bf16.msra.mxu0 %v4349
        %5549 = vmatprep.subr.bf16.mxu0 %v4342
        %5550 = vmatpush1.bf16.msra.mxu0 %v4341
        %5551 = vmatprep.subr.bf16.mxu0 %v4462
        %5552 = vmatpush2.bf16.msra.mxu0 %v4461
        %5553 = vmatprep.subr.bf16.mxu0 %v4454
        %5554 = vmatpush2.bf16.msra.mxu0 %v4453
        %5555 = vmatprep.subr.bf16.mxu0 %v4446
        %5556 = vmatpush2.bf16.msra.mxu0 %v4445
        %5557 = vmatprep.subr.bf16.mxu0 %v4438
        %5558 = vmatpush2.bf16.msra.mxu0 %v4437
        %5559 = vmatprep.subr.bf16.mxu0 %v4430
        %5560 = vmatpush2.bf16.msra.mxu0 %v4429
        %5561 = vmatprep.subr.bf16.mxu0 %v4422
        %5562 = vmatpush2.bf16.msra.mxu0 %v4421
        %5563 = vmatprep.subr.bf16.mxu0 %v4414
        %5564 = vmatpush2.bf16.msra.mxu0 %v4413
        %5565 = vmatprep.subr.bf16.mxu0 %v4406
        %5566 = vmatpush2.bf16.msra.mxu0 %v4405
        %5567 = vmatprep.mubr.bf16.mxu0 %v2242
        %5568 = vmatmul.mubr.bf16.gmra.mxu0 %v2241
        %v5569 = vpop.f32.mrf.mxu0
        %v5570 = vadd.f32 %v2774, %v5569
        %v5571 = vpop.f32.mrf.mxu0
        %v5572 = vadd.f32 %v2778, %v5571
        %v5573 = vpop.f32.mrf.mxu0
        %v5574 = vadd.f32 %v2774, %v5573
        %v5575 = vpop.f32.mrf.mxu0
        %v5576 = vadd.f32 %v2778, %v5575
        %5577 = vdwg.mxu0
        %5578 = vmatprep.subr.bf16.mxu0 %v4526
        %5579 = vmatpush1.bf16.msra.mxu0 %v4525
        %5580 = vmatprep.subr.bf16.mxu0 %v4518
        %5581 = vmatpush1.bf16.msra.mxu0 %v4517
        %5582 = vmatprep.subr.bf16.mxu0 %v4510
        %5583 = vmatpush1.bf16.msra.mxu0 %v4509
        %5584 = vmatprep.subr.bf16.mxu0 %v4502
        %5585 = vmatpush1.bf16.msra.mxu0 %v4501
        %5586 = vmatprep.subr.bf16.mxu0 %v4494
        %5587 = vmatpush1.bf16.msra.mxu0 %v4493
        %5588 = vmatprep.subr.bf16.mxu0 %v4486
        %5589 = vmatpush1.bf16.msra.mxu0 %v4485
        %5590 = vmatprep.subr.bf16.mxu0 %v4478
        %5591 = vmatpush1.bf16.msra.mxu0 %v4477
        %5592 = vmatprep.subr.bf16.mxu0 %v4470
        %5593 = vmatpush1.bf16.msra.mxu0 %v4469
        %5594 = vmatprep.subr.bf16.mxu0 %v4590
        %5595 = vmatpush2.bf16.msra.mxu0 %v4589
        %5596 = vmatprep.subr.bf16.mxu0 %v4582
        %5597 = vmatpush2.bf16.msra.mxu0 %v4581
        %5598 = vmatprep.subr.bf16.mxu0 %v4574
        %5599 = vmatpush2.bf16.msra.mxu0 %v4573
        %5600 = vmatprep.subr.bf16.mxu0 %v4566
        %5601 = vmatpush2.bf16.msra.mxu0 %v4565
        %5602 = vmatprep.subr.bf16.mxu0 %v4558
        %5603 = vmatpush2.bf16.msra.mxu0 %v4557
        %5604 = vmatprep.subr.bf16.mxu0 %v4550
        %5605 = vmatpush2.bf16.msra.mxu0 %v4549
        %5606 = vmatprep.subr.bf16.mxu0 %v4542
        %5607 = vmatpush2.bf16.msra.mxu0 %v4541
        %5608 = vmatprep.subr.bf16.mxu0 %v4534
        %5609 = vmatpush2.bf16.msra.mxu0 %v4533
        %5610 = vmatprep.mubr.bf16.mxu0 %v2244
        %5611 = vmatmul.mubr.bf16.gmra.mxu0 %v2243
        %v5612 = vpop.f32.mrf.mxu0
        %v5613 = vadd.f32 %v5570, %v5612
        %v5614 = vpop.f32.mrf.mxu0
        %v5615 = vadd.f32 %v5572, %v5614
        %v5616 = vpop.f32.mrf.mxu0
        %v5617 = vadd.f32 %v5574, %v5616
        %v5618 = vpop.f32.mrf.mxu0
        %v5619 = vadd.f32 %v5576, %v5618
        %5620 = vdwg.mxu0
        %5621 = vmatprep.subr.bf16.mxu0 %v4654
        %5622 = vmatpush1.bf16.msra.mxu0 %v4653
        %5623 = vmatprep.subr.bf16.mxu0 %v4646
        %5624 = vmatpush1.bf16.msra.mxu0 %v4645
        %5625 = vmatprep.subr.bf16.mxu0 %v4638
        %5626 = vmatpush1.bf16.msra.mxu0 %v4637
        %5627 = vmatprep.subr.bf16.mxu0 %v4630
        %5628 = vmatpush1.bf16.msra.mxu0 %v4629
        %5629 = vmatprep.subr.bf16.mxu0 %v4622
        %5630 = vmatpush1.bf16.msra.mxu0 %v4621
        %5631 = vmatprep.subr.bf16.mxu0 %v4614
        %5632 = vmatpush1.bf16.msra.mxu0 %v4613
        %5633 = vmatprep.subr.bf16.mxu0 %v4606
        %5634 = vmatpush1.bf16.msra.mxu0 %v4605
        %5635 = vmatprep.subr.bf16.mxu0 %v4598
        %5636 = vmatpush1.bf16.msra.mxu0 %v4597
        %5637 = vmatprep.subr.bf16.mxu0 %v4718
        %5638 = vmatpush2.bf16.msra.mxu0 %v4717
        %5639 = vmatprep.subr.bf16.mxu0 %v4710
        %5640 = vmatpush2.bf16.msra.mxu0 %v4709
        %5641 = vmatprep.subr.bf16.mxu0 %v4702
        %5642 = vmatpush2.bf16.msra.mxu0 %v4701
        %5643 = vmatprep.subr.bf16.mxu0 %v4694
        %5644 = vmatpush2.bf16.msra.mxu0 %v4693
        %5645 = vmatprep.subr.bf16.mxu0 %v4686
        %5646 = vmatpush2.bf16.msra.mxu0 %v4685
        %5647 = vmatprep.subr.bf16.mxu0 %v4678
        %5648 = vmatpush2.bf16.msra.mxu0 %v4677
        %5649 = vmatprep.subr.bf16.mxu0 %v4670
        %5650 = vmatpush2.bf16.msra.mxu0 %v4669
        %5651 = vmatprep.subr.bf16.mxu0 %v4662
        %5652 = vmatpush2.bf16.msra.mxu0 %v4661
        %5653 = vmatprep.mubr.bf16.mxu0 %v2246
        %5654 = vmatmul.mubr.bf16.gmra.mxu0 %v2245
        %v5655 = vpop.f32.mrf.mxu0
        %v5656 = vadd.f32 %v5613, %v5655
        %v5657 = vpop.f32.mrf.mxu0
        %v5658 = vadd.f32 %v5615, %v5657
        %v5659 = vpop.f32.mrf.mxu0
        %v5660 = vadd.f32 %v5617, %v5659
        %v5661 = vpop.f32.mrf.mxu0
        %v5662 = vadd.f32 %v5619, %v5661
        %5663 = vdwg.mxu0
        %5664 = vmatprep.subr.bf16.mxu0 %v4782
        %5665 = vmatpush1.bf16.msra.mxu0 %v4781
        %5666 = vmatprep.subr.bf16.mxu0 %v4774
        %5667 = vmatpush1.bf16.msra.mxu0 %v4773
        %5668 = vmatprep.subr.bf16.mxu0 %v4766
        %5669 = vmatpush1.bf16.msra.mxu0 %v4765
        %5670 = vmatprep.subr.bf16.mxu0 %v4758
        %5671 = vmatpush1.bf16.msra.mxu0 %v4757
        %5672 = vmatprep.subr.bf16.mxu0 %v4750
        %5673 = vmatpush1.bf16.msra.mxu0 %v4749
        %5674 = vmatprep.subr.bf16.mxu0 %v4742
        %5675 = vmatpush1.bf16.msra.mxu0 %v4741
        %5676 = vmatprep.subr.bf16.mxu0 %v4734
        %5677 = vmatpush1.bf16.msra.mxu0 %v4733
        %5678 = vmatprep.subr.bf16.mxu0 %v4726
        %5679 = vmatpush1.bf16.msra.mxu0 %v4725
        %5680 = vmatprep.subr.bf16.mxu0 %v4846
        %5681 = vmatpush2.bf16.msra.mxu0 %v4845
        %5682 = vmatprep.subr.bf16.mxu0 %v4838
        %5683 = vmatpush2.bf16.msra.mxu0 %v4837
        %5684 = vmatprep.subr.bf16.mxu0 %v4830
        %5685 = vmatpush2.bf16.msra.mxu0 %v4829
        %5686 = vmatprep.subr.bf16.mxu0 %v4822
        %5687 = vmatpush2.bf16.msra.mxu0 %v4821
        %5688 = vmatprep.subr.bf16.mxu0 %v4814
        %5689 = vmatpush2.bf16.msra.mxu0 %v4813
        %5690 = vmatprep.subr.bf16.mxu0 %v4806
        %5691 = vmatpush2.bf16.msra.mxu0 %v4805
        %5692 = vmatprep.subr.bf16.mxu0 %v4798
        %5693 = vmatpush2.bf16.msra.mxu0 %v4797
        %5694 = vmatprep.subr.bf16.mxu0 %v4790
        %5695 = vmatpush2.bf16.msra.mxu0 %v4789
        %5696 = vmatprep.mubr.bf16.mxu0 %v2248
        %5697 = vmatmul.mubr.bf16.gmra.mxu0 %v2247
        %v5698 = vpop.f32.mrf.mxu0
        %v5699 = vadd.f32 %v5656, %v5698
        %v5700 = vpop.f32.mrf.mxu0
        %v5701 = vadd.f32 %v5658, %v5700
        %v5702 = vpop.f32.mrf.mxu0
        %v5703 = vadd.f32 %v5660, %v5702
        %v5704 = vpop.f32.mrf.mxu0
        %v5705 = vadd.f32 %v5662, %v5704
        %5706 = vdwg.mxu0
        %5707 = vmatprep.subr.bf16.mxu0 %v4400
        %5708 = vmatpush1.bf16.msra.mxu0 %v4399
        %5709 = vmatprep.subr.bf16.mxu0 %v4392
        %5710 = vmatpush1.bf16.msra.mxu0 %v4391
        %5711 = vmatprep.subr.bf16.mxu0 %v4384
        %5712 = vmatpush1.bf16.msra.mxu0 %v4383
        %5713 = vmatprep.subr.bf16.mxu0 %v4376
        %5714 = vmatpush1.bf16.msra.mxu0 %v4375
        %5715 = vmatprep.subr.bf16.mxu0 %v4368
        %5716 = vmatpush1.bf16.msra.mxu0 %v4367
        %5717 = vmatprep.subr.bf16.mxu0 %v4360
        %5718 = vmatpush1.bf16.msra.mxu0 %v4359
        %5719 = vmatprep.subr.bf16.mxu0 %v4352
        %5720 = vmatpush1.bf16.msra.mxu0 %v4351
        %5721 = vmatprep.subr.bf16.mxu0 %v4344
        %5722 = vmatpush1.bf16.msra.mxu0 %v4343
        %5723 = vmatprep.subr.bf16.mxu0 %v4464
        %5724 = vmatpush2.bf16.msra.mxu0 %v4463
        %5725 = vmatprep.subr.bf16.mxu0 %v4456
        %5726 = vmatpush2.bf16.msra.mxu0 %v4455
        %5727 = vmatprep.subr.bf16.mxu0 %v4448
        %5728 = vmatpush2.bf16.msra.mxu0 %v4447
        %5729 = vmatprep.subr.bf16.mxu0 %v4440
        %5730 = vmatpush2.bf16.msra.mxu0 %v4439
        %5731 = vmatprep.subr.bf16.mxu0 %v4432
        %5732 = vmatpush2.bf16.msra.mxu0 %v4431
        %5733 = vmatprep.subr.bf16.mxu0 %v4424
        %5734 = vmatpush2.bf16.msra.mxu0 %v4423
        %5735 = vmatprep.subr.bf16.mxu0 %v4416
        %5736 = vmatpush2.bf16.msra.mxu0 %v4415
        %5737 = vmatprep.subr.bf16.mxu0 %v4408
        %5738 = vmatpush2.bf16.msra.mxu0 %v4407
        %5739 = vmatprep.mubr.bf16.mxu0 %v2242
        %5740 = vmatmul.mubr.bf16.gmra.mxu0 %v2241
        %v5741 = vpop.f32.mrf.mxu0
        %v5742 = vadd.f32 %v2782, %v5741
        %v5743 = vpop.f32.mrf.mxu0
        %v5744 = vadd.f32 %v2786, %v5743
        %v5745 = vpop.f32.mrf.mxu0
        %v5746 = vadd.f32 %v2782, %v5745
        %v5747 = vpop.f32.mrf.mxu0
        %v5748 = vadd.f32 %v2786, %v5747
        %5749 = vdwg.mxu0
        %5750 = vmatprep.subr.bf16.mxu0 %v4528
        %5751 = vmatpush1.bf16.msra.mxu0 %v4527
        %5752 = vmatprep.subr.bf16.mxu0 %v4520
        %5753 = vmatpush1.bf16.msra.mxu0 %v4519
        %5754 = vmatprep.subr.bf16.mxu0 %v4512
        %5755 = vmatpush1.bf16.msra.mxu0 %v4511
        %5756 = vmatprep.subr.bf16.mxu0 %v4504
        %5757 = vmatpush1.bf16.msra.mxu0 %v4503
        %5758 = vmatprep.subr.bf16.mxu0 %v4496
        %5759 = vmatpush1.bf16.msra.mxu0 %v4495
        %5760 = vmatprep.subr.bf16.mxu0 %v4488
        %5761 = vmatpush1.bf16.msra.mxu0 %v4487
        %5762 = vmatprep.subr.bf16.mxu0 %v4480
        %5763 = vmatpush1.bf16.msra.mxu0 %v4479
        %5764 = vmatprep.subr.bf16.mxu0 %v4472
        %5765 = vmatpush1.bf16.msra.mxu0 %v4471
        %5766 = vmatprep.subr.bf16.mxu0 %v4592
        %5767 = vmatpush2.bf16.msra.mxu0 %v4591
        %5768 = vmatprep.subr.bf16.mxu0 %v4584
        %5769 = vmatpush2.bf16.msra.mxu0 %v4583
        %5770 = vmatprep.subr.bf16.mxu0 %v4576
        %5771 = vmatpush2.bf16.msra.mxu0 %v4575
        %5772 = vmatprep.subr.bf16.mxu0 %v4568
        %5773 = vmatpush2.bf16.msra.mxu0 %v4567
        %5774 = vmatprep.subr.bf16.mxu0 %v4560
        %5775 = vmatpush2.bf16.msra.mxu0 %v4559
        %5776 = vmatprep.subr.bf16.mxu0 %v4552
        %5777 = vmatpush2.bf16.msra.mxu0 %v4551
        %5778 = vmatprep.subr.bf16.mxu0 %v4544
        %5779 = vmatpush2.bf16.msra.mxu0 %v4543
        %5780 = vmatprep.subr.bf16.mxu0 %v4536
        %5781 = vmatpush2.bf16.msra.mxu0 %v4535
        %5782 = vmatprep.mubr.bf16.mxu0 %v2244
        %5783 = vmatmul.mubr.bf16.gmra.mxu0 %v2243
        %v5784 = vpop.f32.mrf.mxu0
        %v5785 = vadd.f32 %v5742, %v5784
        %v5786 = vpop.f32.mrf.mxu0
        %v5787 = vadd.f32 %v5744, %v5786
        %v5788 = vpop.f32.mrf.mxu0
        %v5789 = vadd.f32 %v5746, %v5788
        %v5790 = vpop.f32.mrf.mxu0
        %v5791 = vadd.f32 %v5748, %v5790
        %5792 = vdwg.mxu0
        %5793 = vmatprep.subr.bf16.mxu0 %v4656
        %5794 = vmatpush1.bf16.msra.mxu0 %v4655
        %5795 = vmatprep.subr.bf16.mxu0 %v4648
        %5796 = vmatpush1.bf16.msra.mxu0 %v4647
        %5797 = vmatprep.subr.bf16.mxu0 %v4640
        %5798 = vmatpush1.bf16.msra.mxu0 %v4639
        %5799 = vmatprep.subr.bf16.mxu0 %v4632
        %5800 = vmatpush1.bf16.msra.mxu0 %v4631
        %5801 = vmatprep.subr.bf16.mxu0 %v4624
        %5802 = vmatpush1.bf16.msra.mxu0 %v4623
        %5803 = vmatprep.subr.bf16.mxu0 %v4616
        %5804 = vmatpush1.bf16.msra.mxu0 %v4615
        %5805 = vmatprep.subr.bf16.mxu0 %v4608
        %5806 = vmatpush1.bf16.msra.mxu0 %v4607
        %5807 = vmatprep.subr.bf16.mxu0 %v4600
        %5808 = vmatpush1.bf16.msra.mxu0 %v4599
        %5809 = vmatprep.subr.bf16.mxu0 %v4720
        %5810 = vmatpush2.bf16.msra.mxu0 %v4719
        %5811 = vmatprep.subr.bf16.mxu0 %v4712
        %5812 = vmatpush2.bf16.msra.mxu0 %v4711
        %5813 = vmatprep.subr.bf16.mxu0 %v4704
        %5814 = vmatpush2.bf16.msra.mxu0 %v4703
        %5815 = vmatprep.subr.bf16.mxu0 %v4696
        %5816 = vmatpush2.bf16.msra.mxu0 %v4695
        %5817 = vmatprep.subr.bf16.mxu0 %v4688
        %5818 = vmatpush2.bf16.msra.mxu0 %v4687
        %5819 = vmatprep.subr.bf16.mxu0 %v4680
        %5820 = vmatpush2.bf16.msra.mxu0 %v4679
        %5821 = vmatprep.subr.bf16.mxu0 %v4672
        %5822 = vmatpush2.bf16.msra.mxu0 %v4671
        %5823 = vmatprep.subr.bf16.mxu0 %v4664
        %5824 = vmatpush2.bf16.msra.mxu0 %v4663
        %5825 = vmatprep.mubr.bf16.mxu0 %v2246
        %5826 = vmatmul.mubr.bf16.gmra.mxu0 %v2245
        %v5827 = vpop.f32.mrf.mxu0
        %v5828 = vadd.f32 %v5785, %v5827
        %v5829 = vpop.f32.mrf.mxu0
        %v5830 = vadd.f32 %v5787, %v5829
        %v5831 = vpop.f32.mrf.mxu0
        %v5832 = vadd.f32 %v5789, %v5831
        %v5833 = vpop.f32.mrf.mxu0
        %v5834 = vadd.f32 %v5791, %v5833
        %5835 = vdwg.mxu0
        %5836 = vmatprep.subr.bf16.mxu0 %v4784
        %5837 = vmatpush1.bf16.msra.mxu0 %v4783
        %5838 = vmatprep.subr.bf16.mxu0 %v4776
        %5839 = vmatpush1.bf16.msra.mxu0 %v4775
        %5840 = vmatprep.subr.bf16.mxu0 %v4768
        %5841 = vmatpush1.bf16.msra.mxu0 %v4767
        %5842 = vmatprep.subr.bf16.mxu0 %v4760
        %5843 = vmatpush1.bf16.msra.mxu0 %v4759
        %5844 = vmatprep.subr.bf16.mxu0 %v4752
        %5845 = vmatpush1.bf16.msra.mxu0 %v4751
        %5846 = vmatprep.subr.bf16.mxu0 %v4744
        %5847 = vmatpush1.bf16.msra.mxu0 %v4743
        %5848 = vmatprep.subr.bf16.mxu0 %v4736
        %5849 = vmatpush1.bf16.msra.mxu0 %v4735
        %5850 = vmatprep.subr.bf16.mxu0 %v4728
        %5851 = vmatpush1.bf16.msra.mxu0 %v4727
        %5852 = vmatprep.subr.bf16.mxu0 %v4848
        %5853 = vmatpush2.bf16.msra.mxu0 %v4847
        %5854 = vmatprep.subr.bf16.mxu0 %v4840
        %5855 = vmatpush2.bf16.msra.mxu0 %v4839
        %5856 = vmatprep.subr.bf16.mxu0 %v4832
        %5857 = vmatpush2.bf16.msra.mxu0 %v4831
        %5858 = vmatprep.subr.bf16.mxu0 %v4824
        %5859 = vmatpush2.bf16.msra.mxu0 %v4823
        %5860 = vmatprep.subr.bf16.mxu0 %v4816
        %5861 = vmatpush2.bf16.msra.mxu0 %v4815
        %5862 = vmatprep.subr.bf16.mxu0 %v4808
        %5863 = vmatpush2.bf16.msra.mxu0 %v4807
        %5864 = vmatprep.subr.bf16.mxu0 %v4800
        %5865 = vmatpush2.bf16.msra.mxu0 %v4799
        %5866 = vmatprep.subr.bf16.mxu0 %v4792
        %5867 = vmatpush2.bf16.msra.mxu0 %v4791
        %5868 = vmatprep.mubr.bf16.mxu0 %v2248
        %5869 = vmatmul.mubr.bf16.gmra.mxu0 %v2247
        %v5870 = vpop.f32.mrf.mxu0
        %v5871 = vadd.f32 %v5828, %v5870
        %v5872 = vpop.f32.mrf.mxu0
        %v5873 = vadd.f32 %v5830, %v5872
        %v5874 = vpop.f32.mrf.mxu0
        %v5875 = vadd.f32 %v5832, %v5874
        %v5876 = vpop.f32.mrf.mxu0
        %v5877 = vadd.f32 %v5834, %v5876
        %5878 = vdwg.mxu0
        %5879 = vmatprep.subr.bf16.mxu0 %v4402
        %5880 = vmatpush1.bf16.msra.mxu0 %v4401
        %5881 = vmatprep.subr.bf16.mxu0 %v4394
        %5882 = vmatpush1.bf16.msra.mxu0 %v4393
        %5883 = vmatprep.subr.bf16.mxu0 %v4386
        %5884 = vmatpush1.bf16.msra.mxu0 %v4385
        %5885 = vmatprep.subr.bf16.mxu0 %v4378
        %5886 = vmatpush1.bf16.msra.mxu0 %v4377
        %5887 = vmatprep.subr.bf16.mxu0 %v4370
        %5888 = vmatpush1.bf16.msra.mxu0 %v4369
        %5889 = vmatprep.subr.bf16.mxu0 %v4362
        %5890 = vmatpush1.bf16.msra.mxu0 %v4361
        %5891 = vmatprep.subr.bf16.mxu0 %v4354
        %5892 = vmatpush1.bf16.msra.mxu0 %v4353
        %5893 = vmatprep.subr.bf16.mxu0 %v4346
        %5894 = vmatpush1.bf16.msra.mxu0 %v4345
        %5895 = vmatprep.subr.bf16.mxu0 %v4466
        %5896 = vmatpush2.bf16.msra.mxu0 %v4465
        %5897 = vmatprep.subr.bf16.mxu0 %v4458
        %5898 = vmatpush2.bf16.msra.mxu0 %v4457
        %5899 = vmatprep.subr.bf16.mxu0 %v4450
        %5900 = vmatpush2.bf16.msra.mxu0 %v4449
        %5901 = vmatprep.subr.bf16.mxu0 %v4442
        %5902 = vmatpush2.bf16.msra.mxu0 %v4441
        %5903 = vmatprep.subr.bf16.mxu0 %v4434
        %5904 = vmatpush2.bf16.msra.mxu0 %v4433
        %5905 = vmatprep.subr.bf16.mxu0 %v4426
        %5906 = vmatpush2.bf16.msra.mxu0 %v4425
        %5907 = vmatprep.subr.bf16.mxu0 %v4418
        %5908 = vmatpush2.bf16.msra.mxu0 %v4417
        %5909 = vmatprep.subr.bf16.mxu0 %v4410
        %5910 = vmatpush2.bf16.msra.mxu0 %v4409
        %5911 = vmatprep.mubr.bf16.mxu0 %v2242
        %5912 = vmatmul.mubr.bf16.gmra.mxu0 %v2241
        %v5913 = vpop.f32.mrf.mxu0
        %v5914 = vadd.f32 %v2790, %v5913
        %v5915 = vpop.f32.mrf.mxu0
        %v5916 = vadd.f32 %v2794, %v5915
        %v5917 = vpop.f32.mrf.mxu0
        %v5918 = vadd.f32 %v2790, %v5917
        %v5919 = vpop.f32.mrf.mxu0
        %v5920 = vadd.f32 %v2794, %v5919
        %5921 = vdwg.mxu0
        %5922 = vmatprep.subr.bf16.mxu0 %v4530
        %5923 = vmatpush1.bf16.msra.mxu0 %v4529
        %5924 = vmatprep.subr.bf16.mxu0 %v4522
        %5925 = vmatpush1.bf16.msra.mxu0 %v4521
        %5926 = vmatprep.subr.bf16.mxu0 %v4514
        %5927 = vmatpush1.bf16.msra.mxu0 %v4513
        %5928 = vmatprep.subr.bf16.mxu0 %v4506
        %5929 = vmatpush1.bf16.msra.mxu0 %v4505
        %5930 = vmatprep.subr.bf16.mxu0 %v4498
        %5931 = vmatpush1.bf16.msra.mxu0 %v4497
        %5932 = vmatprep.subr.bf16.mxu0 %v4490
        %5933 = vmatpush1.bf16.msra.mxu0 %v4489
        %5934 = vmatprep.subr.bf16.mxu0 %v4482
        %5935 = vmatpush1.bf16.msra.mxu0 %v4481
        %5936 = vmatprep.subr.bf16.mxu0 %v4474
        %5937 = vmatpush1.bf16.msra.mxu0 %v4473
        %5938 = vmatprep.subr.bf16.mxu0 %v4594
        %5939 = vmatpush2.bf16.msra.mxu0 %v4593
        %5940 = vmatprep.subr.bf16.mxu0 %v4586
        %5941 = vmatpush2.bf16.msra.mxu0 %v4585
        %5942 = vmatprep.subr.bf16.mxu0 %v4578
        %5943 = vmatpush2.bf16.msra.mxu0 %v4577
        %5944 = vmatprep.subr.bf16.mxu0 %v4570
        %5945 = vmatpush2.bf16.msra.mxu0 %v4569
        %5946 = vmatprep.subr.bf16.mxu0 %v4562
        %5947 = vmatpush2.bf16.msra.mxu0 %v4561
        %5948 = vmatprep.subr.bf16.mxu0 %v4554
        %5949 = vmatpush2.bf16.msra.mxu0 %v4553
        %5950 = vmatprep.subr.bf16.mxu0 %v4546
        %5951 = vmatpush2.bf16.msra.mxu0 %v4545
        %5952 = vmatprep.subr.bf16.mxu0 %v4538
        %5953 = vmatpush2.bf16.msra.mxu0 %v4537
        %5954 = vmatprep.mubr.bf16.mxu0 %v2244
        %5955 = vmatmul.mubr.bf16.gmra.mxu0 %v2243
        %v5956 = vpop.f32.mrf.mxu0
        %v5957 = vadd.f32 %v5914, %v5956
        %v5958 = vpop.f32.mrf.mxu0
        %v5959 = vadd.f32 %v5916, %v5958
        %v5960 = vpop.f32.mrf.mxu0
        %v5961 = vadd.f32 %v5918, %v5960
        %v5962 = vpop.f32.mrf.mxu0
        %v5963 = vadd.f32 %v5920, %v5962
        %5964 = vdwg.mxu0
        %5965 = vmatprep.subr.bf16.mxu0 %v4658
        %5966 = vmatpush1.bf16.msra.mxu0 %v4657
        %5967 = vmatprep.subr.bf16.mxu0 %v4650
        %5968 = vmatpush1.bf16.msra.mxu0 %v4649
        %5969 = vmatprep.subr.bf16.mxu0 %v4642
        %5970 = vmatpush1.bf16.msra.mxu0 %v4641
        %5971 = vmatprep.subr.bf16.mxu0 %v4634
        %5972 = vmatpush1.bf16.msra.mxu0 %v4633
        %5973 = vmatprep.subr.bf16.mxu0 %v4626
        %5974 = vmatpush1.bf16.msra.mxu0 %v4625
        %5975 = vmatprep.subr.bf16.mxu0 %v4618
        %5976 = vmatpush1.bf16.msra.mxu0 %v4617
        %5977 = vmatprep.subr.bf16.mxu0 %v4610
        %5978 = vmatpush1.bf16.msra.mxu0 %v4609
        %5979 = vmatprep.subr.bf16.mxu0 %v4602
        %5980 = vmatpush1.bf16.msra.mxu0 %v4601
        %5981 = vmatprep.subr.bf16.mxu0 %v4722
        %5982 = vmatpush2.bf16.msra.mxu0 %v4721
        %5983 = vmatprep.subr.bf16.mxu0 %v4714
        %5984 = vmatpush2.bf16.msra.mxu0 %v4713
        %5985 = vmatprep.subr.bf16.mxu0 %v4706
        %5986 = vmatpush2.bf16.msra.mxu0 %v4705
        %5987 = vmatprep.subr.bf16.mxu0 %v4698
        %5988 = vmatpush2.bf16.msra.mxu0 %v4697
        %5989 = vmatprep.subr.bf16.mxu0 %v4690
        %5990 = vmatpush2.bf16.msra.mxu0 %v4689
        %5991 = vmatprep.subr.bf16.mxu0 %v4682
        %5992 = vmatpush2.bf16.msra.mxu0 %v4681
        %5993 = vmatprep.subr.bf16.mxu0 %v4674
        %5994 = vmatpush2.bf16.msra.mxu0 %v4673
        %5995 = vmatprep.subr.bf16.mxu0 %v4666
        %5996 = vmatpush2.bf16.msra.mxu0 %v4665
        %5997 = vmatprep.mubr.bf16.mxu0 %v2246
        %5998 = vmatmul.mubr.bf16.gmra.mxu0 %v2245
        %v5999 = vpop.f32.mrf.mxu0
        %v6000 = vadd.f32 %v5957, %v5999
        %v6001 = vpop.f32.mrf.mxu0
        %v6002 = vadd.f32 %v5959, %v6001
        %v6003 = vpop.f32.mrf.mxu0
        %v6004 = vadd.f32 %v5961, %v6003
        %v6005 = vpop.f32.mrf.mxu0
        %v6006 = vadd.f32 %v5963, %v6005
        %6007 = vdwg.mxu0
        %6008 = vmatprep.subr.bf16.mxu0 %v4786
        %6009 = vmatpush1.bf16.msra.mxu0 %v4785
        %6010 = vmatprep.subr.bf16.mxu0 %v4778
        %6011 = vmatpush1.bf16.msra.mxu0 %v4777
        %6012 = vmatprep.subr.bf16.mxu0 %v4770
        %6013 = vmatpush1.bf16.msra.mxu0 %v4769
        %6014 = vmatprep.subr.bf16.mxu0 %v4762
        %6015 = vmatpush1.bf16.msra.mxu0 %v4761
        %6016 = vmatprep.subr.bf16.mxu0 %v4754
        %6017 = vmatpush1.bf16.msra.mxu0 %v4753
        %6018 = vmatprep.subr.bf16.mxu0 %v4746
        %6019 = vmatpush1.bf16.msra.mxu0 %v4745
        %6020 = vmatprep.subr.bf16.mxu0 %v4738
        %6021 = vmatpush1.bf16.msra.mxu0 %v4737
        %6022 = vmatprep.subr.bf16.mxu0 %v4730
        %6023 = vmatpush1.bf16.msra.mxu0 %v4729
        %6024 = vmatprep.subr.bf16.mxu0 %v4850
        %6025 = vmatpush2.bf16.msra.mxu0 %v4849
        %6026 = vmatprep.subr.bf16.mxu0 %v4842
        %6027 = vmatpush2.bf16.msra.mxu0 %v4841
        %6028 = vmatprep.subr.bf16.mxu0 %v4834
        %6029 = vmatpush2.bf16.msra.mxu0 %v4833
        %6030 = vmatprep.subr.bf16.mxu0 %v4826
        %6031 = vmatpush2.bf16.msra.mxu0 %v4825
        %6032 = vmatprep.subr.bf16.mxu0 %v4818
        %6033 = vmatpush2.bf16.msra.mxu0 %v4817
        %6034 = vmatprep.subr.bf16.mxu0 %v4810
        %6035 = vmatpush2.bf16.msra.mxu0 %v4809
        %6036 = vmatprep.subr.bf16.mxu0 %v4802
        %6037 = vmatpush2.bf16.msra.mxu0 %v4801
        %6038 = vmatprep.subr.bf16.mxu0 %v4794
        %6039 = vmatpush2.bf16.msra.mxu0 %v4793
        %6040 = vmatprep.mubr.bf16.mxu0 %v2248
        %6041 = vmatmul.mubr.bf16.gmra.mxu0 %v2247
        %v6042 = vpop.f32.mrf.mxu0
        %v6043 = vadd.f32 %v6000, %v6042
        %v6044 = vpop.f32.mrf.mxu0
        %v6045 = vadd.f32 %v6002, %v6044
        %v6046 = vpop.f32.mrf.mxu0
        %v6047 = vadd.f32 %v6004, %v6046
        %v6048 = vpop.f32.mrf.mxu0
        %v6049 = vadd.f32 %v6006, %v6048
        %6050 = vdwg.mxu0
        %v6051 = vtanh.pop %v5527
        %v6052 = vtanh.pop %v5529
        %v6053 = vtanh.pop %v5699
        %v6054 = vtanh.pop %v5701
        %v6055 = vtanh.pop %v5871
        %v6056 = vtanh.pop %v5873
        %v6057 = vtanh.pop %v6043
        %v6058 = vtanh.pop %v6045
        %v6059 = vtanh.pop %v5531
        %v6060 = vtanh.pop %v5533
        %v6061 = vtanh.pop %v5703
        %v6062 = vtanh.pop %v5705
        %v6063 = vtanh.pop %v5875
        %v6064 = vtanh.pop %v5877
        %v6065 = vtanh.pop %v6047
        %v6066 = vtanh.pop %v6049
        %v6067 = vpack.c.bf16 %v6059, %v6051
        %v6068 = vpack.c.bf16 %v6060, %v6052
        %v6069 = vpack.c.bf16 %v6061, %v6053
        %v6070 = vpack.c.bf16 %v6062, %v6054
        %v6071 = vpack.c.bf16 %v6063, %v6055
        %v6072 = vpack.c.bf16 %v6064, %v6056
        %v6073 = vpack.c.bf16 %v6065, %v6057
        %v6074 = vpack.c.bf16 %v6066, %v6058
        %v6075 = vld [vmem:[#allocation17] sm:$0xff]
        %v6076 = vld [vmem:[#allocation17 + $0x8] sm:$0xff]
        %v6077 = vld [vmem:[#allocation17 + $0x10] sm:$0xff]
        %v6078 = vld [vmem:[#allocation17 + $0x18] sm:$0xff]
        %v6079 = vld [vmem:[#allocation17 + $0x20] sm:$0xff]
        %v6080 = vld [vmem:[#allocation17 + $0x28] sm:$0xff]
        %v6081 = vld [vmem:[#allocation17 + $0x30] sm:$0xff]
        %v6082 = vld [vmem:[#allocation17 + $0x38] sm:$0xff]
        %v6083 = vld [vmem:[#allocation17 + $0x40] sm:$0xff]
        %v6084 = vld [vmem:[#allocation17 + $0x48] sm:$0xff]
        %v6085 = vld [vmem:[#allocation17 + $0x50] sm:$0xff]
        %v6086 = vld [vmem:[#allocation17 + $0x58] sm:$0xff]
        %v6087 = vld [vmem:[#allocation17 + $0x60] sm:$0xff]
        %v6088 = vld [vmem:[#allocation17 + $0x68] sm:$0xff]
        %v6089 = vld [vmem:[#allocation17 + $0x70] sm:$0xff]
        %v6090 = vld [vmem:[#allocation17 + $0x78] sm:$0xff]
        %v6091 = vld [vmem:[#allocation17 + $0x80] sm:$0xff]
        %v6092 = vld [vmem:[#allocation17 + $0x88] sm:$0xff]
        %v6093 = vld [vmem:[#allocation17 + $0x90] sm:$0xff]
        %v6094 = vld [vmem:[#allocation17 + $0x98] sm:$0xff]
        %v6095 = vld [vmem:[#allocation17 + $0xa0] sm:$0xff]
        %v6096 = vld [vmem:[#allocation17 + $0xa8] sm:$0xff]
        %v6097 = vld [vmem:[#allocation17 + $0xb0] sm:$0xff]
        %v6098 = vld [vmem:[#allocation17 + $0xb8] sm:$0xff]
        %v6099 = vld [vmem:[#allocation17 + $0xc0] sm:$0xff]
        %v6100 = vld [vmem:[#allocation17 + $0xc8] sm:$0xff]
        %v6101 = vld [vmem:[#allocation17 + $0xd0] sm:$0xff]
        %v6102 = vld [vmem:[#allocation17 + $0xd8] sm:$0xff]
        %v6103 = vld [vmem:[#allocation17 + $0xe0] sm:$0xff]
        %v6104 = vld [vmem:[#allocation17 + $0xe8] sm:$0xff]
        %v6105 = vld [vmem:[#allocation17 + $0xf0] sm:$0xff]
        %v6106 = vld [vmem:[#allocation17 + $0xf8] sm:$0xff]
        %v6107 = vld [vmem:[#allocation17 + $0x100] sm:$0xff]
        %v6108 = vld [vmem:[#allocation17 + $0x108] sm:$0xff]
        %v6109 = vld [vmem:[#allocation17 + $0x110] sm:$0xff]
        %v6110 = vld [vmem:[#allocation17 + $0x118] sm:$0xff]
        %v6111 = vld [vmem:[#allocation17 + $0x120] sm:$0xff]
        %v6112 = vld [vmem:[#allocation17 + $0x128] sm:$0xff]
        %v6113 = vld [vmem:[#allocation17 + $0x130] sm:$0xff]
        %v6114 = vld [vmem:[#allocation17 + $0x138] sm:$0xff]
        %v6115 = vld [vmem:[#allocation17 + $0x140] sm:$0xff]
        %v6116 = vld [vmem:[#allocation17 + $0x148] sm:$0xff]
        %v6117 = vld [vmem:[#allocation17 + $0x150] sm:$0xff]
        %v6118 = vld [vmem:[#allocation17 + $0x158] sm:$0xff]
        %v6119 = vld [vmem:[#allocation17 + $0x160] sm:$0xff]
        %v6120 = vld [vmem:[#allocation17 + $0x168] sm:$0xff]
        %v6121 = vld [vmem:[#allocation17 + $0x170] sm:$0xff]
        %v6122 = vld [vmem:[#allocation17 + $0x178] sm:$0xff]
        %v6123 = vld [vmem:[#allocation17 + $0x180] sm:$0xff]
        %v6124 = vld [vmem:[#allocation17 + $0x188] sm:$0xff]
        %v6125 = vld [vmem:[#allocation17 + $0x190] sm:$0xff]
        %v6126 = vld [vmem:[#allocation17 + $0x198] sm:$0xff]
        %v6127 = vld [vmem:[#allocation17 + $0x1a0] sm:$0xff]
        %v6128 = vld [vmem:[#allocation17 + $0x1a8] sm:$0xff]
        %v6129 = vld [vmem:[#allocation17 + $0x1b0] sm:$0xff]
        %v6130 = vld [vmem:[#allocation17 + $0x1b8] sm:$0xff]
        %v6131 = vld [vmem:[#allocation17 + $0x1c0] sm:$0xff]
        %v6132 = vld [vmem:[#allocation17 + $0x1c8] sm:$0xff]
        %v6133 = vld [vmem:[#allocation17 + $0x1d0] sm:$0xff]
        %v6134 = vld [vmem:[#allocation17 + $0x1d8] sm:$0xff]
        %v6135 = vld [vmem:[#allocation17 + $0x1e0] sm:$0xff]
        %v6136 = vld [vmem:[#allocation17 + $0x1e8] sm:$0xff]
        %v6137 = vld [vmem:[#allocation17 + $0x1f0] sm:$0xff]
        %v6138 = vld [vmem:[#allocation17 + $0x1f8] sm:$0xff]
        %v6139 = vld [vmem:[#allocation17 + $0x200] sm:$0xff]
        %v6140 = vld [vmem:[#allocation17 + $0x208] sm:$0xff]
        %v6141 = vld [vmem:[#allocation17 + $0x210] sm:$0xff]
        %v6142 = vld [vmem:[#allocation17 + $0x218] sm:$0xff]
        %v6143 = vld [vmem:[#allocation17 + $0x220] sm:$0xff]
        %v6144 = vld [vmem:[#allocation17 + $0x228] sm:$0xff]
        %v6145 = vld [vmem:[#allocation17 + $0x230] sm:$0xff]
        %v6146 = vld [vmem:[#allocation17 + $0x238] sm:$0xff]
        %v6147 = vld [vmem:[#allocation17 + $0x240] sm:$0xff]
        %v6148 = vld [vmem:[#allocation17 + $0x248] sm:$0xff]
        %v6149 = vld [vmem:[#allocation17 + $0x250] sm:$0xff]
        %v6150 = vld [vmem:[#allocation17 + $0x258] sm:$0xff]
        %v6151 = vld [vmem:[#allocation17 + $0x260] sm:$0xff]
        %v6152 = vld [vmem:[#allocation17 + $0x268] sm:$0xff]
        %v6153 = vld [vmem:[#allocation17 + $0x270] sm:$0xff]
        %v6154 = vld [vmem:[#allocation17 + $0x278] sm:$0xff]
        %v6155 = vld [vmem:[#allocation17 + $0x280] sm:$0xff]
        %v6156 = vld [vmem:[#allocation17 + $0x288] sm:$0xff]
        %v6157 = vld [vmem:[#allocation17 + $0x290] sm:$0xff]
        %v6158 = vld [vmem:[#allocation17 + $0x298] sm:$0xff]
        %v6159 = vld [vmem:[#allocation17 + $0x2a0] sm:$0xff]
        %v6160 = vld [vmem:[#allocation17 + $0x2a8] sm:$0xff]
        %v6161 = vld [vmem:[#allocation17 + $0x2b0] sm:$0xff]
        %v6162 = vld [vmem:[#allocation17 + $0x2b8] sm:$0xff]
        %v6163 = vld [vmem:[#allocation17 + $0x2c0] sm:$0xff]
        %v6164 = vld [vmem:[#allocation17 + $0x2c8] sm:$0xff]
        %v6165 = vld [vmem:[#allocation17 + $0x2d0] sm:$0xff]
        %v6166 = vld [vmem:[#allocation17 + $0x2d8] sm:$0xff]
        %v6167 = vld [vmem:[#allocation17 + $0x2e0] sm:$0xff]
        %v6168 = vld [vmem:[#allocation17 + $0x2e8] sm:$0xff]
        %v6169 = vld [vmem:[#allocation17 + $0x2f0] sm:$0xff]
        %v6170 = vld [vmem:[#allocation17 + $0x2f8] sm:$0xff]
        %v6171 = vld [vmem:[#allocation17 + $0x300] sm:$0xff]
        %v6172 = vld [vmem:[#allocation17 + $0x308] sm:$0xff]
        %v6173 = vld [vmem:[#allocation17 + $0x310] sm:$0xff]
        %v6174 = vld [vmem:[#allocation17 + $0x318] sm:$0xff]
        %v6175 = vld [vmem:[#allocation17 + $0x320] sm:$0xff]
        %v6176 = vld [vmem:[#allocation17 + $0x328] sm:$0xff]
        %v6177 = vld [vmem:[#allocation17 + $0x330] sm:$0xff]
        %v6178 = vld [vmem:[#allocation17 + $0x338] sm:$0xff]
        %v6179 = vld [vmem:[#allocation17 + $0x340] sm:$0xff]
        %v6180 = vld [vmem:[#allocation17 + $0x348] sm:$0xff]
        %v6181 = vld [vmem:[#allocation17 + $0x350] sm:$0xff]
        %v6182 = vld [vmem:[#allocation17 + $0x358] sm:$0xff]
        %v6183 = vld [vmem:[#allocation17 + $0x360] sm:$0xff]
        %v6184 = vld [vmem:[#allocation17 + $0x368] sm:$0xff]
        %v6185 = vld [vmem:[#allocation17 + $0x370] sm:$0xff]
        %v6186 = vld [vmem:[#allocation17 + $0x378] sm:$0xff]
        %v6187 = vld [vmem:[#allocation17 + $0x380] sm:$0xff]
        %v6188 = vld [vmem:[#allocation17 + $0x388] sm:$0xff]
        %v6189 = vld [vmem:[#allocation17 + $0x390] sm:$0xff]
        %v6190 = vld [vmem:[#allocation17 + $0x398] sm:$0xff]
        %v6191 = vld [vmem:[#allocation17 + $0x3a0] sm:$0xff]
        %v6192 = vld [vmem:[#allocation17 + $0x3a8] sm:$0xff]
        %v6193 = vld [vmem:[#allocation17 + $0x3b0] sm:$0xff]
        %v6194 = vld [vmem:[#allocation17 + $0x3b8] sm:$0xff]
        %v6195 = vld [vmem:[#allocation17 + $0x3c0] sm:$0xff]
        %v6196 = vld [vmem:[#allocation17 + $0x3c8] sm:$0xff]
        %v6197 = vld [vmem:[#allocation17 + $0x3d0] sm:$0xff]
        %v6198 = vld [vmem:[#allocation17 + $0x3d8] sm:$0xff]
        %v6199 = vld [vmem:[#allocation17 + $0x3e0] sm:$0xff]
        %v6200 = vld [vmem:[#allocation17 + $0x3e8] sm:$0xff]
        %v6201 = vld [vmem:[#allocation17 + $0x3f0] sm:$0xff]
        %v6202 = vld [vmem:[#allocation17 + $0x3f8] sm:$0xff]
        %v6203 = vld [vmem:[#allocation17 + $0x400] sm:$0xff]
        %v6204 = vld [vmem:[#allocation17 + $0x408] sm:$0xff]
        %v6205 = vld [vmem:[#allocation17 + $0x410] sm:$0xff]
        %v6206 = vld [vmem:[#allocation17 + $0x418] sm:$0xff]
        %v6207 = vld [vmem:[#allocation17 + $0x420] sm:$0xff]
        %v6208 = vld [vmem:[#allocation17 + $0x428] sm:$0xff]
        %v6209 = vld [vmem:[#allocation17 + $0x430] sm:$0xff]
        %v6210 = vld [vmem:[#allocation17 + $0x438] sm:$0xff]
        %v6211 = vld [vmem:[#allocation17 + $0x440] sm:$0xff]
        %v6212 = vld [vmem:[#allocation17 + $0x448] sm:$0xff]
        %v6213 = vld [vmem:[#allocation17 + $0x450] sm:$0xff]
        %v6214 = vld [vmem:[#allocation17 + $0x458] sm:$0xff]
        %v6215 = vld [vmem:[#allocation17 + $0x460] sm:$0xff]
        %v6216 = vld [vmem:[#allocation17 + $0x468] sm:$0xff]
        %v6217 = vld [vmem:[#allocation17 + $0x470] sm:$0xff]
        %v6218 = vld [vmem:[#allocation17 + $0x478] sm:$0xff]
        %v6219 = vld [vmem:[#allocation17 + $0x480] sm:$0xff]
        %v6220 = vld [vmem:[#allocation17 + $0x488] sm:$0xff]
        %v6221 = vld [vmem:[#allocation17 + $0x490] sm:$0xff]
        %v6222 = vld [vmem:[#allocation17 + $0x498] sm:$0xff]
        %v6223 = vld [vmem:[#allocation17 + $0x4a0] sm:$0xff]
        %v6224 = vld [vmem:[#allocation17 + $0x4a8] sm:$0xff]
        %v6225 = vld [vmem:[#allocation17 + $0x4b0] sm:$0xff]
        %v6226 = vld [vmem:[#allocation17 + $0x4b8] sm:$0xff]
        %v6227 = vld [vmem:[#allocation17 + $0x4c0] sm:$0xff]
        %v6228 = vld [vmem:[#allocation17 + $0x4c8] sm:$0xff]
        %v6229 = vld [vmem:[#allocation17 + $0x4d0] sm:$0xff]
        %v6230 = vld [vmem:[#allocation17 + $0x4d8] sm:$0xff]
        %v6231 = vld [vmem:[#allocation17 + $0x4e0] sm:$0xff]
        %v6232 = vld [vmem:[#allocation17 + $0x4e8] sm:$0xff]
        %v6233 = vld [vmem:[#allocation17 + $0x4f0] sm:$0xff]
        %v6234 = vld [vmem:[#allocation17 + $0x4f8] sm:$0xff]
        %v6235 = vld [vmem:[#allocation17 + $0x500] sm:$0xff]
        %v6236 = vld [vmem:[#allocation17 + $0x508] sm:$0xff]
        %v6237 = vld [vmem:[#allocation17 + $0x510] sm:$0xff]
        %v6238 = vld [vmem:[#allocation17 + $0x518] sm:$0xff]
        %v6239 = vld [vmem:[#allocation17 + $0x520] sm:$0xff]
        %v6240 = vld [vmem:[#allocation17 + $0x528] sm:$0xff]
        %v6241 = vld [vmem:[#allocation17 + $0x530] sm:$0xff]
        %v6242 = vld [vmem:[#allocation17 + $0x538] sm:$0xff]
        %v6243 = vld [vmem:[#allocation17 + $0x540] sm:$0xff]
        %v6244 = vld [vmem:[#allocation17 + $0x548] sm:$0xff]
        %v6245 = vld [vmem:[#allocation17 + $0x550] sm:$0xff]
        %v6246 = vld [vmem:[#allocation17 + $0x558] sm:$0xff]
        %v6247 = vld [vmem:[#allocation17 + $0x560] sm:$0xff]
        %v6248 = vld [vmem:[#allocation17 + $0x568] sm:$0xff]
        %v6249 = vld [vmem:[#allocation17 + $0x570] sm:$0xff]
        %v6250 = vld [vmem:[#allocation17 + $0x578] sm:$0xff]
        %v6251 = vld [vmem:[#allocation17 + $0x580] sm:$0xff]
        %v6252 = vld [vmem:[#allocation17 + $0x588] sm:$0xff]
        %v6253 = vld [vmem:[#allocation17 + $0x590] sm:$0xff]
        %v6254 = vld [vmem:[#allocation17 + $0x598] sm:$0xff]
        %v6255 = vld [vmem:[#allocation17 + $0x5a0] sm:$0xff]
        %v6256 = vld [vmem:[#allocation17 + $0x5a8] sm:$0xff]
        %v6257 = vld [vmem:[#allocation17 + $0x5b0] sm:$0xff]
        %v6258 = vld [vmem:[#allocation17 + $0x5b8] sm:$0xff]
        %v6259 = vld [vmem:[#allocation17 + $0x5c0] sm:$0xff]
        %v6260 = vld [vmem:[#allocation17 + $0x5c8] sm:$0xff]
        %v6261 = vld [vmem:[#allocation17 + $0x5d0] sm:$0xff]
        %v6262 = vld [vmem:[#allocation17 + $0x5d8] sm:$0xff]
        %v6263 = vld [vmem:[#allocation17 + $0x5e0] sm:$0xff]
        %v6264 = vld [vmem:[#allocation17 + $0x5e8] sm:$0xff]
        %v6265 = vld [vmem:[#allocation17 + $0x5f0] sm:$0xff]
        %v6266 = vld [vmem:[#allocation17 + $0x5f8] sm:$0xff]
        %v6267 = vld [vmem:[#allocation17 + $0x600] sm:$0xff]
        %v6268 = vld [vmem:[#allocation17 + $0x608] sm:$0xff]
        %v6269 = vld [vmem:[#allocation17 + $0x610] sm:$0xff]
        %v6270 = vld [vmem:[#allocation17 + $0x618] sm:$0xff]
        %v6271 = vld [vmem:[#allocation17 + $0x620] sm:$0xff]
        %v6272 = vld [vmem:[#allocation17 + $0x628] sm:$0xff]
        %v6273 = vld [vmem:[#allocation17 + $0x630] sm:$0xff]
        %v6274 = vld [vmem:[#allocation17 + $0x638] sm:$0xff]
        %v6275 = vld [vmem:[#allocation17 + $0x640] sm:$0xff]
        %v6276 = vld [vmem:[#allocation17 + $0x648] sm:$0xff]
        %v6277 = vld [vmem:[#allocation17 + $0x650] sm:$0xff]
        %v6278 = vld [vmem:[#allocation17 + $0x658] sm:$0xff]
        %v6279 = vld [vmem:[#allocation17 + $0x660] sm:$0xff]
        %v6280 = vld [vmem:[#allocation17 + $0x668] sm:$0xff]
        %v6281 = vld [vmem:[#allocation17 + $0x670] sm:$0xff]
        %v6282 = vld [vmem:[#allocation17 + $0x678] sm:$0xff]
        %v6283 = vld [vmem:[#allocation17 + $0x680] sm:$0xff]
        %v6284 = vld [vmem:[#allocation17 + $0x688] sm:$0xff]
        %v6285 = vld [vmem:[#allocation17 + $0x690] sm:$0xff]
        %v6286 = vld [vmem:[#allocation17 + $0x698] sm:$0xff]
        %v6287 = vld [vmem:[#allocation17 + $0x6a0] sm:$0xff]
        %v6288 = vld [vmem:[#allocation17 + $0x6a8] sm:$0xff]
        %v6289 = vld [vmem:[#allocation17 + $0x6b0] sm:$0xff]
        %v6290 = vld [vmem:[#allocation17 + $0x6b8] sm:$0xff]
        %v6291 = vld [vmem:[#allocation17 + $0x6c0] sm:$0xff]
        %v6292 = vld [vmem:[#allocation17 + $0x6c8] sm:$0xff]
        %v6293 = vld [vmem:[#allocation17 + $0x6d0] sm:$0xff]
        %v6294 = vld [vmem:[#allocation17 + $0x6d8] sm:$0xff]
        %v6295 = vld [vmem:[#allocation17 + $0x6e0] sm:$0xff]
        %v6296 = vld [vmem:[#allocation17 + $0x6e8] sm:$0xff]
        %v6297 = vld [vmem:[#allocation17 + $0x6f0] sm:$0xff]
        %v6298 = vld [vmem:[#allocation17 + $0x6f8] sm:$0xff]
        %v6299 = vld [vmem:[#allocation17 + $0x700] sm:$0xff]
        %v6300 = vld [vmem:[#allocation17 + $0x708] sm:$0xff]
        %v6301 = vld [vmem:[#allocation17 + $0x710] sm:$0xff]
        %v6302 = vld [vmem:[#allocation17 + $0x718] sm:$0xff]
        %v6303 = vld [vmem:[#allocation17 + $0x720] sm:$0xff]
        %v6304 = vld [vmem:[#allocation17 + $0x728] sm:$0xff]
        %v6305 = vld [vmem:[#allocation17 + $0x730] sm:$0xff]
        %v6306 = vld [vmem:[#allocation17 + $0x738] sm:$0xff]
        %v6307 = vld [vmem:[#allocation17 + $0x740] sm:$0xff]
        %v6308 = vld [vmem:[#allocation17 + $0x748] sm:$0xff]
        %v6309 = vld [vmem:[#allocation17 + $0x750] sm:$0xff]
        %v6310 = vld [vmem:[#allocation17 + $0x758] sm:$0xff]
        %v6311 = vld [vmem:[#allocation17 + $0x760] sm:$0xff]
        %v6312 = vld [vmem:[#allocation17 + $0x768] sm:$0xff]
        %v6313 = vld [vmem:[#allocation17 + $0x770] sm:$0xff]
        %v6314 = vld [vmem:[#allocation17 + $0x778] sm:$0xff]
        %v6315 = vld [vmem:[#allocation17 + $0x780] sm:$0xff]
        %v6316 = vld [vmem:[#allocation17 + $0x788] sm:$0xff]
        %v6317 = vld [vmem:[#allocation17 + $0x790] sm:$0xff]
        %v6318 = vld [vmem:[#allocation17 + $0x798] sm:$0xff]
        %v6319 = vld [vmem:[#allocation17 + $0x7a0] sm:$0xff]
        %v6320 = vld [vmem:[#allocation17 + $0x7a8] sm:$0xff]
        %v6321 = vld [vmem:[#allocation17 + $0x7b0] sm:$0xff]
        %v6322 = vld [vmem:[#allocation17 + $0x7b8] sm:$0xff]
        %v6323 = vld [vmem:[#allocation17 + $0x7c0] sm:$0xff]
        %v6324 = vld [vmem:[#allocation17 + $0x7c8] sm:$0xff]
        %v6325 = vld [vmem:[#allocation17 + $0x7d0] sm:$0xff]
        %v6326 = vld [vmem:[#allocation17 + $0x7d8] sm:$0xff]
        %v6327 = vld [vmem:[#allocation17 + $0x7e0] sm:$0xff]
        %v6328 = vld [vmem:[#allocation17 + $0x7e8] sm:$0xff]
        %v6329 = vld [vmem:[#allocation17 + $0x7f0] sm:$0xff]
        %v6330 = vld [vmem:[#allocation17 + $0x7f8] sm:$0xff]
        %v6331 = vld [vmem:[#allocation17 + $0x800] sm:$0xff]
        %v6332 = vld [vmem:[#allocation17 + $0x808] sm:$0xff]
        %v6333 = vld [vmem:[#allocation17 + $0x810] sm:$0xff]
        %v6334 = vld [vmem:[#allocation17 + $0x818] sm:$0xff]
        %v6335 = vld [vmem:[#allocation17 + $0x820] sm:$0xff]
        %v6336 = vld [vmem:[#allocation17 + $0x828] sm:$0xff]
        %v6337 = vld [vmem:[#allocation17 + $0x830] sm:$0xff]
        %v6338 = vld [vmem:[#allocation17 + $0x838] sm:$0xff]
        %v6339 = vld [vmem:[#allocation17 + $0x840] sm:$0xff]
        %v6340 = vld [vmem:[#allocation17 + $0x848] sm:$0xff]
        %v6341 = vld [vmem:[#allocation17 + $0x850] sm:$0xff]
        %v6342 = vld [vmem:[#allocation17 + $0x858] sm:$0xff]
        %v6343 = vld [vmem:[#allocation17 + $0x860] sm:$0xff]
        %v6344 = vld [vmem:[#allocation17 + $0x868] sm:$0xff]
        %v6345 = vld [vmem:[#allocation17 + $0x870] sm:$0xff]
        %v6346 = vld [vmem:[#allocation17 + $0x878] sm:$0xff]
        %v6347 = vld [vmem:[#allocation17 + $0x880] sm:$0xff]
        %v6348 = vld [vmem:[#allocation17 + $0x888] sm:$0xff]
        %v6349 = vld [vmem:[#allocation17 + $0x890] sm:$0xff]
        %v6350 = vld [vmem:[#allocation17 + $0x898] sm:$0xff]
        %v6351 = vld [vmem:[#allocation17 + $0x8a0] sm:$0xff]
        %v6352 = vld [vmem:[#allocation17 + $0x8a8] sm:$0xff]
        %v6353 = vld [vmem:[#allocation17 + $0x8b0] sm:$0xff]
        %v6354 = vld [vmem:[#allocation17 + $0x8b8] sm:$0xff]
        %v6355 = vld [vmem:[#allocation17 + $0x8c0] sm:$0xff]
        %v6356 = vld [vmem:[#allocation17 + $0x8c8] sm:$0xff]
        %v6357 = vld [vmem:[#allocation17 + $0x8d0] sm:$0xff]
        %v6358 = vld [vmem:[#allocation17 + $0x8d8] sm:$0xff]
        %v6359 = vld [vmem:[#allocation17 + $0x8e0] sm:$0xff]
        %v6360 = vld [vmem:[#allocation17 + $0x8e8] sm:$0xff]
        %v6361 = vld [vmem:[#allocation17 + $0x8f0] sm:$0xff]
        %v6362 = vld [vmem:[#allocation17 + $0x8f8] sm:$0xff]
        %v6363 = vld [vmem:[#allocation17 + $0x900] sm:$0xff]
        %v6364 = vld [vmem:[#allocation17 + $0x908] sm:$0xff]
        %v6365 = vld [vmem:[#allocation17 + $0x910] sm:$0xff]
        %v6366 = vld [vmem:[#allocation17 + $0x918] sm:$0xff]
        %v6367 = vld [vmem:[#allocation17 + $0x920] sm:$0xff]
        %v6368 = vld [vmem:[#allocation17 + $0x928] sm:$0xff]
        %v6369 = vld [vmem:[#allocation17 + $0x930] sm:$0xff]
        %v6370 = vld [vmem:[#allocation17 + $0x938] sm:$0xff]
        %v6371 = vld [vmem:[#allocation17 + $0x940] sm:$0xff]
        %v6372 = vld [vmem:[#allocation17 + $0x948] sm:$0xff]
        %v6373 = vld [vmem:[#allocation17 + $0x950] sm:$0xff]
        %v6374 = vld [vmem:[#allocation17 + $0x958] sm:$0xff]
        %v6375 = vld [vmem:[#allocation17 + $0x960] sm:$0xff]
        %v6376 = vld [vmem:[#allocation17 + $0x968] sm:$0xff]
        %v6377 = vld [vmem:[#allocation17 + $0x970] sm:$0xff]
        %v6378 = vld [vmem:[#allocation17 + $0x978] sm:$0xff]
        %v6379 = vld [vmem:[#allocation17 + $0x980] sm:$0xff]
        %v6380 = vld [vmem:[#allocation17 + $0x988] sm:$0xff]
        %v6381 = vld [vmem:[#allocation17 + $0x990] sm:$0xff]
        %v6382 = vld [vmem:[#allocation17 + $0x998] sm:$0xff]
        %v6383 = vld [vmem:[#allocation17 + $0x9a0] sm:$0xff]
        %v6384 = vld [vmem:[#allocation17 + $0x9a8] sm:$0xff]
        %v6385 = vld [vmem:[#allocation17 + $0x9b0] sm:$0xff]
        %v6386 = vld [vmem:[#allocation17 + $0x9b8] sm:$0xff]
        %v6387 = vld [vmem:[#allocation17 + $0x9c0] sm:$0xff]
        %v6388 = vld [vmem:[#allocation17 + $0x9c8] sm:$0xff]
        %v6389 = vld [vmem:[#allocation17 + $0x9d0] sm:$0xff]
        %v6390 = vld [vmem:[#allocation17 + $0x9d8] sm:$0xff]
        %v6391 = vld [vmem:[#allocation17 + $0x9e0] sm:$0xff]
        %v6392 = vld [vmem:[#allocation17 + $0x9e8] sm:$0xff]
        %v6393 = vld [vmem:[#allocation17 + $0x9f0] sm:$0xff]
        %v6394 = vld [vmem:[#allocation17 + $0x9f8] sm:$0xff]
        %v6395 = vld [vmem:[#allocation17 + $0xa00] sm:$0xff]
        %v6396 = vld [vmem:[#allocation17 + $0xa08] sm:$0xff]
        %v6397 = vld [vmem:[#allocation17 + $0xa10] sm:$0xff]
        %v6398 = vld [vmem:[#allocation17 + $0xa18] sm:$0xff]
        %v6399 = vld [vmem:[#allocation17 + $0xa20] sm:$0xff]
        %v6400 = vld [vmem:[#allocation17 + $0xa28] sm:$0xff]
        %v6401 = vld [vmem:[#allocation17 + $0xa30] sm:$0xff]
        %v6402 = vld [vmem:[#allocation17 + $0xa38] sm:$0xff]
        %v6403 = vld [vmem:[#allocation17 + $0xa40] sm:$0xff]
        %v6404 = vld [vmem:[#allocation17 + $0xa48] sm:$0xff]
        %v6405 = vld [vmem:[#allocation17 + $0xa50] sm:$0xff]
        %v6406 = vld [vmem:[#allocation17 + $0xa58] sm:$0xff]
        %v6407 = vld [vmem:[#allocation17 + $0xa60] sm:$0xff]
        %v6408 = vld [vmem:[#allocation17 + $0xa68] sm:$0xff]
        %v6409 = vld [vmem:[#allocation17 + $0xa70] sm:$0xff]
        %v6410 = vld [vmem:[#allocation17 + $0xa78] sm:$0xff]
        %v6411 = vld [vmem:[#allocation17 + $0xa80] sm:$0xff]
        %v6412 = vld [vmem:[#allocation17 + $0xa88] sm:$0xff]
        %v6413 = vld [vmem:[#allocation17 + $0xa90] sm:$0xff]
        %v6414 = vld [vmem:[#allocation17 + $0xa98] sm:$0xff]
        %v6415 = vld [vmem:[#allocation17 + $0xaa0] sm:$0xff]
        %v6416 = vld [vmem:[#allocation17 + $0xaa8] sm:$0xff]
        %v6417 = vld [vmem:[#allocation17 + $0xab0] sm:$0xff]
        %v6418 = vld [vmem:[#allocation17 + $0xab8] sm:$0xff]
        %v6419 = vld [vmem:[#allocation17 + $0xac0] sm:$0xff]
        %v6420 = vld [vmem:[#allocation17 + $0xac8] sm:$0xff]
        %v6421 = vld [vmem:[#allocation17 + $0xad0] sm:$0xff]
        %v6422 = vld [vmem:[#allocation17 + $0xad8] sm:$0xff]
        %v6423 = vld [vmem:[#allocation17 + $0xae0] sm:$0xff]
        %v6424 = vld [vmem:[#allocation17 + $0xae8] sm:$0xff]
        %v6425 = vld [vmem:[#allocation17 + $0xaf0] sm:$0xff]
        %v6426 = vld [vmem:[#allocation17 + $0xaf8] sm:$0xff]
        %v6427 = vld [vmem:[#allocation17 + $0xb00] sm:$0xff]
        %v6428 = vld [vmem:[#allocation17 + $0xb08] sm:$0xff]
        %v6429 = vld [vmem:[#allocation17 + $0xb10] sm:$0xff]
        %v6430 = vld [vmem:[#allocation17 + $0xb18] sm:$0xff]
        %v6431 = vld [vmem:[#allocation17 + $0xb20] sm:$0xff]
        %v6432 = vld [vmem:[#allocation17 + $0xb28] sm:$0xff]
        %v6433 = vld [vmem:[#allocation17 + $0xb30] sm:$0xff]
        %v6434 = vld [vmem:[#allocation17 + $0xb38] sm:$0xff]
        %v6435 = vld [vmem:[#allocation17 + $0xb40] sm:$0xff]
        %v6436 = vld [vmem:[#allocation17 + $0xb48] sm:$0xff]
        %v6437 = vld [vmem:[#allocation17 + $0xb50] sm:$0xff]
        %v6438 = vld [vmem:[#allocation17 + $0xb58] sm:$0xff]
        %v6439 = vld [vmem:[#allocation17 + $0xb60] sm:$0xff]
        %v6440 = vld [vmem:[#allocation17 + $0xb68] sm:$0xff]
        %v6441 = vld [vmem:[#allocation17 + $0xb70] sm:$0xff]
        %v6442 = vld [vmem:[#allocation17 + $0xb78] sm:$0xff]
        %v6443 = vld [vmem:[#allocation17 + $0xb80] sm:$0xff]
        %v6444 = vld [vmem:[#allocation17 + $0xb88] sm:$0xff]
        %v6445 = vld [vmem:[#allocation17 + $0xb90] sm:$0xff]
        %v6446 = vld [vmem:[#allocation17 + $0xb98] sm:$0xff]
        %v6447 = vld [vmem:[#allocation17 + $0xba0] sm:$0xff]
        %v6448 = vld [vmem:[#allocation17 + $0xba8] sm:$0xff]
        %v6449 = vld [vmem:[#allocation17 + $0xbb0] sm:$0xff]
        %v6450 = vld [vmem:[#allocation17 + $0xbb8] sm:$0xff]
        %v6451 = vld [vmem:[#allocation17 + $0xbc0] sm:$0xff]
        %v6452 = vld [vmem:[#allocation17 + $0xbc8] sm:$0xff]
        %v6453 = vld [vmem:[#allocation17 + $0xbd0] sm:$0xff]
        %v6454 = vld [vmem:[#allocation17 + $0xbd8] sm:$0xff]
        %v6455 = vld [vmem:[#allocation17 + $0xbe0] sm:$0xff]
        %v6456 = vld [vmem:[#allocation17 + $0xbe8] sm:$0xff]
        %v6457 = vld [vmem:[#allocation17 + $0xbf0] sm:$0xff]
        %v6458 = vld [vmem:[#allocation17 + $0xbf8] sm:$0xff]
        %v6459 = vld [vmem:[#allocation17 + $0xc00] sm:$0xff]
        %v6460 = vld [vmem:[#allocation17 + $0xc08] sm:$0xff]
        %v6461 = vld [vmem:[#allocation17 + $0xc10] sm:$0xff]
        %v6462 = vld [vmem:[#allocation17 + $0xc18] sm:$0xff]
        %v6463 = vld [vmem:[#allocation17 + $0xc20] sm:$0xff]
        %v6464 = vld [vmem:[#allocation17 + $0xc28] sm:$0xff]
        %v6465 = vld [vmem:[#allocation17 + $0xc30] sm:$0xff]
        %v6466 = vld [vmem:[#allocation17 + $0xc38] sm:$0xff]
        %v6467 = vld [vmem:[#allocation17 + $0xc40] sm:$0xff]
        %v6468 = vld [vmem:[#allocation17 + $0xc48] sm:$0xff]
        %v6469 = vld [vmem:[#allocation17 + $0xc50] sm:$0xff]
        %v6470 = vld [vmem:[#allocation17 + $0xc58] sm:$0xff]
        %v6471 = vld [vmem:[#allocation17 + $0xc60] sm:$0xff]
        %v6472 = vld [vmem:[#allocation17 + $0xc68] sm:$0xff]
        %v6473 = vld [vmem:[#allocation17 + $0xc70] sm:$0xff]
        %v6474 = vld [vmem:[#allocation17 + $0xc78] sm:$0xff]
        %v6475 = vld [vmem:[#allocation17 + $0xc80] sm:$0xff]
        %v6476 = vld [vmem:[#allocation17 + $0xc88] sm:$0xff]
        %v6477 = vld [vmem:[#allocation17 + $0xc90] sm:$0xff]
        %v6478 = vld [vmem:[#allocation17 + $0xc98] sm:$0xff]
        %v6479 = vld [vmem:[#allocation17 + $0xca0] sm:$0xff]
        %v6480 = vld [vmem:[#allocation17 + $0xca8] sm:$0xff]
        %v6481 = vld [vmem:[#allocation17 + $0xcb0] sm:$0xff]
        %v6482 = vld [vmem:[#allocation17 + $0xcb8] sm:$0xff]
        %v6483 = vld [vmem:[#allocation17 + $0xcc0] sm:$0xff]
        %v6484 = vld [vmem:[#allocation17 + $0xcc8] sm:$0xff]
        %v6485 = vld [vmem:[#allocation17 + $0xcd0] sm:$0xff]
        %v6486 = vld [vmem:[#allocation17 + $0xcd8] sm:$0xff]
        %v6487 = vld [vmem:[#allocation17 + $0xce0] sm:$0xff]
        %v6488 = vld [vmem:[#allocation17 + $0xce8] sm:$0xff]
        %v6489 = vld [vmem:[#allocation17 + $0xcf0] sm:$0xff]
        %v6490 = vld [vmem:[#allocation17 + $0xcf8] sm:$0xff]
        %v6491 = vld [vmem:[#allocation17 + $0xd00] sm:$0xff]
        %v6492 = vld [vmem:[#allocation17 + $0xd08] sm:$0xff]
        %v6493 = vld [vmem:[#allocation17 + $0xd10] sm:$0xff]
        %v6494 = vld [vmem:[#allocation17 + $0xd18] sm:$0xff]
        %v6495 = vld [vmem:[#allocation17 + $0xd20] sm:$0xff]
        %v6496 = vld [vmem:[#allocation17 + $0xd28] sm:$0xff]
        %v6497 = vld [vmem:[#allocation17 + $0xd30] sm:$0xff]
        %v6498 = vld [vmem:[#allocation17 + $0xd38] sm:$0xff]
        %v6499 = vld [vmem:[#allocation17 + $0xd40] sm:$0xff]
        %v6500 = vld [vmem:[#allocation17 + $0xd48] sm:$0xff]
        %v6501 = vld [vmem:[#allocation17 + $0xd50] sm:$0xff]
        %v6502 = vld [vmem:[#allocation17 + $0xd58] sm:$0xff]
        %v6503 = vld [vmem:[#allocation17 + $0xd60] sm:$0xff]
        %v6504 = vld [vmem:[#allocation17 + $0xd68] sm:$0xff]
        %v6505 = vld [vmem:[#allocation17 + $0xd70] sm:$0xff]
        %v6506 = vld [vmem:[#allocation17 + $0xd78] sm:$0xff]
        %v6507 = vld [vmem:[#allocation17 + $0xd80] sm:$0xff]
        %v6508 = vld [vmem:[#allocation17 + $0xd88] sm:$0xff]
        %v6509 = vld [vmem:[#allocation17 + $0xd90] sm:$0xff]
        %v6510 = vld [vmem:[#allocation17 + $0xd98] sm:$0xff]
        %v6511 = vld [vmem:[#allocation17 + $0xda0] sm:$0xff]
        %v6512 = vld [vmem:[#allocation17 + $0xda8] sm:$0xff]
        %v6513 = vld [vmem:[#allocation17 + $0xdb0] sm:$0xff]
        %v6514 = vld [vmem:[#allocation17 + $0xdb8] sm:$0xff]
        %v6515 = vld [vmem:[#allocation17 + $0xdc0] sm:$0xff]
        %v6516 = vld [vmem:[#allocation17 + $0xdc8] sm:$0xff]
        %v6517 = vld [vmem:[#allocation17 + $0xdd0] sm:$0xff]
        %v6518 = vld [vmem:[#allocation17 + $0xdd8] sm:$0xff]
        %v6519 = vld [vmem:[#allocation17 + $0xde0] sm:$0xff]
        %v6520 = vld [vmem:[#allocation17 + $0xde8] sm:$0xff]
        %v6521 = vld [vmem:[#allocation17 + $0xdf0] sm:$0xff]
        %v6522 = vld [vmem:[#allocation17 + $0xdf8] sm:$0xff]
        %v6523 = vld [vmem:[#allocation17 + $0xe00] sm:$0xff]
        %v6524 = vld [vmem:[#allocation17 + $0xe08] sm:$0xff]
        %v6525 = vld [vmem:[#allocation17 + $0xe10] sm:$0xff]
        %v6526 = vld [vmem:[#allocation17 + $0xe18] sm:$0xff]
        %v6527 = vld [vmem:[#allocation17 + $0xe20] sm:$0xff]
        %v6528 = vld [vmem:[#allocation17 + $0xe28] sm:$0xff]
        %v6529 = vld [vmem:[#allocation17 + $0xe30] sm:$0xff]
        %v6530 = vld [vmem:[#allocation17 + $0xe38] sm:$0xff]
        %v6531 = vld [vmem:[#allocation17 + $0xe40] sm:$0xff]
        %v6532 = vld [vmem:[#allocation17 + $0xe48] sm:$0xff]
        %v6533 = vld [vmem:[#allocation17 + $0xe50] sm:$0xff]
        %v6534 = vld [vmem:[#allocation17 + $0xe58] sm:$0xff]
        %v6535 = vld [vmem:[#allocation17 + $0xe60] sm:$0xff]
        %v6536 = vld [vmem:[#allocation17 + $0xe68] sm:$0xff]
        %v6537 = vld [vmem:[#allocation17 + $0xe70] sm:$0xff]
        %v6538 = vld [vmem:[#allocation17 + $0xe78] sm:$0xff]
        %v6539 = vld [vmem:[#allocation17 + $0xe80] sm:$0xff]
        %v6540 = vld [vmem:[#allocation17 + $0xe88] sm:$0xff]
        %v6541 = vld [vmem:[#allocation17 + $0xe90] sm:$0xff]
        %v6542 = vld [vmem:[#allocation17 + $0xe98] sm:$0xff]
        %v6543 = vld [vmem:[#allocation17 + $0xea0] sm:$0xff]
        %v6544 = vld [vmem:[#allocation17 + $0xea8] sm:$0xff]
        %v6545 = vld [vmem:[#allocation17 + $0xeb0] sm:$0xff]
        %v6546 = vld [vmem:[#allocation17 + $0xeb8] sm:$0xff]
        %v6547 = vld [vmem:[#allocation17 + $0xec0] sm:$0xff]
        %v6548 = vld [vmem:[#allocation17 + $0xec8] sm:$0xff]
        %v6549 = vld [vmem:[#allocation17 + $0xed0] sm:$0xff]
        %v6550 = vld [vmem:[#allocation17 + $0xed8] sm:$0xff]
        %v6551 = vld [vmem:[#allocation17 + $0xee0] sm:$0xff]
        %v6552 = vld [vmem:[#allocation17 + $0xee8] sm:$0xff]
        %v6553 = vld [vmem:[#allocation17 + $0xef0] sm:$0xff]
        %v6554 = vld [vmem:[#allocation17 + $0xef8] sm:$0xff]
        %v6555 = vld [vmem:[#allocation17 + $0xf00] sm:$0xff]
        %v6556 = vld [vmem:[#allocation17 + $0xf08] sm:$0xff]
        %v6557 = vld [vmem:[#allocation17 + $0xf10] sm:$0xff]
        %v6558 = vld [vmem:[#allocation17 + $0xf18] sm:$0xff]
        %v6559 = vld [vmem:[#allocation17 + $0xf20] sm:$0xff]
        %v6560 = vld [vmem:[#allocation17 + $0xf28] sm:$0xff]
        %v6561 = vld [vmem:[#allocation17 + $0xf30] sm:$0xff]
        %v6562 = vld [vmem:[#allocation17 + $0xf38] sm:$0xff]
        %v6563 = vld [vmem:[#allocation17 + $0xf40] sm:$0xff]
        %v6564 = vld [vmem:[#allocation17 + $0xf48] sm:$0xff]
        %v6565 = vld [vmem:[#allocation17 + $0xf50] sm:$0xff]
        %v6566 = vld [vmem:[#allocation17 + $0xf58] sm:$0xff]
        %v6567 = vld [vmem:[#allocation17 + $0xf60] sm:$0xff]
        %v6568 = vld [vmem:[#allocation17 + $0xf68] sm:$0xff]
        %v6569 = vld [vmem:[#allocation17 + $0xf70] sm:$0xff]
        %v6570 = vld [vmem:[#allocation17 + $0xf78] sm:$0xff]
        %v6571 = vld [vmem:[#allocation17 + $0xf80] sm:$0xff]
        %v6572 = vld [vmem:[#allocation17 + $0xf88] sm:$0xff]
        %v6573 = vld [vmem:[#allocation17 + $0xf90] sm:$0xff]
        %v6574 = vld [vmem:[#allocation17 + $0xf98] sm:$0xff]
        %v6575 = vld [vmem:[#allocation17 + $0xfa0] sm:$0xff]
        %v6576 = vld [vmem:[#allocation17 + $0xfa8] sm:$0xff]
        %v6577 = vld [vmem:[#allocation17 + $0xfb0] sm:$0xff]
        %v6578 = vld [vmem:[#allocation17 + $0xfb8] sm:$0xff]
        %v6579 = vld [vmem:[#allocation17 + $0xfc0] sm:$0xff]
        %v6580 = vld [vmem:[#allocation17 + $0xfc8] sm:$0xff]
        %v6581 = vld [vmem:[#allocation17 + $0xfd0] sm:$0xff]
        %v6582 = vld [vmem:[#allocation17 + $0xfd8] sm:$0xff]
        %v6583 = vld [vmem:[#allocation17 + $0xfe0] sm:$0xff]
        %v6584 = vld [vmem:[#allocation17 + $0xfe8] sm:$0xff]
        %v6585 = vld [vmem:[#allocation17 + $0xff0] sm:$0xff]
        %v6586 = vld [vmem:[#allocation17 + $0xff8] sm:$0xff]
        %v6587 = vld [vmem:[#allocation19] sm:$0xff]
        %v6589 = vlaneseq
        %v6590 = vshrl.u32 %v6589, 7
        %v6591 = vsub.s32 0, %v6590
        %v6592 = vrot.slane %v6587, %v6591
        %v6593 = vlaneseq
        %v6594 = vshrl.u32 %v6593, 7
        %v6595 = vsub.s32 1, %v6594
        %v6596 = vrot.slane %v6587, %v6595
        %v6597 = vlaneseq
        %v6598 = vshrl.u32 %v6597, 7
        %v6599 = vsub.s32 2, %v6598
        %v6600 = vrot.slane %v6587, %v6599
        %v6601 = vlaneseq
        %v6602 = vshrl.u32 %v6601, 7
        %v6603 = vsub.s32 3, %v6602
        %v6604 = vrot.slane %v6587, %v6603
        %v6605 = vlaneseq
        %v6606 = vshrl.u32 %v6605, 7
        %v6607 = vsub.s32 4, %v6606
        %v6608 = vrot.slane %v6587, %v6607
        %v6609 = vlaneseq
        %v6610 = vshrl.u32 %v6609, 7
        %v6611 = vsub.s32 5, %v6610
        %v6612 = vrot.slane %v6587, %v6611
        %v6613 = vlaneseq
        %v6614 = vshrl.u32 %v6613, 7
        %v6615 = vsub.s32 6, %v6614
        %v6616 = vrot.slane %v6587, %v6615
        %v6617 = vlaneseq
        %v6618 = vshrl.u32 %v6617, 7
        %v6619 = vsub.s32 7, %v6618
        %v6620 = vrot.slane %v6587, %v6619
        %v7141 = vunpack.c.l.b16 %v6075
        %v7142 = vunpack.c.h.b16 %v6075
        %v7143 = vunpack.c.l.b16 %v6076
        %v7144 = vunpack.c.h.b16 %v6076
        %v7145 = vunpack.c.l.b16 %v6077
        %v7146 = vunpack.c.h.b16 %v6077
        %v7147 = vunpack.c.l.b16 %v6078
        %v7148 = vunpack.c.h.b16 %v6078
        %v7149 = vunpack.c.l.b16 %v6079
        %v7150 = vunpack.c.h.b16 %v6079
        %v7151 = vunpack.c.l.b16 %v6080
        %v7152 = vunpack.c.h.b16 %v6080
        %v7153 = vunpack.c.l.b16 %v6081
        %v7154 = vunpack.c.h.b16 %v6081
        %v7155 = vunpack.c.l.b16 %v6082
        %v7156 = vunpack.c.h.b16 %v6082
        %v7157 = vunpack.c.l.b16 %v6083
        %v7158 = vunpack.c.h.b16 %v6083
        %v7159 = vunpack.c.l.b16 %v6084
        %v7160 = vunpack.c.h.b16 %v6084
        %v7161 = vunpack.c.l.b16 %v6085
        %v7162 = vunpack.c.h.b16 %v6085
        %v7163 = vunpack.c.l.b16 %v6086
        %v7164 = vunpack.c.h.b16 %v6086
        %v7165 = vunpack.c.l.b16 %v6087
        %v7166 = vunpack.c.h.b16 %v6087
        %v7167 = vunpack.c.l.b16 %v6088
        %v7168 = vunpack.c.h.b16 %v6088
        %v7169 = vunpack.c.l.b16 %v6089
        %v7170 = vunpack.c.h.b16 %v6089
        %v7171 = vunpack.c.l.b16 %v6090
        %v7172 = vunpack.c.h.b16 %v6090
        %v7173 = vunpack.c.l.b16 %v6091
        %v7174 = vunpack.c.h.b16 %v6091
        %v7175 = vunpack.c.l.b16 %v6092
        %v7176 = vunpack.c.h.b16 %v6092
        %v7177 = vunpack.c.l.b16 %v6093
        %v7178 = vunpack.c.h.b16 %v6093
        %v7179 = vunpack.c.l.b16 %v6094
        %v7180 = vunpack.c.h.b16 %v6094
        %v7181 = vunpack.c.l.b16 %v6095
        %v7182 = vunpack.c.h.b16 %v6095
        %v7183 = vunpack.c.l.b16 %v6096
        %v7184 = vunpack.c.h.b16 %v6096
        %v7185 = vunpack.c.l.b16 %v6097
        %v7186 = vunpack.c.h.b16 %v6097
        %v7187 = vunpack.c.l.b16 %v6098
        %v7188 = vunpack.c.h.b16 %v6098
        %v7189 = vunpack.c.l.b16 %v6099
        %v7190 = vunpack.c.h.b16 %v6099
        %v7191 = vunpack.c.l.b16 %v6100
        %v7192 = vunpack.c.h.b16 %v6100
        %v7193 = vunpack.c.l.b16 %v6101
        %v7194 = vunpack.c.h.b16 %v6101
        %v7195 = vunpack.c.l.b16 %v6102
        %v7196 = vunpack.c.h.b16 %v6102
        %v7197 = vunpack.c.l.b16 %v6103
        %v7198 = vunpack.c.h.b16 %v6103
        %v7199 = vunpack.c.l.b16 %v6104
        %v7200 = vunpack.c.h.b16 %v6104
        %v7201 = vunpack.c.l.b16 %v6105
        %v7202 = vunpack.c.h.b16 %v6105
        %v7203 = vunpack.c.l.b16 %v6106
        %v7204 = vunpack.c.h.b16 %v6106
        %v7205 = vunpack.c.l.b16 %v6107
        %v7206 = vunpack.c.h.b16 %v6107
        %v7207 = vunpack.c.l.b16 %v6108
        %v7208 = vunpack.c.h.b16 %v6108
        %v7209 = vunpack.c.l.b16 %v6109
        %v7210 = vunpack.c.h.b16 %v6109
        %v7211 = vunpack.c.l.b16 %v6110
        %v7212 = vunpack.c.h.b16 %v6110
        %v7213 = vunpack.c.l.b16 %v6111
        %v7214 = vunpack.c.h.b16 %v6111
        %v7215 = vunpack.c.l.b16 %v6112
        %v7216 = vunpack.c.h.b16 %v6112
        %v7217 = vunpack.c.l.b16 %v6113
        %v7218 = vunpack.c.h.b16 %v6113
        %v7219 = vunpack.c.l.b16 %v6114
        %v7220 = vunpack.c.h.b16 %v6114
        %v7221 = vunpack.c.l.b16 %v6115
        %v7222 = vunpack.c.h.b16 %v6115
        %v7223 = vunpack.c.l.b16 %v6116
        %v7224 = vunpack.c.h.b16 %v6116
        %v7225 = vunpack.c.l.b16 %v6117
        %v7226 = vunpack.c.h.b16 %v6117
        %v7227 = vunpack.c.l.b16 %v6118
        %v7228 = vunpack.c.h.b16 %v6118
        %v7229 = vunpack.c.l.b16 %v6119
        %v7230 = vunpack.c.h.b16 %v6119
        %v7231 = vunpack.c.l.b16 %v6120
        %v7232 = vunpack.c.h.b16 %v6120
        %v7233 = vunpack.c.l.b16 %v6121
        %v7234 = vunpack.c.h.b16 %v6121
        %v7235 = vunpack.c.l.b16 %v6122
        %v7236 = vunpack.c.h.b16 %v6122
        %v7237 = vunpack.c.l.b16 %v6123
        %v7238 = vunpack.c.h.b16 %v6123
        %v7239 = vunpack.c.l.b16 %v6124
        %v7240 = vunpack.c.h.b16 %v6124
        %v7241 = vunpack.c.l.b16 %v6125
        %v7242 = vunpack.c.h.b16 %v6125
        %v7243 = vunpack.c.l.b16 %v6126
        %v7244 = vunpack.c.h.b16 %v6126
        %v7245 = vunpack.c.l.b16 %v6127
        %v7246 = vunpack.c.h.b16 %v6127
        %v7247 = vunpack.c.l.b16 %v6128
        %v7248 = vunpack.c.h.b16 %v6128
        %v7249 = vunpack.c.l.b16 %v6129
        %v7250 = vunpack.c.h.b16 %v6129
        %v7251 = vunpack.c.l.b16 %v6130
        %v7252 = vunpack.c.h.b16 %v6130
        %v7253 = vunpack.c.l.b16 %v6131
        %v7254 = vunpack.c.h.b16 %v6131
        %v7255 = vunpack.c.l.b16 %v6132
        %v7256 = vunpack.c.h.b16 %v6132
        %v7257 = vunpack.c.l.b16 %v6133
        %v7258 = vunpack.c.h.b16 %v6133
        %v7259 = vunpack.c.l.b16 %v6134
        %v7260 = vunpack.c.h.b16 %v6134
        %v7261 = vunpack.c.l.b16 %v6135
        %v7262 = vunpack.c.h.b16 %v6135
        %v7263 = vunpack.c.l.b16 %v6136
        %v7264 = vunpack.c.h.b16 %v6136
        %v7265 = vunpack.c.l.b16 %v6137
        %v7266 = vunpack.c.h.b16 %v6137
        %v7267 = vunpack.c.l.b16 %v6138
        %v7268 = vunpack.c.h.b16 %v6138
        %v7269 = vunpack.c.l.b16 %v6139
        %v7270 = vunpack.c.h.b16 %v6139
        %v7271 = vunpack.c.l.b16 %v6140
        %v7272 = vunpack.c.h.b16 %v6140
        %v7273 = vunpack.c.l.b16 %v6141
        %v7274 = vunpack.c.h.b16 %v6141
        %v7275 = vunpack.c.l.b16 %v6142
        %v7276 = vunpack.c.h.b16 %v6142
        %v7277 = vunpack.c.l.b16 %v6143
        %v7278 = vunpack.c.h.b16 %v6143
        %v7279 = vunpack.c.l.b16 %v6144
        %v7280 = vunpack.c.h.b16 %v6144
        %v7281 = vunpack.c.l.b16 %v6145
        %v7282 = vunpack.c.h.b16 %v6145
        %v7283 = vunpack.c.l.b16 %v6146
        %v7284 = vunpack.c.h.b16 %v6146
        %v7285 = vunpack.c.l.b16 %v6147
        %v7286 = vunpack.c.h.b16 %v6147
        %v7287 = vunpack.c.l.b16 %v6148
        %v7288 = vunpack.c.h.b16 %v6148
        %v7289 = vunpack.c.l.b16 %v6149
        %v7290 = vunpack.c.h.b16 %v6149
        %v7291 = vunpack.c.l.b16 %v6150
        %v7292 = vunpack.c.h.b16 %v6150
        %v7293 = vunpack.c.l.b16 %v6151
        %v7294 = vunpack.c.h.b16 %v6151
        %v7295 = vunpack.c.l.b16 %v6152
        %v7296 = vunpack.c.h.b16 %v6152
        %v7297 = vunpack.c.l.b16 %v6153
        %v7298 = vunpack.c.h.b16 %v6153
        %v7299 = vunpack.c.l.b16 %v6154
        %v7300 = vunpack.c.h.b16 %v6154
        %v7301 = vunpack.c.l.b16 %v6155
        %v7302 = vunpack.c.h.b16 %v6155
        %v7303 = vunpack.c.l.b16 %v6156
        %v7304 = vunpack.c.h.b16 %v6156
        %v7305 = vunpack.c.l.b16 %v6157
        %v7306 = vunpack.c.h.b16 %v6157
        %v7307 = vunpack.c.l.b16 %v6158
        %v7308 = vunpack.c.h.b16 %v6158
        %v7309 = vunpack.c.l.b16 %v6159
        %v7310 = vunpack.c.h.b16 %v6159
        %v7311 = vunpack.c.l.b16 %v6160
        %v7312 = vunpack.c.h.b16 %v6160
        %v7313 = vunpack.c.l.b16 %v6161
        %v7314 = vunpack.c.h.b16 %v6161
        %v7315 = vunpack.c.l.b16 %v6162
        %v7316 = vunpack.c.h.b16 %v6162
        %v7317 = vunpack.c.l.b16 %v6163
        %v7318 = vunpack.c.h.b16 %v6163
        %v7319 = vunpack.c.l.b16 %v6164
        %v7320 = vunpack.c.h.b16 %v6164
        %v7321 = vunpack.c.l.b16 %v6165
        %v7322 = vunpack.c.h.b16 %v6165
        %v7323 = vunpack.c.l.b16 %v6166
        %v7324 = vunpack.c.h.b16 %v6166
        %v7325 = vunpack.c.l.b16 %v6167
        %v7326 = vunpack.c.h.b16 %v6167
        %v7327 = vunpack.c.l.b16 %v6168
        %v7328 = vunpack.c.h.b16 %v6168
        %v7329 = vunpack.c.l.b16 %v6169
        %v7330 = vunpack.c.h.b16 %v6169
        %v7331 = vunpack.c.l.b16 %v6170
        %v7332 = vunpack.c.h.b16 %v6170
        %v7333 = vunpack.c.l.b16 %v6171
        %v7334 = vunpack.c.h.b16 %v6171
        %v7335 = vunpack.c.l.b16 %v6172
        %v7336 = vunpack.c.h.b16 %v6172
        %v7337 = vunpack.c.l.b16 %v6173
        %v7338 = vunpack.c.h.b16 %v6173
        %v7339 = vunpack.c.l.b16 %v6174
        %v7340 = vunpack.c.h.b16 %v6174
        %v7341 = vunpack.c.l.b16 %v6175
        %v7342 = vunpack.c.h.b16 %v6175
        %v7343 = vunpack.c.l.b16 %v6176
        %v7344 = vunpack.c.h.b16 %v6176
        %v7345 = vunpack.c.l.b16 %v6177
        %v7346 = vunpack.c.h.b16 %v6177
        %v7347 = vunpack.c.l.b16 %v6178
        %v7348 = vunpack.c.h.b16 %v6178
        %v7349 = vunpack.c.l.b16 %v6179
        %v7350 = vunpack.c.h.b16 %v6179
        %v7351 = vunpack.c.l.b16 %v6180
        %v7352 = vunpack.c.h.b16 %v6180
        %v7353 = vunpack.c.l.b16 %v6181
        %v7354 = vunpack.c.h.b16 %v6181
        %v7355 = vunpack.c.l.b16 %v6182
        %v7356 = vunpack.c.h.b16 %v6182
        %v7357 = vunpack.c.l.b16 %v6183
        %v7358 = vunpack.c.h.b16 %v6183
        %v7359 = vunpack.c.l.b16 %v6184
        %v7360 = vunpack.c.h.b16 %v6184
        %v7361 = vunpack.c.l.b16 %v6185
        %v7362 = vunpack.c.h.b16 %v6185
        %v7363 = vunpack.c.l.b16 %v6186
        %v7364 = vunpack.c.h.b16 %v6186
        %v7365 = vunpack.c.l.b16 %v6187
        %v7366 = vunpack.c.h.b16 %v6187
        %v7367 = vunpack.c.l.b16 %v6188
        %v7368 = vunpack.c.h.b16 %v6188
        %v7369 = vunpack.c.l.b16 %v6189
        %v7370 = vunpack.c.h.b16 %v6189
        %v7371 = vunpack.c.l.b16 %v6190
        %v7372 = vunpack.c.h.b16 %v6190
        %v7373 = vunpack.c.l.b16 %v6191
        %v7374 = vunpack.c.h.b16 %v6191
        %v7375 = vunpack.c.l.b16 %v6192
        %v7376 = vunpack.c.h.b16 %v6192
        %v7377 = vunpack.c.l.b16 %v6193
        %v7378 = vunpack.c.h.b16 %v6193
        %v7379 = vunpack.c.l.b16 %v6194
        %v7380 = vunpack.c.h.b16 %v6194
        %v7381 = vunpack.c.l.b16 %v6195
        %v7382 = vunpack.c.h.b16 %v6195
        %v7383 = vunpack.c.l.b16 %v6196
        %v7384 = vunpack.c.h.b16 %v6196
        %v7385 = vunpack.c.l.b16 %v6197
        %v7386 = vunpack.c.h.b16 %v6197
        %v7387 = vunpack.c.l.b16 %v6198
        %v7388 = vunpack.c.h.b16 %v6198
        %v7389 = vunpack.c.l.b16 %v6199
        %v7390 = vunpack.c.h.b16 %v6199
        %v7391 = vunpack.c.l.b16 %v6200
        %v7392 = vunpack.c.h.b16 %v6200
        %v7393 = vunpack.c.l.b16 %v6201
        %v7394 = vunpack.c.h.b16 %v6201
        %v7395 = vunpack.c.l.b16 %v6202
        %v7396 = vunpack.c.h.b16 %v6202
        %v7397 = vunpack.c.l.b16 %v6203
        %v7398 = vunpack.c.h.b16 %v6203
        %v7399 = vunpack.c.l.b16 %v6204
        %v7400 = vunpack.c.h.b16 %v6204
        %v7401 = vunpack.c.l.b16 %v6205
        %v7402 = vunpack.c.h.b16 %v6205
        %v7403 = vunpack.c.l.b16 %v6206
        %v7404 = vunpack.c.h.b16 %v6206
        %v7405 = vunpack.c.l.b16 %v6207
        %v7406 = vunpack.c.h.b16 %v6207
        %v7407 = vunpack.c.l.b16 %v6208
        %v7408 = vunpack.c.h.b16 %v6208
        %v7409 = vunpack.c.l.b16 %v6209
        %v7410 = vunpack.c.h.b16 %v6209
        %v7411 = vunpack.c.l.b16 %v6210
        %v7412 = vunpack.c.h.b16 %v6210
        %v7413 = vunpack.c.l.b16 %v6211
        %v7414 = vunpack.c.h.b16 %v6211
        %v7415 = vunpack.c.l.b16 %v6212
        %v7416 = vunpack.c.h.b16 %v6212
        %v7417 = vunpack.c.l.b16 %v6213
        %v7418 = vunpack.c.h.b16 %v6213
        %v7419 = vunpack.c.l.b16 %v6214
        %v7420 = vunpack.c.h.b16 %v6214
        %v7421 = vunpack.c.l.b16 %v6215
        %v7422 = vunpack.c.h.b16 %v6215
        %v7423 = vunpack.c.l.b16 %v6216
        %v7424 = vunpack.c.h.b16 %v6216
        %v7425 = vunpack.c.l.b16 %v6217
        %v7426 = vunpack.c.h.b16 %v6217
        %v7427 = vunpack.c.l.b16 %v6218
        %v7428 = vunpack.c.h.b16 %v6218
        %v7429 = vunpack.c.l.b16 %v6219
        %v7430 = vunpack.c.h.b16 %v6219
        %v7431 = vunpack.c.l.b16 %v6220
        %v7432 = vunpack.c.h.b16 %v6220
        %v7433 = vunpack.c.l.b16 %v6221
        %v7434 = vunpack.c.h.b16 %v6221
        %v7435 = vunpack.c.l.b16 %v6222
        %v7436 = vunpack.c.h.b16 %v6222
        %v7437 = vunpack.c.l.b16 %v6223
        %v7438 = vunpack.c.h.b16 %v6223
        %v7439 = vunpack.c.l.b16 %v6224
        %v7440 = vunpack.c.h.b16 %v6224
        %v7441 = vunpack.c.l.b16 %v6225
        %v7442 = vunpack.c.h.b16 %v6225
        %v7443 = vunpack.c.l.b16 %v6226
        %v7444 = vunpack.c.h.b16 %v6226
        %v7445 = vunpack.c.l.b16 %v6227
        %v7446 = vunpack.c.h.b16 %v6227
        %v7447 = vunpack.c.l.b16 %v6228
        %v7448 = vunpack.c.h.b16 %v6228
        %v7449 = vunpack.c.l.b16 %v6229
        %v7450 = vunpack.c.h.b16 %v6229
        %v7451 = vunpack.c.l.b16 %v6230
        %v7452 = vunpack.c.h.b16 %v6230
        %v7453 = vunpack.c.l.b16 %v6231
        %v7454 = vunpack.c.h.b16 %v6231
        %v7455 = vunpack.c.l.b16 %v6232
        %v7456 = vunpack.c.h.b16 %v6232
        %v7457 = vunpack.c.l.b16 %v6233
        %v7458 = vunpack.c.h.b16 %v6233
        %v7459 = vunpack.c.l.b16 %v6234
        %v7460 = vunpack.c.h.b16 %v6234
        %v7461 = vunpack.c.l.b16 %v6235
        %v7462 = vunpack.c.h.b16 %v6235
        %v7463 = vunpack.c.l.b16 %v6236
        %v7464 = vunpack.c.h.b16 %v6236
        %v7465 = vunpack.c.l.b16 %v6237
        %v7466 = vunpack.c.h.b16 %v6237
        %v7467 = vunpack.c.l.b16 %v6238
        %v7468 = vunpack.c.h.b16 %v6238
        %v7469 = vunpack.c.l.b16 %v6239
        %v7470 = vunpack.c.h.b16 %v6239
        %v7471 = vunpack.c.l.b16 %v6240
        %v7472 = vunpack.c.h.b16 %v6240
        %v7473 = vunpack.c.l.b16 %v6241
        %v7474 = vunpack.c.h.b16 %v6241
        %v7475 = vunpack.c.l.b16 %v6242
        %v7476 = vunpack.c.h.b16 %v6242
        %v7477 = vunpack.c.l.b16 %v6243
        %v7478 = vunpack.c.h.b16 %v6243
        %v7479 = vunpack.c.l.b16 %v6244
        %v7480 = vunpack.c.h.b16 %v6244
        %v7481 = vunpack.c.l.b16 %v6245
        %v7482 = vunpack.c.h.b16 %v6245
        %v7483 = vunpack.c.l.b16 %v6246
        %v7484 = vunpack.c.h.b16 %v6246
        %v7485 = vunpack.c.l.b16 %v6247
        %v7486 = vunpack.c.h.b16 %v6247
        %v7487 = vunpack.c.l.b16 %v6248
        %v7488 = vunpack.c.h.b16 %v6248
        %v7489 = vunpack.c.l.b16 %v6249
        %v7490 = vunpack.c.h.b16 %v6249
        %v7491 = vunpack.c.l.b16 %v6250
        %v7492 = vunpack.c.h.b16 %v6250
        %v7493 = vunpack.c.l.b16 %v6251
        %v7494 = vunpack.c.h.b16 %v6251
        %v7495 = vunpack.c.l.b16 %v6252
        %v7496 = vunpack.c.h.b16 %v6252
        %v7497 = vunpack.c.l.b16 %v6253
        %v7498 = vunpack.c.h.b16 %v6253
        %v7499 = vunpack.c.l.b16 %v6254
        %v7500 = vunpack.c.h.b16 %v6254
        %v7501 = vunpack.c.l.b16 %v6255
        %v7502 = vunpack.c.h.b16 %v6255
        %v7503 = vunpack.c.l.b16 %v6256
        %v7504 = vunpack.c.h.b16 %v6256
        %v7505 = vunpack.c.l.b16 %v6257
        %v7506 = vunpack.c.h.b16 %v6257
        %v7507 = vunpack.c.l.b16 %v6258
        %v7508 = vunpack.c.h.b16 %v6258
        %v7509 = vunpack.c.l.b16 %v6259
        %v7510 = vunpack.c.h.b16 %v6259
        %v7511 = vunpack.c.l.b16 %v6260
        %v7512 = vunpack.c.h.b16 %v6260
        %v7513 = vunpack.c.l.b16 %v6261
        %v7514 = vunpack.c.h.b16 %v6261
        %v7515 = vunpack.c.l.b16 %v6262
        %v7516 = vunpack.c.h.b16 %v6262
        %v7517 = vunpack.c.l.b16 %v6263
        %v7518 = vunpack.c.h.b16 %v6263
        %v7519 = vunpack.c.l.b16 %v6264
        %v7520 = vunpack.c.h.b16 %v6264
        %v7521 = vunpack.c.l.b16 %v6265
        %v7522 = vunpack.c.h.b16 %v6265
        %v7523 = vunpack.c.l.b16 %v6266
        %v7524 = vunpack.c.h.b16 %v6266
        %v7525 = vunpack.c.l.b16 %v6267
        %v7526 = vunpack.c.h.b16 %v6267
        %v7527 = vunpack.c.l.b16 %v6268
        %v7528 = vunpack.c.h.b16 %v6268
        %v7529 = vunpack.c.l.b16 %v6269
        %v7530 = vunpack.c.h.b16 %v6269
        %v7531 = vunpack.c.l.b16 %v6270
        %v7532 = vunpack.c.h.b16 %v6270
        %v7533 = vunpack.c.l.b16 %v6271
        %v7534 = vunpack.c.h.b16 %v6271
        %v7535 = vunpack.c.l.b16 %v6272
        %v7536 = vunpack.c.h.b16 %v6272
        %v7537 = vunpack.c.l.b16 %v6273
        %v7538 = vunpack.c.h.b16 %v6273
        %v7539 = vunpack.c.l.b16 %v6274
        %v7540 = vunpack.c.h.b16 %v6274
        %v7541 = vunpack.c.l.b16 %v6275
        %v7542 = vunpack.c.h.b16 %v6275
        %v7543 = vunpack.c.l.b16 %v6276
        %v7544 = vunpack.c.h.b16 %v6276
        %v7545 = vunpack.c.l.b16 %v6277
        %v7546 = vunpack.c.h.b16 %v6277
        %v7547 = vunpack.c.l.b16 %v6278
        %v7548 = vunpack.c.h.b16 %v6278
        %v7549 = vunpack.c.l.b16 %v6279
        %v7550 = vunpack.c.h.b16 %v6279
        %v7551 = vunpack.c.l.b16 %v6280
        %v7552 = vunpack.c.h.b16 %v6280
        %v7553 = vunpack.c.l.b16 %v6281
        %v7554 = vunpack.c.h.b16 %v6281
        %v7555 = vunpack.c.l.b16 %v6282
        %v7556 = vunpack.c.h.b16 %v6282
        %v7557 = vunpack.c.l.b16 %v6283
        %v7558 = vunpack.c.h.b16 %v6283
        %v7559 = vunpack.c.l.b16 %v6284
        %v7560 = vunpack.c.h.b16 %v6284
        %v7561 = vunpack.c.l.b16 %v6285
        %v7562 = vunpack.c.h.b16 %v6285
        %v7563 = vunpack.c.l.b16 %v6286
        %v7564 = vunpack.c.h.b16 %v6286
        %v7565 = vunpack.c.l.b16 %v6287
        %v7566 = vunpack.c.h.b16 %v6287
        %v7567 = vunpack.c.l.b16 %v6288
        %v7568 = vunpack.c.h.b16 %v6288
        %v7569 = vunpack.c.l.b16 %v6289
        %v7570 = vunpack.c.h.b16 %v6289
        %v7571 = vunpack.c.l.b16 %v6290
        %v7572 = vunpack.c.h.b16 %v6290
        %v7573 = vunpack.c.l.b16 %v6291
        %v7574 = vunpack.c.h.b16 %v6291
        %v7575 = vunpack.c.l.b16 %v6292
        %v7576 = vunpack.c.h.b16 %v6292
        %v7577 = vunpack.c.l.b16 %v6293
        %v7578 = vunpack.c.h.b16 %v6293
        %v7579 = vunpack.c.l.b16 %v6294
        %v7580 = vunpack.c.h.b16 %v6294
        %v7581 = vunpack.c.l.b16 %v6295
        %v7582 = vunpack.c.h.b16 %v6295
        %v7583 = vunpack.c.l.b16 %v6296
        %v7584 = vunpack.c.h.b16 %v6296
        %v7585 = vunpack.c.l.b16 %v6297
        %v7586 = vunpack.c.h.b16 %v6297
        %v7587 = vunpack.c.l.b16 %v6298
        %v7588 = vunpack.c.h.b16 %v6298
        %v7589 = vunpack.c.l.b16 %v6299
        %v7590 = vunpack.c.h.b16 %v6299
        %v7591 = vunpack.c.l.b16 %v6300
        %v7592 = vunpack.c.h.b16 %v6300
        %v7593 = vunpack.c.l.b16 %v6301
        %v7594 = vunpack.c.h.b16 %v6301
        %v7595 = vunpack.c.l.b16 %v6302
        %v7596 = vunpack.c.h.b16 %v6302
        %v7597 = vunpack.c.l.b16 %v6303
        %v7598 = vunpack.c.h.b16 %v6303
        %v7599 = vunpack.c.l.b16 %v6304
        %v7600 = vunpack.c.h.b16 %v6304
        %v7601 = vunpack.c.l.b16 %v6305
        %v7602 = vunpack.c.h.b16 %v6305
        %v7603 = vunpack.c.l.b16 %v6306
        %v7604 = vunpack.c.h.b16 %v6306
        %v7605 = vunpack.c.l.b16 %v6307
        %v7606 = vunpack.c.h.b16 %v6307
        %v7607 = vunpack.c.l.b16 %v6308
        %v7608 = vunpack.c.h.b16 %v6308
        %v7609 = vunpack.c.l.b16 %v6309
        %v7610 = vunpack.c.h.b16 %v6309
        %v7611 = vunpack.c.l.b16 %v6310
        %v7612 = vunpack.c.h.b16 %v6310
        %v7613 = vunpack.c.l.b16 %v6311
        %v7614 = vunpack.c.h.b16 %v6311
        %v7615 = vunpack.c.l.b16 %v6312
        %v7616 = vunpack.c.h.b16 %v6312
        %v7617 = vunpack.c.l.b16 %v6313
        %v7618 = vunpack.c.h.b16 %v6313
        %v7619 = vunpack.c.l.b16 %v6314
        %v7620 = vunpack.c.h.b16 %v6314
        %v7621 = vunpack.c.l.b16 %v6315
        %v7622 = vunpack.c.h.b16 %v6315
        %v7623 = vunpack.c.l.b16 %v6316
        %v7624 = vunpack.c.h.b16 %v6316
        %v7625 = vunpack.c.l.b16 %v6317
        %v7626 = vunpack.c.h.b16 %v6317
        %v7627 = vunpack.c.l.b16 %v6318
        %v7628 = vunpack.c.h.b16 %v6318
        %v7629 = vunpack.c.l.b16 %v6319
        %v7630 = vunpack.c.h.b16 %v6319
        %v7631 = vunpack.c.l.b16 %v6320
        %v7632 = vunpack.c.h.b16 %v6320
        %v7633 = vunpack.c.l.b16 %v6321
        %v7634 = vunpack.c.h.b16 %v6321
        %v7635 = vunpack.c.l.b16 %v6322
        %v7636 = vunpack.c.h.b16 %v6322
        %v7637 = vunpack.c.l.b16 %v6323
        %v7638 = vunpack.c.h.b16 %v6323
        %v7639 = vunpack.c.l.b16 %v6324
        %v7640 = vunpack.c.h.b16 %v6324
        %v7641 = vunpack.c.l.b16 %v6325
        %v7642 = vunpack.c.h.b16 %v6325
        %v7643 = vunpack.c.l.b16 %v6326
        %v7644 = vunpack.c.h.b16 %v6326
        %v7645 = vunpack.c.l.b16 %v6327
        %v7646 = vunpack.c.h.b16 %v6327
        %v7647 = vunpack.c.l.b16 %v6328
        %v7648 = vunpack.c.h.b16 %v6328
        %v7649 = vunpack.c.l.b16 %v6329
        %v7650 = vunpack.c.h.b16 %v6329
        %v7651 = vunpack.c.l.b16 %v6330
        %v7652 = vunpack.c.h.b16 %v6330
        %v7653 = vunpack.c.l.b16 %v6331
        %v7654 = vunpack.c.h.b16 %v6331
        %v7655 = vunpack.c.l.b16 %v6332
        %v7656 = vunpack.c.h.b16 %v6332
        %v7657 = vunpack.c.l.b16 %v6333
        %v7658 = vunpack.c.h.b16 %v6333
        %v7659 = vunpack.c.l.b16 %v6334
        %v7660 = vunpack.c.h.b16 %v6334
        %v7661 = vunpack.c.l.b16 %v6335
        %v7662 = vunpack.c.h.b16 %v6335
        %v7663 = vunpack.c.l.b16 %v6336
        %v7664 = vunpack.c.h.b16 %v6336
        %v7665 = vunpack.c.l.b16 %v6337
        %v7666 = vunpack.c.h.b16 %v6337
        %v7667 = vunpack.c.l.b16 %v6338
        %v7668 = vunpack.c.h.b16 %v6338
        %v7669 = vunpack.c.l.b16 %v6339
        %v7670 = vunpack.c.h.b16 %v6339
        %v7671 = vunpack.c.l.b16 %v6340
        %v7672 = vunpack.c.h.b16 %v6340
        %v7673 = vunpack.c.l.b16 %v6341
        %v7674 = vunpack.c.h.b16 %v6341
        %v7675 = vunpack.c.l.b16 %v6342
        %v7676 = vunpack.c.h.b16 %v6342
        %v7677 = vunpack.c.l.b16 %v6343
        %v7678 = vunpack.c.h.b16 %v6343
        %v7679 = vunpack.c.l.b16 %v6344
        %v7680 = vunpack.c.h.b16 %v6344
        %v7681 = vunpack.c.l.b16 %v6345
        %v7682 = vunpack.c.h.b16 %v6345
        %v7683 = vunpack.c.l.b16 %v6346
        %v7684 = vunpack.c.h.b16 %v6346
        %v7685 = vunpack.c.l.b16 %v6347
        %v7686 = vunpack.c.h.b16 %v6347
        %v7687 = vunpack.c.l.b16 %v6348
        %v7688 = vunpack.c.h.b16 %v6348
        %v7689 = vunpack.c.l.b16 %v6349
        %v7690 = vunpack.c.h.b16 %v6349
        %v7691 = vunpack.c.l.b16 %v6350
        %v7692 = vunpack.c.h.b16 %v6350
        %v7693 = vunpack.c.l.b16 %v6351
        %v7694 = vunpack.c.h.b16 %v6351
        %v7695 = vunpack.c.l.b16 %v6352
        %v7696 = vunpack.c.h.b16 %v6352
        %v7697 = vunpack.c.l.b16 %v6353
        %v7698 = vunpack.c.h.b16 %v6353
        %v7699 = vunpack.c.l.b16 %v6354
        %v7700 = vunpack.c.h.b16 %v6354
        %v7701 = vunpack.c.l.b16 %v6355
        %v7702 = vunpack.c.h.b16 %v6355
        %v7703 = vunpack.c.l.b16 %v6356
        %v7704 = vunpack.c.h.b16 %v6356
        %v7705 = vunpack.c.l.b16 %v6357
        %v7706 = vunpack.c.h.b16 %v6357
        %v7707 = vunpack.c.l.b16 %v6358
        %v7708 = vunpack.c.h.b16 %v6358
        %v7709 = vunpack.c.l.b16 %v6359
        %v7710 = vunpack.c.h.b16 %v6359
        %v7711 = vunpack.c.l.b16 %v6360
        %v7712 = vunpack.c.h.b16 %v6360
        %v7713 = vunpack.c.l.b16 %v6361
        %v7714 = vunpack.c.h.b16 %v6361
        %v7715 = vunpack.c.l.b16 %v6362
        %v7716 = vunpack.c.h.b16 %v6362
        %v7717 = vunpack.c.l.b16 %v6363
        %v7718 = vunpack.c.h.b16 %v6363
        %v7719 = vunpack.c.l.b16 %v6364
        %v7720 = vunpack.c.h.b16 %v6364
        %v7721 = vunpack.c.l.b16 %v6365
        %v7722 = vunpack.c.h.b16 %v6365
        %v7723 = vunpack.c.l.b16 %v6366
        %v7724 = vunpack.c.h.b16 %v6366
        %v7725 = vunpack.c.l.b16 %v6367
        %v7726 = vunpack.c.h.b16 %v6367
        %v7727 = vunpack.c.l.b16 %v6368
        %v7728 = vunpack.c.h.b16 %v6368
        %v7729 = vunpack.c.l.b16 %v6369
        %v7730 = vunpack.c.h.b16 %v6369
        %v7731 = vunpack.c.l.b16 %v6370
        %v7732 = vunpack.c.h.b16 %v6370
        %v7733 = vunpack.c.l.b16 %v6371
        %v7734 = vunpack.c.h.b16 %v6371
        %v7735 = vunpack.c.l.b16 %v6372
        %v7736 = vunpack.c.h.b16 %v6372
        %v7737 = vunpack.c.l.b16 %v6373
        %v7738 = vunpack.c.h.b16 %v6373
        %v7739 = vunpack.c.l.b16 %v6374
        %v7740 = vunpack.c.h.b16 %v6374
        %v7741 = vunpack.c.l.b16 %v6375
        %v7742 = vunpack.c.h.b16 %v6375
        %v7743 = vunpack.c.l.b16 %v6376
        %v7744 = vunpack.c.h.b16 %v6376
        %v7745 = vunpack.c.l.b16 %v6377
        %v7746 = vunpack.c.h.b16 %v6377
        %v7747 = vunpack.c.l.b16 %v6378
        %v7748 = vunpack.c.h.b16 %v6378
        %v7749 = vunpack.c.l.b16 %v6379
        %v7750 = vunpack.c.h.b16 %v6379
        %v7751 = vunpack.c.l.b16 %v6380
        %v7752 = vunpack.c.h.b16 %v6380
        %v7753 = vunpack.c.l.b16 %v6381
        %v7754 = vunpack.c.h.b16 %v6381
        %v7755 = vunpack.c.l.b16 %v6382
        %v7756 = vunpack.c.h.b16 %v6382
        %v7757 = vunpack.c.l.b16 %v6383
        %v7758 = vunpack.c.h.b16 %v6383
        %v7759 = vunpack.c.l.b16 %v6384
        %v7760 = vunpack.c.h.b16 %v6384
        %v7761 = vunpack.c.l.b16 %v6385
        %v7762 = vunpack.c.h.b16 %v6385
        %v7763 = vunpack.c.l.b16 %v6386
        %v7764 = vunpack.c.h.b16 %v6386
        %v7765 = vunpack.c.l.b16 %v6387
        %v7766 = vunpack.c.h.b16 %v6387
        %v7767 = vunpack.c.l.b16 %v6388
        %v7768 = vunpack.c.h.b16 %v6388
        %v7769 = vunpack.c.l.b16 %v6389
        %v7770 = vunpack.c.h.b16 %v6389
        %v7771 = vunpack.c.l.b16 %v6390
        %v7772 = vunpack.c.h.b16 %v6390
        %v7773 = vunpack.c.l.b16 %v6391
        %v7774 = vunpack.c.h.b16 %v6391
        %v7775 = vunpack.c.l.b16 %v6392
        %v7776 = vunpack.c.h.b16 %v6392
        %v7777 = vunpack.c.l.b16 %v6393
        %v7778 = vunpack.c.h.b16 %v6393
        %v7779 = vunpack.c.l.b16 %v6394
        %v7780 = vunpack.c.h.b16 %v6394
        %v7781 = vunpack.c.l.b16 %v6395
        %v7782 = vunpack.c.h.b16 %v6395
        %v7783 = vunpack.c.l.b16 %v6396
        %v7784 = vunpack.c.h.b16 %v6396
        %v7785 = vunpack.c.l.b16 %v6397
        %v7786 = vunpack.c.h.b16 %v6397
        %v7787 = vunpack.c.l.b16 %v6398
        %v7788 = vunpack.c.h.b16 %v6398
        %v7789 = vunpack.c.l.b16 %v6399
        %v7790 = vunpack.c.h.b16 %v6399
        %v7791 = vunpack.c.l.b16 %v6400
        %v7792 = vunpack.c.h.b16 %v6400
        %v7793 = vunpack.c.l.b16 %v6401
        %v7794 = vunpack.c.h.b16 %v6401
        %v7795 = vunpack.c.l.b16 %v6402
        %v7796 = vunpack.c.h.b16 %v6402
        %v7797 = vunpack.c.l.b16 %v6403
        %v7798 = vunpack.c.h.b16 %v6403
        %v7799 = vunpack.c.l.b16 %v6404
        %v7800 = vunpack.c.h.b16 %v6404
        %v7801 = vunpack.c.l.b16 %v6405
        %v7802 = vunpack.c.h.b16 %v6405
        %v7803 = vunpack.c.l.b16 %v6406
        %v7804 = vunpack.c.h.b16 %v6406
        %v7805 = vunpack.c.l.b16 %v6407
        %v7806 = vunpack.c.h.b16 %v6407
        %v7807 = vunpack.c.l.b16 %v6408
        %v7808 = vunpack.c.h.b16 %v6408
        %v7809 = vunpack.c.l.b16 %v6409
        %v7810 = vunpack.c.h.b16 %v6409
        %v7811 = vunpack.c.l.b16 %v6410
        %v7812 = vunpack.c.h.b16 %v6410
        %v7813 = vunpack.c.l.b16 %v6411
        %v7814 = vunpack.c.h.b16 %v6411
        %v7815 = vunpack.c.l.b16 %v6412
        %v7816 = vunpack.c.h.b16 %v6412
        %v7817 = vunpack.c.l.b16 %v6413
        %v7818 = vunpack.c.h.b16 %v6413
        %v7819 = vunpack.c.l.b16 %v6414
        %v7820 = vunpack.c.h.b16 %v6414
        %v7821 = vunpack.c.l.b16 %v6415
        %v7822 = vunpack.c.h.b16 %v6415
        %v7823 = vunpack.c.l.b16 %v6416
        %v7824 = vunpack.c.h.b16 %v6416
        %v7825 = vunpack.c.l.b16 %v6417
        %v7826 = vunpack.c.h.b16 %v6417
        %v7827 = vunpack.c.l.b16 %v6418
        %v7828 = vunpack.c.h.b16 %v6418
        %v7829 = vunpack.c.l.b16 %v6419
        %v7830 = vunpack.c.h.b16 %v6419
        %v7831 = vunpack.c.l.b16 %v6420
        %v7832 = vunpack.c.h.b16 %v6420
        %v7833 = vunpack.c.l.b16 %v6421
        %v7834 = vunpack.c.h.b16 %v6421
        %v7835 = vunpack.c.l.b16 %v6422
        %v7836 = vunpack.c.h.b16 %v6422
        %v7837 = vunpack.c.l.b16 %v6423
        %v7838 = vunpack.c.h.b16 %v6423
        %v7839 = vunpack.c.l.b16 %v6424
        %v7840 = vunpack.c.h.b16 %v6424
        %v7841 = vunpack.c.l.b16 %v6425
        %v7842 = vunpack.c.h.b16 %v6425
        %v7843 = vunpack.c.l.b16 %v6426
        %v7844 = vunpack.c.h.b16 %v6426
        %v7845 = vunpack.c.l.b16 %v6427
        %v7846 = vunpack.c.h.b16 %v6427
        %v7847 = vunpack.c.l.b16 %v6428
        %v7848 = vunpack.c.h.b16 %v6428
        %v7849 = vunpack.c.l.b16 %v6429
        %v7850 = vunpack.c.h.b16 %v6429
        %v7851 = vunpack.c.l.b16 %v6430
        %v7852 = vunpack.c.h.b16 %v6430
        %v7853 = vunpack.c.l.b16 %v6431
        %v7854 = vunpack.c.h.b16 %v6431
        %v7855 = vunpack.c.l.b16 %v6432
        %v7856 = vunpack.c.h.b16 %v6432
        %v7857 = vunpack.c.l.b16 %v6433
        %v7858 = vunpack.c.h.b16 %v6433
        %v7859 = vunpack.c.l.b16 %v6434
        %v7860 = vunpack.c.h.b16 %v6434
        %v7861 = vunpack.c.l.b16 %v6435
        %v7862 = vunpack.c.h.b16 %v6435
        %v7863 = vunpack.c.l.b16 %v6436
        %v7864 = vunpack.c.h.b16 %v6436
        %v7865 = vunpack.c.l.b16 %v6437
        %v7866 = vunpack.c.h.b16 %v6437
        %v7867 = vunpack.c.l.b16 %v6438
        %v7868 = vunpack.c.h.b16 %v6438
        %v7869 = vunpack.c.l.b16 %v6439
        %v7870 = vunpack.c.h.b16 %v6439
        %v7871 = vunpack.c.l.b16 %v6440
        %v7872 = vunpack.c.h.b16 %v6440
        %v7873 = vunpack.c.l.b16 %v6441
        %v7874 = vunpack.c.h.b16 %v6441
        %v7875 = vunpack.c.l.b16 %v6442
        %v7876 = vunpack.c.h.b16 %v6442
        %v7877 = vunpack.c.l.b16 %v6443
        %v7878 = vunpack.c.h.b16 %v6443
        %v7879 = vunpack.c.l.b16 %v6444
        %v7880 = vunpack.c.h.b16 %v6444
        %v7881 = vunpack.c.l.b16 %v6445
        %v7882 = vunpack.c.h.b16 %v6445
        %v7883 = vunpack.c.l.b16 %v6446
        %v7884 = vunpack.c.h.b16 %v6446
        %v7885 = vunpack.c.l.b16 %v6447
        %v7886 = vunpack.c.h.b16 %v6447
        %v7887 = vunpack.c.l.b16 %v6448
        %v7888 = vunpack.c.h.b16 %v6448
        %v7889 = vunpack.c.l.b16 %v6449
        %v7890 = vunpack.c.h.b16 %v6449
        %v7891 = vunpack.c.l.b16 %v6450
        %v7892 = vunpack.c.h.b16 %v6450
        %v7893 = vunpack.c.l.b16 %v6451
        %v7894 = vunpack.c.h.b16 %v6451
        %v7895 = vunpack.c.l.b16 %v6452
        %v7896 = vunpack.c.h.b16 %v6452
        %v7897 = vunpack.c.l.b16 %v6453
        %v7898 = vunpack.c.h.b16 %v6453
        %v7899 = vunpack.c.l.b16 %v6454
        %v7900 = vunpack.c.h.b16 %v6454
        %v7901 = vunpack.c.l.b16 %v6455
        %v7902 = vunpack.c.h.b16 %v6455
        %v7903 = vunpack.c.l.b16 %v6456
        %v7904 = vunpack.c.h.b16 %v6456
        %v7905 = vunpack.c.l.b16 %v6457
        %v7906 = vunpack.c.h.b16 %v6457
        %v7907 = vunpack.c.l.b16 %v6458
        %v7908 = vunpack.c.h.b16 %v6458
        %v7909 = vunpack.c.l.b16 %v6459
        %v7910 = vunpack.c.h.b16 %v6459
        %v7911 = vunpack.c.l.b16 %v6460
        %v7912 = vunpack.c.h.b16 %v6460
        %v7913 = vunpack.c.l.b16 %v6461
        %v7914 = vunpack.c.h.b16 %v6461
        %v7915 = vunpack.c.l.b16 %v6462
        %v7916 = vunpack.c.h.b16 %v6462
        %v7917 = vunpack.c.l.b16 %v6463
        %v7918 = vunpack.c.h.b16 %v6463
        %v7919 = vunpack.c.l.b16 %v6464
        %v7920 = vunpack.c.h.b16 %v6464
        %v7921 = vunpack.c.l.b16 %v6465
        %v7922 = vunpack.c.h.b16 %v6465
        %v7923 = vunpack.c.l.b16 %v6466
        %v7924 = vunpack.c.h.b16 %v6466
        %v7925 = vunpack.c.l.b16 %v6467
        %v7926 = vunpack.c.h.b16 %v6467
        %v7927 = vunpack.c.l.b16 %v6468
        %v7928 = vunpack.c.h.b16 %v6468
        %v7929 = vunpack.c.l.b16 %v6469
        %v7930 = vunpack.c.h.b16 %v6469
        %v7931 = vunpack.c.l.b16 %v6470
        %v7932 = vunpack.c.h.b16 %v6470
        %v7933 = vunpack.c.l.b16 %v6471
        %v7934 = vunpack.c.h.b16 %v6471
        %v7935 = vunpack.c.l.b16 %v6472
        %v7936 = vunpack.c.h.b16 %v6472
        %v7937 = vunpack.c.l.b16 %v6473
        %v7938 = vunpack.c.h.b16 %v6473
        %v7939 = vunpack.c.l.b16 %v6474
        %v7940 = vunpack.c.h.b16 %v6474
        %v7941 = vunpack.c.l.b16 %v6475
        %v7942 = vunpack.c.h.b16 %v6475
        %v7943 = vunpack.c.l.b16 %v6476
        %v7944 = vunpack.c.h.b16 %v6476
        %v7945 = vunpack.c.l.b16 %v6477
        %v7946 = vunpack.c.h.b16 %v6477
        %v7947 = vunpack.c.l.b16 %v6478
        %v7948 = vunpack.c.h.b16 %v6478
        %v7949 = vunpack.c.l.b16 %v6479
        %v7950 = vunpack.c.h.b16 %v6479
        %v7951 = vunpack.c.l.b16 %v6480
        %v7952 = vunpack.c.h.b16 %v6480
        %v7953 = vunpack.c.l.b16 %v6481
        %v7954 = vunpack.c.h.b16 %v6481
        %v7955 = vunpack.c.l.b16 %v6482
        %v7956 = vunpack.c.h.b16 %v6482
        %v7957 = vunpack.c.l.b16 %v6483
        %v7958 = vunpack.c.h.b16 %v6483
        %v7959 = vunpack.c.l.b16 %v6484
        %v7960 = vunpack.c.h.b16 %v6484
        %v7961 = vunpack.c.l.b16 %v6485
        %v7962 = vunpack.c.h.b16 %v6485
        %v7963 = vunpack.c.l.b16 %v6486
        %v7964 = vunpack.c.h.b16 %v6486
        %v7965 = vunpack.c.l.b16 %v6487
        %v7966 = vunpack.c.h.b16 %v6487
        %v7967 = vunpack.c.l.b16 %v6488
        %v7968 = vunpack.c.h.b16 %v6488
        %v7969 = vunpack.c.l.b16 %v6489
        %v7970 = vunpack.c.h.b16 %v6489
        %v7971 = vunpack.c.l.b16 %v6490
        %v7972 = vunpack.c.h.b16 %v6490
        %v7973 = vunpack.c.l.b16 %v6491
        %v7974 = vunpack.c.h.b16 %v6491
        %v7975 = vunpack.c.l.b16 %v6492
        %v7976 = vunpack.c.h.b16 %v6492
        %v7977 = vunpack.c.l.b16 %v6493
        %v7978 = vunpack.c.h.b16 %v6493
        %v7979 = vunpack.c.l.b16 %v6494
        %v7980 = vunpack.c.h.b16 %v6494
        %v7981 = vunpack.c.l.b16 %v6495
        %v7982 = vunpack.c.h.b16 %v6495
        %v7983 = vunpack.c.l.b16 %v6496
        %v7984 = vunpack.c.h.b16 %v6496
        %v7985 = vunpack.c.l.b16 %v6497
        %v7986 = vunpack.c.h.b16 %v6497
        %v7987 = vunpack.c.l.b16 %v6498
        %v7988 = vunpack.c.h.b16 %v6498
        %v7989 = vunpack.c.l.b16 %v6499
        %v7990 = vunpack.c.h.b16 %v6499
        %v7991 = vunpack.c.l.b16 %v6500
        %v7992 = vunpack.c.h.b16 %v6500
        %v7993 = vunpack.c.l.b16 %v6501
        %v7994 = vunpack.c.h.b16 %v6501
        %v7995 = vunpack.c.l.b16 %v6502
        %v7996 = vunpack.c.h.b16 %v6502
        %v7997 = vunpack.c.l.b16 %v6503
        %v7998 = vunpack.c.h.b16 %v6503
        %v7999 = vunpack.c.l.b16 %v6504
        %v8000 = vunpack.c.h.b16 %v6504
        %v8001 = vunpack.c.l.b16 %v6505
        %v8002 = vunpack.c.h.b16 %v6505
        %v8003 = vunpack.c.l.b16 %v6506
        %v8004 = vunpack.c.h.b16 %v6506
        %v8005 = vunpack.c.l.b16 %v6507
        %v8006 = vunpack.c.h.b16 %v6507
        %v8007 = vunpack.c.l.b16 %v6508
        %v8008 = vunpack.c.h.b16 %v6508
        %v8009 = vunpack.c.l.b16 %v6509
        %v8010 = vunpack.c.h.b16 %v6509
        %v8011 = vunpack.c.l.b16 %v6510
        %v8012 = vunpack.c.h.b16 %v6510
        %v8013 = vunpack.c.l.b16 %v6511
        %v8014 = vunpack.c.h.b16 %v6511
        %v8015 = vunpack.c.l.b16 %v6512
        %v8016 = vunpack.c.h.b16 %v6512
        %v8017 = vunpack.c.l.b16 %v6513
        %v8018 = vunpack.c.h.b16 %v6513
        %v8019 = vunpack.c.l.b16 %v6514
        %v8020 = vunpack.c.h.b16 %v6514
        %v8021 = vunpack.c.l.b16 %v6515
        %v8022 = vunpack.c.h.b16 %v6515
        %v8023 = vunpack.c.l.b16 %v6516
        %v8024 = vunpack.c.h.b16 %v6516
        %v8025 = vunpack.c.l.b16 %v6517
        %v8026 = vunpack.c.h.b16 %v6517
        %v8027 = vunpack.c.l.b16 %v6518
        %v8028 = vunpack.c.h.b16 %v6518
        %v8029 = vunpack.c.l.b16 %v6519
        %v8030 = vunpack.c.h.b16 %v6519
        %v8031 = vunpack.c.l.b16 %v6520
        %v8032 = vunpack.c.h.b16 %v6520
        %v8033 = vunpack.c.l.b16 %v6521
        %v8034 = vunpack.c.h.b16 %v6521
        %v8035 = vunpack.c.l.b16 %v6522
        %v8036 = vunpack.c.h.b16 %v6522
        %v8037 = vunpack.c.l.b16 %v6523
        %v8038 = vunpack.c.h.b16 %v6523
        %v8039 = vunpack.c.l.b16 %v6524
        %v8040 = vunpack.c.h.b16 %v6524
        %v8041 = vunpack.c.l.b16 %v6525
        %v8042 = vunpack.c.h.b16 %v6525
        %v8043 = vunpack.c.l.b16 %v6526
        %v8044 = vunpack.c.h.b16 %v6526
        %v8045 = vunpack.c.l.b16 %v6527
        %v8046 = vunpack.c.h.b16 %v6527
        %v8047 = vunpack.c.l.b16 %v6528
        %v8048 = vunpack.c.h.b16 %v6528
        %v8049 = vunpack.c.l.b16 %v6529
        %v8050 = vunpack.c.h.b16 %v6529
        %v8051 = vunpack.c.l.b16 %v6530
        %v8052 = vunpack.c.h.b16 %v6530
        %v8053 = vunpack.c.l.b16 %v6531
        %v8054 = vunpack.c.h.b16 %v6531
        %v8055 = vunpack.c.l.b16 %v6532
        %v8056 = vunpack.c.h.b16 %v6532
        %v8057 = vunpack.c.l.b16 %v6533
        %v8058 = vunpack.c.h.b16 %v6533
        %v8059 = vunpack.c.l.b16 %v6534
        %v8060 = vunpack.c.h.b16 %v6534
        %v8061 = vunpack.c.l.b16 %v6535
        %v8062 = vunpack.c.h.b16 %v6535
        %v8063 = vunpack.c.l.b16 %v6536
        %v8064 = vunpack.c.h.b16 %v6536
        %v8065 = vunpack.c.l.b16 %v6537
        %v8066 = vunpack.c.h.b16 %v6537
        %v8067 = vunpack.c.l.b16 %v6538
        %v8068 = vunpack.c.h.b16 %v6538
        %v8069 = vunpack.c.l.b16 %v6539
        %v8070 = vunpack.c.h.b16 %v6539
        %v8071 = vunpack.c.l.b16 %v6540
        %v8072 = vunpack.c.h.b16 %v6540
        %v8073 = vunpack.c.l.b16 %v6541
        %v8074 = vunpack.c.h.b16 %v6541
        %v8075 = vunpack.c.l.b16 %v6542
        %v8076 = vunpack.c.h.b16 %v6542
        %v8077 = vunpack.c.l.b16 %v6543
        %v8078 = vunpack.c.h.b16 %v6543
        %v8079 = vunpack.c.l.b16 %v6544
        %v8080 = vunpack.c.h.b16 %v6544
        %v8081 = vunpack.c.l.b16 %v6545
        %v8082 = vunpack.c.h.b16 %v6545
        %v8083 = vunpack.c.l.b16 %v6546
        %v8084 = vunpack.c.h.b16 %v6546
        %v8085 = vunpack.c.l.b16 %v6547
        %v8086 = vunpack.c.h.b16 %v6547
        %v8087 = vunpack.c.l.b16 %v6548
        %v8088 = vunpack.c.h.b16 %v6548
        %v8089 = vunpack.c.l.b16 %v6549
        %v8090 = vunpack.c.h.b16 %v6549
        %v8091 = vunpack.c.l.b16 %v6550
        %v8092 = vunpack.c.h.b16 %v6550
        %v8093 = vunpack.c.l.b16 %v6551
        %v8094 = vunpack.c.h.b16 %v6551
        %v8095 = vunpack.c.l.b16 %v6552
        %v8096 = vunpack.c.h.b16 %v6552
        %v8097 = vunpack.c.l.b16 %v6553
        %v8098 = vunpack.c.h.b16 %v6553
        %v8099 = vunpack.c.l.b16 %v6554
        %v8100 = vunpack.c.h.b16 %v6554
        %v8101 = vunpack.c.l.b16 %v6555
        %v8102 = vunpack.c.h.b16 %v6555
        %v8103 = vunpack.c.l.b16 %v6556
        %v8104 = vunpack.c.h.b16 %v6556
        %v8105 = vunpack.c.l.b16 %v6557
        %v8106 = vunpack.c.h.b16 %v6557
        %v8107 = vunpack.c.l.b16 %v6558
        %v8108 = vunpack.c.h.b16 %v6558
        %v8109 = vunpack.c.l.b16 %v6559
        %v8110 = vunpack.c.h.b16 %v6559
        %v8111 = vunpack.c.l.b16 %v6560
        %v8112 = vunpack.c.h.b16 %v6560
        %v8113 = vunpack.c.l.b16 %v6561
        %v8114 = vunpack.c.h.b16 %v6561
        %v8115 = vunpack.c.l.b16 %v6562
        %v8116 = vunpack.c.h.b16 %v6562
        %v8117 = vunpack.c.l.b16 %v6563
        %v8118 = vunpack.c.h.b16 %v6563
        %v8119 = vunpack.c.l.b16 %v6564
        %v8120 = vunpack.c.h.b16 %v6564
        %v8121 = vunpack.c.l.b16 %v6565
        %v8122 = vunpack.c.h.b16 %v6565
        %v8123 = vunpack.c.l.b16 %v6566
        %v8124 = vunpack.c.h.b16 %v6566
        %v8125 = vunpack.c.l.b16 %v6567
        %v8126 = vunpack.c.h.b16 %v6567
        %v8127 = vunpack.c.l.b16 %v6568
        %v8128 = vunpack.c.h.b16 %v6568
        %v8129 = vunpack.c.l.b16 %v6569
        %v8130 = vunpack.c.h.b16 %v6569
        %v8131 = vunpack.c.l.b16 %v6570
        %v8132 = vunpack.c.h.b16 %v6570
        %v8133 = vunpack.c.l.b16 %v6571
        %v8134 = vunpack.c.h.b16 %v6571
        %v8135 = vunpack.c.l.b16 %v6572
        %v8136 = vunpack.c.h.b16 %v6572
        %v8137 = vunpack.c.l.b16 %v6573
        %v8138 = vunpack.c.h.b16 %v6573
        %v8139 = vunpack.c.l.b16 %v6574
        %v8140 = vunpack.c.h.b16 %v6574
        %v8141 = vunpack.c.l.b16 %v6575
        %v8142 = vunpack.c.h.b16 %v6575
        %v8143 = vunpack.c.l.b16 %v6576
        %v8144 = vunpack.c.h.b16 %v6576
        %v8145 = vunpack.c.l.b16 %v6577
        %v8146 = vunpack.c.h.b16 %v6577
        %v8147 = vunpack.c.l.b16 %v6578
        %v8148 = vunpack.c.h.b16 %v6578
        %v8149 = vunpack.c.l.b16 %v6579
        %v8150 = vunpack.c.h.b16 %v6579
        %v8151 = vunpack.c.l.b16 %v6580
        %v8152 = vunpack.c.h.b16 %v6580
        %v8153 = vunpack.c.l.b16 %v6581
        %v8154 = vunpack.c.h.b16 %v6581
        %v8155 = vunpack.c.l.b16 %v6582
        %v8156 = vunpack.c.h.b16 %v6582
        %v8157 = vunpack.c.l.b16 %v6583
        %v8158 = vunpack.c.h.b16 %v6583
        %v8159 = vunpack.c.l.b16 %v6584
        %v8160 = vunpack.c.h.b16 %v6584
        %v8161 = vunpack.c.l.b16 %v6585
        %v8162 = vunpack.c.h.b16 %v6585
        %v8163 = vunpack.c.l.b16 %v6586
        %v8164 = vunpack.c.h.b16 %v6586
        %v8165 = vpack.c.b16 %v7149, %v7141
        %v8166 = vpack.c.b16 %v7150, %v7142
        %v8167 = vpack.c.b16 %v7151, %v7143
        %v8168 = vpack.c.b16 %v7152, %v7144
        %v8169 = vpack.c.b16 %v7153, %v7145
        %v8170 = vpack.c.b16 %v7154, %v7146
        %v8171 = vpack.c.b16 %v7155, %v7147
        %v8172 = vpack.c.b16 %v7156, %v7148
        %v8173 = vpack.c.b16 %v7165, %v7157
        %v8174 = vpack.c.b16 %v7166, %v7158
        %v8175 = vpack.c.b16 %v7167, %v7159
        %v8176 = vpack.c.b16 %v7168, %v7160
        %v8177 = vpack.c.b16 %v7169, %v7161
        %v8178 = vpack.c.b16 %v7170, %v7162
        %v8179 = vpack.c.b16 %v7171, %v7163
        %v8180 = vpack.c.b16 %v7172, %v7164
        %v8181 = vpack.c.b16 %v7181, %v7173
        %v8182 = vpack.c.b16 %v7182, %v7174
        %v8183 = vpack.c.b16 %v7183, %v7175
        %v8184 = vpack.c.b16 %v7184, %v7176
        %v8185 = vpack.c.b16 %v7185, %v7177
        %v8186 = vpack.c.b16 %v7186, %v7178
        %v8187 = vpack.c.b16 %v7187, %v7179
        %v8188 = vpack.c.b16 %v7188, %v7180
        %v8189 = vpack.c.b16 %v7197, %v7189
        %v8190 = vpack.c.b16 %v7198, %v7190
        %v8191 = vpack.c.b16 %v7199, %v7191
        %v8192 = vpack.c.b16 %v7200, %v7192
        %v8193 = vpack.c.b16 %v7201, %v7193
        %v8194 = vpack.c.b16 %v7202, %v7194
        %v8195 = vpack.c.b16 %v7203, %v7195
        %v8196 = vpack.c.b16 %v7204, %v7196
        %v8197 = vpack.c.b16 %v7213, %v7205
        %v8198 = vpack.c.b16 %v7214, %v7206
        %v8199 = vpack.c.b16 %v7215, %v7207
        %v8200 = vpack.c.b16 %v7216, %v7208
        %v8201 = vpack.c.b16 %v7217, %v7209
        %v8202 = vpack.c.b16 %v7218, %v7210
        %v8203 = vpack.c.b16 %v7219, %v7211
        %v8204 = vpack.c.b16 %v7220, %v7212
        %v8205 = vpack.c.b16 %v7229, %v7221
        %v8206 = vpack.c.b16 %v7230, %v7222
        %v8207 = vpack.c.b16 %v7231, %v7223
        %v8208 = vpack.c.b16 %v7232, %v7224
        %v8209 = vpack.c.b16 %v7233, %v7225
        %v8210 = vpack.c.b16 %v7234, %v7226
        %v8211 = vpack.c.b16 %v7235, %v7227
        %v8212 = vpack.c.b16 %v7236, %v7228
        %v8213 = vpack.c.b16 %v7245, %v7237
        %v8214 = vpack.c.b16 %v7246, %v7238
        %v8215 = vpack.c.b16 %v7247, %v7239
        %v8216 = vpack.c.b16 %v7248, %v7240
        %v8217 = vpack.c.b16 %v7249, %v7241
        %v8218 = vpack.c.b16 %v7250, %v7242
        %v8219 = vpack.c.b16 %v7251, %v7243
        %v8220 = vpack.c.b16 %v7252, %v7244
        %v8221 = vpack.c.b16 %v7261, %v7253
        %v8222 = vpack.c.b16 %v7262, %v7254
        %v8223 = vpack.c.b16 %v7263, %v7255
        %v8224 = vpack.c.b16 %v7264, %v7256
        %v8225 = vpack.c.b16 %v7265, %v7257
        %v8226 = vpack.c.b16 %v7266, %v7258
        %v8227 = vpack.c.b16 %v7267, %v7259
        %v8228 = vpack.c.b16 %v7268, %v7260
        %v8229 = vpack.c.b16 %v7277, %v7269
        %v8230 = vpack.c.b16 %v7278, %v7270
        %v8231 = vpack.c.b16 %v7279, %v7271
        %v8232 = vpack.c.b16 %v7280, %v7272
        %v8233 = vpack.c.b16 %v7281, %v7273
        %v8234 = vpack.c.b16 %v7282, %v7274
        %v8235 = vpack.c.b16 %v7283, %v7275
        %v8236 = vpack.c.b16 %v7284, %v7276
        %v8237 = vpack.c.b16 %v7293, %v7285
        %v8238 = vpack.c.b16 %v7294, %v7286
        %v8239 = vpack.c.b16 %v7295, %v7287
        %v8240 = vpack.c.b16 %v7296, %v7288
        %v8241 = vpack.c.b16 %v7297, %v7289
        %v8242 = vpack.c.b16 %v7298, %v7290
        %v8243 = vpack.c.b16 %v7299, %v7291
        %v8244 = vpack.c.b16 %v7300, %v7292
        %v8245 = vpack.c.b16 %v7309, %v7301
        %v8246 = vpack.c.b16 %v7310, %v7302
        %v8247 = vpack.c.b16 %v7311, %v7303
        %v8248 = vpack.c.b16 %v7312, %v7304
        %v8249 = vpack.c.b16 %v7313, %v7305
        %v8250 = vpack.c.b16 %v7314, %v7306
        %v8251 = vpack.c.b16 %v7315, %v7307
        %v8252 = vpack.c.b16 %v7316, %v7308
        %v8253 = vpack.c.b16 %v7325, %v7317
        %v8254 = vpack.c.b16 %v7326, %v7318
        %v8255 = vpack.c.b16 %v7327, %v7319
        %v8256 = vpack.c.b16 %v7328, %v7320
        %v8257 = vpack.c.b16 %v7329, %v7321
        %v8258 = vpack.c.b16 %v7330, %v7322
        %v8259 = vpack.c.b16 %v7331, %v7323
        %v8260 = vpack.c.b16 %v7332, %v7324
        %v8261 = vpack.c.b16 %v7341, %v7333
        %v8262 = vpack.c.b16 %v7342, %v7334
        %v8263 = vpack.c.b16 %v7343, %v7335
        %v8264 = vpack.c.b16 %v7344, %v7336
        %v8265 = vpack.c.b16 %v7345, %v7337
        %v8266 = vpack.c.b16 %v7346, %v7338
        %v8267 = vpack.c.b16 %v7347, %v7339
        %v8268 = vpack.c.b16 %v7348, %v7340
        %v8269 = vpack.c.b16 %v7357, %v7349
        %v8270 = vpack.c.b16 %v7358, %v7350
        %v8271 = vpack.c.b16 %v7359, %v7351
        %v8272 = vpack.c.b16 %v7360, %v7352
        %v8273 = vpack.c.b16 %v7361, %v7353
        %v8274 = vpack.c.b16 %v7362, %v7354
        %v8275 = vpack.c.b16 %v7363, %v7355
        %v8276 = vpack.c.b16 %v7364, %v7356
        %v8277 = vpack.c.b16 %v7373, %v7365
        %v8278 = vpack.c.b16 %v7374, %v7366
        %v8279 = vpack.c.b16 %v7375, %v7367
        %v8280 = vpack.c.b16 %v7376, %v7368
        %v8281 = vpack.c.b16 %v7377, %v7369
        %v8282 = vpack.c.b16 %v7378, %v7370
        %v8283 = vpack.c.b16 %v7379, %v7371
        %v8284 = vpack.c.b16 %v7380, %v7372
        %v8285 = vpack.c.b16 %v7389, %v7381
        %v8286 = vpack.c.b16 %v7390, %v7382
        %v8287 = vpack.c.b16 %v7391, %v7383
        %v8288 = vpack.c.b16 %v7392, %v7384
        %v8289 = vpack.c.b16 %v7393, %v7385
        %v8290 = vpack.c.b16 %v7394, %v7386
        %v8291 = vpack.c.b16 %v7395, %v7387
        %v8292 = vpack.c.b16 %v7396, %v7388
        %v8293 = vpack.c.b16 %v7405, %v7397
        %v8294 = vpack.c.b16 %v7406, %v7398
        %v8295 = vpack.c.b16 %v7407, %v7399
        %v8296 = vpack.c.b16 %v7408, %v7400
        %v8297 = vpack.c.b16 %v7409, %v7401
        %v8298 = vpack.c.b16 %v7410, %v7402
        %v8299 = vpack.c.b16 %v7411, %v7403
        %v8300 = vpack.c.b16 %v7412, %v7404
        %v8301 = vpack.c.b16 %v7421, %v7413
        %v8302 = vpack.c.b16 %v7422, %v7414
        %v8303 = vpack.c.b16 %v7423, %v7415
        %v8304 = vpack.c.b16 %v7424, %v7416
        %v8305 = vpack.c.b16 %v7425, %v7417
        %v8306 = vpack.c.b16 %v7426, %v7418
        %v8307 = vpack.c.b16 %v7427, %v7419
        %v8308 = vpack.c.b16 %v7428, %v7420
        %v8309 = vpack.c.b16 %v7437, %v7429
        %v8310 = vpack.c.b16 %v7438, %v7430
        %v8311 = vpack.c.b16 %v7439, %v7431
        %v8312 = vpack.c.b16 %v7440, %v7432
        %v8313 = vpack.c.b16 %v7441, %v7433
        %v8314 = vpack.c.b16 %v7442, %v7434
        %v8315 = vpack.c.b16 %v7443, %v7435
        %v8316 = vpack.c.b16 %v7444, %v7436
        %v8317 = vpack.c.b16 %v7453, %v7445
        %v8318 = vpack.c.b16 %v7454, %v7446
        %v8319 = vpack.c.b16 %v7455, %v7447
        %v8320 = vpack.c.b16 %v7456, %v7448
        %v8321 = vpack.c.b16 %v7457, %v7449
        %v8322 = vpack.c.b16 %v7458, %v7450
        %v8323 = vpack.c.b16 %v7459, %v7451
        %v8324 = vpack.c.b16 %v7460, %v7452
        %v8325 = vpack.c.b16 %v7469, %v7461
        %v8326 = vpack.c.b16 %v7470, %v7462
        %v8327 = vpack.c.b16 %v7471, %v7463
        %v8328 = vpack.c.b16 %v7472, %v7464
        %v8329 = vpack.c.b16 %v7473, %v7465
        %v8330 = vpack.c.b16 %v7474, %v7466
        %v8331 = vpack.c.b16 %v7475, %v7467
        %v8332 = vpack.c.b16 %v7476, %v7468
        %v8333 = vpack.c.b16 %v7485, %v7477
        %v8334 = vpack.c.b16 %v7486, %v7478
        %v8335 = vpack.c.b16 %v7487, %v7479
        %v8336 = vpack.c.b16 %v7488, %v7480
        %v8337 = vpack.c.b16 %v7489, %v7481
        %v8338 = vpack.c.b16 %v7490, %v7482
        %v8339 = vpack.c.b16 %v7491, %v7483
        %v8340 = vpack.c.b16 %v7492, %v7484
        %v8341 = vpack.c.b16 %v7501, %v7493
        %v8342 = vpack.c.b16 %v7502, %v7494
        %v8343 = vpack.c.b16 %v7503, %v7495
        %v8344 = vpack.c.b16 %v7504, %v7496
        %v8345 = vpack.c.b16 %v7505, %v7497
        %v8346 = vpack.c.b16 %v7506, %v7498
        %v8347 = vpack.c.b16 %v7507, %v7499
        %v8348 = vpack.c.b16 %v7508, %v7500
        %v8349 = vpack.c.b16 %v7517, %v7509
        %v8350 = vpack.c.b16 %v7518, %v7510
        %v8351 = vpack.c.b16 %v7519, %v7511
        %v8352 = vpack.c.b16 %v7520, %v7512
        %v8353 = vpack.c.b16 %v7521, %v7513
        %v8354 = vpack.c.b16 %v7522, %v7514
        %v8355 = vpack.c.b16 %v7523, %v7515
        %v8356 = vpack.c.b16 %v7524, %v7516
        %v8357 = vpack.c.b16 %v7533, %v7525
        %v8358 = vpack.c.b16 %v7534, %v7526
        %v8359 = vpack.c.b16 %v7535, %v7527
        %v8360 = vpack.c.b16 %v7536, %v7528
        %v8361 = vpack.c.b16 %v7537, %v7529
        %v8362 = vpack.c.b16 %v7538, %v7530
        %v8363 = vpack.c.b16 %v7539, %v7531
        %v8364 = vpack.c.b16 %v7540, %v7532
        %v8365 = vpack.c.b16 %v7549, %v7541
        %v8366 = vpack.c.b16 %v7550, %v7542
        %v8367 = vpack.c.b16 %v7551, %v7543
        %v8368 = vpack.c.b16 %v7552, %v7544
        %v8369 = vpack.c.b16 %v7553, %v7545
        %v8370 = vpack.c.b16 %v7554, %v7546
        %v8371 = vpack.c.b16 %v7555, %v7547
        %v8372 = vpack.c.b16 %v7556, %v7548
        %v8373 = vpack.c.b16 %v7565, %v7557
        %v8374 = vpack.c.b16 %v7566, %v7558
        %v8375 = vpack.c.b16 %v7567, %v7559
        %v8376 = vpack.c.b16 %v7568, %v7560
        %v8377 = vpack.c.b16 %v7569, %v7561
        %v8378 = vpack.c.b16 %v7570, %v7562
        %v8379 = vpack.c.b16 %v7571, %v7563
        %v8380 = vpack.c.b16 %v7572, %v7564
        %v8381 = vpack.c.b16 %v7581, %v7573
        %v8382 = vpack.c.b16 %v7582, %v7574
        %v8383 = vpack.c.b16 %v7583, %v7575
        %v8384 = vpack.c.b16 %v7584, %v7576
        %v8385 = vpack.c.b16 %v7585, %v7577
        %v8386 = vpack.c.b16 %v7586, %v7578
        %v8387 = vpack.c.b16 %v7587, %v7579
        %v8388 = vpack.c.b16 %v7588, %v7580
        %v8389 = vpack.c.b16 %v7597, %v7589
        %v8390 = vpack.c.b16 %v7598, %v7590
        %v8391 = vpack.c.b16 %v7599, %v7591
        %v8392 = vpack.c.b16 %v7600, %v7592
        %v8393 = vpack.c.b16 %v7601, %v7593
        %v8394 = vpack.c.b16 %v7602, %v7594
        %v8395 = vpack.c.b16 %v7603, %v7595
        %v8396 = vpack.c.b16 %v7604, %v7596
        %v8397 = vpack.c.b16 %v7613, %v7605
        %v8398 = vpack.c.b16 %v7614, %v7606
        %v8399 = vpack.c.b16 %v7615, %v7607
        %v8400 = vpack.c.b16 %v7616, %v7608
        %v8401 = vpack.c.b16 %v7617, %v7609
        %v8402 = vpack.c.b16 %v7618, %v7610
        %v8403 = vpack.c.b16 %v7619, %v7611
        %v8404 = vpack.c.b16 %v7620, %v7612
        %v8405 = vpack.c.b16 %v7629, %v7621
        %v8406 = vpack.c.b16 %v7630, %v7622
        %v8407 = vpack.c.b16 %v7631, %v7623
        %v8408 = vpack.c.b16 %v7632, %v7624
        %v8409 = vpack.c.b16 %v7633, %v7625
        %v8410 = vpack.c.b16 %v7634, %v7626
        %v8411 = vpack.c.b16 %v7635, %v7627
        %v8412 = vpack.c.b16 %v7636, %v7628
        %v8413 = vpack.c.b16 %v7645, %v7637
        %v8414 = vpack.c.b16 %v7646, %v7638
        %v8415 = vpack.c.b16 %v7647, %v7639
        %v8416 = vpack.c.b16 %v7648, %v7640
        %v8417 = vpack.c.b16 %v7649, %v7641
        %v8418 = vpack.c.b16 %v7650, %v7642
        %v8419 = vpack.c.b16 %v7651, %v7643
        %v8420 = vpack.c.b16 %v7652, %v7644
        %v8421 = vpack.c.b16 %v7661, %v7653
        %v8422 = vpack.c.b16 %v7662, %v7654
        %v8423 = vpack.c.b16 %v7663, %v7655
        %v8424 = vpack.c.b16 %v7664, %v7656
        %v8425 = vpack.c.b16 %v7665, %v7657
        %v8426 = vpack.c.b16 %v7666, %v7658
        %v8427 = vpack.c.b16 %v7667, %v7659
        %v8428 = vpack.c.b16 %v7668, %v7660
        %v8429 = vpack.c.b16 %v7677, %v7669
        %v8430 = vpack.c.b16 %v7678, %v7670
        %v8431 = vpack.c.b16 %v7679, %v7671
        %v8432 = vpack.c.b16 %v7680, %v7672
        %v8433 = vpack.c.b16 %v7681, %v7673
        %v8434 = vpack.c.b16 %v7682, %v7674
        %v8435 = vpack.c.b16 %v7683, %v7675
        %v8436 = vpack.c.b16 %v7684, %v7676
        %v8437 = vpack.c.b16 %v7693, %v7685
        %v8438 = vpack.c.b16 %v7694, %v7686
        %v8439 = vpack.c.b16 %v7695, %v7687
        %v8440 = vpack.c.b16 %v7696, %v7688
        %v8441 = vpack.c.b16 %v7697, %v7689
        %v8442 = vpack.c.b16 %v7698, %v7690
        %v8443 = vpack.c.b16 %v7699, %v7691
        %v8444 = vpack.c.b16 %v7700, %v7692
        %v8445 = vpack.c.b16 %v7709, %v7701
        %v8446 = vpack.c.b16 %v7710, %v7702
        %v8447 = vpack.c.b16 %v7711, %v7703
        %v8448 = vpack.c.b16 %v7712, %v7704
        %v8449 = vpack.c.b16 %v7713, %v7705
        %v8450 = vpack.c.b16 %v7714, %v7706
        %v8451 = vpack.c.b16 %v7715, %v7707
        %v8452 = vpack.c.b16 %v7716, %v7708
        %v8453 = vpack.c.b16 %v7725, %v7717
        %v8454 = vpack.c.b16 %v7726, %v7718
        %v8455 = vpack.c.b16 %v7727, %v7719
        %v8456 = vpack.c.b16 %v7728, %v7720
        %v8457 = vpack.c.b16 %v7729, %v7721
        %v8458 = vpack.c.b16 %v7730, %v7722
        %v8459 = vpack.c.b16 %v7731, %v7723
        %v8460 = vpack.c.b16 %v7732, %v7724
        %v8461 = vpack.c.b16 %v7741, %v7733
        %v8462 = vpack.c.b16 %v7742, %v7734
        %v8463 = vpack.c.b16 %v7743, %v7735
        %v8464 = vpack.c.b16 %v7744, %v7736
        %v8465 = vpack.c.b16 %v7745, %v7737
        %v8466 = vpack.c.b16 %v7746, %v7738
        %v8467 = vpack.c.b16 %v7747, %v7739
        %v8468 = vpack.c.b16 %v7748, %v7740
        %v8469 = vpack.c.b16 %v7757, %v7749
        %v8470 = vpack.c.b16 %v7758, %v7750
        %v8471 = vpack.c.b16 %v7759, %v7751
        %v8472 = vpack.c.b16 %v7760, %v7752
        %v8473 = vpack.c.b16 %v7761, %v7753
        %v8474 = vpack.c.b16 %v7762, %v7754
        %v8475 = vpack.c.b16 %v7763, %v7755
        %v8476 = vpack.c.b16 %v7764, %v7756
        %v8477 = vpack.c.b16 %v7773, %v7765
        %v8478 = vpack.c.b16 %v7774, %v7766
        %v8479 = vpack.c.b16 %v7775, %v7767
        %v8480 = vpack.c.b16 %v7776, %v7768
        %v8481 = vpack.c.b16 %v7777, %v7769
        %v8482 = vpack.c.b16 %v7778, %v7770
        %v8483 = vpack.c.b16 %v7779, %v7771
        %v8484 = vpack.c.b16 %v7780, %v7772
        %v8485 = vpack.c.b16 %v7789, %v7781
        %v8486 = vpack.c.b16 %v7790, %v7782
        %v8487 = vpack.c.b16 %v7791, %v7783
        %v8488 = vpack.c.b16 %v7792, %v7784
        %v8489 = vpack.c.b16 %v7793, %v7785
        %v8490 = vpack.c.b16 %v7794, %v7786
        %v8491 = vpack.c.b16 %v7795, %v7787
        %v8492 = vpack.c.b16 %v7796, %v7788
        %v8493 = vpack.c.b16 %v7805, %v7797
        %v8494 = vpack.c.b16 %v7806, %v7798
        %v8495 = vpack.c.b16 %v7807, %v7799
        %v8496 = vpack.c.b16 %v7808, %v7800
        %v8497 = vpack.c.b16 %v7809, %v7801
        %v8498 = vpack.c.b16 %v7810, %v7802
        %v8499 = vpack.c.b16 %v7811, %v7803
        %v8500 = vpack.c.b16 %v7812, %v7804
        %v8501 = vpack.c.b16 %v7821, %v7813
        %v8502 = vpack.c.b16 %v7822, %v7814
        %v8503 = vpack.c.b16 %v7823, %v7815
        %v8504 = vpack.c.b16 %v7824, %v7816
        %v8505 = vpack.c.b16 %v7825, %v7817
        %v8506 = vpack.c.b16 %v7826, %v7818
        %v8507 = vpack.c.b16 %v7827, %v7819
        %v8508 = vpack.c.b16 %v7828, %v7820
        %v8509 = vpack.c.b16 %v7837, %v7829
        %v8510 = vpack.c.b16 %v7838, %v7830
        %v8511 = vpack.c.b16 %v7839, %v7831
        %v8512 = vpack.c.b16 %v7840, %v7832
        %v8513 = vpack.c.b16 %v7841, %v7833
        %v8514 = vpack.c.b16 %v7842, %v7834
        %v8515 = vpack.c.b16 %v7843, %v7835
        %v8516 = vpack.c.b16 %v7844, %v7836
        %v8517 = vpack.c.b16 %v7853, %v7845
        %v8518 = vpack.c.b16 %v7854, %v7846
        %v8519 = vpack.c.b16 %v7855, %v7847
        %v8520 = vpack.c.b16 %v7856, %v7848
        %v8521 = vpack.c.b16 %v7857, %v7849
        %v8522 = vpack.c.b16 %v7858, %v7850
        %v8523 = vpack.c.b16 %v7859, %v7851
        %v8524 = vpack.c.b16 %v7860, %v7852
        %v8525 = vpack.c.b16 %v7869, %v7861
        %v8526 = vpack.c.b16 %v7870, %v7862
        %v8527 = vpack.c.b16 %v7871, %v7863
        %v8528 = vpack.c.b16 %v7872, %v7864
        %v8529 = vpack.c.b16 %v7873, %v7865
        %v8530 = vpack.c.b16 %v7874, %v7866
        %v8531 = vpack.c.b16 %v7875, %v7867
        %v8532 = vpack.c.b16 %v7876, %v7868
        %v8533 = vpack.c.b16 %v7885, %v7877
        %v8534 = vpack.c.b16 %v7886, %v7878
        %v8535 = vpack.c.b16 %v7887, %v7879
        %v8536 = vpack.c.b16 %v7888, %v7880
        %v8537 = vpack.c.b16 %v7889, %v7881
        %v8538 = vpack.c.b16 %v7890, %v7882
        %v8539 = vpack.c.b16 %v7891, %v7883
        %v8540 = vpack.c.b16 %v7892, %v7884
        %v8541 = vpack.c.b16 %v7901, %v7893
        %v8542 = vpack.c.b16 %v7902, %v7894
        %v8543 = vpack.c.b16 %v7903, %v7895
        %v8544 = vpack.c.b16 %v7904, %v7896
        %v8545 = vpack.c.b16 %v7905, %v7897
        %v8546 = vpack.c.b16 %v7906, %v7898
        %v8547 = vpack.c.b16 %v7907, %v7899
        %v8548 = vpack.c.b16 %v7908, %v7900
        %v8549 = vpack.c.b16 %v7917, %v7909
        %v8550 = vpack.c.b16 %v7918, %v7910
        %v8551 = vpack.c.b16 %v7919, %v7911
        %v8552 = vpack.c.b16 %v7920, %v7912
        %v8553 = vpack.c.b16 %v7921, %v7913
        %v8554 = vpack.c.b16 %v7922, %v7914
        %v8555 = vpack.c.b16 %v7923, %v7915
        %v8556 = vpack.c.b16 %v7924, %v7916
        %v8557 = vpack.c.b16 %v7933, %v7925
        %v8558 = vpack.c.b16 %v7934, %v7926
        %v8559 = vpack.c.b16 %v7935, %v7927
        %v8560 = vpack.c.b16 %v7936, %v7928
        %v8561 = vpack.c.b16 %v7937, %v7929
        %v8562 = vpack.c.b16 %v7938, %v7930
        %v8563 = vpack.c.b16 %v7939, %v7931
        %v8564 = vpack.c.b16 %v7940, %v7932
        %v8565 = vpack.c.b16 %v7949, %v7941
        %v8566 = vpack.c.b16 %v7950, %v7942
        %v8567 = vpack.c.b16 %v7951, %v7943
        %v8568 = vpack.c.b16 %v7952, %v7944
        %v8569 = vpack.c.b16 %v7953, %v7945
        %v8570 = vpack.c.b16 %v7954, %v7946
        %v8571 = vpack.c.b16 %v7955, %v7947
        %v8572 = vpack.c.b16 %v7956, %v7948
        %v8573 = vpack.c.b16 %v7965, %v7957
        %v8574 = vpack.c.b16 %v7966, %v7958
        %v8575 = vpack.c.b16 %v7967, %v7959
        %v8576 = vpack.c.b16 %v7968, %v7960
        %v8577 = vpack.c.b16 %v7969, %v7961
        %v8578 = vpack.c.b16 %v7970, %v7962
        %v8579 = vpack.c.b16 %v7971, %v7963
        %v8580 = vpack.c.b16 %v7972, %v7964
        %v8581 = vpack.c.b16 %v7981, %v7973
        %v8582 = vpack.c.b16 %v7982, %v7974
        %v8583 = vpack.c.b16 %v7983, %v7975
        %v8584 = vpack.c.b16 %v7984, %v7976
        %v8585 = vpack.c.b16 %v7985, %v7977
        %v8586 = vpack.c.b16 %v7986, %v7978
        %v8587 = vpack.c.b16 %v7987, %v7979
        %v8588 = vpack.c.b16 %v7988, %v7980
        %v8589 = vpack.c.b16 %v7997, %v7989
        %v8590 = vpack.c.b16 %v7998, %v7990
        %v8591 = vpack.c.b16 %v7999, %v7991
        %v8592 = vpack.c.b16 %v8000, %v7992
        %v8593 = vpack.c.b16 %v8001, %v7993
        %v8594 = vpack.c.b16 %v8002, %v7994
        %v8595 = vpack.c.b16 %v8003, %v7995
        %v8596 = vpack.c.b16 %v8004, %v7996
        %v8597 = vpack.c.b16 %v8013, %v8005
        %v8598 = vpack.c.b16 %v8014, %v8006
        %v8599 = vpack.c.b16 %v8015, %v8007
        %v8600 = vpack.c.b16 %v8016, %v8008
        %v8601 = vpack.c.b16 %v8017, %v8009
        %v8602 = vpack.c.b16 %v8018, %v8010
        %v8603 = vpack.c.b16 %v8019, %v8011
        %v8604 = vpack.c.b16 %v8020, %v8012
        %v8605 = vpack.c.b16 %v8029, %v8021
        %v8606 = vpack.c.b16 %v8030, %v8022
        %v8607 = vpack.c.b16 %v8031, %v8023
        %v8608 = vpack.c.b16 %v8032, %v8024
        %v8609 = vpack.c.b16 %v8033, %v8025
        %v8610 = vpack.c.b16 %v8034, %v8026
        %v8611 = vpack.c.b16 %v8035, %v8027
        %v8612 = vpack.c.b16 %v8036, %v8028
        %v8613 = vpack.c.b16 %v8045, %v8037
        %v8614 = vpack.c.b16 %v8046, %v8038
        %v8615 = vpack.c.b16 %v8047, %v8039
        %v8616 = vpack.c.b16 %v8048, %v8040
        %v8617 = vpack.c.b16 %v8049, %v8041
        %v8618 = vpack.c.b16 %v8050, %v8042
        %v8619 = vpack.c.b16 %v8051, %v8043
        %v8620 = vpack.c.b16 %v8052, %v8044
        %v8621 = vpack.c.b16 %v8061, %v8053
        %v8622 = vpack.c.b16 %v8062, %v8054
        %v8623 = vpack.c.b16 %v8063, %v8055
        %v8624 = vpack.c.b16 %v8064, %v8056
        %v8625 = vpack.c.b16 %v8065, %v8057
        %v8626 = vpack.c.b16 %v8066, %v8058
        %v8627 = vpack.c.b16 %v8067, %v8059
        %v8628 = vpack.c.b16 %v8068, %v8060
        %v8629 = vpack.c.b16 %v8077, %v8069
        %v8630 = vpack.c.b16 %v8078, %v8070
        %v8631 = vpack.c.b16 %v8079, %v8071
        %v8632 = vpack.c.b16 %v8080, %v8072
        %v8633 = vpack.c.b16 %v8081, %v8073
        %v8634 = vpack.c.b16 %v8082, %v8074
        %v8635 = vpack.c.b16 %v8083, %v8075
        %v8636 = vpack.c.b16 %v8084, %v8076
        %v8637 = vpack.c.b16 %v8093, %v8085
        %v8638 = vpack.c.b16 %v8094, %v8086
        %v8639 = vpack.c.b16 %v8095, %v8087
        %v8640 = vpack.c.b16 %v8096, %v8088
        %v8641 = vpack.c.b16 %v8097, %v8089
        %v8642 = vpack.c.b16 %v8098, %v8090
        %v8643 = vpack.c.b16 %v8099, %v8091
        %v8644 = vpack.c.b16 %v8100, %v8092
        %v8645 = vpack.c.b16 %v8109, %v8101
        %v8646 = vpack.c.b16 %v8110, %v8102
        %v8647 = vpack.c.b16 %v8111, %v8103
        %v8648 = vpack.c.b16 %v8112, %v8104
        %v8649 = vpack.c.b16 %v8113, %v8105
        %v8650 = vpack.c.b16 %v8114, %v8106
        %v8651 = vpack.c.b16 %v8115, %v8107
        %v8652 = vpack.c.b16 %v8116, %v8108
        %v8653 = vpack.c.b16 %v8125, %v8117
        %v8654 = vpack.c.b16 %v8126, %v8118
        %v8655 = vpack.c.b16 %v8127, %v8119
        %v8656 = vpack.c.b16 %v8128, %v8120
        %v8657 = vpack.c.b16 %v8129, %v8121
        %v8658 = vpack.c.b16 %v8130, %v8122
        %v8659 = vpack.c.b16 %v8131, %v8123
        %v8660 = vpack.c.b16 %v8132, %v8124
        %v8661 = vpack.c.b16 %v8141, %v8133
        %v8662 = vpack.c.b16 %v8142, %v8134
        %v8663 = vpack.c.b16 %v8143, %v8135
        %v8664 = vpack.c.b16 %v8144, %v8136
        %v8665 = vpack.c.b16 %v8145, %v8137
        %v8666 = vpack.c.b16 %v8146, %v8138
        %v8667 = vpack.c.b16 %v8147, %v8139
        %v8668 = vpack.c.b16 %v8148, %v8140
        %v8669 = vpack.c.b16 %v8157, %v8149
        %v8670 = vpack.c.b16 %v8158, %v8150
        %v8671 = vpack.c.b16 %v8159, %v8151
        %v8672 = vpack.c.b16 %v8160, %v8152
        %v8673 = vpack.c.b16 %v8161, %v8153
        %v8674 = vpack.c.b16 %v8162, %v8154
        %v8675 = vpack.c.b16 %v8163, %v8155
        %v8676 = vpack.c.b16 %v8164, %v8156
        %9189 = vmatprep.subr.bf16.mxu0 %v8222
        %9190 = vmatpush1.bf16.msra.mxu0 %v8221
        %9191 = vmatprep.subr.bf16.mxu0 %v8214
        %9192 = vmatpush1.bf16.msra.mxu0 %v8213
        %9193 = vmatprep.subr.bf16.mxu0 %v8206
        %9194 = vmatpush1.bf16.msra.mxu0 %v8205
        %9195 = vmatprep.subr.bf16.mxu0 %v8198
        %9196 = vmatpush1.bf16.msra.mxu0 %v8197
        %9197 = vmatprep.subr.bf16.mxu0 %v8190
        %9198 = vmatpush1.bf16.msra.mxu0 %v8189
        %9199 = vmatprep.subr.bf16.mxu0 %v8182
        %9200 = vmatpush1.bf16.msra.mxu0 %v8181
        %9201 = vmatprep.subr.bf16.mxu0 %v8174
        %9202 = vmatpush1.bf16.msra.mxu0 %v8173
        %9203 = vmatprep.subr.bf16.mxu0 %v8166
        %9204 = vmatpush1.bf16.msra.mxu0 %v8165
        %9205 = vmatprep.subr.bf16.mxu0 %v8286
        %9206 = vmatpush2.bf16.msra.mxu0 %v8285
        %9207 = vmatprep.subr.bf16.mxu0 %v8278
        %9208 = vmatpush2.bf16.msra.mxu0 %v8277
        %9209 = vmatprep.subr.bf16.mxu0 %v8270
        %9210 = vmatpush2.bf16.msra.mxu0 %v8269
        %9211 = vmatprep.subr.bf16.mxu0 %v8262
        %9212 = vmatpush2.bf16.msra.mxu0 %v8261
        %9213 = vmatprep.subr.bf16.mxu0 %v8254
        %9214 = vmatpush2.bf16.msra.mxu0 %v8253
        %9215 = vmatprep.subr.bf16.mxu0 %v8246
        %9216 = vmatpush2.bf16.msra.mxu0 %v8245
        %9217 = vmatprep.subr.bf16.mxu0 %v8238
        %9218 = vmatpush2.bf16.msra.mxu0 %v8237
        %9219 = vmatprep.subr.bf16.mxu0 %v8230
        %9220 = vmatpush2.bf16.msra.mxu0 %v8229
        %9221 = vmatprep.mubr.bf16.mxu0 %v6068
        %9222 = vmatmul.mubr.bf16.gmra.mxu0 %v6067
        %v9223 = vpop.f32.mrf.mxu0
        %v9224 = vadd.f32 %v6592, %v9223
        %v9225 = vpop.f32.mrf.mxu0
        %v9226 = vadd.f32 %v6596, %v9225
        %v9227 = vpop.f32.mrf.mxu0
        %v9228 = vadd.f32 %v6592, %v9227
        %v9229 = vpop.f32.mrf.mxu0
        %v9230 = vadd.f32 %v6596, %v9229
        %9231 = vdwg.mxu0
        %9232 = vmatprep.subr.bf16.mxu0 %v8350
        %9233 = vmatpush1.bf16.msra.mxu0 %v8349
        %9234 = vmatprep.subr.bf16.mxu0 %v8342
        %9235 = vmatpush1.bf16.msra.mxu0 %v8341
        %9236 = vmatprep.subr.bf16.mxu0 %v8334
        %9237 = vmatpush1.bf16.msra.mxu0 %v8333
        %9238 = vmatprep.subr.bf16.mxu0 %v8326
        %9239 = vmatpush1.bf16.msra.mxu0 %v8325
        %9240 = vmatprep.subr.bf16.mxu0 %v8318
        %9241 = vmatpush1.bf16.msra.mxu0 %v8317
        %9242 = vmatprep.subr.bf16.mxu0 %v8310
        %9243 = vmatpush1.bf16.msra.mxu0 %v8309
        %9244 = vmatprep.subr.bf16.mxu0 %v8302
        %9245 = vmatpush1.bf16.msra.mxu0 %v8301
        %9246 = vmatprep.subr.bf16.mxu0 %v8294
        %9247 = vmatpush1.bf16.msra.mxu0 %v8293
        %9248 = vmatprep.subr.bf16.mxu0 %v8414
        %9249 = vmatpush2.bf16.msra.mxu0 %v8413
        %9250 = vmatprep.subr.bf16.mxu0 %v8406
        %9251 = vmatpush2.bf16.msra.mxu0 %v8405
        %9252 = vmatprep.subr.bf16.mxu0 %v8398
        %9253 = vmatpush2.bf16.msra.mxu0 %v8397
        %9254 = vmatprep.subr.bf16.mxu0 %v8390
        %9255 = vmatpush2.bf16.msra.mxu0 %v8389
        %9256 = vmatprep.subr.bf16.mxu0 %v8382
        %9257 = vmatpush2.bf16.msra.mxu0 %v8381
        %9258 = vmatprep.subr.bf16.mxu0 %v8374
        %9259 = vmatpush2.bf16.msra.mxu0 %v8373
        %9260 = vmatprep.subr.bf16.mxu0 %v8366
        %9261 = vmatpush2.bf16.msra.mxu0 %v8365
        %9262 = vmatprep.subr.bf16.mxu0 %v8358
        %9263 = vmatpush2.bf16.msra.mxu0 %v8357
        %9264 = vmatprep.mubr.bf16.mxu0 %v6070
        %9265 = vmatmul.mubr.bf16.gmra.mxu0 %v6069
        %v9266 = vpop.f32.mrf.mxu0
        %v9267 = vadd.f32 %v9224, %v9266
        %v9268 = vpop.f32.mrf.mxu0
        %v9269 = vadd.f32 %v9226, %v9268
        %v9270 = vpop.f32.mrf.mxu0
        %v9271 = vadd.f32 %v9228, %v9270
        %v9272 = vpop.f32.mrf.mxu0
        %v9273 = vadd.f32 %v9230, %v9272
        %9274 = vdwg.mxu0
        %9275 = vmatprep.subr.bf16.mxu0 %v8478
        %9276 = vmatpush1.bf16.msra.mxu0 %v8477
        %9277 = vmatprep.subr.bf16.mxu0 %v8470
        %9278 = vmatpush1.bf16.msra.mxu0 %v8469
        %9279 = vmatprep.subr.bf16.mxu0 %v8462
        %9280 = vmatpush1.bf16.msra.mxu0 %v8461
        %9281 = vmatprep.subr.bf16.mxu0 %v8454
        %9282 = vmatpush1.bf16.msra.mxu0 %v8453
        %9283 = vmatprep.subr.bf16.mxu0 %v8446
        %9284 = vmatpush1.bf16.msra.mxu0 %v8445
        %9285 = vmatprep.subr.bf16.mxu0 %v8438
        %9286 = vmatpush1.bf16.msra.mxu0 %v8437
        %9287 = vmatprep.subr.bf16.mxu0 %v8430
        %9288 = vmatpush1.bf16.msra.mxu0 %v8429
        %9289 = vmatprep.subr.bf16.mxu0 %v8422
        %9290 = vmatpush1.bf16.msra.mxu0 %v8421
        %9291 = vmatprep.subr.bf16.mxu0 %v8542
        %9292 = vmatpush2.bf16.msra.mxu0 %v8541
        %9293 = vmatprep.subr.bf16.mxu0 %v8534
        %9294 = vmatpush2.bf16.msra.mxu0 %v8533
        %9295 = vmatprep.subr.bf16.mxu0 %v8526
        %9296 = vmatpush2.bf16.msra.mxu0 %v8525
        %9297 = vmatprep.subr.bf16.mxu0 %v8518
        %9298 = vmatpush2.bf16.msra.mxu0 %v8517
        %9299 = vmatprep.subr.bf16.mxu0 %v8510
        %9300 = vmatpush2.bf16.msra.mxu0 %v8509
        %9301 = vmatprep.subr.bf16.mxu0 %v8502
        %9302 = vmatpush2.bf16.msra.mxu0 %v8501
        %9303 = vmatprep.subr.bf16.mxu0 %v8494
        %9304 = vmatpush2.bf16.msra.mxu0 %v8493
        %9305 = vmatprep.subr.bf16.mxu0 %v8486
        %9306 = vmatpush2.bf16.msra.mxu0 %v8485
        %9307 = vmatprep.mubr.bf16.mxu0 %v6072
        %9308 = vmatmul.mubr.bf16.gmra.mxu0 %v6071
        %v9309 = vpop.f32.mrf.mxu0
        %v9310 = vadd.f32 %v9267, %v9309
        %v9311 = vpop.f32.mrf.mxu0
        %v9312 = vadd.f32 %v9269, %v9311
        %v9313 = vpop.f32.mrf.mxu0
        %v9314 = vadd.f32 %v9271, %v9313
        %v9315 = vpop.f32.mrf.mxu0
        %v9316 = vadd.f32 %v9273, %v9315
        %9317 = vdwg.mxu0
        %9318 = vmatprep.subr.bf16.mxu0 %v8606
        %9319 = vmatpush1.bf16.msra.mxu0 %v8605
        %9320 = vmatprep.subr.bf16.mxu0 %v8598
        %9321 = vmatpush1.bf16.msra.mxu0 %v8597
        %9322 = vmatprep.subr.bf16.mxu0 %v8590
        %9323 = vmatpush1.bf16.msra.mxu0 %v8589
        %9324 = vmatprep.subr.bf16.mxu0 %v8582
        %9325 = vmatpush1.bf16.msra.mxu0 %v8581
        %9326 = vmatprep.subr.bf16.mxu0 %v8574
        %9327 = vmatpush1.bf16.msra.mxu0 %v8573
        %9328 = vmatprep.subr.bf16.mxu0 %v8566
        %9329 = vmatpush1.bf16.msra.mxu0 %v8565
        %9330 = vmatprep.subr.bf16.mxu0 %v8558
        %9331 = vmatpush1.bf16.msra.mxu0 %v8557
        %9332 = vmatprep.subr.bf16.mxu0 %v8550
        %9333 = vmatpush1.bf16.msra.mxu0 %v8549
        %9334 = vmatprep.subr.bf16.mxu0 %v8670
        %9335 = vmatpush2.bf16.msra.mxu0 %v8669
        %9336 = vmatprep.subr.bf16.mxu0 %v8662
        %9337 = vmatpush2.bf16.msra.mxu0 %v8661
        %9338 = vmatprep.subr.bf16.mxu0 %v8654
        %9339 = vmatpush2.bf16.msra.mxu0 %v8653
        %9340 = vmatprep.subr.bf16.mxu0 %v8646
        %9341 = vmatpush2.bf16.msra.mxu0 %v8645
        %9342 = vmatprep.subr.bf16.mxu0 %v8638
        %9343 = vmatpush2.bf16.msra.mxu0 %v8637
        %9344 = vmatprep.subr.bf16.mxu0 %v8630
        %9345 = vmatpush2.bf16.msra.mxu0 %v8629
        %9346 = vmatprep.subr.bf16.mxu0 %v8622
        %9347 = vmatpush2.bf16.msra.mxu0 %v8621
        %9348 = vmatprep.subr.bf16.mxu0 %v8614
        %9349 = vmatpush2.bf16.msra.mxu0 %v8613
        %9350 = vmatprep.mubr.bf16.mxu0 %v6074
        %9351 = vmatmul.mubr.bf16.gmra.mxu0 %v6073
        %v9352 = vpop.f32.mrf.mxu0
        %v9353 = vadd.f32 %v9310, %v9352
        %v9354 = vpop.f32.mrf.mxu0
        %v9355 = vadd.f32 %v9312, %v9354
        %v9356 = vpop.f32.mrf.mxu0
        %v9357 = vadd.f32 %v9314, %v9356
        %v9358 = vpop.f32.mrf.mxu0
        %v9359 = vadd.f32 %v9316, %v9358
        %9360 = vdwg.mxu0
        %9361 = vmatprep.subr.bf16.mxu0 %v8224
        %9362 = vmatpush1.bf16.msra.mxu0 %v8223
        %9363 = vmatprep.subr.bf16.mxu0 %v8216
        %9364 = vmatpush1.bf16.msra.mxu0 %v8215
        %9365 = vmatprep.subr.bf16.mxu0 %v8208
        %9366 = vmatpush1.bf16.msra.mxu0 %v8207
        %9367 = vmatprep.subr.bf16.mxu0 %v8200
        %9368 = vmatpush1.bf16.msra.mxu0 %v8199
        %9369 = vmatprep.subr.bf16.mxu0 %v8192
        %9370 = vmatpush1.bf16.msra.mxu0 %v8191
        %9371 = vmatprep.subr.bf16.mxu0 %v8184
        %9372 = vmatpush1.bf16.msra.mxu0 %v8183
        %9373 = vmatprep.subr.bf16.mxu0 %v8176
        %9374 = vmatpush1.bf16.msra.mxu0 %v8175
        %9375 = vmatprep.subr.bf16.mxu0 %v8168
        %9376 = vmatpush1.bf16.msra.mxu0 %v8167
        %9377 = vmatprep.subr.bf16.mxu0 %v8288
        %9378 = vmatpush2.bf16.msra.mxu0 %v8287
        %9379 = vmatprep.subr.bf16.mxu0 %v8280
        %9380 = vmatpush2.bf16.msra.mxu0 %v8279
        %9381 = vmatprep.subr.bf16.mxu0 %v8272
        %9382 = vmatpush2.bf16.msra.mxu0 %v8271
        %9383 = vmatprep.subr.bf16.mxu0 %v8264
        %9384 = vmatpush2.bf16.msra.mxu0 %v8263
        %9385 = vmatprep.subr.bf16.mxu0 %v8256
        %9386 = vmatpush2.bf16.msra.mxu0 %v8255
        %9387 = vmatprep.subr.bf16.mxu0 %v8248
        %9388 = vmatpush2.bf16.msra.mxu0 %v8247
        %9389 = vmatprep.subr.bf16.mxu0 %v8240
        %9390 = vmatpush2.bf16.msra.mxu0 %v8239
        %9391 = vmatprep.subr.bf16.mxu0 %v8232
        %9392 = vmatpush2.bf16.msra.mxu0 %v8231
        %9393 = vmatprep.mubr.bf16.mxu0 %v6068
        %9394 = vmatmul.mubr.bf16.gmra.mxu0 %v6067
        %v9395 = vpop.f32.mrf.mxu0
        %v9396 = vadd.f32 %v6600, %v9395
        %v9397 = vpop.f32.mrf.mxu0
        %v9398 = vadd.f32 %v6604, %v9397
        %v9399 = vpop.f32.mrf.mxu0
        %v9400 = vadd.f32 %v6600, %v9399
        %v9401 = vpop.f32.mrf.mxu0
        %v9402 = vadd.f32 %v6604, %v9401
        %9403 = vdwg.mxu0
        %9404 = vmatprep.subr.bf16.mxu0 %v8352
        %9405 = vmatpush1.bf16.msra.mxu0 %v8351
        %9406 = vmatprep.subr.bf16.mxu0 %v8344
        %9407 = vmatpush1.bf16.msra.mxu0 %v8343
        %9408 = vmatprep.subr.bf16.mxu0 %v8336
        %9409 = vmatpush1.bf16.msra.mxu0 %v8335
        %9410 = vmatprep.subr.bf16.mxu0 %v8328
        %9411 = vmatpush1.bf16.msra.mxu0 %v8327
        %9412 = vmatprep.subr.bf16.mxu0 %v8320
        %9413 = vmatpush1.bf16.msra.mxu0 %v8319
        %9414 = vmatprep.subr.bf16.mxu0 %v8312
        %9415 = vmatpush1.bf16.msra.mxu0 %v8311
        %9416 = vmatprep.subr.bf16.mxu0 %v8304
        %9417 = vmatpush1.bf16.msra.mxu0 %v8303
        %9418 = vmatprep.subr.bf16.mxu0 %v8296
        %9419 = vmatpush1.bf16.msra.mxu0 %v8295
        %9420 = vmatprep.subr.bf16.mxu0 %v8416
        %9421 = vmatpush2.bf16.msra.mxu0 %v8415
        %9422 = vmatprep.subr.bf16.mxu0 %v8408
        %9423 = vmatpush2.bf16.msra.mxu0 %v8407
        %9424 = vmatprep.subr.bf16.mxu0 %v8400
        %9425 = vmatpush2.bf16.msra.mxu0 %v8399
        %9426 = vmatprep.subr.bf16.mxu0 %v8392
        %9427 = vmatpush2.bf16.msra.mxu0 %v8391
        %9428 = vmatprep.subr.bf16.mxu0 %v8384
        %9429 = vmatpush2.bf16.msra.mxu0 %v8383
        %9430 = vmatprep.subr.bf16.mxu0 %v8376
        %9431 = vmatpush2.bf16.msra.mxu0 %v8375
        %9432 = vmatprep.subr.bf16.mxu0 %v8368
        %9433 = vmatpush2.bf16.msra.mxu0 %v8367
        %9434 = vmatprep.subr.bf16.mxu0 %v8360
        %9435 = vmatpush2.bf16.msra.mxu0 %v8359
        %9436 = vmatprep.mubr.bf16.mxu0 %v6070
        %9437 = vmatmul.mubr.bf16.gmra.mxu0 %v6069
        %v9438 = vpop.f32.mrf.mxu0
        %v9439 = vadd.f32 %v9396, %v9438
        %v9440 = vpop.f32.mrf.mxu0
        %v9441 = vadd.f32 %v9398, %v9440
        %v9442 = vpop.f32.mrf.mxu0
        %v9443 = vadd.f32 %v9400, %v9442
        %v9444 = vpop.f32.mrf.mxu0
        %v9445 = vadd.f32 %v9402, %v9444
        %9446 = vdwg.mxu0
        %9447 = vmatprep.subr.bf16.mxu0 %v8480
        %9448 = vmatpush1.bf16.msra.mxu0 %v8479
        %9449 = vmatprep.subr.bf16.mxu0 %v8472
        %9450 = vmatpush1.bf16.msra.mxu0 %v8471
        %9451 = vmatprep.subr.bf16.mxu0 %v8464
        %9452 = vmatpush1.bf16.msra.mxu0 %v8463
        %9453 = vmatprep.subr.bf16.mxu0 %v8456
        %9454 = vmatpush1.bf16.msra.mxu0 %v8455
        %9455 = vmatprep.subr.bf16.mxu0 %v8448
        %9456 = vmatpush1.bf16.msra.mxu0 %v8447
        %9457 = vmatprep.subr.bf16.mxu0 %v8440
        %9458 = vmatpush1.bf16.msra.mxu0 %v8439
        %9459 = vmatprep.subr.bf16.mxu0 %v8432
        %9460 = vmatpush1.bf16.msra.mxu0 %v8431
        %9461 = vmatprep.subr.bf16.mxu0 %v8424
        %9462 = vmatpush1.bf16.msra.mxu0 %v8423
        %9463 = vmatprep.subr.bf16.mxu0 %v8544
        %9464 = vmatpush2.bf16.msra.mxu0 %v8543
        %9465 = vmatprep.subr.bf16.mxu0 %v8536
        %9466 = vmatpush2.bf16.msra.mxu0 %v8535
        %9467 = vmatprep.subr.bf16.mxu0 %v8528
        %9468 = vmatpush2.bf16.msra.mxu0 %v8527
        %9469 = vmatprep.subr.bf16.mxu0 %v8520
        %9470 = vmatpush2.bf16.msra.mxu0 %v8519
        %9471 = vmatprep.subr.bf16.mxu0 %v8512
        %9472 = vmatpush2.bf16.msra.mxu0 %v8511
        %9473 = vmatprep.subr.bf16.mxu0 %v8504
        %9474 = vmatpush2.bf16.msra.mxu0 %v8503
        %9475 = vmatprep.subr.bf16.mxu0 %v8496
        %9476 = vmatpush2.bf16.msra.mxu0 %v8495
        %9477 = vmatprep.subr.bf16.mxu0 %v8488
        %9478 = vmatpush2.bf16.msra.mxu0 %v8487
        %9479 = vmatprep.mubr.bf16.mxu0 %v6072
        %9480 = vmatmul.mubr.bf16.gmra.mxu0 %v6071
        %v9481 = vpop.f32.mrf.mxu0
        %v9482 = vadd.f32 %v9439, %v9481
        %v9483 = vpop.f32.mrf.mxu0
        %v9484 = vadd.f32 %v9441, %v9483
        %v9485 = vpop.f32.mrf.mxu0
        %v9486 = vadd.f32 %v9443, %v9485
        %v9487 = vpop.f32.mrf.mxu0
        %v9488 = vadd.f32 %v9445, %v9487
        %9489 = vdwg.mxu0
        %9490 = vmatprep.subr.bf16.mxu0 %v8608
        %9491 = vmatpush1.bf16.msra.mxu0 %v8607
        %9492 = vmatprep.subr.bf16.mxu0 %v8600
        %9493 = vmatpush1.bf16.msra.mxu0 %v8599
        %9494 = vmatprep.subr.bf16.mxu0 %v8592
        %9495 = vmatpush1.bf16.msra.mxu0 %v8591
        %9496 = vmatprep.subr.bf16.mxu0 %v8584
        %9497 = vmatpush1.bf16.msra.mxu0 %v8583
        %9498 = vmatprep.subr.bf16.mxu0 %v8576
        %9499 = vmatpush1.bf16.msra.mxu0 %v8575
        %9500 = vmatprep.subr.bf16.mxu0 %v8568
        %9501 = vmatpush1.bf16.msra.mxu0 %v8567
        %9502 = vmatprep.subr.bf16.mxu0 %v8560
        %9503 = vmatpush1.bf16.msra.mxu0 %v8559
        %9504 = vmatprep.subr.bf16.mxu0 %v8552
        %9505 = vmatpush1.bf16.msra.mxu0 %v8551
        %9506 = vmatprep.subr.bf16.mxu0 %v8672
        %9507 = vmatpush2.bf16.msra.mxu0 %v8671
        %9508 = vmatprep.subr.bf16.mxu0 %v8664
        %9509 = vmatpush2.bf16.msra.mxu0 %v8663
        %9510 = vmatprep.subr.bf16.mxu0 %v8656
        %9511 = vmatpush2.bf16.msra.mxu0 %v8655
        %9512 = vmatprep.subr.bf16.mxu0 %v8648
        %9513 = vmatpush2.bf16.msra.mxu0 %v8647
        %9514 = vmatprep.subr.bf16.mxu0 %v8640
        %9515 = vmatpush2.bf16.msra.mxu0 %v8639
        %9516 = vmatprep.subr.bf16.mxu0 %v8632
        %9517 = vmatpush2.bf16.msra.mxu0 %v8631
        %9518 = vmatprep.subr.bf16.mxu0 %v8624
        %9519 = vmatpush2.bf16.msra.mxu0 %v8623
        %9520 = vmatprep.subr.bf16.mxu0 %v8616
        %9521 = vmatpush2.bf16.msra.mxu0 %v8615
        %9522 = vmatprep.mubr.bf16.mxu0 %v6074
        %9523 = vmatmul.mubr.bf16.gmra.mxu0 %v6073
        %v9524 = vpop.f32.mrf.mxu0
        %v9525 = vadd.f32 %v9482, %v9524
        %v9526 = vpop.f32.mrf.mxu0
        %v9527 = vadd.f32 %v9484, %v9526
        %v9528 = vpop.f32.mrf.mxu0
        %v9529 = vadd.f32 %v9486, %v9528
        %v9530 = vpop.f32.mrf.mxu0
        %v9531 = vadd.f32 %v9488, %v9530
        %9532 = vdwg.mxu0
        %9533 = vmatprep.subr.bf16.mxu0 %v8226
        %9534 = vmatpush1.bf16.msra.mxu0 %v8225
        %9535 = vmatprep.subr.bf16.mxu0 %v8218
        %9536 = vmatpush1.bf16.msra.mxu0 %v8217
        %9537 = vmatprep.subr.bf16.mxu0 %v8210
        %9538 = vmatpush1.bf16.msra.mxu0 %v8209
        %9539 = vmatprep.subr.bf16.mxu0 %v8202
        %9540 = vmatpush1.bf16.msra.mxu0 %v8201
        %9541 = vmatprep.subr.bf16.mxu0 %v8194
        %9542 = vmatpush1.bf16.msra.mxu0 %v8193
        %9543 = vmatprep.subr.bf16.mxu0 %v8186
        %9544 = vmatpush1.bf16.msra.mxu0 %v8185
        %9545 = vmatprep.subr.bf16.mxu0 %v8178
        %9546 = vmatpush1.bf16.msra.mxu0 %v8177
        %9547 = vmatprep.subr.bf16.mxu0 %v8170
        %9548 = vmatpush1.bf16.msra.mxu0 %v8169
        %9549 = vmatprep.subr.bf16.mxu0 %v8290
        %9550 = vmatpush2.bf16.msra.mxu0 %v8289
        %9551 = vmatprep.subr.bf16.mxu0 %v8282
        %9552 = vmatpush2.bf16.msra.mxu0 %v8281
        %9553 = vmatprep.subr.bf16.mxu0 %v8274
        %9554 = vmatpush2.bf16.msra.mxu0 %v8273
        %9555 = vmatprep.subr.bf16.mxu0 %v8266
        %9556 = vmatpush2.bf16.msra.mxu0 %v8265
        %9557 = vmatprep.subr.bf16.mxu0 %v8258
        %9558 = vmatpush2.bf16.msra.mxu0 %v8257
        %9559 = vmatprep.subr.bf16.mxu0 %v8250
        %9560 = vmatpush2.bf16.msra.mxu0 %v8249
        %9561 = vmatprep.subr.bf16.mxu0 %v8242
        %9562 = vmatpush2.bf16.msra.mxu0 %v8241
        %9563 = vmatprep.subr.bf16.mxu0 %v8234
        %9564 = vmatpush2.bf16.msra.mxu0 %v8233
        %9565 = vmatprep.mubr.bf16.mxu0 %v6068
        %9566 = vmatmul.mubr.bf16.gmra.mxu0 %v6067
        %v9567 = vpop.f32.mrf.mxu0
        %v9568 = vadd.f32 %v6608, %v9567
        %v9569 = vpop.f32.mrf.mxu0
        %v9570 = vadd.f32 %v6612, %v9569
        %v9571 = vpop.f32.mrf.mxu0
        %v9572 = vadd.f32 %v6608, %v9571
        %v9573 = vpop.f32.mrf.mxu0
        %v9574 = vadd.f32 %v6612, %v9573
        %9575 = vdwg.mxu0
        %9576 = vmatprep.subr.bf16.mxu0 %v8354
        %9577 = vmatpush1.bf16.msra.mxu0 %v8353
        %9578 = vmatprep.subr.bf16.mxu0 %v8346
        %9579 = vmatpush1.bf16.msra.mxu0 %v8345
        %9580 = vmatprep.subr.bf16.mxu0 %v8338
        %9581 = vmatpush1.bf16.msra.mxu0 %v8337
        %9582 = vmatprep.subr.bf16.mxu0 %v8330
        %9583 = vmatpush1.bf16.msra.mxu0 %v8329
        %9584 = vmatprep.subr.bf16.mxu0 %v8322
        %9585 = vmatpush1.bf16.msra.mxu0 %v8321
        %9586 = vmatprep.subr.bf16.mxu0 %v8314
        %9587 = vmatpush1.bf16.msra.mxu0 %v8313
        %9588 = vmatprep.subr.bf16.mxu0 %v8306
        %9589 = vmatpush1.bf16.msra.mxu0 %v8305
        %9590 = vmatprep.subr.bf16.mxu0 %v8298
        %9591 = vmatpush1.bf16.msra.mxu0 %v8297
        %9592 = vmatprep.subr.bf16.mxu0 %v8418
        %9593 = vmatpush2.bf16.msra.mxu0 %v8417
        %9594 = vmatprep.subr.bf16.mxu0 %v8410
        %9595 = vmatpush2.bf16.msra.mxu0 %v8409
        %9596 = vmatprep.subr.bf16.mxu0 %v8402
        %9597 = vmatpush2.bf16.msra.mxu0 %v8401
        %9598 = vmatprep.subr.bf16.mxu0 %v8394
        %9599 = vmatpush2.bf16.msra.mxu0 %v8393
        %9600 = vmatprep.subr.bf16.mxu0 %v8386
        %9601 = vmatpush2.bf16.msra.mxu0 %v8385
        %9602 = vmatprep.subr.bf16.mxu0 %v8378
        %9603 = vmatpush2.bf16.msra.mxu0 %v8377
        %9604 = vmatprep.subr.bf16.mxu0 %v8370
        %9605 = vmatpush2.bf16.msra.mxu0 %v8369
        %9606 = vmatprep.subr.bf16.mxu0 %v8362
        %9607 = vmatpush2.bf16.msra.mxu0 %v8361
        %9608 = vmatprep.mubr.bf16.mxu0 %v6070
        %9609 = vmatmul.mubr.bf16.gmra.mxu0 %v6069
        %v9610 = vpop.f32.mrf.mxu0
        %v9611 = vadd.f32 %v9568, %v9610
        %v9612 = vpop.f32.mrf.mxu0
        %v9613 = vadd.f32 %v9570, %v9612
        %v9614 = vpop.f32.mrf.mxu0
        %v9615 = vadd.f32 %v9572, %v9614
        %v9616 = vpop.f32.mrf.mxu0
        %v9617 = vadd.f32 %v9574, %v9616
        %9618 = vdwg.mxu0
        %9619 = vmatprep.subr.bf16.mxu0 %v8482
        %9620 = vmatpush1.bf16.msra.mxu0 %v8481
        %9621 = vmatprep.subr.bf16.mxu0 %v8474
        %9622 = vmatpush1.bf16.msra.mxu0 %v8473
        %9623 = vmatprep.subr.bf16.mxu0 %v8466
        %9624 = vmatpush1.bf16.msra.mxu0 %v8465
        %9625 = vmatprep.subr.bf16.mxu0 %v8458
        %9626 = vmatpush1.bf16.msra.mxu0 %v8457
        %9627 = vmatprep.subr.bf16.mxu0 %v8450
        %9628 = vmatpush1.bf16.msra.mxu0 %v8449
        %9629 = vmatprep.subr.bf16.mxu0 %v8442
        %9630 = vmatpush1.bf16.msra.mxu0 %v8441
        %9631 = vmatprep.subr.bf16.mxu0 %v8434
        %9632 = vmatpush1.bf16.msra.mxu0 %v8433
        %9633 = vmatprep.subr.bf16.mxu0 %v8426
        %9634 = vmatpush1.bf16.msra.mxu0 %v8425
        %9635 = vmatprep.subr.bf16.mxu0 %v8546
        %9636 = vmatpush2.bf16.msra.mxu0 %v8545
        %9637 = vmatprep.subr.bf16.mxu0 %v8538
        %9638 = vmatpush2.bf16.msra.mxu0 %v8537
        %9639 = vmatprep.subr.bf16.mxu0 %v8530
        %9640 = vmatpush2.bf16.msra.mxu0 %v8529
        %9641 = vmatprep.subr.bf16.mxu0 %v8522
        %9642 = vmatpush2.bf16.msra.mxu0 %v8521
        %9643 = vmatprep.subr.bf16.mxu0 %v8514
        %9644 = vmatpush2.bf16.msra.mxu0 %v8513
        %9645 = vmatprep.subr.bf16.mxu0 %v8506
        %9646 = vmatpush2.bf16.msra.mxu0 %v8505
        %9647 = vmatprep.subr.bf16.mxu0 %v8498
        %9648 = vmatpush2.bf16.msra.mxu0 %v8497
        %9649 = vmatprep.subr.bf16.mxu0 %v8490
        %9650 = vmatpush2.bf16.msra.mxu0 %v8489
        %9651 = vmatprep.mubr.bf16.mxu0 %v6072
        %9652 = vmatmul.mubr.bf16.gmra.mxu0 %v6071
        %v9653 = vpop.f32.mrf.mxu0
        %v9654 = vadd.f32 %v9611, %v9653
        %v9655 = vpop.f32.mrf.mxu0
        %v9656 = vadd.f32 %v9613, %v9655
        %v9657 = vpop.f32.mrf.mxu0
        %v9658 = vadd.f32 %v9615, %v9657
        %v9659 = vpop.f32.mrf.mxu0
        %v9660 = vadd.f32 %v9617, %v9659
        %9661 = vdwg.mxu0
        %9662 = vmatprep.subr.bf16.mxu0 %v8610
        %9663 = vmatpush1.bf16.msra.mxu0 %v8609
        %9664 = vmatprep.subr.bf16.mxu0 %v8602
        %9665 = vmatpush1.bf16.msra.mxu0 %v8601
        %9666 = vmatprep.subr.bf16.mxu0 %v8594
        %9667 = vmatpush1.bf16.msra.mxu0 %v8593
        %9668 = vmatprep.subr.bf16.mxu0 %v8586
        %9669 = vmatpush1.bf16.msra.mxu0 %v8585
        %9670 = vmatprep.subr.bf16.mxu0 %v8578
        %9671 = vmatpush1.bf16.msra.mxu0 %v8577
        %9672 = vmatprep.subr.bf16.mxu0 %v8570
        %9673 = vmatpush1.bf16.msra.mxu0 %v8569
        %9674 = vmatprep.subr.bf16.mxu0 %v8562
        %9675 = vmatpush1.bf16.msra.mxu0 %v8561
        %9676 = vmatprep.subr.bf16.mxu0 %v8554
        %9677 = vmatpush1.bf16.msra.mxu0 %v8553
        %9678 = vmatprep.subr.bf16.mxu0 %v8674
        %9679 = vmatpush2.bf16.msra.mxu0 %v8673
        %9680 = vmatprep.subr.bf16.mxu0 %v8666
        %9681 = vmatpush2.bf16.msra.mxu0 %v8665
        %9682 = vmatprep.subr.bf16.mxu0 %v8658
        %9683 = vmatpush2.bf16.msra.mxu0 %v8657
        %9684 = vmatprep.subr.bf16.mxu0 %v8650
        %9685 = vmatpush2.bf16.msra.mxu0 %v8649
        %9686 = vmatprep.subr.bf16.mxu0 %v8642
        %9687 = vmatpush2.bf16.msra.mxu0 %v8641
        %9688 = vmatprep.subr.bf16.mxu0 %v8634
        %9689 = vmatpush2.bf16.msra.mxu0 %v8633
        %9690 = vmatprep.subr.bf16.mxu0 %v8626
        %9691 = vmatpush2.bf16.msra.mxu0 %v8625
        %9692 = vmatprep.subr.bf16.mxu0 %v8618
        %9693 = vmatpush2.bf16.msra.mxu0 %v8617
        %9694 = vmatprep.mubr.bf16.mxu0 %v6074
        %9695 = vmatmul.mubr.bf16.gmra.mxu0 %v6073
        %v9696 = vpop.f32.mrf.mxu0
        %v9697 = vadd.f32 %v9654, %v9696
        %v9698 = vpop.f32.mrf.mxu0
        %v9699 = vadd.f32 %v9656, %v9698
        %v9700 = vpop.f32.mrf.mxu0
        %v9701 = vadd.f32 %v9658, %v9700
        %v9702 = vpop.f32.mrf.mxu0
        %v9703 = vadd.f32 %v9660, %v9702
        %9704 = vdwg.mxu0
        %9705 = vmatprep.subr.bf16.mxu0 %v8228
        %9706 = vmatpush1.bf16.msra.mxu0 %v8227
        %9707 = vmatprep.subr.bf16.mxu0 %v8220
        %9708 = vmatpush1.bf16.msra.mxu0 %v8219
        %9709 = vmatprep.subr.bf16.mxu0 %v8212
        %9710 = vmatpush1.bf16.msra.mxu0 %v8211
        %9711 = vmatprep.subr.bf16.mxu0 %v8204
        %9712 = vmatpush1.bf16.msra.mxu0 %v8203
        %9713 = vmatprep.subr.bf16.mxu0 %v8196
        %9714 = vmatpush1.bf16.msra.mxu0 %v8195
        %9715 = vmatprep.subr.bf16.mxu0 %v8188
        %9716 = vmatpush1.bf16.msra.mxu0 %v8187
        %9717 = vmatprep.subr.bf16.mxu0 %v8180
        %9718 = vmatpush1.bf16.msra.mxu0 %v8179
        %9719 = vmatprep.subr.bf16.mxu0 %v8172
        %9720 = vmatpush1.bf16.msra.mxu0 %v8171
        %9721 = vmatprep.subr.bf16.mxu0 %v8292
        %9722 = vmatpush2.bf16.msra.mxu0 %v8291
        %9723 = vmatprep.subr.bf16.mxu0 %v8284
        %9724 = vmatpush2.bf16.msra.mxu0 %v8283
        %9725 = vmatprep.subr.bf16.mxu0 %v8276
        %9726 = vmatpush2.bf16.msra.mxu0 %v8275
        %9727 = vmatprep.subr.bf16.mxu0 %v8268
        %9728 = vmatpush2.bf16.msra.mxu0 %v8267
        %9729 = vmatprep.subr.bf16.mxu0 %v8260
        %9730 = vmatpush2.bf16.msra.mxu0 %v8259
        %9731 = vmatprep.subr.bf16.mxu0 %v8252
        %9732 = vmatpush2.bf16.msra.mxu0 %v8251
        %9733 = vmatprep.subr.bf16.mxu0 %v8244
        %9734 = vmatpush2.bf16.msra.mxu0 %v8243
        %9735 = vmatprep.subr.bf16.mxu0 %v8236
        %9736 = vmatpush2.bf16.msra.mxu0 %v8235
        %9737 = vmatprep.mubr.bf16.mxu0 %v6068
        %9738 = vmatmul.mubr.bf16.gmra.mxu0 %v6067
        %v9739 = vpop.f32.mrf.mxu0
        %v9740 = vadd.f32 %v6616, %v9739
        %v9741 = vpop.f32.mrf.mxu0
        %v9742 = vadd.f32 %v6620, %v9741
        %v9743 = vpop.f32.mrf.mxu0
        %v9744 = vadd.f32 %v6616, %v9743
        %v9745 = vpop.f32.mrf.mxu0
        %v9746 = vadd.f32 %v6620, %v9745
        %9747 = vdwg.mxu0
        %9748 = vmatprep.subr.bf16.mxu0 %v8356
        %9749 = vmatpush1.bf16.msra.mxu0 %v8355
        %9750 = vmatprep.subr.bf16.mxu0 %v8348
        %9751 = vmatpush1.bf16.msra.mxu0 %v8347
        %9752 = vmatprep.subr.bf16.mxu0 %v8340
        %9753 = vmatpush1.bf16.msra.mxu0 %v8339
        %9754 = vmatprep.subr.bf16.mxu0 %v8332
        %9755 = vmatpush1.bf16.msra.mxu0 %v8331
        %9756 = vmatprep.subr.bf16.mxu0 %v8324
        %9757 = vmatpush1.bf16.msra.mxu0 %v8323
        %9758 = vmatprep.subr.bf16.mxu0 %v8316
        %9759 = vmatpush1.bf16.msra.mxu0 %v8315
        %9760 = vmatprep.subr.bf16.mxu0 %v8308
        %9761 = vmatpush1.bf16.msra.mxu0 %v8307
        %9762 = vmatprep.subr.bf16.mxu0 %v8300
        %9763 = vmatpush1.bf16.msra.mxu0 %v8299
        %9764 = vmatprep.subr.bf16.mxu0 %v8420
        %9765 = vmatpush2.bf16.msra.mxu0 %v8419
        %9766 = vmatprep.subr.bf16.mxu0 %v8412
        %9767 = vmatpush2.bf16.msra.mxu0 %v8411
        %9768 = vmatprep.subr.bf16.mxu0 %v8404
        %9769 = vmatpush2.bf16.msra.mxu0 %v8403
        %9770 = vmatprep.subr.bf16.mxu0 %v8396
        %9771 = vmatpush2.bf16.msra.mxu0 %v8395
        %9772 = vmatprep.subr.bf16.mxu0 %v8388
        %9773 = vmatpush2.bf16.msra.mxu0 %v8387
        %9774 = vmatprep.subr.bf16.mxu0 %v8380
        %9775 = vmatpush2.bf16.msra.mxu0 %v8379
        %9776 = vmatprep.subr.bf16.mxu0 %v8372
        %9777 = vmatpush2.bf16.msra.mxu0 %v8371
        %9778 = vmatprep.subr.bf16.mxu0 %v8364
        %9779 = vmatpush2.bf16.msra.mxu0 %v8363
        %9780 = vmatprep.mubr.bf16.mxu0 %v6070
        %9781 = vmatmul.mubr.bf16.gmra.mxu0 %v6069
        %v9782 = vpop.f32.mrf.mxu0
        %v9783 = vadd.f32 %v9740, %v9782
        %v9784 = vpop.f32.mrf.mxu0
        %v9785 = vadd.f32 %v9742, %v9784
        %v9786 = vpop.f32.mrf.mxu0
        %v9787 = vadd.f32 %v9744, %v9786
        %v9788 = vpop.f32.mrf.mxu0
        %v9789 = vadd.f32 %v9746, %v9788
        %9790 = vdwg.mxu0
        %9791 = vmatprep.subr.bf16.mxu0 %v8484
        %9792 = vmatpush1.bf16.msra.mxu0 %v8483
        %9793 = vmatprep.subr.bf16.mxu0 %v8476
        %9794 = vmatpush1.bf16.msra.mxu0 %v8475
        %9795 = vmatprep.subr.bf16.mxu0 %v8468
        %9796 = vmatpush1.bf16.msra.mxu0 %v8467
        %9797 = vmatprep.subr.bf16.mxu0 %v8460
        %9798 = vmatpush1.bf16.msra.mxu0 %v8459
        %9799 = vmatprep.subr.bf16.mxu0 %v8452
        %9800 = vmatpush1.bf16.msra.mxu0 %v8451
        %9801 = vmatprep.subr.bf16.mxu0 %v8444
        %9802 = vmatpush1.bf16.msra.mxu0 %v8443
        %9803 = vmatprep.subr.bf16.mxu0 %v8436
        %9804 = vmatpush1.bf16.msra.mxu0 %v8435
        %9805 = vmatprep.subr.bf16.mxu0 %v8428
        %9806 = vmatpush1.bf16.msra.mxu0 %v8427
        %9807 = vmatprep.subr.bf16.mxu0 %v8548
        %9808 = vmatpush2.bf16.msra.mxu0 %v8547
        %9809 = vmatprep.subr.bf16.mxu0 %v8540
        %9810 = vmatpush2.bf16.msra.mxu0 %v8539
        %9811 = vmatprep.subr.bf16.mxu0 %v8532
        %9812 = vmatpush2.bf16.msra.mxu0 %v8531
        %9813 = vmatprep.subr.bf16.mxu0 %v8524
        %9814 = vmatpush2.bf16.msra.mxu0 %v8523
        %9815 = vmatprep.subr.bf16.mxu0 %v8516
        %9816 = vmatpush2.bf16.msra.mxu0 %v8515
        %9817 = vmatprep.subr.bf16.mxu0 %v8508
        %9818 = vmatpush2.bf16.msra.mxu0 %v8507
        %9819 = vmatprep.subr.bf16.mxu0 %v8500
        %9820 = vmatpush2.bf16.msra.mxu0 %v8499
        %9821 = vmatprep.subr.bf16.mxu0 %v8492
        %9822 = vmatpush2.bf16.msra.mxu0 %v8491
        %9823 = vmatprep.mubr.bf16.mxu0 %v6072
        %9824 = vmatmul.mubr.bf16.gmra.mxu0 %v6071
        %v9825 = vpop.f32.mrf.mxu0
        %v9826 = vadd.f32 %v9783, %v9825
        %v9827 = vpop.f32.mrf.mxu0
        %v9828 = vadd.f32 %v9785, %v9827
        %v9829 = vpop.f32.mrf.mxu0
        %v9830 = vadd.f32 %v9787, %v9829
        %v9831 = vpop.f32.mrf.mxu0
        %v9832 = vadd.f32 %v9789, %v9831
        %9833 = vdwg.mxu0
        %9834 = vmatprep.subr.bf16.mxu0 %v8612
        %9835 = vmatpush1.bf16.msra.mxu0 %v8611
        %9836 = vmatprep.subr.bf16.mxu0 %v8604
        %9837 = vmatpush1.bf16.msra.mxu0 %v8603
        %9838 = vmatprep.subr.bf16.mxu0 %v8596
        %9839 = vmatpush1.bf16.msra.mxu0 %v8595
        %9840 = vmatprep.subr.bf16.mxu0 %v8588
        %9841 = vmatpush1.bf16.msra.mxu0 %v8587
        %9842 = vmatprep.subr.bf16.mxu0 %v8580
        %9843 = vmatpush1.bf16.msra.mxu0 %v8579
        %9844 = vmatprep.subr.bf16.mxu0 %v8572
        %9845 = vmatpush1.bf16.msra.mxu0 %v8571
        %9846 = vmatprep.subr.bf16.mxu0 %v8564
        %9847 = vmatpush1.bf16.msra.mxu0 %v8563
        %9848 = vmatprep.subr.bf16.mxu0 %v8556
        %9849 = vmatpush1.bf16.msra.mxu0 %v8555
        %9850 = vmatprep.subr.bf16.mxu0 %v8676
        %9851 = vmatpush2.bf16.msra.mxu0 %v8675
        %9852 = vmatprep.subr.bf16.mxu0 %v8668
        %9853 = vmatpush2.bf16.msra.mxu0 %v8667
        %9854 = vmatprep.subr.bf16.mxu0 %v8660
        %9855 = vmatpush2.bf16.msra.mxu0 %v8659
        %9856 = vmatprep.subr.bf16.mxu0 %v8652
        %9857 = vmatpush2.bf16.msra.mxu0 %v8651
        %9858 = vmatprep.subr.bf16.mxu0 %v8644
        %9859 = vmatpush2.bf16.msra.mxu0 %v8643
        %9860 = vmatprep.subr.bf16.mxu0 %v8636
        %9861 = vmatpush2.bf16.msra.mxu0 %v8635
        %9862 = vmatprep.subr.bf16.mxu0 %v8628
        %9863 = vmatpush2.bf16.msra.mxu0 %v8627
        %9864 = vmatprep.subr.bf16.mxu0 %v8620
        %9865 = vmatpush2.bf16.msra.mxu0 %v8619
        %9866 = vmatprep.mubr.bf16.mxu0 %v6074
        %9867 = vmatmul.mubr.bf16.gmra.mxu0 %v6073
        %v9868 = vpop.f32.mrf.mxu0
        %v9869 = vadd.f32 %v9826, %v9868
        %v9870 = vpop.f32.mrf.mxu0
        %v9871 = vadd.f32 %v9828, %v9870
        %v9872 = vpop.f32.mrf.mxu0
        %v9873 = vadd.f32 %v9830, %v9872
        %v9874 = vpop.f32.mrf.mxu0
        %v9875 = vadd.f32 %v9832, %v9874
        %9876 = vdwg.mxu0
        %v9877 = vtanh.pop %v9353
        %v9878 = vtanh.pop %v9355
        %v9879 = vtanh.pop %v9525
        %v9880 = vtanh.pop %v9527
        %v9881 = vtanh.pop %v9697
        %v9882 = vtanh.pop %v9699
        %v9883 = vtanh.pop %v9869
        %v9884 = vtanh.pop %v9871
        %v9885 = vtanh.pop %v9357
        %v9886 = vtanh.pop %v9359
        %v9887 = vtanh.pop %v9529
        %v9888 = vtanh.pop %v9531
        %v9889 = vtanh.pop %v9701
        %v9890 = vtanh.pop %v9703
        %v9891 = vtanh.pop %v9873
        %v9892 = vtanh.pop %v9875
        %v9893 = vpack.c.bf16 %v9885, %v9877
        %v9894 = vpack.c.bf16 %v9886, %v9878
        %v9895 = vpack.c.bf16 %v9887, %v9879
        %v9896 = vpack.c.bf16 %v9888, %v9880
        %v9897 = vpack.c.bf16 %v9889, %v9881
        %v9898 = vpack.c.bf16 %v9890, %v9882
        %v9899 = vpack.c.bf16 %v9891, %v9883
        %v9900 = vpack.c.bf16 %v9892, %v9884
        %v9901 = vld [vmem:[#allocation20] sm:$0xf]
        %v9902 = vld [vmem:[#allocation20 + $0x4] sm:$0xf]
        %v9903 = vld [vmem:[#allocation20 + $0x8] sm:$0xf]
        %v9904 = vld [vmem:[#allocation20 + $0xc] sm:$0xf]
        %v9905 = vld [vmem:[#allocation20 + $0x10] sm:$0xf]
        %v9906 = vld [vmem:[#allocation20 + $0x14] sm:$0xf]
        %v9907 = vld [vmem:[#allocation20 + $0x18] sm:$0xf]
        %v9908 = vld [vmem:[#allocation20 + $0x1c] sm:$0xf]
        %v9909 = vld [vmem:[#allocation20 + $0x20] sm:$0xf]
        %v9910 = vld [vmem:[#allocation20 + $0x24] sm:$0xf]
        %v9911 = vld [vmem:[#allocation20 + $0x28] sm:$0xf]
        %v9912 = vld [vmem:[#allocation20 + $0x2c] sm:$0xf]
        %v9913 = vld [vmem:[#allocation20 + $0x30] sm:$0xf]
        %v9914 = vld [vmem:[#allocation20 + $0x34] sm:$0xf]
        %v9915 = vld [vmem:[#allocation20 + $0x38] sm:$0xf]
        %v9916 = vld [vmem:[#allocation20 + $0x3c] sm:$0xf]
        %v9917 = vld [vmem:[#allocation20 + $0x40] sm:$0xf]
        %v9918 = vld [vmem:[#allocation20 + $0x44] sm:$0xf]
        %v9919 = vld [vmem:[#allocation20 + $0x48] sm:$0xf]
        %v9920 = vld [vmem:[#allocation20 + $0x4c] sm:$0xf]
        %v9921 = vld [vmem:[#allocation20 + $0x50] sm:$0xf]
        %v9922 = vld [vmem:[#allocation20 + $0x54] sm:$0xf]
        %v9923 = vld [vmem:[#allocation20 + $0x58] sm:$0xf]
        %v9924 = vld [vmem:[#allocation20 + $0x5c] sm:$0xf]
        %v9925 = vld [vmem:[#allocation20 + $0x60] sm:$0xf]
        %v9926 = vld [vmem:[#allocation20 + $0x64] sm:$0xf]
        %v9927 = vld [vmem:[#allocation20 + $0x68] sm:$0xf]
        %v9928 = vld [vmem:[#allocation20 + $0x6c] sm:$0xf]
        %v9929 = vld [vmem:[#allocation20 + $0x70] sm:$0xf]
        %v9930 = vld [vmem:[#allocation20 + $0x74] sm:$0xf]
        %v9931 = vld [vmem:[#allocation20 + $0x78] sm:$0xf]
        %v9932 = vld [vmem:[#allocation20 + $0x7c] sm:$0xf]
        %v9933 = vld [vmem:[#allocation20 + $0x80] sm:$0xf]
        %v9934 = vld [vmem:[#allocation20 + $0x84] sm:$0xf]
        %v9935 = vld [vmem:[#allocation20 + $0x88] sm:$0xf]
        %v9936 = vld [vmem:[#allocation20 + $0x8c] sm:$0xf]
        %v9937 = vld [vmem:[#allocation20 + $0x90] sm:$0xf]
        %v9938 = vld [vmem:[#allocation20 + $0x94] sm:$0xf]
        %v9939 = vld [vmem:[#allocation20 + $0x98] sm:$0xf]
        %v9940 = vld [vmem:[#allocation20 + $0x9c] sm:$0xf]
        %v9941 = vld [vmem:[#allocation20 + $0xa0] sm:$0xf]
        %v9942 = vld [vmem:[#allocation20 + $0xa4] sm:$0xf]
        %v9943 = vld [vmem:[#allocation20 + $0xa8] sm:$0xf]
        %v9944 = vld [vmem:[#allocation20 + $0xac] sm:$0xf]
        %v9945 = vld [vmem:[#allocation20 + $0xb0] sm:$0xf]
        %v9946 = vld [vmem:[#allocation20 + $0xb4] sm:$0xf]
        %v9947 = vld [vmem:[#allocation20 + $0xb8] sm:$0xf]
        %v9948 = vld [vmem:[#allocation20 + $0xbc] sm:$0xf]
        %v9949 = vld [vmem:[#allocation20 + $0xc0] sm:$0xf]
        %v9950 = vld [vmem:[#allocation20 + $0xc4] sm:$0xf]
        %v9951 = vld [vmem:[#allocation20 + $0xc8] sm:$0xf]
        %v9952 = vld [vmem:[#allocation20 + $0xcc] sm:$0xf]
        %v9953 = vld [vmem:[#allocation20 + $0xd0] sm:$0xf]
        %v9954 = vld [vmem:[#allocation20 + $0xd4] sm:$0xf]
        %v9955 = vld [vmem:[#allocation20 + $0xd8] sm:$0xf]
        %v9956 = vld [vmem:[#allocation20 + $0xdc] sm:$0xf]
        %v9957 = vld [vmem:[#allocation20 + $0xe0] sm:$0xf]
        %v9958 = vld [vmem:[#allocation20 + $0xe4] sm:$0xf]
        %v9959 = vld [vmem:[#allocation20 + $0xe8] sm:$0xf]
        %v9960 = vld [vmem:[#allocation20 + $0xec] sm:$0xf]
        %v9961 = vld [vmem:[#allocation20 + $0xf0] sm:$0xf]
        %v9962 = vld [vmem:[#allocation20 + $0xf4] sm:$0xf]
        %v9963 = vld [vmem:[#allocation20 + $0xf8] sm:$0xf]
        %v9964 = vld [vmem:[#allocation20 + $0xfc] sm:$0xf]
        %v9965 = vld [vmem:[#allocation20 + $0x100] sm:$0xf]
        %v9966 = vld [vmem:[#allocation20 + $0x104] sm:$0xf]
        %v9967 = vld [vmem:[#allocation20 + $0x108] sm:$0xf]
        %v9968 = vld [vmem:[#allocation20 + $0x10c] sm:$0xf]
        %v9969 = vld [vmem:[#allocation20 + $0x110] sm:$0xf]
        %v9970 = vld [vmem:[#allocation20 + $0x114] sm:$0xf]
        %v9971 = vld [vmem:[#allocation20 + $0x118] sm:$0xf]
        %v9972 = vld [vmem:[#allocation20 + $0x11c] sm:$0xf]
        %v9973 = vld [vmem:[#allocation20 + $0x120] sm:$0xf]
        %v9974 = vld [vmem:[#allocation20 + $0x124] sm:$0xf]
        %v9975 = vld [vmem:[#allocation20 + $0x128] sm:$0xf]
        %v9976 = vld [vmem:[#allocation20 + $0x12c] sm:$0xf]
        %v9977 = vld [vmem:[#allocation20 + $0x130] sm:$0xf]
        %v9978 = vld [vmem:[#allocation20 + $0x134] sm:$0xf]
        %v9979 = vld [vmem:[#allocation20 + $0x138] sm:$0xf]
        %v9980 = vld [vmem:[#allocation20 + $0x13c] sm:$0xf]
        %v9981 = vld [vmem:[#allocation20 + $0x140] sm:$0xf]
        %v9982 = vld [vmem:[#allocation20 + $0x144] sm:$0xf]
        %v9983 = vld [vmem:[#allocation20 + $0x148] sm:$0xf]
        %v9984 = vld [vmem:[#allocation20 + $0x14c] sm:$0xf]
        %v9985 = vld [vmem:[#allocation20 + $0x150] sm:$0xf]
        %v9986 = vld [vmem:[#allocation20 + $0x154] sm:$0xf]
        %v9987 = vld [vmem:[#allocation20 + $0x158] sm:$0xf]
        %v9988 = vld [vmem:[#allocation20 + $0x15c] sm:$0xf]
        %v9989 = vld [vmem:[#allocation20 + $0x160] sm:$0xf]
        %v9990 = vld [vmem:[#allocation20 + $0x164] sm:$0xf]
        %v9991 = vld [vmem:[#allocation20 + $0x168] sm:$0xf]
        %v9992 = vld [vmem:[#allocation20 + $0x16c] sm:$0xf]
        %v9993 = vld [vmem:[#allocation20 + $0x170] sm:$0xf]
        %v9994 = vld [vmem:[#allocation20 + $0x174] sm:$0xf]
        %v9995 = vld [vmem:[#allocation20 + $0x178] sm:$0xf]
        %v9996 = vld [vmem:[#allocation20 + $0x17c] sm:$0xf]
        %v9997 = vld [vmem:[#allocation20 + $0x180] sm:$0xf]
        %v9998 = vld [vmem:[#allocation20 + $0x184] sm:$0xf]
        %v9999 = vld [vmem:[#allocation20 + $0x188] sm:$0xf]
        %v10000 = vld [vmem:[#allocation20 + $0x18c] sm:$0xf]
        %v10001 = vld [vmem:[#allocation20 + $0x190] sm:$0xf]
        %v10002 = vld [vmem:[#allocation20 + $0x194] sm:$0xf]
        %v10003 = vld [vmem:[#allocation20 + $0x198] sm:$0xf]
        %v10004 = vld [vmem:[#allocation20 + $0x19c] sm:$0xf]
        %v10005 = vld [vmem:[#allocation20 + $0x1a0] sm:$0xf]
        %v10006 = vld [vmem:[#allocation20 + $0x1a4] sm:$0xf]
        %v10007 = vld [vmem:[#allocation20 + $0x1a8] sm:$0xf]
        %v10008 = vld [vmem:[#allocation20 + $0x1ac] sm:$0xf]
        %v10009 = vld [vmem:[#allocation20 + $0x1b0] sm:$0xf]
        %v10010 = vld [vmem:[#allocation20 + $0x1b4] sm:$0xf]
        %v10011 = vld [vmem:[#allocation20 + $0x1b8] sm:$0xf]
        %v10012 = vld [vmem:[#allocation20 + $0x1bc] sm:$0xf]
        %v10013 = vld [vmem:[#allocation20 + $0x1c0] sm:$0xf]
        %v10014 = vld [vmem:[#allocation20 + $0x1c4] sm:$0xf]
        %v10015 = vld [vmem:[#allocation20 + $0x1c8] sm:$0xf]
        %v10016 = vld [vmem:[#allocation20 + $0x1cc] sm:$0xf]
        %v10017 = vld [vmem:[#allocation20 + $0x1d0] sm:$0xf]
        %v10018 = vld [vmem:[#allocation20 + $0x1d4] sm:$0xf]
        %v10019 = vld [vmem:[#allocation20 + $0x1d8] sm:$0xf]
        %v10020 = vld [vmem:[#allocation20 + $0x1dc] sm:$0xf]
        %v10021 = vld [vmem:[#allocation20 + $0x1e0] sm:$0xf]
        %v10022 = vld [vmem:[#allocation20 + $0x1e4] sm:$0xf]
        %v10023 = vld [vmem:[#allocation20 + $0x1e8] sm:$0xf]
        %v10024 = vld [vmem:[#allocation20 + $0x1ec] sm:$0xf]
        %v10025 = vld [vmem:[#allocation20 + $0x1f0] sm:$0xf]
        %v10026 = vld [vmem:[#allocation20 + $0x1f4] sm:$0xf]
        %v10027 = vld [vmem:[#allocation20 + $0x1f8] sm:$0xf]
        %v10028 = vld [vmem:[#allocation20 + $0x1fc] sm:$0xf]
        %v10029 = vld [vmem:[#allocation22] sm:$0x1]
        %v10031 = vlaneseq
        %v10032 = vshrl.u32 %v10031, 7
        %v10033 = vsub.s32 0, %v10032
        %v10034 = vrot.slane %v10029, %v10033
        %v10164 = vunpack.c.l.b16 %v9901
        %v10165 = vunpack.c.l.b16 %v9902
        %v10166 = vunpack.c.l.b16 %v9903
        %v10167 = vunpack.c.l.b16 %v9904
        %v10168 = vunpack.c.l.b16 %v9905
        %v10169 = vunpack.c.l.b16 %v9906
        %v10170 = vunpack.c.l.b16 %v9907
        %v10171 = vunpack.c.l.b16 %v9908
        %v10172 = vunpack.c.l.b16 %v9909
        %v10173 = vunpack.c.l.b16 %v9910
        %v10174 = vunpack.c.l.b16 %v9911
        %v10175 = vunpack.c.l.b16 %v9912
        %v10176 = vunpack.c.l.b16 %v9913
        %v10177 = vunpack.c.l.b16 %v9914
        %v10178 = vunpack.c.l.b16 %v9915
        %v10179 = vunpack.c.l.b16 %v9916
        %v10180 = vunpack.c.l.b16 %v9917
        %v10181 = vunpack.c.l.b16 %v9918
        %v10182 = vunpack.c.l.b16 %v9919
        %v10183 = vunpack.c.l.b16 %v9920
        %v10184 = vunpack.c.l.b16 %v9921
        %v10185 = vunpack.c.l.b16 %v9922
        %v10186 = vunpack.c.l.b16 %v9923
        %v10187 = vunpack.c.l.b16 %v9924
        %v10188 = vunpack.c.l.b16 %v9925
        %v10189 = vunpack.c.l.b16 %v9926
        %v10190 = vunpack.c.l.b16 %v9927
        %v10191 = vunpack.c.l.b16 %v9928
        %v10192 = vunpack.c.l.b16 %v9929
        %v10193 = vunpack.c.l.b16 %v9930
        %v10194 = vunpack.c.l.b16 %v9931
        %v10195 = vunpack.c.l.b16 %v9932
        %v10196 = vunpack.c.l.b16 %v9933
        %v10197 = vunpack.c.l.b16 %v9934
        %v10198 = vunpack.c.l.b16 %v9935
        %v10199 = vunpack.c.l.b16 %v9936
        %v10200 = vunpack.c.l.b16 %v9937
        %v10201 = vunpack.c.l.b16 %v9938
        %v10202 = vunpack.c.l.b16 %v9939
        %v10203 = vunpack.c.l.b16 %v9940
        %v10204 = vunpack.c.l.b16 %v9941
        %v10205 = vunpack.c.l.b16 %v9942
        %v10206 = vunpack.c.l.b16 %v9943
        %v10207 = vunpack.c.l.b16 %v9944
        %v10208 = vunpack.c.l.b16 %v9945
        %v10209 = vunpack.c.l.b16 %v9946
        %v10210 = vunpack.c.l.b16 %v9947
        %v10211 = vunpack.c.l.b16 %v9948
        %v10212 = vunpack.c.l.b16 %v9949
        %v10213 = vunpack.c.l.b16 %v9950
        %v10214 = vunpack.c.l.b16 %v9951
        %v10215 = vunpack.c.l.b16 %v9952
        %v10216 = vunpack.c.l.b16 %v9953
        %v10217 = vunpack.c.l.b16 %v9954
        %v10218 = vunpack.c.l.b16 %v9955
        %v10219 = vunpack.c.l.b16 %v9956
        %v10220 = vunpack.c.l.b16 %v9957
        %v10221 = vunpack.c.l.b16 %v9958
        %v10222 = vunpack.c.l.b16 %v9959
        %v10223 = vunpack.c.l.b16 %v9960
        %v10224 = vunpack.c.l.b16 %v9961
        %v10225 = vunpack.c.l.b16 %v9962
        %v10226 = vunpack.c.l.b16 %v9963
        %v10227 = vunpack.c.l.b16 %v9964
        %v10228 = vunpack.c.l.b16 %v9965
        %v10229 = vunpack.c.l.b16 %v9966
        %v10230 = vunpack.c.l.b16 %v9967
        %v10231 = vunpack.c.l.b16 %v9968
        %v10232 = vunpack.c.l.b16 %v9969
        %v10233 = vunpack.c.l.b16 %v9970
        %v10234 = vunpack.c.l.b16 %v9971
        %v10235 = vunpack.c.l.b16 %v9972
        %v10236 = vunpack.c.l.b16 %v9973
        %v10237 = vunpack.c.l.b16 %v9974
        %v10238 = vunpack.c.l.b16 %v9975
        %v10239 = vunpack.c.l.b16 %v9976
        %v10240 = vunpack.c.l.b16 %v9977
        %v10241 = vunpack.c.l.b16 %v9978
        %v10242 = vunpack.c.l.b16 %v9979
        %v10243 = vunpack.c.l.b16 %v9980
        %v10244 = vunpack.c.l.b16 %v9981
        %v10245 = vunpack.c.l.b16 %v9982
        %v10246 = vunpack.c.l.b16 %v9983
        %v10247 = vunpack.c.l.b16 %v9984
        %v10248 = vunpack.c.l.b16 %v9985
        %v10249 = vunpack.c.l.b16 %v9986
        %v10250 = vunpack.c.l.b16 %v9987
        %v10251 = vunpack.c.l.b16 %v9988
        %v10252 = vunpack.c.l.b16 %v9989
        %v10253 = vunpack.c.l.b16 %v9990
        %v10254 = vunpack.c.l.b16 %v9991
        %v10255 = vunpack.c.l.b16 %v9992
        %v10256 = vunpack.c.l.b16 %v9993
        %v10257 = vunpack.c.l.b16 %v9994
        %v10258 = vunpack.c.l.b16 %v9995
        %v10259 = vunpack.c.l.b16 %v9996
        %v10260 = vunpack.c.l.b16 %v9997
        %v10261 = vunpack.c.l.b16 %v9998
        %v10262 = vunpack.c.l.b16 %v9999
        %v10263 = vunpack.c.l.b16 %v10000
        %v10264 = vunpack.c.l.b16 %v10001
        %v10265 = vunpack.c.l.b16 %v10002
        %v10266 = vunpack.c.l.b16 %v10003
        %v10267 = vunpack.c.l.b16 %v10004
        %v10268 = vunpack.c.l.b16 %v10005
        %v10269 = vunpack.c.l.b16 %v10006
        %v10270 = vunpack.c.l.b16 %v10007
        %v10271 = vunpack.c.l.b16 %v10008
        %v10272 = vunpack.c.l.b16 %v10009
        %v10273 = vunpack.c.l.b16 %v10010
        %v10274 = vunpack.c.l.b16 %v10011
        %v10275 = vunpack.c.l.b16 %v10012
        %v10276 = vunpack.c.l.b16 %v10013
        %v10277 = vunpack.c.l.b16 %v10014
        %v10278 = vunpack.c.l.b16 %v10015
        %v10279 = vunpack.c.l.b16 %v10016
        %v10280 = vunpack.c.l.b16 %v10017
        %v10281 = vunpack.c.l.b16 %v10018
        %v10282 = vunpack.c.l.b16 %v10019
        %v10283 = vunpack.c.l.b16 %v10020
        %v10284 = vunpack.c.l.b16 %v10021
        %v10285 = vunpack.c.l.b16 %v10022
        %v10286 = vunpack.c.l.b16 %v10023
        %v10287 = vunpack.c.l.b16 %v10024
        %v10288 = vunpack.c.l.b16 %v10025
        %v10289 = vunpack.c.l.b16 %v10026
        %v10290 = vunpack.c.l.b16 %v10027
        %v10291 = vunpack.c.l.b16 %v10028
        %v10292 = vpack.c.b16 %v10165, %v10164
        %v10293 = vpack.c.b16 %v10167, %v10166
        %v10294 = vpack.c.b16 %v10169, %v10168
        %v10295 = vpack.c.b16 %v10171, %v10170
        %v10296 = vpack.c.b16 %v10173, %v10172
        %v10297 = vpack.c.b16 %v10175, %v10174
        %v10298 = vpack.c.b16 %v10177, %v10176
        %v10299 = vpack.c.b16 %v10179, %v10178
        %v10300 = vpack.c.b16 %v10181, %v10180
        %v10301 = vpack.c.b16 %v10183, %v10182
        %v10302 = vpack.c.b16 %v10185, %v10184
        %v10303 = vpack.c.b16 %v10187, %v10186
        %v10304 = vpack.c.b16 %v10189, %v10188
        %v10305 = vpack.c.b16 %v10191, %v10190
        %v10306 = vpack.c.b16 %v10193, %v10192
        %v10307 = vpack.c.b16 %v10195, %v10194
        %v10308 = vpack.c.b16 %v10197, %v10196
        %v10309 = vpack.c.b16 %v10199, %v10198
        %v10310 = vpack.c.b16 %v10201, %v10200
        %v10311 = vpack.c.b16 %v10203, %v10202
        %v10312 = vpack.c.b16 %v10205, %v10204
        %v10313 = vpack.c.b16 %v10207, %v10206
        %v10314 = vpack.c.b16 %v10209, %v10208
        %v10315 = vpack.c.b16 %v10211, %v10210
        %v10316 = vpack.c.b16 %v10213, %v10212
        %v10317 = vpack.c.b16 %v10215, %v10214
        %v10318 = vpack.c.b16 %v10217, %v10216
        %v10319 = vpack.c.b16 %v10219, %v10218
        %v10320 = vpack.c.b16 %v10221, %v10220
        %v10321 = vpack.c.b16 %v10223, %v10222
        %v10322 = vpack.c.b16 %v10225, %v10224
        %v10323 = vpack.c.b16 %v10227, %v10226
        %v10324 = vpack.c.b16 %v10229, %v10228
        %v10325 = vpack.c.b16 %v10231, %v10230
        %v10326 = vpack.c.b16 %v10233, %v10232
        %v10327 = vpack.c.b16 %v10235, %v10234
        %v10328 = vpack.c.b16 %v10237, %v10236
        %v10329 = vpack.c.b16 %v10239, %v10238
        %v10330 = vpack.c.b16 %v10241, %v10240
        %v10331 = vpack.c.b16 %v10243, %v10242
        %v10332 = vpack.c.b16 %v10245, %v10244
        %v10333 = vpack.c.b16 %v10247, %v10246
        %v10334 = vpack.c.b16 %v10249, %v10248
        %v10335 = vpack.c.b16 %v10251, %v10250
        %v10336 = vpack.c.b16 %v10253, %v10252
        %v10337 = vpack.c.b16 %v10255, %v10254
        %v10338 = vpack.c.b16 %v10257, %v10256
        %v10339 = vpack.c.b16 %v10259, %v10258
        %v10340 = vpack.c.b16 %v10261, %v10260
        %v10341 = vpack.c.b16 %v10263, %v10262
        %v10342 = vpack.c.b16 %v10265, %v10264
        %v10343 = vpack.c.b16 %v10267, %v10266
        %v10344 = vpack.c.b16 %v10269, %v10268
        %v10345 = vpack.c.b16 %v10271, %v10270
        %v10346 = vpack.c.b16 %v10273, %v10272
        %v10347 = vpack.c.b16 %v10275, %v10274
        %v10348 = vpack.c.b16 %v10277, %v10276
        %v10349 = vpack.c.b16 %v10279, %v10278
        %v10350 = vpack.c.b16 %v10281, %v10280
        %v10351 = vpack.c.b16 %v10283, %v10282
        %v10352 = vpack.c.b16 %v10285, %v10284
        %v10353 = vpack.c.b16 %v10287, %v10286
        %v10354 = vpack.c.b16 %v10289, %v10288
        %v10355 = vpack.c.b16 %v10291, %v10290
        %10420 = vmatprep.subr.bf16.mxu0 0
        %10421 = vmatpush1.bf16.msra.mxu0 %v10299
        %10422 = vmatprep.subr.bf16.mxu0 0
        %10423 = vmatpush1.bf16.msra.mxu0 %v10298
        %10424 = vmatprep.subr.bf16.mxu0 0
        %10425 = vmatpush1.bf16.msra.mxu0 %v10297
        %10426 = vmatprep.subr.bf16.mxu0 0
        %10427 = vmatpush1.bf16.msra.mxu0 %v10296
        %10428 = vmatprep.subr.bf16.mxu0 0
        %10429 = vmatpush1.bf16.msra.mxu0 %v10295
        %10430 = vmatprep.subr.bf16.mxu0 0
        %10431 = vmatpush1.bf16.msra.mxu0 %v10294
        %10432 = vmatprep.subr.bf16.mxu0 0
        %10433 = vmatpush1.bf16.msra.mxu0 %v10293
        %10434 = vmatprep.subr.bf16.mxu0 0
        %10435 = vmatpush1.bf16.msra.mxu0 %v10292
        %10436 = vmatprep.subr.bf16.mxu0 0
        %10437 = vmatpush2.bf16.msra.mxu0 %v10307
        %10438 = vmatprep.subr.bf16.mxu0 0
        %10439 = vmatpush2.bf16.msra.mxu0 %v10306
        %10440 = vmatprep.subr.bf16.mxu0 0
        %10441 = vmatpush2.bf16.msra.mxu0 %v10305
        %10442 = vmatprep.subr.bf16.mxu0 0
        %10443 = vmatpush2.bf16.msra.mxu0 %v10304
        %10444 = vmatprep.subr.bf16.mxu0 0
        %10445 = vmatpush2.bf16.msra.mxu0 %v10303
        %10446 = vmatprep.subr.bf16.mxu0 0
        %10447 = vmatpush2.bf16.msra.mxu0 %v10302
        %10448 = vmatprep.subr.bf16.mxu0 0
        %10449 = vmatpush2.bf16.msra.mxu0 %v10301
        %10450 = vmatprep.subr.bf16.mxu0 0
        %10451 = vmatpush2.bf16.msra.mxu0 %v10300
        %10452 = vmatprep.mubr.bf16.mxu0 %v9894
        %10453 = vmatmul.mubr.bf16.gmra.mxu0 %v9893
        %v10454 = vpop.f32.mrf.mxu0
        %v10455 = vadd.f32 %v10034, %v10454
        %v10456 = vpop.f32.mrf.mxu0
        %v10457 = vpop.f32.mrf.mxu0
        %v10458 = vadd.f32 %v10034, %v10457
        %v10459 = vpop.f32.mrf.mxu0
        %10460 = vdwg.mxu0
        %10461 = vmatprep.subr.bf16.mxu0 0
        %10462 = vmatpush1.bf16.msra.mxu0 %v10315
        %10463 = vmatprep.subr.bf16.mxu0 0
        %10464 = vmatpush1.bf16.msra.mxu0 %v10314
        %10465 = vmatprep.subr.bf16.mxu0 0
        %10466 = vmatpush1.bf16.msra.mxu0 %v10313
        %10467 = vmatprep.subr.bf16.mxu0 0
        %10468 = vmatpush1.bf16.msra.mxu0 %v10312
        %10469 = vmatprep.subr.bf16.mxu0 0
        %10470 = vmatpush1.bf16.msra.mxu0 %v10311
        %10471 = vmatprep.subr.bf16.mxu0 0
        %10472 = vmatpush1.bf16.msra.mxu0 %v10310
        %10473 = vmatprep.subr.bf16.mxu0 0
        %10474 = vmatpush1.bf16.msra.mxu0 %v10309
        %10475 = vmatprep.subr.bf16.mxu0 0
        %10476 = vmatpush1.bf16.msra.mxu0 %v10308
        %10477 = vmatprep.subr.bf16.mxu0 0
        %10478 = vmatpush2.bf16.msra.mxu0 %v10323
        %10479 = vmatprep.subr.bf16.mxu0 0
        %10480 = vmatpush2.bf16.msra.mxu0 %v10322
        %10481 = vmatprep.subr.bf16.mxu0 0
        %10482 = vmatpush2.bf16.msra.mxu0 %v10321
        %10483 = vmatprep.subr.bf16.mxu0 0
        %10484 = vmatpush2.bf16.msra.mxu0 %v10320
        %10485 = vmatprep.subr.bf16.mxu0 0
        %10486 = vmatpush2.bf16.msra.mxu0 %v10319
        %10487 = vmatprep.subr.bf16.mxu0 0
        %10488 = vmatpush2.bf16.msra.mxu0 %v10318
        %10489 = vmatprep.subr.bf16.mxu0 0
        %10490 = vmatpush2.bf16.msra.mxu0 %v10317
        %10491 = vmatprep.subr.bf16.mxu0 0
        %10492 = vmatpush2.bf16.msra.mxu0 %v10316
        %10493 = vmatprep.mubr.bf16.mxu0 %v9896
        %10494 = vmatmul.mubr.bf16.gmra.mxu0 %v9895
        %v10495 = vpop.f32.mrf.mxu0
        %v10496 = vadd.f32 %v10455, %v10495
        %v10497 = vpop.f32.mrf.mxu0
        %v10498 = vpop.f32.mrf.mxu0
        %v10499 = vadd.f32 %v10458, %v10498
        %v10500 = vpop.f32.mrf.mxu0
        %10501 = vdwg.mxu0
        %10502 = vmatprep.subr.bf16.mxu0 0
        %10503 = vmatpush1.bf16.msra.mxu0 %v10331
        %10504 = vmatprep.subr.bf16.mxu0 0
        %10505 = vmatpush1.bf16.msra.mxu0 %v10330
        %10506 = vmatprep.subr.bf16.mxu0 0
        %10507 = vmatpush1.bf16.msra.mxu0 %v10329
        %10508 = vmatprep.subr.bf16.mxu0 0
        %10509 = vmatpush1.bf16.msra.mxu0 %v10328
        %10510 = vmatprep.subr.bf16.mxu0 0
        %10511 = vmatpush1.bf16.msra.mxu0 %v10327
        %10512 = vmatprep.subr.bf16.mxu0 0
        %10513 = vmatpush1.bf16.msra.mxu0 %v10326
        %10514 = vmatprep.subr.bf16.mxu0 0
        %10515 = vmatpush1.bf16.msra.mxu0 %v10325
        %10516 = vmatprep.subr.bf16.mxu0 0
        %10517 = vmatpush1.bf16.msra.mxu0 %v10324
        %10518 = vmatprep.subr.bf16.mxu0 0
        %10519 = vmatpush2.bf16.msra.mxu0 %v10339
        %10520 = vmatprep.subr.bf16.mxu0 0
        %10521 = vmatpush2.bf16.msra.mxu0 %v10338
        %10522 = vmatprep.subr.bf16.mxu0 0
        %10523 = vmatpush2.bf16.msra.mxu0 %v10337
        %10524 = vmatprep.subr.bf16.mxu0 0
        %10525 = vmatpush2.bf16.msra.mxu0 %v10336
        %10526 = vmatprep.subr.bf16.mxu0 0
        %10527 = vmatpush2.bf16.msra.mxu0 %v10335
        %10528 = vmatprep.subr.bf16.mxu0 0
        %10529 = vmatpush2.bf16.msra.mxu0 %v10334
        %10530 = vmatprep.subr.bf16.mxu0 0
        %10531 = vmatpush2.bf16.msra.mxu0 %v10333
        %10532 = vmatprep.subr.bf16.mxu0 0
        %10533 = vmatpush2.bf16.msra.mxu0 %v10332
        %10534 = vmatprep.mubr.bf16.mxu0 %v9898
        %10535 = vmatmul.mubr.bf16.gmra.mxu0 %v9897
        %v10536 = vpop.f32.mrf.mxu0
        %v10537 = vadd.f32 %v10496, %v10536
        %v10538 = vpop.f32.mrf.mxu0
        %v10539 = vpop.f32.mrf.mxu0
        %v10540 = vadd.f32 %v10499, %v10539
        %v10541 = vpop.f32.mrf.mxu0
        %10542 = vdwg.mxu0
        %10543 = vmatprep.subr.bf16.mxu0 0
        %10544 = vmatpush1.bf16.msra.mxu0 %v10347
        %10545 = vmatprep.subr.bf16.mxu0 0
        %10546 = vmatpush1.bf16.msra.mxu0 %v10346
        %10547 = vmatprep.subr.bf16.mxu0 0
        %10548 = vmatpush1.bf16.msra.mxu0 %v10345
        %10549 = vmatprep.subr.bf16.mxu0 0
        %10550 = vmatpush1.bf16.msra.mxu0 %v10344
        %10551 = vmatprep.subr.bf16.mxu0 0
        %10552 = vmatpush1.bf16.msra.mxu0 %v10343
        %10553 = vmatprep.subr.bf16.mxu0 0
        %10554 = vmatpush1.bf16.msra.mxu0 %v10342
        %10555 = vmatprep.subr.bf16.mxu0 0
        %10556 = vmatpush1.bf16.msra.mxu0 %v10341
        %10557 = vmatprep.subr.bf16.mxu0 0
        %10558 = vmatpush1.bf16.msra.mxu0 %v10340
        %10559 = vmatprep.subr.bf16.mxu0 0
        %10560 = vmatpush2.bf16.msra.mxu0 %v10355
        %10561 = vmatprep.subr.bf16.mxu0 0
        %10562 = vmatpush2.bf16.msra.mxu0 %v10354
        %10563 = vmatprep.subr.bf16.mxu0 0
        %10564 = vmatpush2.bf16.msra.mxu0 %v10353
        %10565 = vmatprep.subr.bf16.mxu0 0
        %10566 = vmatpush2.bf16.msra.mxu0 %v10352
        %10567 = vmatprep.subr.bf16.mxu0 0
        %10568 = vmatpush2.bf16.msra.mxu0 %v10351
        %10569 = vmatprep.subr.bf16.mxu0 0
        %10570 = vmatpush2.bf16.msra.mxu0 %v10350
        %10571 = vmatprep.subr.bf16.mxu0 0
        %10572 = vmatpush2.bf16.msra.mxu0 %v10349
        %10573 = vmatprep.subr.bf16.mxu0 0
        %10574 = vmatpush2.bf16.msra.mxu0 %v10348
        %10575 = vmatprep.mubr.bf16.mxu0 %v9900
        %10576 = vmatmul.mubr.bf16.gmra.mxu0 %v9899
        %v10577 = vpop.f32.mrf.mxu0
        %v10578 = vadd.f32 %v10537, %v10577
        %v10579 = vpop.f32.mrf.mxu0
        %v10580 = vpop.f32.mrf.mxu0
        %v10581 = vadd.f32 %v10540, %v10580
        %v10582 = vpop.f32.mrf.mxu0
        %10583 = vdwg.mxu0
        %10584 = vmax.xlane.f32.xlu0 %v10578
        %v10585 = vpop.xlane.xlu0 %10584
        %10586 = vmax.xlane.f32.xlu0 %v10581
        %v10587 = vpop.xlane.xlu0 %10586
        %v10588 = vsub.f32 %v10578, %v10585
        %v10589 = vsub.f32 %v10581, %v10587
        %v10590 = vmul.f32 %v10588, 1.442695
        %v10591 = vpow.pop %v10590
        %v10592 = vmul.f32 %v10589, 1.442695
        %v10593 = vpow.pop %v10592
        %10594 = vadd.xlane.f32.xlu0 %v10591
        %v10595 = vpop.xlane.xlu0 %10594
        %10596 = vadd.xlane.f32.xlu0 %v10593
        %v10597 = vpop.xlane.xlu0 %10596
        %v10598 = vlog2.pop %v10595
        %v10599 = vmul.f32 %v10598, 0.6931472
        %v10600 = vlog2.pop %v10597
        %v10601 = vmul.f32 %v10600, 0.6931472
        %v10602 = vsub.f32 %v10588, %v10599
        %v10603 = vsub.f32 %v10589, %v10601
        %10604 = vst [vmem:[%s649] sm:$0xff] %v10602
        %10605 = vst [vmem:[%s649 + $0x8] sm:$0xff] %v10603
        %s10606 = sand.u32 %s329, 1
        %s10607 = scalar_lea.sflag [#allocation4], %s10606
        %s10608 = sand.u32 %s329, 1
        %s10609 = smul.addr %s10608, 16
        %s10610 = scalar_lea.vmem [#allocation23], %s10609
        // Predicated region
        $region125: #{tpu_custom_call.1} parent=71 // pred_check
          %p10611 = pneg %p339
        $region126: #{tpu_custom_call.1} parent=71 // pred_check_branch
          %10613 = sbr.rel (%p10611) target = $region128
        $region127: #{tpu_custom_call.1} parent=71 // pred_region
          %s10614 = smul.u32 2, %s38
          %s10616 = ssub.s32 256, 256
          %10617 = vsyncadd %s10607, %s10616
          %s10618 = smul.addr %s10614, 128
          %s10619 = scalar_lea.hbm %s13, %s10618
          %s10620 = sshll.u32 %s10610, 4
          %s10621 = int_to_ptr.vmem [resolvable:$true] %s10620
          %10626 = dma.vmem_to_hbm [thread:$0]  %s10621, 256, %s10619, %s10607, 128, 128, 8
        $region128: #{tpu_custom_call.1} parent=71 // pred_fallthru
          _
      $region72: #{tpu_custom_call.1} parent=5 // pred_fallthru
        _
      %p10627 = scmp.le.s32.totalorder 2, %s33
      // Predicated region
      $region129: #{tpu_custom_call.1} parent=5 // pred_check
        %p10628 = pneg %p10627
      $region130: #{tpu_custom_call.1} parent=5 // pred_check_branch
        %10630 = sbr.rel (%p10628) target = $region132
      $region131: #{tpu_custom_call.1} parent=5 // pred_region
        %s10631 = ssub.s32 %s33, 2
        // Predicated region
        $region133: #{tpu_custom_call.1} parent=131 // pred_check
          %p10632 = pneg %p345
        $region134: #{tpu_custom_call.1} parent=131 // pred_check_branch
          %10634 = sbr.rel (%p10632) target = $region136
        $region135: #{tpu_custom_call.1} parent=131 // pred_region
          %s10635 = sand.u32 %s330, 1
          %s10636 = scalar_lea.sflag [#allocation4], %s10635
          %s10637 = sand.u32 %s330, 1
          %s10638 = smul.addr %s10637, 16
          %s10639 = scalar_lea.vmem [#allocation23], %s10638
          %10640 = dma.done %s10636, 256
        $region136: #{tpu_custom_call.1} parent=131 // pred_fallthru
          _
      $region132: #{tpu_custom_call.1} parent=5 // pred_fallthru
        _
    $region6: #{tpu_custom_call.1} parent=1 // loop_footer
      %s37 = sadd.s32 1, %s33
    $region7: #{tpu_custom_call.1} parent=1 // loop_footer_branch
      %32 = sbr.rel target = $region3
    $region8: #{tpu_custom_call.1} parent=1 // loop_exit
      _
    %10641 = vsyncpa [#allocation3], 1
    %s10642 = scalar_lea.sflag [#allocation3], 1
    %10643 = vsyncpa %s10642, 1
    %10644 = vsyncpa [#allocation6], 1
    %s10645 = scalar_lea.sflag [#allocation6], 1
    %10646 = vsyncpa %s10645, 1
    %10647 = vsyncpa [#allocation9], 1
    %10648 = vsyncpa [#allocation12], 1
    %10649 = vsyncpa [#allocation15], 1
    %10650 = vsyncpa [#allocation18], 1
    %10651 = vsyncpa [#allocation21], 1
    %10652 = vsyncpa [#allocation4], 1
    %s10653 = scalar_lea.sflag [#allocation4], 1
    %10654 = vsyncpa %s10653, 1

</llo_original>
